<compile_context>
chip_gen: v6e
topology: v6e:2x2x1
jax: 0.10.0
libtpu: 0.0.40
codegen_flags: <defaults>
</compile_context>

<pallas_src>
import numpy as np

import jax
import jax.numpy as jnp
from jax.experimental import pallas as pl
from jax.experimental.pallas import tpu as pltpu


# ------------------------------ static network geometry ------------------------------

_N, _BC = 2, 4                      # batch, base_channels
_H0 = _W0 = 16                      # level-0 spatial size
_H1 = _W1 = 8
_H2 = _W2 = 4
_LX = _N * _W0 * 3                  # input lanes  (96)
_L0 = _N * _W0 * _BC                # level-0 lanes (128)
_L1 = _N * _W1 * (2 * _BC)          # level-1 lanes (128)
_L2 = _N * _W2 * (4 * _BC)          # level-2 lanes (128)
_EPS = 1e-5

# VMEM scratch buffers (rows include the zero padding rows each consumer needs).
_SCRATCH_SHAPES = (
    (_H0 + 2, _L0),      # a00   : conv0_0 out, pad 1
    (_H0 + 2, _L0),      # a01   : conv0_1 out ("conv0"), pad 1
    (_H0 + 4, _L0),      # a01ps : parity-split copy of the pad-2 frame (for conv1_0)
    (_H1 + 2, _L1),      # a10
    (_H1 + 2, _L1),      # a11
    (_H1 + 2, _L1),      # a12   : "conv1", pad 1
    (_H1 + 4, _L1),      # a12ps : parity-split pad-2 frame (for conv2_0)
    (_H2 + 2, _L2),      # a20
    (_H2 + 2, _L2),      # a21
    (_H2 + 1, _L2),      # a22   : "conv2"/intra1, one bottom zero row for deconv1
    (_H1 + 2, 2 * _L1),  # cat1  : [deconv1 out | conv1], pad 1
    (_H1 + 1, _L1),      # intra2: one bottom zero row for deconv2
    (_H0 + 2, 2 * _L0),  # cat2  : [deconv2 out | conv0], pad 1
)

_WEIGHT_ORDER = ('w00', 'w01', 'w10', 'w11', 'w12', 'w20', 'w21', 'w22',
                 'wo1', 'wd1t', 'wd1c', 'wo2', 'wd2t', 'wd2c', 'wo3')


# ------------------------------ the fused kernel ------------------------------

def _featurenet_kernel(x_ref, w00, w01, w10, w11, w12, w20, w21, w22,
                       wo1, wd1t, wd1c, wo2, wd2t, wd2c, wo3,
                       o1_ref, o2_ref, o3_ref,
                       a00, a01, a01ps, a10, a11, a12, a12ps,
                       a20, a21, a22, cat1, intra2, cat2):
    f32 = jnp.float32

    # Zero all scratch once: establishes the zero padding rows.
    for buf in (a00, a01, a01ps, a10, a11, a12, a12ps, a20, a21, a22,
                cat1, intra2, cat2):
        buf[...] = jnp.zeros(buf.shape, f32)

    def proj(length, cout):
        # P[l, l'] = 1 iff lane l and lane l' carry the same channel (cout is 2^k).
        r = jax.lax.broadcasted_iota(jnp.int32, (length, length), 0)
        c = jax.lax.broadcasted_iota(jnp.int32, (length, length), 1)
        return jnp.where((r & (cout - 1)) == (c & (cout - 1)), 1.0, 0.0).astype(f32)

    p0 = proj(_L0, _BC)              # 128 lanes, C=4
    p1 = proj(_L1, 2 * _BC)          # 128 lanes, C=8
    p2 = proj(_L2, 4 * _BC)          # 128 lanes, C=16
    pd1 = proj(2 * _L1, 2 * _BC)     # 256 lanes, C=8  (deconv1 pre-interleave)
    pd2 = proj(2 * _L0, _BC)         # 256 lanes, C=4  (deconv2 pre-interleave)

    def bn_relu(acc, p, cnt):
        # Training-mode BatchNorm (biased variance, gamma=1, beta=0) + ReLU.
        s = jnp.sum(acc, axis=0, keepdims=True)
        sq = jnp.sum(acc * acc, axis=0, keepdims=True)
        mean = jnp.dot(s, p, preferred_element_type=f32) * (1.0 / cnt)
        msq = jnp.dot(sq, p, preferred_element_type=f32) * (1.0 / cnt)
        var = jnp.maximum(msq - mean * mean, 0.0)
        inv = jax.lax.rsqrt(var + _EPS)
        return jnp.maximum((acc - mean) * inv, 0.0)

    def conv(src, w, kh, ho):
        # stride-1 conv: kh contiguous row-tap windows of a (top-)padded buffer.
        acc = jnp.dot(src[0:ho, :], w[0], preferred_element_type=f32)
        for di in range(1, kh):
            acc = acc + jnp.dot(src[di:di + ho, :], w[di],
                                preferred_element_type=f32)
        return acc

    def conv_s2(ps, w, half, ho):
        # stride-2 (k=5, pad=2) conv reading a parity-split padded buffer:
        # even taps hit the even half, odd taps the odd half, all contiguous.
        acc = None
        for di in range(5):
            start = di // 2 if di % 2 == 0 else half + (di - 1) // 2
            t = jnp.dot(ps[start:start + ho, :], w[di],
                        preferred_element_type=f32)
            acc = t if acc is None else acc + t
        return acc

    cnt0 = float(_N * _H0 * _W0)     # 512
    cnt1 = float(_N * _H1 * _W1)     # 128
    cnt2 = float(_N * _H2 * _W2)     # 32

    # -------------------- encoder --------------------
    y = bn_relu(conv(x_ref, w00, 3, _H0), p0, cnt0)              # conv0_0
    a00[1:1 + _H0, :] = y
    y = bn_relu(conv(a00, w01, 3, _H0), p0, cnt0)                # conv0_1 -> "conv0"
    a01[1:1 + _H0, :] = y
    for h in range(_H0):                                         # parity-split pad-2 frame
        rp = h + 2
        idx = rp // 2 if rp % 2 == 0 else (_H0 + 4) // 2 + rp // 2
        a01ps[idx:idx + 1, :] = a01[1 + h:2 + h, :]

    y = bn_relu(conv_s2(a01ps, w10, (_H0 + 4) // 2, _H1), p1, cnt1)   # conv1_0 (s=2)
    a10[1:1 + _H1, :] = y
    y = bn_relu(conv(a10, w11, 3, _H1), p1, cnt1)                # conv1_1
    a11[1:1 + _H1, :] = y
    y = bn_relu(conv(a11, w12, 3, _H1), p1, cnt1)                # conv1_2 -> "conv1"
    a12[1:1 + _H1, :] = y
    for h in range(_H1):
        rp = h + 2
        idx = rp // 2 if rp % 2 == 0 else (_H1 + 4) // 2 + rp // 2
        a12ps[idx:idx + 1, :] = a12[1 + h:2 + h, :]

    y = bn_relu(conv_s2(a12ps, w20, (_H1 + 4) // 2, _H2), p2, cnt2)   # conv2_0 (s=2)
    a20[1:1 + _H2, :] = y
    y = bn_relu(conv(a20, w21, 3, _H2), p2, cnt2)                # conv2_1
    a21[1:1 + _H2, :] = y
    conv2 = bn_relu(conv(a21, w22, 3, _H2), p2, cnt2)            # conv2_2 -> intra_feat
    a22[0:_H2, :] = conv2

    # stage-1 head (1x1 conv, no BN / ReLU)
    o1_ref[...] = jnp.dot(conv2, wo1[...], preferred_element_type=f32)

    # -------------------- decoder: deconv1 (stage 2) --------------------
    # Polyphase transposed conv: one matmul per row tap produces both output-row
    # parities as two 128-lane halves; BN is joint over both halves.
    d = bn_relu(conv(a22, wd1t, 2, _H2), pd1, cnt1)
    for r in range(_H2):
        for a in range(2):
            cat1[1 + 2 * r + a:2 + 2 * r + a, 0:_L1] = d[r:r + 1, a * _L1:(a + 1) * _L1]
    cat1[1:1 + _H1, _L1:2 * _L1] = a12[1:1 + _H1, :]             # torch.cat((deconv, conv1))

    intra2_v = bn_relu(conv(cat1, wd1c, 3, _H1), p1, cnt1)       # deconv1.conv
    o2_ref[...] = jnp.dot(intra2_v, wo2[...], preferred_element_type=f32)
    intra2[0:_H1, :] = intra2_v

    # -------------------- decoder: deconv2 (stage 3) --------------------
    d = bn_relu(conv(intra2, wd2t, 2, _H1), pd2, cnt0)
    for r in range(_H1):
        for a in range(2):
            cat2[1 + 2 * r + a:2 + 2 * r + a, 0:_L0] = d[r:r + 1, a * _L0:(a + 1) * _L0]
    cat2[1:1 + _H0, _L0:2 * _L0] = a01[1:1 + _H0, :]             # torch.cat((deconv, conv0))

    intra3_v = bn_relu(conv(cat2, wd2c, 3, _H0), p0, cnt0)       # deconv2.conv
    o3_ref[...] = jnp.dot(intra3_v, wo3[...], preferred_element_type=f32)


# ------------------------------ wrapper-side weight packing ------------------------------
# Activations are packed as (rows, N*W*C) with lane order (n, w, c), c minor.  The
# per-row-tap block weight matrices fold the batch block-diagonal, the column taps,
# the column padding and the column stride, so every tap inside the kernel is a plain
# 2-D matmul against a contiguous row window.

def _pack_conv(w_oihw, n_img, w_in, stride, pad):
    w = np.asarray(w_oihw, np.float32)
    co, ci, kh, kw = w.shape
    wo = (w_in + 2 * pad - kw) // stride + 1
    b = np.zeros((kh, n_img * w_in * ci, n_img * wo * co), np.float32)
    for di in range(kh):
        for dj in range(kw):
            blk = w[:, :, di, dj].T                               # (ci, co)
            for j in range(wo):
                wc = stride * j + dj - pad
                if 0 <= wc < w_in:
                    for n in range(n_img):
                        r0 = (n * w_in + wc) * ci
                        c0 = (n * wo + j) * co
                        b[di, r0:r0 + ci, c0:c0 + co] = blk
    return b


def _pack_conv_cat(w_oihw, n_img, w_in):
    # 3x3 stride-1 pad-1 conv over a [deconv-half | skip-half] concat buffer.
    w = np.asarray(w_oihw, np.float32)
    co, ci2, kh, kw = w.shape
    c = ci2 // 2
    half = n_img * w_in * c
    b = np.zeros((kh, 2 * half, n_img * w_in * co), np.float32)
    for di in range(kh):
        for dj in range(kw):
            blk_d = w[:, :c, di, dj].T                            # deconv-half channels
            blk_s = w[:, c:, di, dj].T                            # skip-half channels
            for j in range(w_in):
                wc = j + dj - 1
                if 0 <= wc < w_in:
                    for n in range(n_img):
                        r0 = (n * w_in + wc) * c
                        c0 = (n * w_in + j) * co
                        b[di, r0:r0 + c, c0:c0 + co] = blk_d
                        b[di, half + r0:half + r0 + c, c0:c0 + co] = blk_s
    return b


def _pack_pointwise(w_oihw, n_img, w_in):
    w = np.asarray(w_oihw, np.float32)
    co, ci = w.shape[0], w.shape[1]
    blk = w[:, :, 0, 0].T
    b = np.zeros((n_img * w_in * ci, n_img * w_in * co), np.float32)
    for n in range(n_img):
        for j in range(w_in):
            b[(n * w_in + j) * ci:(n * w_in + j) * ci + ci,
              (n * w_in + j) * co:(n * w_in + j) * co + co] = blk
    return b


def _pack_deconv(wt_iohw, n_img, w_in):
    # ConvTranspose2d(k=3, s=2, p=1, output_padding=1): polyphase tap matrices.
    # Tap r0 in {0,1} reads input row r + r0; output lanes are
    # [row-parity a=0 | a=1], each half ordered (n, out_col, co).
    w = np.asarray(wt_iohw, np.float32)
    ci, co, kh, kw = w.shape
    w_out = 2 * w_in
    out_half = n_img * w_out * co
    b = np.zeros((2, n_img * w_in * ci, 2 * out_half), np.float32)
    for a in (0, 1):
        for r0 in (0, 1):
            ki = 1 + a - 2 * r0
            if not (0 <= ki < kh):
                continue
            for bb in (0, 1):
                for dj in (0, 1):
                    kj = 1 + bb - 2 * dj
                    if not (0 <= kj < kw):
                        continue
                    blk = w[:, :, ki, kj]                          # (ci, co)
                    for u in range(w_in):
                        wi = u + dj
                        if wi >= w_in:
                            continue
                        ow = 2 * u + bb
                        for n in range(n_img):
                            r = (n * w_in + wi) * ci
                            c0 = a * out_half + (n * w_out + ow) * co
                            b[r0, r:r + ci, c0:c0 + co] = blk
    return b


def pack_featurenet_params(params):
    p = {
        'w00': _pack_conv(params['conv0_0'], _N, _W0, 1, 1),
        'w01': _pack_conv(params['conv0_1'], _N, _W0, 1, 1),
        'w10': _pack_conv(params['conv1_0'], _N, _W0, 2, 2),
        'w11': _pack_conv(params['conv1_1'], _N, _W1, 1, 1),
        'w12': _pack_conv(params['conv1_2'], _N, _W1, 1, 1),
        'w20': _pack_conv(params['conv2_0'], _N, _W1, 2, 2),
        'w21': _pack_conv(params['conv2_1'], _N, _W2, 1, 1),
        'w22': _pack_conv(params['conv2_2'], _N, _W2, 1, 1),
        'wo1': _pack_pointwise(params['out1'], _N, _W2),
        'wd1t': _pack_deconv(params['deconv1_t'], _N, _W2),
        'wd1c': _pack_conv_cat(params['deconv1_c'], _N, _W1),
        'wo2': _pack_pointwise(params['out2'], _N, _W1),
        'wd2t': _pack_deconv(params['deconv2_t'], _N, _W1),
        'wd2c': _pack_conv_cat(params['deconv2_c'], _N, _W0),
        'wo3': _pack_pointwise(params['out3'], _N, _W0),
    }
    return {k: jnp.asarray(v) for k, v in p.items()}


# ------------------------------ FeatureNet forward ------------------------------

def _full_spec(shape):
    nd = len(shape)

    def imap(i):
        return (0,) * nd

    return pl.BlockSpec(shape, imap)


def feature_net_forward(x_nchw, packed):
    n, c, h, w = x_nchw.shape
    assert (n, c, h, w) == (_N, 3, _H0, _W0)
    # Pack the network input as (H, N*W*C) with lane order (n, w, c) and pad 1 row.
    xp = jnp.transpose(x_nchw.astype(jnp.float32), (2, 0, 3, 1)).reshape(h, n * w * c)
    xp = jnp.pad(xp, ((1, 1), (0, 0)))

    operands = [xp] + [packed[k] for k in _WEIGHT_ORDER]
    out_shape = (jax.ShapeDtypeStruct((_H2, _L2), jnp.float32),
                 jax.ShapeDtypeStruct((_H1, _L1), jnp.float32),
                 jax.ShapeDtypeStruct((_H0, _L0), jnp.float32))

    o1, o2, o3 = pl.pallas_call(
        _featurenet_kernel,
        out_shape=out_shape,
        grid=(1,),
        in_specs=[_full_spec(op.shape) for op in operands],
        out_specs=tuple(_full_spec(s.shape) for s in out_shape),
        scratch_shapes=[pltpu.VMEM(s, jnp.float32) for s in _SCRATCH_SHAPES],
        compiler_params=pltpu.CompilerParams(
            dimension_semantics=("arbitrary",),
            vmem_limit_bytes=32 * 1024 * 1024),
    )(*operands)

    def to_nchw(o, ho, wo, cc):
        return jnp.transpose(o.reshape(ho, _N, wo, cc), (1, 3, 0, 2))

    return {'stage1': to_nchw(o1, _H2, _W2, 4 * _BC),
            'stage2': to_nchw(o2, _H1, _W1, 2 * _BC),
            'stage3': to_nchw(o3, _H0, _W0, _BC)}


# ------------------------------ parameters ------------------------------

def _xavier(key, shape):
    fan_in = shape[1] * shape[2] * shape[3]
    fan_out = shape[0] * shape[2] * shape[3]
    bound = (6.0 / (fan_in + fan_out)) ** 0.5
    return jax.random.uniform(key, shape, jnp.float32, -bound, bound)


def make_params(key, base_channels=4):
    C = base_channels
    shapes = {
        'conv0_0': (C, 3, 3, 3),
        'conv0_1': (C, C, 3, 3),
        'conv1_0': (2 * C, C, 5, 5),
        'conv1_1': (2 * C, 2 * C, 3, 3),
        'conv1_2': (2 * C, 2 * C, 3, 3),
        'conv2_0': (4 * C, 2 * C, 5, 5),
        'conv2_1': (4 * C, 4 * C, 3, 3),
        'conv2_2': (4 * C, 4 * C, 3, 3),
        'out1': (4 * C, 4 * C, 1, 1),
        'deconv1_t': (4 * C, 2 * C, 3, 3),   # ConvTranspose2d weight (Cin, Cout, kh, kw)
        'deconv1_c': (2 * C, 4 * C, 3, 3),
        'out2': (2 * C, 2 * C, 1, 1),
        'deconv2_t': (2 * C, C, 3, 3),
        'deconv2_c': (C, 2 * C, 3, 3),
        'out3': (C, C, 1, 1),
    }
    keys = jax.random.split(key, len(shapes))
    return {name: _xavier(k, s) for (name, s), k in zip(shapes.items(), keys)}


if __name__ == "__main__":
    key = jax.random.PRNGKey(0)
    k_x, k_p = jax.random.split(key)

    x = jax.random.normal(k_x, (_N, 3, _H0, _W0), jnp.float32)   # NCHW input
    params = make_params(k_p, _BC)
    packed = pack_featurenet_params(params)                      # one-time numpy packing

    fwd = jax.jit(feature_net_forward)
    outs = jax.block_until_ready(fwd(x, packed))

    assert outs['stage1'].shape == (_N, 4 * _BC, _H2, _W2)
    assert outs['stage2'].shape == (_N, 2 * _BC, _H1, _W1)
    assert outs['stage3'].shape == (_N, _BC, _H0, _W0)
    assert all(bool(jnp.all(jnp.isfinite(v))) for v in outs.values())
    print("KERNEL_OK")
</pallas_src>

<mosaic_0001>
module attributes {stable_mosaic.version = 11 : i64} {
  func.func @_featurenet_kernel(%arg0: i32, %arg1: memref<18x96xf32, #tpu.memory_space<vmem>>, %arg2: memref<3x96x128xf32, #tpu.memory_space<vmem>>, %arg3: memref<3x128x128xf32, #tpu.memory_space<vmem>>, %arg4: memref<5x128x128xf32, #tpu.memory_space<vmem>>, %arg5: memref<3x128x128xf32, #tpu.memory_space<vmem>>, %arg6: memref<3x128x128xf32, #tpu.memory_space<vmem>>, %arg7: memref<5x128x128xf32, #tpu.memory_space<vmem>>, %arg8: memref<3x128x128xf32, #tpu.memory_space<vmem>>, %arg9: memref<3x128x128xf32, #tpu.memory_space<vmem>>, %arg10: memref<128x128xf32, #tpu.memory_space<vmem>>, %arg11: memref<2x128x256xf32, #tpu.memory_space<vmem>>, %arg12: memref<3x256x128xf32, #tpu.memory_space<vmem>>, %arg13: memref<128x128xf32, #tpu.memory_space<vmem>>, %arg14: memref<2x128x256xf32, #tpu.memory_space<vmem>>, %arg15: memref<3x256x128xf32, #tpu.memory_space<vmem>>, %arg16: memref<128x128xf32, #tpu.memory_space<vmem>>, %arg17: memref<4x128xf32, #tpu.memory_space<vmem>>, %arg18: memref<8x128xf32, #tpu.memory_space<vmem>>, %arg19: memref<16x128xf32, #tpu.memory_space<vmem>>, %arg20: memref<18x128xf32, #tpu.memory_space<vmem>>, %arg21: memref<18x128xf32, #tpu.memory_space<vmem>>, %arg22: memref<20x128xf32, #tpu.memory_space<vmem>>, %arg23: memref<10x128xf32, #tpu.memory_space<vmem>>, %arg24: memref<10x128xf32, #tpu.memory_space<vmem>>, %arg25: memref<10x128xf32, #tpu.memory_space<vmem>>, %arg26: memref<12x128xf32, #tpu.memory_space<vmem>>, %arg27: memref<6x128xf32, #tpu.memory_space<vmem>>, %arg28: memref<6x128xf32, #tpu.memory_space<vmem>>, %arg29: memref<5x128xf32, #tpu.memory_space<vmem>>, %arg30: memref<10x256xf32, #tpu.memory_space<vmem>>, %arg31: memref<9x128xf32, #tpu.memory_space<vmem>>, %arg32: memref<18x256xf32, #tpu.memory_space<vmem>>) attributes {dimension_semantics = [#tpu.dimension_semantics<arbitrary>], iteration_bounds = array<i64: 1>, scalar_prefetch = 0 : i64, scratch_operands = 13 : i64, tpu.core_type = #tpu.core_type<tc>, window_params = [{pipeline_mode = #tpu.pipeline_mode<synchronous>, transform_indices = @transform_0, window_bounds = array<i64: 18, 96>}, {pipeline_mode = #tpu.pipeline_mode<synchronous>, transform_indices = @transform_1, window_bounds = array<i64: 3, 96, 128>}, {pipeline_mode = #tpu.pipeline_mode<synchronous>, transform_indices = @transform_2, window_bounds = array<i64: 3, 128, 128>}, {pipeline_mode = #tpu.pipeline_mode<synchronous>, transform_indices = @transform_3, window_bounds = array<i64: 5, 128, 128>}, {pipeline_mode = #tpu.pipeline_mode<synchronous>, transform_indices = @transform_4, window_bounds = array<i64: 3, 128, 128>}, {pipeline_mode = #tpu.pipeline_mode<synchronous>, transform_indices = @transform_5, window_bounds = array<i64: 3, 128, 128>}, {pipeline_mode = #tpu.pipeline_mode<synchronous>, transform_indices = @transform_6, window_bounds = array<i64: 5, 128, 128>}, {pipeline_mode = #tpu.pipeline_mode<synchronous>, transform_indices = @transform_7, window_bounds = array<i64: 3, 128, 128>}, {pipeline_mode = #tpu.pipeline_mode<synchronous>, transform_indices = @transform_8, window_bounds = array<i64: 3, 128, 128>}, {pipeline_mode = #tpu.pipeline_mode<synchronous>, transform_indices = @transform_9, window_bounds = array<i64: 128, 128>}, {pipeline_mode = #tpu.pipeline_mode<synchronous>, transform_indices = @transform_10, window_bounds = array<i64: 2, 128, 256>}, {pipeline_mode = #tpu.pipeline_mode<synchronous>, transform_indices = @transform_11, window_bounds = array<i64: 3, 256, 128>}, {pipeline_mode = #tpu.pipeline_mode<synchronous>, transform_indices = @transform_12, window_bounds = array<i64: 128, 128>}, {pipeline_mode = #tpu.pipeline_mode<synchronous>, transform_indices = @transform_13, window_bounds = array<i64: 2, 128, 256>}, {pipeline_mode = #tpu.pipeline_mode<synchronous>, transform_indices = @transform_14, window_bounds = array<i64: 3, 256, 128>}, {pipeline_mode = #tpu.pipeline_mode<synchronous>, transform_indices = @transform_15, window_bounds = array<i64: 128, 128>}, {pipeline_mode = #tpu.pipeline_mode<synchronous>, transform_indices = @transform_16, window_bounds = array<i64: 4, 128>}, {pipeline_mode = #tpu.pipeline_mode<synchronous>, transform_indices = @transform_17, window_bounds = array<i64: 8, 128>}, {pipeline_mode = #tpu.pipeline_mode<synchronous>, transform_indices = @transform_18, window_bounds = array<i64: 16, 128>}]} {
    %cst = arith.constant 0.000000e+00 : f32
    %0 = vector.broadcast %cst : f32 to vector<18x128xf32>
    %c0 = arith.constant 0 : index
    %c0_0 = arith.constant 0 : index
    %1 = vector.load %arg20[%c0, %c0_0] : memref<18x128xf32, #tpu.memory_space<vmem>>, vector<18x128xf32>
    tpu.vector_store %arg20[%c0, %c0_0], %0 {strides = array<i32>} : memref<18x128xf32, #tpu.memory_space<vmem>>, vector<18x128xf32>,
    %cst_1 = arith.constant 0.000000e+00 : f32
    %2 = vector.broadcast %cst_1 : f32 to vector<18x128xf32>
    %c0_2 = arith.constant 0 : index
    %c0_3 = arith.constant 0 : index
    %3 = vector.load %arg21[%c0_2, %c0_3] : memref<18x128xf32, #tpu.memory_space<vmem>>, vector<18x128xf32>
    tpu.vector_store %arg21[%c0_2, %c0_3], %2 {strides = array<i32>} : memref<18x128xf32, #tpu.memory_space<vmem>>, vector<18x128xf32>,
    %cst_4 = arith.constant 0.000000e+00 : f32
    %4 = vector.broadcast %cst_4 : f32 to vector<20x128xf32>
    %c0_5 = arith.constant 0 : index
    %c0_6 = arith.constant 0 : index
    %5 = vector.load %arg22[%c0_5, %c0_6] : memref<20x128xf32, #tpu.memory_space<vmem>>, vector<20x128xf32>
    tpu.vector_store %arg22[%c0_5, %c0_6], %4 {strides = array<i32>} : memref<20x128xf32, #tpu.memory_space<vmem>>, vector<20x128xf32>,
    %cst_7 = arith.constant 0.000000e+00 : f32
    %6 = vector.broadcast %cst_7 : f32 to vector<10x128xf32>
    %c0_8 = arith.constant 0 : index
    %c0_9 = arith.constant 0 : index
    %7 = vector.load %arg23[%c0_8, %c0_9] : memref<10x128xf32, #tpu.memory_space<vmem>>, vector<10x128xf32>
    tpu.vector_store %arg23[%c0_8, %c0_9], %6 {strides = array<i32>} : memref<10x128xf32, #tpu.memory_space<vmem>>, vector<10x128xf32>,
    %cst_10 = arith.constant 0.000000e+00 : f32
    %8 = vector.broadcast %cst_10 : f32 to vector<10x128xf32>
    %c0_11 = arith.constant 0 : index
    %c0_12 = arith.constant 0 : index
    %9 = vector.load %arg24[%c0_11, %c0_12] : memref<10x128xf32, #tpu.memory_space<vmem>>, vector<10x128xf32>
    tpu.vector_store %arg24[%c0_11, %c0_12], %8 {strides = array<i32>} : memref<10x128xf32, #tpu.memory_space<vmem>>, vector<10x128xf32>,
    %cst_13 = arith.constant 0.000000e+00 : f32
    %10 = vector.broadcast %cst_13 : f32 to vector<10x128xf32>
    %c0_14 = arith.constant 0 : index
    %c0_15 = arith.constant 0 : index
    %11 = vector.load %arg25[%c0_14, %c0_15] : memref<10x128xf32, #tpu.memory_space<vmem>>, vector<10x128xf32>
    tpu.vector_store %arg25[%c0_14, %c0_15], %10 {strides = array<i32>} : memref<10x128xf32, #tpu.memory_space<vmem>>, vector<10x128xf32>,
    %cst_16 = arith.constant 0.000000e+00 : f32
    %12 = vector.broadcast %cst_16 : f32 to vector<12x128xf32>
    %c0_17 = arith.constant 0 : index
    %c0_18 = arith.constant 0 : index
    %13 = vector.load %arg26[%c0_17, %c0_18] : memref<12x128xf32, #tpu.memory_space<vmem>>, vector<12x128xf32>
    tpu.vector_store %arg26[%c0_17, %c0_18], %12 {strides = array<i32>} : memref<12x128xf32, #tpu.memory_space<vmem>>, vector<12x128xf32>,
    %cst_19 = arith.constant 0.000000e+00 : f32
    %14 = vector.broadcast %cst_19 : f32 to vector<6x128xf32>
    %c0_20 = arith.constant 0 : index
    %c0_21 = arith.constant 0 : index
    %15 = vector.load %arg27[%c0_20, %c0_21] : memref<6x128xf32, #tpu.memory_space<vmem>>, vector<6x128xf32>
    tpu.vector_store %arg27[%c0_20, %c0_21], %14 {strides = array<i32>} : memref<6x128xf32, #tpu.memory_space<vmem>>, vector<6x128xf32>,
    %cst_22 = arith.constant 0.000000e+00 : f32
    %16 = vector.broadcast %cst_22 : f32 to vector<6x128xf32>
    %c0_23 = arith.constant 0 : index
    %c0_24 = arith.constant 0 : index
    %17 = vector.load %arg28[%c0_23, %c0_24] : memref<6x128xf32, #tpu.memory_space<vmem>>, vector<6x128xf32>
    tpu.vector_store %arg28[%c0_23, %c0_24], %16 {strides = array<i32>} : memref<6x128xf32, #tpu.memory_space<vmem>>, vector<6x128xf32>,
    %cst_25 = arith.constant 0.000000e+00 : f32
    %18 = vector.broadcast %cst_25 : f32 to vector<5x128xf32>
    %c0_26 = arith.constant 0 : index
    %c0_27 = arith.constant 0 : index
    %19 = vector.load %arg29[%c0_26, %c0_27] : memref<5x128xf32, #tpu.memory_space<vmem>>, vector<5x128xf32>
    tpu.vector_store %arg29[%c0_26, %c0_27], %18 {strides = array<i32>} : memref<5x128xf32, #tpu.memory_space<vmem>>, vector<5x128xf32>,
    %cst_28 = arith.constant 0.000000e+00 : f32
    %20 = vector.broadcast %cst_28 : f32 to vector<10x256xf32>
    %c0_29 = arith.constant 0 : index
    %c0_30 = arith.constant 0 : index
    %21 = vector.load %arg30[%c0_29, %c0_30] : memref<10x256xf32, #tpu.memory_space<vmem>>, vector<10x256xf32>
    tpu.vector_store %arg30[%c0_29, %c0_30], %20 {strides = array<i32>} : memref<10x256xf32, #tpu.memory_space<vmem>>, vector<10x256xf32>,
    %cst_31 = arith.constant 0.000000e+00 : f32
    %22 = vector.broadcast %cst_31 : f32 to vector<9x128xf32>
    %c0_32 = arith.constant 0 : index
    %c0_33 = arith.constant 0 : index
    %23 = vector.load %arg31[%c0_32, %c0_33] : memref<9x128xf32, #tpu.memory_space<vmem>>, vector<9x128xf32>
    tpu.vector_store %arg31[%c0_32, %c0_33], %22 {strides = array<i32>} : memref<9x128xf32, #tpu.memory_space<vmem>>, vector<9x128xf32>,
    %cst_34 = arith.constant 0.000000e+00 : f32
    %24 = vector.broadcast %cst_34 : f32 to vector<18x256xf32>
    %c0_35 = arith.constant 0 : index
    %c0_36 = arith.constant 0 : index
    %25 = vector.load %arg32[%c0_35, %c0_36] : memref<18x256xf32, #tpu.memory_space<vmem>>, vector<18x256xf32>
    tpu.vector_store %arg32[%c0_35, %c0_36], %24 {strides = array<i32>} : memref<18x256xf32, #tpu.memory_space<vmem>>, vector<18x256xf32>,
    %26 = tpu.iota {dimensions = array<i32: 0>} : vector<128x128xi32>
    %27 = tpu.iota {dimensions = array<i32: 1>} : vector<128x128xi32>
    %c3_i32 = arith.constant 3 : i32
    %28 = vector.broadcast %c3_i32 : i32 to vector<128x128xi32>
    %29 = arith.andi %26, %28 : vector<128x128xi32>
    %c3_i32_37 = arith.constant 3 : i32
    %30 = vector.broadcast %c3_i32_37 : i32 to vector<128x128xi32>
    %31 = arith.andi %27, %30 : vector<128x128xi32>
    %32 = arith.cmpi eq, %29, %31 : vector<128x128xi32>
    %cst_38 = arith.constant 1.000000e+00 : f32
    %cst_39 = arith.constant 0.000000e+00 : f32
    %33 = vector.broadcast %cst_38 : f32 to vector<128x128xf32>
    %34 = vector.broadcast %cst_39 : f32 to vector<128x128xf32>
    %35 = arith.select %32, %33, %34 : vector<128x128xi1>, vector<128x128xf32>
    %36 = tpu.iota {dimensions = array<i32: 0>} : vector<128x128xi32>
    %37 = tpu.iota {dimensions = array<i32: 1>} : vector<128x128xi32>
    %c7_i32 = arith.constant 7 : i32
    %38 = vector.broadcast %c7_i32 : i32 to vector<128x128xi32>
    %39 = arith.andi %36, %38 : vector<128x128xi32>
    %c7_i32_40 = arith.constant 7 : i32
    %40 = vector.broadcast %c7_i32_40 : i32 to vector<128x128xi32>
    %41 = arith.andi %37, %40 : vector<128x128xi32>
    %42 = arith.cmpi eq, %39, %41 : vector<128x128xi32>
    %cst_41 = arith.constant 1.000000e+00 : f32
    %cst_42 = arith.constant 0.000000e+00 : f32
    %43 = vector.broadcast %cst_41 : f32 to vector<128x128xf32>
    %44 = vector.broadcast %cst_42 : f32 to vector<128x128xf32>
    %45 = arith.select %42, %43, %44 : vector<128x128xi1>, vector<128x128xf32>
    %46 = tpu.iota {dimensions = array<i32: 0>} : vector<128x128xi32>
    %47 = tpu.iota {dimensions = array<i32: 1>} : vector<128x128xi32>
    %c15_i32 = arith.constant 15 : i32
    %48 = vector.broadcast %c15_i32 : i32 to vector<128x128xi32>
    %49 = arith.andi %46, %48 : vector<128x128xi32>
    %c15_i32_43 = arith.constant 15 : i32
    %50 = vector.broadcast %c15_i32_43 : i32 to vector<128x128xi32>
    %51 = arith.andi %47, %50 : vector<128x128xi32>
    %52 = arith.cmpi eq, %49, %51 : vector<128x128xi32>
    %cst_44 = arith.constant 1.000000e+00 : f32
    %cst_45 = arith.constant 0.000000e+00 : f32
    %53 = vector.broadcast %cst_44 : f32 to vector<128x128xf32>
    %54 = vector.broadcast %cst_45 : f32 to vector<128x128xf32>
    %55 = arith.select %52, %53, %54 : vector<128x128xi1>, vector<128x128xf32>
    %56 = tpu.iota {dimensions = array<i32: 0>} : vector<256x256xi32>
    %57 = tpu.iota {dimensions = array<i32: 1>} : vector<256x256xi32>
    %c7_i32_46 = arith.constant 7 : i32
    %58 = vector.broadcast %c7_i32_46 : i32 to vector<256x256xi32>
    %59 = arith.andi %56, %58 : vector<256x256xi32>
    %c7_i32_47 = arith.constant 7 : i32
    %60 = vector.broadcast %c7_i32_47 : i32 to vector<256x256xi32>
    %61 = arith.andi %57, %60 : vector<256x256xi32>
    %62 = arith.cmpi eq, %59, %61 : vector<256x256xi32>
    %cst_48 = arith.constant 1.000000e+00 : f32
    %cst_49 = arith.constant 0.000000e+00 : f32
    %63 = vector.broadcast %cst_48 : f32 to vector<256x256xf32>
    %64 = vector.broadcast %cst_49 : f32 to vector<256x256xf32>
    %65 = arith.select %62, %63, %64 : vector<256x256xi1>, vector<256x256xf32>
    %66 = tpu.iota {dimensions = array<i32: 0>} : vector<256x256xi32>
    %67 = tpu.iota {dimensions = array<i32: 1>} : vector<256x256xi32>
    %c3_i32_50 = arith.constant 3 : i32
    %68 = vector.broadcast %c3_i32_50 : i32 to vector<256x256xi32>
    %69 = arith.andi %66, %68 : vector<256x256xi32>
    %c3_i32_51 = arith.constant 3 : i32
    %70 = vector.broadcast %c3_i32_51 : i32 to vector<256x256xi32>
    %71 = arith.andi %67, %70 : vector<256x256xi32>
    %72 = arith.cmpi eq, %69, %71 : vector<256x256xi32>
    %cst_52 = arith.constant 1.000000e+00 : f32
    %cst_53 = arith.constant 0.000000e+00 : f32
    %73 = vector.broadcast %cst_52 : f32 to vector<256x256xf32>
    %74 = vector.broadcast %cst_53 : f32 to vector<256x256xf32>
    %75 = arith.select %72, %73, %74 : vector<256x256xi1>, vector<256x256xf32>
    %c0_54 = arith.constant 0 : index
    %c0_55 = arith.constant 0 : index
    %76 = vector.load %arg1[%c0_54, %c0_55] : memref<18x96xf32, #tpu.memory_space<vmem>>, vector<16x96xf32>
    %c0_56 = arith.constant 0 : index
    %c0_57 = arith.constant 0 : index
    %c0_58 = arith.constant 0 : index
    %77 = vector.load %arg2[%c0_56, %c0_57, %c0_58] : memref<3x96x128xf32, #tpu.memory_space<vmem>>, vector<1x96x128xf32>
    %78 = vector.shape_cast %77 : vector<1x96x128xf32> to vector<96x128xf32>
    %cst_59 = arith.constant dense<0.000000e+00> : vector<16x128xf32>
    %79 = tpu.matmul %76, %78, %cst_59 {dimension_numbers = #tpu.dot_dimension_numbers<[1], [0], [0], [1], [0, 0, 1, 1], [], []>} : vector<16x96xf32>, vector<96x128xf32>, vector<16x128xf32> -> vector<16x128xf32>
    %c1 = arith.constant 1 : index
    %c0_60 = arith.constant 0 : index
    %80 = vector.load %arg1[%c1, %c0_60] : memref<18x96xf32, #tpu.memory_space<vmem>>, vector<16x96xf32>
    %c1_61 = arith.constant 1 : index
    %c0_62 = arith.constant 0 : index
    %c0_63 = arith.constant 0 : index
    %81 = vector.load %arg2[%c1_61, %c0_62, %c0_63] : memref<3x96x128xf32, #tpu.memory_space<vmem>>, vector<1x96x128xf32>
    %82 = vector.shape_cast %81 : vector<1x96x128xf32> to vector<96x128xf32>
    %cst_64 = arith.constant dense<0.000000e+00> : vector<16x128xf32>
    %83 = tpu.matmul %80, %82, %cst_64 {dimension_numbers = #tpu.dot_dimension_numbers<[1], [0], [0], [1], [0, 0, 1, 1], [], []>} : vector<16x96xf32>, vector<96x128xf32>, vector<16x128xf32> -> vector<16x128xf32>
    %84 = arith.addf %79, %83 : vector<16x128xf32>
    %c2 = arith.constant 2 : index
    %c0_65 = arith.constant 0 : index
    %85 = vector.load %arg1[%c2, %c0_65] : memref<18x96xf32, #tpu.memory_space<vmem>>, vector<16x96xf32>
    %c2_66 = arith.constant 2 : index
    %c0_67 = arith.constant 0 : index
    %c0_68 = arith.constant 0 : index
    %86 = vector.load %arg2[%c2_66, %c0_67, %c0_68] : memref<3x96x128xf32, #tpu.memory_space<vmem>>, vector<1x96x128xf32>
    %87 = vector.shape_cast %86 : vector<1x96x128xf32> to vector<96x128xf32>
    %cst_69 = arith.constant dense<0.000000e+00> : vector<16x128xf32>
    %88 = tpu.matmul %85, %87, %cst_69 {dimension_numbers = #tpu.dot_dimension_numbers<[1], [0], [0], [1], [0, 0, 1, 1], [], []>} : vector<16x96xf32>, vector<96x128xf32>, vector<16x128xf32> -> vector<16x128xf32>
    %89 = arith.addf %84, %88 : vector<16x128xf32>
    %cst_70 = arith.constant dense<0.000000e+00> : vector<128xf32>
    %90 = vector.multi_reduction <add>, %89, %cst_70 [0] : vector<16x128xf32> to vector<128xf32>
    %91 = vector.shape_cast %90 : vector<128xf32> to vector<1x128xf32>
    %92 = arith.mulf %89, %89 : vector<16x128xf32>
    %cst_71 = arith.constant dense<0.000000e+00> : vector<128xf32>
    %93 = vector.multi_reduction <add>, %92, %cst_71 [0] : vector<16x128xf32> to vector<128xf32>
    %94 = vector.shape_cast %93 : vector<128xf32> to vector<1x128xf32>
    %cst_72 = arith.constant dense<0.000000e+00> : vector<1x128xf32>
    %95 = tpu.matmul %91, %35, %cst_72 {dimension_numbers = #tpu.dot_dimension_numbers<[1], [0], [0], [1], [0, 0, 1, 1], [], []>} : vector<1x128xf32>, vector<128x128xf32>, vector<1x128xf32> -> vector<1x128xf32>
    %cst_73 = arith.constant 0.001953125 : f32
    %96 = vector.broadcast %cst_73 : f32 to vector<1x128xf32>
    %97 = arith.mulf %95, %96 : vector<1x128xf32>
    %cst_74 = arith.constant dense<0.000000e+00> : vector<1x128xf32>
    %98 = tpu.matmul %94, %35, %cst_74 {dimension_numbers = #tpu.dot_dimension_numbers<[1], [0], [0], [1], [0, 0, 1, 1], [], []>} : vector<1x128xf32>, vector<128x128xf32>, vector<1x128xf32> -> vector<1x128xf32>
    %cst_75 = arith.constant 0.001953125 : f32
    %99 = vector.broadcast %cst_75 : f32 to vector<1x128xf32>
    %100 = arith.mulf %98, %99 : vector<1x128xf32>
    %101 = arith.mulf %97, %97 : vector<1x128xf32>
    %102 = arith.subf %100, %101 : vector<1x128xf32>
    %cst_76 = arith.constant 0.000000e+00 : f32
    %103 = vector.broadcast %cst_76 : f32 to vector<1x128xf32>
    %104 = arith.maximumf %102, %103 : vector<1x128xf32>
    %cst_77 = arith.constant 9.99999974E-6 : f32
    %105 = vector.broadcast %cst_77 : f32 to vector<1x128xf32>
    %106 = arith.addf %104, %105 : vector<1x128xf32>
    %107 = math.rsqrt %106 : vector<1x128xf32>
    %108 = vector.broadcast %97 : vector<1x128xf32> to vector<16x128xf32>
    %109 = arith.subf %89, %108 : vector<16x128xf32>
    %110 = vector.broadcast %107 : vector<1x128xf32> to vector<16x128xf32>
    %111 = arith.mulf %109, %110 : vector<16x128xf32>
    %cst_78 = arith.constant 0.000000e+00 : f32
    %112 = vector.broadcast %cst_78 : f32 to vector<16x128xf32>
    %113 = arith.maximumf %111, %112 : vector<16x128xf32>
    %c1_79 = arith.constant 1 : index
    %c0_80 = arith.constant 0 : index
    %114 = vector.load %arg20[%c1_79, %c0_80] : memref<18x128xf32, #tpu.memory_space<vmem>>, vector<16x128xf32>
    tpu.vector_store %arg20[%c1_79, %c0_80], %113 {strides = array<i32>} : memref<18x128xf32, #tpu.memory_space<vmem>>, vector<16x128xf32>,
    %c0_81 = arith.constant 0 : index
    %c0_82 = arith.constant 0 : index
    %115 = vector.load %arg20[%c0_81, %c0_82] : memref<18x128xf32, #tpu.memory_space<vmem>>, vector<16x128xf32>
    %c0_83 = arith.constant 0 : index
    %c0_84 = arith.constant 0 : index
    %c0_85 = arith.constant 0 : index
    %116 = vector.load %arg3[%c0_83, %c0_84, %c0_85] : memref<3x128x128xf32, #tpu.memory_space<vmem>>, vector<1x128x128xf32>
    %117 = vector.shape_cast %116 : vector<1x128x128xf32> to vector<128x128xf32>
    %cst_86 = arith.constant dense<0.000000e+00> : vector<16x128xf32>
    %118 = tpu.matmul %115, %117, %cst_86 {dimension_numbers = #tpu.dot_dimension_numbers<[1], [0], [0], [1], [0, 0, 1, 1], [], []>} : vector<16x128xf32>, vector<128x128xf32>, vector<16x128xf32> -> vector<16x128xf32>
    %c1_87 = arith.constant 1 : index
    %c0_88 = arith.constant 0 : index
    %119 = vector.load %arg20[%c1_87, %c0_88] : memref<18x128xf32, #tpu.memory_space<vmem>>, vector<16x128xf32>
    %c1_89 = arith.constant 1 : index
    %c0_90 = arith.constant 0 : index
    %c0_91 = arith.constant 0 : index
    %120 = vector.load %arg3[%c1_89, %c0_90, %c0_91] : memref<3x128x128xf32, #tpu.memory_space<vmem>>, vector<1x128x128xf32>
    %121 = vector.shape_cast %120 : vector<1x128x128xf32> to vector<128x128xf32>
    %cst_92 = arith.constant dense<0.000000e+00> : vector<16x128xf32>
    %122 = tpu.matmul %119, %121, %cst_92 {dimension_numbers = #tpu.dot_dimension_numbers<[1], [0], [0], [1], [0, 0, 1, 1], [], []>} : vector<16x128xf32>, vector<128x128xf32>, vector<16x128xf32> -> vector<16x128xf32>
    %123 = arith.addf %118, %122 : vector<16x128xf32>
    %c2_93 = arith.constant 2 : index
    %c0_94 = arith.constant 0 : index
    %124 = vector.load %arg20[%c2_93, %c0_94] : memref<18x128xf32, #tpu.memory_space<vmem>>, vector<16x128xf32>
    %c2_95 = arith.constant 2 : index
    %c0_96 = arith.constant 0 : index
    %c0_97 = arith.constant 0 : index
    %125 = vector.load %arg3[%c2_95, %c0_96, %c0_97] : memref<3x128x128xf32, #tpu.memory_space<vmem>>, vector<1x128x128xf32>
    %126 = vector.shape_cast %125 : vector<1x128x128xf32> to vector<128x128xf32>
    %cst_98 = arith.constant dense<0.000000e+00> : vector<16x128xf32>
    %127 = tpu.matmul %124, %126, %cst_98 {dimension_numbers = #tpu.dot_dimension_numbers<[1], [0], [0], [1], [0, 0, 1, 1], [], []>} : vector<16x128xf32>, vector<128x128xf32>, vector<16x128xf32> -> vector<16x128xf32>
    %128 = arith.addf %123, %127 : vector<16x128xf32>
    %cst_99 = arith.constant dense<0.000000e+00> : vector<128xf32>
    %129 = vector.multi_reduction <add>, %128, %cst_99 [0] : vector<16x128xf32> to vector<128xf32>
    %130 = vector.shape_cast %129 : vector<128xf32> to vector<1x128xf32>
    %131 = arith.mulf %128, %128 : vector<16x128xf32>
    %cst_100 = arith.constant dense<0.000000e+00> : vector<128xf32>
    %132 = vector.multi_reduction <add>, %131, %cst_100 [0] : vector<16x128xf32> to vector<128xf32>
    %133 = vector.shape_cast %132 : vector<128xf32> to vector<1x128xf32>
    %cst_101 = arith.constant dense<0.000000e+00> : vector<1x128xf32>
    %134 = tpu.matmul %130, %35, %cst_101 {dimension_numbers = #tpu.dot_dimension_numbers<[1], [0], [0], [1], [0, 0, 1, 1], [], []>} : vector<1x128xf32>, vector<128x128xf32>, vector<1x128xf32> -> vector<1x128xf32>
    %cst_102 = arith.constant 0.001953125 : f32
    %135 = vector.broadcast %cst_102 : f32 to vector<1x128xf32>
    %136 = arith.mulf %134, %135 : vector<1x128xf32>
    %cst_103 = arith.constant dense<0.000000e+00> : vector<1x128xf32>
    %137 = tpu.matmul %133, %35, %cst_103 {dimension_numbers = #tpu.dot_dimension_numbers<[1], [0], [0], [1], [0, 0, 1, 1], [], []>} : vector<1x128xf32>, vector<128x128xf32>, vector<1x128xf32> -> vector<1x128xf32>
    %cst_104 = arith.constant 0.001953125 : f32
    %138 = vector.broadcast %cst_104 : f32 to vector<1x128xf32>
    %139 = arith.mulf %137, %138 : vector<1x128xf32>
    %140 = arith.mulf %136, %136 : vector<1x128xf32>
    %141 = arith.subf %139, %140 : vector<1x128xf32>
    %cst_105 = arith.constant 0.000000e+00 : f32
    %142 = vector.broadcast %cst_105 : f32 to vector<1x128xf32>
    %143 = arith.maximumf %141, %142 : vector<1x128xf32>
    %cst_106 = arith.constant 9.99999974E-6 : f32
    %144 = vector.broadcast %cst_106 : f32 to vector<1x128xf32>
    %145 = arith.addf %143, %144 : vector<1x128xf32>
    %146 = math.rsqrt %145 : vector<1x128xf32>
    %147 = vector.broadcast %136 : vector<1x128xf32> to vector<16x128xf32>
    %148 = arith.subf %128, %147 : vector<16x128xf32>
    %149 = vector.broadcast %146 : vector<1x128xf32> to vector<16x128xf32>
    %150 = arith.mulf %148, %149 : vector<16x128xf32>
    %cst_107 = arith.constant 0.000000e+00 : f32
    %151 = vector.broadcast %cst_107 : f32 to vector<16x128xf32>
    %152 = arith.maximumf %150, %151 : vector<16x128xf32>
    %c1_108 = arith.constant 1 : index
    %c0_109 = arith.constant 0 : index
    %153 = vector.load %arg21[%c1_108, %c0_109] : memref<18x128xf32, #tpu.memory_space<vmem>>, vector<16x128xf32>
    tpu.vector_store %arg21[%c1_108, %c0_109], %152 {strides = array<i32>} : memref<18x128xf32, #tpu.memory_space<vmem>>, vector<16x128xf32>,
    %c1_110 = arith.constant 1 : index
    %c0_111 = arith.constant 0 : index
    %154 = vector.load %arg21[%c1_110, %c0_111] : memref<18x128xf32, #tpu.memory_space<vmem>>, vector<1x128xf32>
    %c1_112 = arith.constant 1 : index
    %c0_113 = arith.constant 0 : index
    %155 = vector.load %arg22[%c1_112, %c0_113] : memref<20x128xf32, #tpu.memory_space<vmem>>, vector<1x128xf32>
    tpu.vector_store %arg22[%c1_112, %c0_113], %154 {strides = array<i32>} : memref<20x128xf32, #tpu.memory_space<vmem>>, vector<1x128xf32>,
    %c2_114 = arith.constant 2 : index
    %c0_115 = arith.constant 0 : index
    %156 = vector.load %arg21[%c2_114, %c0_115] : memref<18x128xf32, #tpu.memory_space<vmem>>, vector<1x128xf32>
    %c11 = arith.constant 11 : index
    %c0_116 = arith.constant 0 : index
    %157 = vector.load %arg22[%c11, %c0_116] : memref<20x128xf32, #tpu.memory_space<vmem>>, vector<1x128xf32>
    tpu.vector_store %arg22[%c11, %c0_116], %156 {strides = array<i32>} : memref<20x128xf32, #tpu.memory_space<vmem>>, vector<1x128xf32>,
    %c3 = arith.constant 3 : index
    %c0_117 = arith.constant 0 : index
    %158 = vector.load %arg21[%c3, %c0_117] : memref<18x128xf32, #tpu.memory_space<vmem>>, vector<1x128xf32>
    %c2_118 = arith.constant 2 : index
    %c0_119 = arith.constant 0 : index
    %159 = vector.load %arg22[%c2_118, %c0_119] : memref<20x128xf32, #tpu.memory_space<vmem>>, vector<1x128xf32>
    tpu.vector_store %arg22[%c2_118, %c0_119], %158 {strides = array<i32>} : memref<20x128xf32, #tpu.memory_space<vmem>>, vector<1x128xf32>,
    %c4 = arith.constant 4 : index
    %c0_120 = arith.constant 0 : index
    %160 = vector.load %arg21[%c4, %c0_120] : memref<18x128xf32, #tpu.memory_space<vmem>>, vector<1x128xf32>
    %c12 = arith.constant 12 : index
    %c0_121 = arith.constant 0 : index
    %161 = vector.load %arg22[%c12, %c0_121] : memref<20x128xf32, #tpu.memory_space<vmem>>, vector<1x128xf32>
    tpu.vector_store %arg22[%c12, %c0_121], %160 {strides = array<i32>} : memref<20x128xf32, #tpu.memory_space<vmem>>, vector<1x128xf32>,
    %c5 = arith.constant 5 : index
    %c0_122 = arith.constant 0 : index
    %162 = vector.load %arg21[%c5, %c0_122] : memref<18x128xf32, #tpu.memory_space<vmem>>, vector<1x128xf32>
    %c3_123 = arith.constant 3 : index
    %c0_124 = arith.constant 0 : index
    %163 = vector.load %arg22[%c3_123, %c0_124] : memref<20x128xf32, #tpu.memory_space<vmem>>, vector<1x128xf32>
    tpu.vector_store %arg22[%c3_123, %c0_124], %162 {strides = array<i32>} : memref<20x128xf32, #tpu.memory_space<vmem>>, vector<1x128xf32>,
    %c6 = arith.constant 6 : index
    %c0_125 = arith.constant 0 : index
    %164 = vector.load %arg21[%c6, %c0_125] : memref<18x128xf32, #tpu.memory_space<vmem>>, vector<1x128xf32>
    %c13 = arith.constant 13 : index
    %c0_126 = arith.constant 0 : index
    %165 = vector.load %arg22[%c13, %c0_126] : memref<20x128xf32, #tpu.memory_space<vmem>>, vector<1x128xf32>
    tpu.vector_store %arg22[%c13, %c0_126], %164 {strides = array<i32>} : memref<20x128xf32, #tpu.memory_space<vmem>>, vector<1x128xf32>,
    %c7 = arith.constant 7 : index
    %c0_127 = arith.constant 0 : index
    %166 = vector.load %arg21[%c7, %c0_127] : memref<18x128xf32, #tpu.memory_space<vmem>>, vector<1x128xf32>
    %c4_128 = arith.constant 4 : index
    %c0_129 = arith.constant 0 : index
    %167 = vector.load %arg22[%c4_128, %c0_129] : memref<20x128xf32, #tpu.memory_space<vmem>>, vector<1x128xf32>
    tpu.vector_store %arg22[%c4_128, %c0_129], %166 {strides = array<i32>} : memref<20x128xf32, #tpu.memory_space<vmem>>, vector<1x128xf32>,
    %c8 = arith.constant 8 : index
    %c0_130 = arith.constant 0 : index
    %168 = vector.load %arg21[%c8, %c0_130] : memref<18x128xf32, #tpu.memory_space<vmem>>, vector<1x128xf32>
    %c14 = arith.constant 14 : index
    %c0_131 = arith.constant 0 : index
    %169 = vector.load %arg22[%c14, %c0_131] : memref<20x128xf32, #tpu.memory_space<vmem>>, vector<1x128xf32>
    tpu.vector_store %arg22[%c14, %c0_131], %168 {strides = array<i32>} : memref<20x128xf32, #tpu.memory_space<vmem>>, vector<1x128xf32>,
    %c9 = arith.constant 9 : index
    %c0_132 = arith.constant 0 : index
    %170 = vector.load %arg21[%c9, %c0_132] : memref<18x128xf32, #tpu.memory_space<vmem>>, vector<1x128xf32>
    %c5_133 = arith.constant 5 : index
    %c0_134 = arith.constant 0 : index
    %171 = vector.load %arg22[%c5_133, %c0_134] : memref<20x128xf32, #tpu.memory_space<vmem>>, vector<1x128xf32>
    tpu.vector_store %arg22[%c5_133, %c0_134], %170 {strides = array<i32>} : memref<20x128xf32, #tpu.memory_space<vmem>>, vector<1x128xf32>,
    %c10 = arith.constant 10 : index
    %c0_135 = arith.constant 0 : index
    %172 = vector.load %arg21[%c10, %c0_135] : memref<18x128xf32, #tpu.memory_space<vmem>>, vector<1x128xf32>
    %c15 = arith.constant 15 : index
    %c0_136 = arith.constant 0 : index
    %173 = vector.load %arg22[%c15, %c0_136] : memref<20x128xf32, #tpu.memory_space<vmem>>, vector<1x128xf32>
    tpu.vector_store %arg22[%c15, %c0_136], %172 {strides = array<i32>} : memref<20x128xf32, #tpu.memory_space<vmem>>, vector<1x128xf32>,
    %c11_137 = arith.constant 11 : index
    %c0_138 = arith.constant 0 : index
    %174 = vector.load %arg21[%c11_137, %c0_138] : memref<18x128xf32, #tpu.memory_space<vmem>>, vector<1x128xf32>
    %c6_139 = arith.constant 6 : index
    %c0_140 = arith.constant 0 : index
    %175 = vector.load %arg22[%c6_139, %c0_140] : memref<20x128xf32, #tpu.memory_space<vmem>>, vector<1x128xf32>
    tpu.vector_store %arg22[%c6_139, %c0_140], %174 {strides = array<i32>} : memref<20x128xf32, #tpu.memory_space<vmem>>, vector<1x128xf32>,
    %c12_141 = arith.constant 12 : index
    %c0_142 = arith.constant 0 : index
    %176 = vector.load %arg21[%c12_141, %c0_142] : memref<18x128xf32, #tpu.memory_space<vmem>>, vector<1x128xf32>
    %c16 = arith.constant 16 : index
    %c0_143 = arith.constant 0 : index
    %177 = vector.load %arg22[%c16, %c0_143] : memref<20x128xf32, #tpu.memory_space<vmem>>, vector<1x128xf32>
    tpu.vector_store %arg22[%c16, %c0_143], %176 {strides = array<i32>} : memref<20x128xf32, #tpu.memory_space<vmem>>, vector<1x128xf32>,
    %c13_144 = arith.constant 13 : index
    %c0_145 = arith.constant 0 : index
    %178 = vector.load %arg21[%c13_144, %c0_145] : memref<18x128xf32, #tpu.memory_space<vmem>>, vector<1x128xf32>
    %c7_146 = arith.constant 7 : index
    %c0_147 = arith.constant 0 : index
    %179 = vector.load %arg22[%c7_146, %c0_147] : memref<20x128xf32, #tpu.memory_space<vmem>>, vector<1x128xf32>
    tpu.vector_store %arg22[%c7_146, %c0_147], %178 {strides = array<i32>} : memref<20x128xf32, #tpu.memory_space<vmem>>, vector<1x128xf32>,
    %c14_148 = arith.constant 14 : index
    %c0_149 = arith.constant 0 : index
    %180 = vector.load %arg21[%c14_148, %c0_149] : memref<18x128xf32, #tpu.memory_space<vmem>>, vector<1x128xf32>
    %c17 = arith.constant 17 : index
    %c0_150 = arith.constant 0 : index
    %181 = vector.load %arg22[%c17, %c0_150] : memref<20x128xf32, #tpu.memory_space<vmem>>, vector<1x128xf32>
    tpu.vector_store %arg22[%c17, %c0_150], %180 {strides = array<i32>} : memref<20x128xf32, #tpu.memory_space<vmem>>, vector<1x128xf32>,
    %c15_151 = arith.constant 15 : index
    %c0_152 = arith.constant 0 : index
    %182 = vector.load %arg21[%c15_151, %c0_152] : memref<18x128xf32, #tpu.memory_space<vmem>>, vector<1x128xf32>
    %c8_153 = arith.constant 8 : index
    %c0_154 = arith.constant 0 : index
    %183 = vector.load %arg22[%c8_153, %c0_154] : memref<20x128xf32, #tpu.memory_space<vmem>>, vector<1x128xf32>
    tpu.vector_store %arg22[%c8_153, %c0_154], %182 {strides = array<i32>} : memref<20x128xf32, #tpu.memory_space<vmem>>, vector<1x128xf32>,
    %c16_155 = arith.constant 16 : index
    %c0_156 = arith.constant 0 : index
    %184 = vector.load %arg21[%c16_155, %c0_156] : memref<18x128xf32, #tpu.memory_space<vmem>>, vector<1x128xf32>
    %c18 = arith.constant 18 : index
    %c0_157 = arith.constant 0 : index
    %185 = vector.load %arg22[%c18, %c0_157] : memref<20x128xf32, #tpu.memory_space<vmem>>, vector<1x128xf32>
    tpu.vector_store %arg22[%c18, %c0_157], %184 {strides = array<i32>} : memref<20x128xf32, #tpu.memory_space<vmem>>, vector<1x128xf32>,
    %c0_158 = arith.constant 0 : index
    %c0_159 = arith.constant 0 : index
    %186 = vector.load %arg22[%c0_158, %c0_159] : memref<20x128xf32, #tpu.memory_space<vmem>>, vector<8x128xf32>
    %c0_160 = arith.constant 0 : index
    %c0_161 = arith.constant 0 : index
    %c0_162 = arith.constant 0 : index
    %187 = vector.load %arg4[%c0_160, %c0_161, %c0_162] : memref<5x128x128xf32, #tpu.memory_space<vmem>>, vector<1x128x128xf32>
    %188 = vector.shape_cast %187 : vector<1x128x128xf32> to vector<128x128xf32>
    %cst_163 = arith.constant dense<0.000000e+00> : vector<8x128xf32>
    %189 = tpu.matmul %186, %188, %cst_163 {dimension_numbers = #tpu.dot_dimension_numbers<[1], [0], [0], [1], [0, 0, 1, 1], [], []>} : vector<8x128xf32>, vector<128x128xf32>, vector<8x128xf32> -> vector<8x128xf32>
    %c10_164 = arith.constant 10 : index
    %c0_165 = arith.constant 0 : index
    %190 = vector.load %arg22[%c10_164, %c0_165] : memref<20x128xf32, #tpu.memory_space<vmem>>, vector<8x128xf32>
    %c1_166 = arith.constant 1 : index
    %c0_167 = arith.constant 0 : index
    %c0_168 = arith.constant 0 : index
    %191 = vector.load %arg4[%c1_166, %c0_167, %c0_168] : memref<5x128x128xf32, #tpu.memory_space<vmem>>, vector<1x128x128xf32>
    %192 = vector.shape_cast %191 : vector<1x128x128xf32> to vector<128x128xf32>
    %cst_169 = arith.constant dense<0.000000e+00> : vector<8x128xf32>
    %193 = tpu.matmul %190, %192, %cst_169 {dimension_numbers = #tpu.dot_dimension_numbers<[1], [0], [0], [1], [0, 0, 1, 1], [], []>} : vector<8x128xf32>, vector<128x128xf32>, vector<8x128xf32> -> vector<8x128xf32>
    %194 = arith.addf %189, %193 : vector<8x128xf32>
    %c1_170 = arith.constant 1 : index
    %c0_171 = arith.constant 0 : index
    %195 = vector.load %arg22[%c1_170, %c0_171] : memref<20x128xf32, #tpu.memory_space<vmem>>, vector<8x128xf32>
    %c2_172 = arith.constant 2 : index
    %c0_173 = arith.constant 0 : index
    %c0_174 = arith.constant 0 : index
    %196 = vector.load %arg4[%c2_172, %c0_173, %c0_174] : memref<5x128x128xf32, #tpu.memory_space<vmem>>, vector<1x128x128xf32>
    %197 = vector.shape_cast %196 : vector<1x128x128xf32> to vector<128x128xf32>
    %cst_175 = arith.constant dense<0.000000e+00> : vector<8x128xf32>
    %198 = tpu.matmul %195, %197, %cst_175 {dimension_numbers = #tpu.dot_dimension_numbers<[1], [0], [0], [1], [0, 0, 1, 1], [], []>} : vector<8x128xf32>, vector<128x128xf32>, vector<8x128xf32> -> vector<8x128xf32>
    %199 = arith.addf %194, %198 : vector<8x128xf32>
    %c11_176 = arith.constant 11 : index
    %c0_177 = arith.constant 0 : index
    %200 = vector.load %arg22[%c11_176, %c0_177] : memref<20x128xf32, #tpu.memory_space<vmem>>, vector<8x128xf32>
    %c3_178 = arith.constant 3 : index
    %c0_179 = arith.constant 0 : index
    %c0_180 = arith.constant 0 : index
    %201 = vector.load %arg4[%c3_178, %c0_179, %c0_180] : memref<5x128x128xf32, #tpu.memory_space<vmem>>, vector<1x128x128xf32>
    %202 = vector.shape_cast %201 : vector<1x128x128xf32> to vector<128x128xf32>
    %cst_181 = arith.constant dense<0.000000e+00> : vector<8x128xf32>
    %203 = tpu.matmul %200, %202, %cst_181 {dimension_numbers = #tpu.dot_dimension_numbers<[1], [0], [0], [1], [0, 0, 1, 1], [], []>} : vector<8x128xf32>, vector<128x128xf32>, vector<8x128xf32> -> vector<8x128xf32>
    %204 = arith.addf %199, %203 : vector<8x128xf32>
    %c2_182 = arith.constant 2 : index
    %c0_183 = arith.constant 0 : index
    %205 = vector.load %arg22[%c2_182, %c0_183] : memref<20x128xf32, #tpu.memory_space<vmem>>, vector<8x128xf32>
    %c4_184 = arith.constant 4 : index
    %c0_185 = arith.constant 0 : index
    %c0_186 = arith.constant 0 : index
    %206 = vector.load %arg4[%c4_184, %c0_185, %c0_186] : memref<5x128x128xf32, #tpu.memory_space<vmem>>, vector<1x128x128xf32>
    %207 = vector.shape_cast %206 : vector<1x128x128xf32> to vector<128x128xf32>
    %cst_187 = arith.constant dense<0.000000e+00> : vector<8x128xf32>
    %208 = tpu.matmul %205, %207, %cst_187 {dimension_numbers = #tpu.dot_dimension_numbers<[1], [0], [0], [1], [0, 0, 1, 1], [], []>} : vector<8x128xf32>, vector<128x128xf32>, vector<8x128xf32> -> vector<8x128xf32>
    %209 = arith.addf %204, %208 : vector<8x128xf32>
    %cst_188 = arith.constant dense<0.000000e+00> : vector<128xf32>
    %210 = vector.multi_reduction <add>, %209, %cst_188 [0] : vector<8x128xf32> to vector<128xf32>
    %211 = vector.shape_cast %210 : vector<128xf32> to vector<1x128xf32>
    %212 = arith.mulf %209, %209 : vector<8x128xf32>
    %cst_189 = arith.constant dense<0.000000e+00> : vector<128xf32>
    %213 = vector.multi_reduction <add>, %212, %cst_189 [0] : vector<8x128xf32> to vector<128xf32>
    %214 = vector.shape_cast %213 : vector<128xf32> to vector<1x128xf32>
    %cst_190 = arith.constant dense<0.000000e+00> : vector<1x128xf32>
    %215 = tpu.matmul %211, %45, %cst_190 {dimension_numbers = #tpu.dot_dimension_numbers<[1], [0], [0], [1], [0, 0, 1, 1], [], []>} : vector<1x128xf32>, vector<128x128xf32>, vector<1x128xf32> -> vector<1x128xf32>
    %cst_191 = arith.constant 7.812500e-03 : f32
    %216 = vector.broadcast %cst_191 : f32 to vector<1x128xf32>
    %217 = arith.mulf %215, %216 : vector<1x128xf32>
    %cst_192 = arith.constant dense<0.000000e+00> : vector<1x128xf32>
    %218 = tpu.matmul %214, %45, %cst_192 {dimension_numbers = #tpu.dot_dimension_numbers<[1], [0], [0], [1], [0, 0, 1, 1], [], []>} : vector<1x128xf32>, vector<128x128xf32>, vector<1x128xf32> -> vector<1x128xf32>
    %cst_193 = arith.constant 7.812500e-03 : f32
    %219 = vector.broadcast %cst_193 : f32 to vector<1x128xf32>
    %220 = arith.mulf %218, %219 : vector<1x128xf32>
    %221 = arith.mulf %217, %217 : vector<1x128xf32>
    %222 = arith.subf %220, %221 : vector<1x128xf32>
    %cst_194 = arith.constant 0.000000e+00 : f32
    %223 = vector.broadcast %cst_194 : f32 to vector<1x128xf32>
    %224 = arith.maximumf %222, %223 : vector<1x128xf32>
    %cst_195 = arith.constant 9.99999974E-6 : f32
    %225 = vector.broadcast %cst_195 : f32 to vector<1x128xf32>
    %226 = arith.addf %224, %225 : vector<1x128xf32>
    %227 = math.rsqrt %226 : vector<1x128xf32>
    %228 = vector.broadcast %217 : vector<1x128xf32> to vector<8x128xf32>
    %229 = arith.subf %209, %228 : vector<8x128xf32>
    %230 = vector.broadcast %227 : vector<1x128xf32> to vector<8x128xf32>
    %231 = arith.mulf %229, %230 : vector<8x128xf32>
    %cst_196 = arith.constant 0.000000e+00 : f32
    %232 = vector.broadcast %cst_196 : f32 to vector<8x128xf32>
    %233 = arith.maximumf %231, %232 : vector<8x128xf32>
    %c1_197 = arith.constant 1 : index
    %c0_198 = arith.constant 0 : index
    %234 = vector.load %arg23[%c1_197, %c0_198] : memref<10x128xf32, #tpu.memory_space<vmem>>, vector<8x128xf32>
    tpu.vector_store %arg23[%c1_197, %c0_198], %233 {strides = array<i32>} : memref<10x128xf32, #tpu.memory_space<vmem>>, vector<8x128xf32>,
    %c0_199 = arith.constant 0 : index
    %c0_200 = arith.constant 0 : index
    %235 = vector.load %arg23[%c0_199, %c0_200] : memref<10x128xf32, #tpu.memory_space<vmem>>, vector<8x128xf32>
    %c0_201 = arith.constant 0 : index
    %c0_202 = arith.constant 0 : index
    %c0_203 = arith.constant 0 : index
    %236 = vector.load %arg5[%c0_201, %c0_202, %c0_203] : memref<3x128x128xf32, #tpu.memory_space<vmem>>, vector<1x128x128xf32>
    %237 = vector.shape_cast %236 : vector<1x128x128xf32> to vector<128x128xf32>
    %cst_204 = arith.constant dense<0.000000e+00> : vector<8x128xf32>
    %238 = tpu.matmul %235, %237, %cst_204 {dimension_numbers = #tpu.dot_dimension_numbers<[1], [0], [0], [1], [0, 0, 1, 1], [], []>} : vector<8x128xf32>, vector<128x128xf32>, vector<8x128xf32> -> vector<8x128xf32>
    %c1_205 = arith.constant 1 : index
    %c0_206 = arith.constant 0 : index
    %239 = vector.load %arg23[%c1_205, %c0_206] : memref<10x128xf32, #tpu.memory_space<vmem>>, vector<8x128xf32>
    %c1_207 = arith.constant 1 : index
    %c0_208 = arith.constant 0 : index
    %c0_209 = arith.constant 0 : index
    %240 = vector.load %arg5[%c1_207, %c0_208, %c0_209] : memref<3x128x128xf32, #tpu.memory_space<vmem>>, vector<1x128x128xf32>
    %241 = vector.shape_cast %240 : vector<1x128x128xf32> to vector<128x128xf32>
    %cst_210 = arith.constant dense<0.000000e+00> : vector<8x128xf32>
    %242 = tpu.matmul %239, %241, %cst_210 {dimension_numbers = #tpu.dot_dimension_numbers<[1], [0], [0], [1], [0, 0, 1, 1], [], []>} : vector<8x128xf32>, vector<128x128xf32>, vector<8x128xf32> -> vector<8x128xf32>
    %243 = arith.addf %238, %242 : vector<8x128xf32>
    %c2_211 = arith.constant 2 : index
    %c0_212 = arith.constant 0 : index
    %244 = vector.load %arg23[%c2_211, %c0_212] : memref<10x128xf32, #tpu.memory_space<vmem>>, vector<8x128xf32>
    %c2_213 = arith.constant 2 : index
    %c0_214 = arith.constant 0 : index
    %c0_215 = arith.constant 0 : index
    %245 = vector.load %arg5[%c2_213, %c0_214, %c0_215] : memref<3x128x128xf32, #tpu.memory_space<vmem>>, vector<1x128x128xf32>
    %246 = vector.shape_cast %245 : vector<1x128x128xf32> to vector<128x128xf32>
    %cst_216 = arith.constant dense<0.000000e+00> : vector<8x128xf32>
    %247 = tpu.matmul %244, %246, %cst_216 {dimension_numbers = #tpu.dot_dimension_numbers<[1], [0], [0], [1], [0, 0, 1, 1], [], []>} : vector<8x128xf32>, vector<128x128xf32>, vector<8x128xf32> -> vector<8x128xf32>
    %248 = arith.addf %243, %247 : vector<8x128xf32>
    %cst_217 = arith.constant dense<0.000000e+00> : vector<128xf32>
    %249 = vector.multi_reduction <add>, %248, %cst_217 [0] : vector<8x128xf32> to vector<128xf32>
    %250 = vector.shape_cast %249 : vector<128xf32> to vector<1x128xf32>
    %251 = arith.mulf %248, %248 : vector<8x128xf32>
    %cst_218 = arith.constant dense<0.000000e+00> : vector<128xf32>
    %252 = vector.multi_reduction <add>, %251, %cst_218 [0] : vector<8x128xf32> to vector<128xf32>
    %253 = vector.shape_cast %252 : vector<128xf32> to vector<1x128xf32>
    %cst_219 = arith.constant dense<0.000000e+00> : vector<1x128xf32>
    %254 = tpu.matmul %250, %45, %cst_219 {dimension_numbers = #tpu.dot_dimension_numbers<[1], [0], [0], [1], [0, 0, 1, 1], [], []>} : vector<1x128xf32>, vector<128x128xf32>, vector<1x128xf32> -> vector<1x128xf32>
    %cst_220 = arith.constant 7.812500e-03 : f32
    %255 = vector.broadcast %cst_220 : f32 to vector<1x128xf32>
    %256 = arith.mulf %254, %255 : vector<1x128xf32>
    %cst_221 = arith.constant dense<0.000000e+00> : vector<1x128xf32>
    %257 = tpu.matmul %253, %45, %cst_221 {dimension_numbers = #tpu.dot_dimension_numbers<[1], [0], [0], [1], [0, 0, 1, 1], [], []>} : vector<1x128xf32>, vector<128x128xf32>, vector<1x128xf32> -> vector<1x128xf32>
    %cst_222 = arith.constant 7.812500e-03 : f32
    %258 = vector.broadcast %cst_222 : f32 to vector<1x128xf32>
    %259 = arith.mulf %257, %258 : vector<1x128xf32>
    %260 = arith.mulf %256, %256 : vector<1x128xf32>
    %261 = arith.subf %259, %260 : vector<1x128xf32>
    %cst_223 = arith.constant 0.000000e+00 : f32
    %262 = vector.broadcast %cst_223 : f32 to vector<1x128xf32>
    %263 = arith.maximumf %261, %262 : vector<1x128xf32>
    %cst_224 = arith.constant 9.99999974E-6 : f32
    %264 = vector.broadcast %cst_224 : f32 to vector<1x128xf32>
    %265 = arith.addf %263, %264 : vector<1x128xf32>
    %266 = math.rsqrt %265 : vector<1x128xf32>
    %267 = vector.broadcast %256 : vector<1x128xf32> to vector<8x128xf32>
    %268 = arith.subf %248, %267 : vector<8x128xf32>
    %269 = vector.broadcast %266 : vector<1x128xf32> to vector<8x128xf32>
    %270 = arith.mulf %268, %269 : vector<8x128xf32>
    %cst_225 = arith.constant 0.000000e+00 : f32
    %271 = vector.broadcast %cst_225 : f32 to vector<8x128xf32>
    %272 = arith.maximumf %270, %271 : vector<8x128xf32>
    %c1_226 = arith.constant 1 : index
    %c0_227 = arith.constant 0 : index
    %273 = vector.load %arg24[%c1_226, %c0_227] : memref<10x128xf32, #tpu.memory_space<vmem>>, vector<8x128xf32>
    tpu.vector_store %arg24[%c1_226, %c0_227], %272 {strides = array<i32>} : memref<10x128xf32, #tpu.memory_space<vmem>>, vector<8x128xf32>,
    %c0_228 = arith.constant 0 : index
    %c0_229 = arith.constant 0 : index
    %274 = vector.load %arg24[%c0_228, %c0_229] : memref<10x128xf32, #tpu.memory_space<vmem>>, vector<8x128xf32>
    %c0_230 = arith.constant 0 : index
    %c0_231 = arith.constant 0 : index
    %c0_232 = arith.constant 0 : index
    %275 = vector.load %arg6[%c0_230, %c0_231, %c0_232] : memref<3x128x128xf32, #tpu.memory_space<vmem>>, vector<1x128x128xf32>
    %276 = vector.shape_cast %275 : vector<1x128x128xf32> to vector<128x128xf32>
    %cst_233 = arith.constant dense<0.000000e+00> : vector<8x128xf32>
    %277 = tpu.matmul %274, %276, %cst_233 {dimension_numbers = #tpu.dot_dimension_numbers<[1], [0], [0], [1], [0, 0, 1, 1], [], []>} : vector<8x128xf32>, vector<128x128xf32>, vector<8x128xf32> -> vector<8x128xf32>
    %c1_234 = arith.constant 1 : index
    %c0_235 = arith.constant 0 : index
    %278 = vector.load %arg24[%c1_234, %c0_235] : memref<10x128xf32, #tpu.memory_space<vmem>>, vector<8x128xf32>
    %c1_236 = arith.constant 1 : index
    %c0_237 = arith.constant 0 : index
    %c0_238 = arith.constant 0 : index
    %279 = vector.load %arg6[%c1_236, %c0_237, %c0_238] : memref<3x128x128xf32, #tpu.memory_space<vmem>>, vector<1x128x128xf32>
    %280 = vector.shape_cast %279 : vector<1x128x128xf32> to vector<128x128xf32>
    %cst_239 = arith.constant dense<0.000000e+00> : vector<8x128xf32>
    %281 = tpu.matmul %278, %280, %cst_239 {dimension_numbers = #tpu.dot_dimension_numbers<[1], [0], [0], [1], [0, 0, 1, 1], [], []>} : vector<8x128xf32>, vector<128x128xf32>, vector<8x128xf32> -> vector<8x128xf32>
    %282 = arith.addf %277, %281 : vector<8x128xf32>
    %c2_240 = arith.constant 2 : index
    %c0_241 = arith.constant 0 : index
    %283 = vector.load %arg24[%c2_240, %c0_241] : memref<10x128xf32, #tpu.memory_space<vmem>>, vector<8x128xf32>
    %c2_242 = arith.constant 2 : index
    %c0_243 = arith.constant 0 : index
    %c0_244 = arith.constant 0 : index
    %284 = vector.load %arg6[%c2_242, %c0_243, %c0_244] : memref<3x128x128xf32, #tpu.memory_space<vmem>>, vector<1x128x128xf32>
    %285 = vector.shape_cast %284 : vector<1x128x128xf32> to vector<128x128xf32>
    %cst_245 = arith.constant dense<0.000000e+00> : vector<8x128xf32>
    %286 = tpu.matmul %283, %285, %cst_245 {dimension_numbers = #tpu.dot_dimension_numbers<[1], [0], [0], [1], [0, 0, 1, 1], [], []>} : vector<8x128xf32>, vector<128x128xf32>, vector<8x128xf32> -> vector<8x128xf32>
    %287 = arith.addf %282, %286 : vector<8x128xf32>
    %cst_246 = arith.constant dense<0.000000e+00> : vector<128xf32>
    %288 = vector.multi_reduction <add>, %287, %cst_246 [0] : vector<8x128xf32> to vector<128xf32>
    %289 = vector.shape_cast %288 : vector<128xf32> to vector<1x128xf32>
    %290 = arith.mulf %287, %287 : vector<8x128xf32>
    %cst_247 = arith.constant dense<0.000000e+00> : vector<128xf32>
    %291 = vector.multi_reduction <add>, %290, %cst_247 [0] : vector<8x128xf32> to vector<128xf32>
    %292 = vector.shape_cast %291 : vector<128xf32> to vector<1x128xf32>
    %cst_248 = arith.constant dense<0.000000e+00> : vector<1x128xf32>
    %293 = tpu.matmul %289, %45, %cst_248 {dimension_numbers = #tpu.dot_dimension_numbers<[1], [0], [0], [1], [0, 0, 1, 1], [], []>} : vector<1x128xf32>, vector<128x128xf32>, vector<1x128xf32> -> vector<1x128xf32>
    %cst_249 = arith.constant 7.812500e-03 : f32
    %294 = vector.broadcast %cst_249 : f32 to vector<1x128xf32>
    %295 = arith.mulf %293, %294 : vector<1x128xf32>
    %cst_250 = arith.constant dense<0.000000e+00> : vector<1x128xf32>
    %296 = tpu.matmul %292, %45, %cst_250 {dimension_numbers = #tpu.dot_dimension_numbers<[1], [0], [0], [1], [0, 0, 1, 1], [], []>} : vector<1x128xf32>, vector<128x128xf32>, vector<1x128xf32> -> vector<1x128xf32>
    %cst_251 = arith.constant 7.812500e-03 : f32
    %297 = vector.broadcast %cst_251 : f32 to vector<1x128xf32>
    %298 = arith.mulf %296, %297 : vector<1x128xf32>
    %299 = arith.mulf %295, %295 : vector<1x128xf32>
    %300 = arith.subf %298, %299 : vector<1x128xf32>
    %cst_252 = arith.constant 0.000000e+00 : f32
    %301 = vector.broadcast %cst_252 : f32 to vector<1x128xf32>
    %302 = arith.maximumf %300, %301 : vector<1x128xf32>
    %cst_253 = arith.constant 9.99999974E-6 : f32
    %303 = vector.broadcast %cst_253 : f32 to vector<1x128xf32>
    %304 = arith.addf %302, %303 : vector<1x128xf32>
    %305 = math.rsqrt %304 : vector<1x128xf32>
    %306 = vector.broadcast %295 : vector<1x128xf32> to vector<8x128xf32>
    %307 = arith.subf %287, %306 : vector<8x128xf32>
    %308 = vector.broadcast %305 : vector<1x128xf32> to vector<8x128xf32>
    %309 = arith.mulf %307, %308 : vector<8x128xf32>
    %cst_254 = arith.constant 0.000000e+00 : f32
    %310 = vector.broadcast %cst_254 : f32 to vector<8x128xf32>
    %311 = arith.maximumf %309, %310 : vector<8x128xf32>
    %c1_255 = arith.constant 1 : index
    %c0_256 = arith.constant 0 : index
    %312 = vector.load %arg25[%c1_255, %c0_256] : memref<10x128xf32, #tpu.memory_space<vmem>>, vector<8x128xf32>
    tpu.vector_store %arg25[%c1_255, %c0_256], %311 {strides = array<i32>} : memref<10x128xf32, #tpu.memory_space<vmem>>, vector<8x128xf32>,
    %c1_257 = arith.constant 1 : index
    %c0_258 = arith.constant 0 : index
    %313 = vector.load %arg25[%c1_257, %c0_258] : memref<10x128xf32, #tpu.memory_space<vmem>>, vector<1x128xf32>
    %c1_259 = arith.constant 1 : index
    %c0_260 = arith.constant 0 : index
    %314 = vector.load %arg26[%c1_259, %c0_260] : memref<12x128xf32, #tpu.memory_space<vmem>>, vector<1x128xf32>
    tpu.vector_store %arg26[%c1_259, %c0_260], %313 {strides = array<i32>} : memref<12x128xf32, #tpu.memory_space<vmem>>, vector<1x128xf32>,
    %c2_261 = arith.constant 2 : index
    %c0_262 = arith.constant 0 : index
    %315 = vector.load %arg25[%c2_261, %c0_262] : memref<10x128xf32, #tpu.memory_space<vmem>>, vector<1x128xf32>
    %c7_263 = arith.constant 7 : index
    %c0_264 = arith.constant 0 : index
    %316 = vector.load %arg26[%c7_263, %c0_264] : memref<12x128xf32, #tpu.memory_space<vmem>>, vector<1x128xf32>
    tpu.vector_store %arg26[%c7_263, %c0_264], %315 {strides = array<i32>} : memref<12x128xf32, #tpu.memory_space<vmem>>, vector<1x128xf32>,
    %c3_265 = arith.constant 3 : index
    %c0_266 = arith.constant 0 : index
    %317 = vector.load %arg25[%c3_265, %c0_266] : memref<10x128xf32, #tpu.memory_space<vmem>>, vector<1x128xf32>
    %c2_267 = arith.constant 2 : index
    %c0_268 = arith.constant 0 : index
    %318 = vector.load %arg26[%c2_267, %c0_268] : memref<12x128xf32, #tpu.memory_space<vmem>>, vector<1x128xf32>
    tpu.vector_store %arg26[%c2_267, %c0_268], %317 {strides = array<i32>} : memref<12x128xf32, #tpu.memory_space<vmem>>, vector<1x128xf32>,
    %c4_269 = arith.constant 4 : index
    %c0_270 = arith.constant 0 : index
    %319 = vector.load %arg25[%c4_269, %c0_270] : memref<10x128xf32, #tpu.memory_space<vmem>>, vector<1x128xf32>
    %c8_271 = arith.constant 8 : index
    %c0_272 = arith.constant 0 : index
    %320 = vector.load %arg26[%c8_271, %c0_272] : memref<12x128xf32, #tpu.memory_space<vmem>>, vector<1x128xf32>
    tpu.vector_store %arg26[%c8_271, %c0_272], %319 {strides = array<i32>} : memref<12x128xf32, #tpu.memory_space<vmem>>, vector<1x128xf32>,
    %c5_273 = arith.constant 5 : index
    %c0_274 = arith.constant 0 : index
    %321 = vector.load %arg25[%c5_273, %c0_274] : memref<10x128xf32, #tpu.memory_space<vmem>>, vector<1x128xf32>
    %c3_275 = arith.constant 3 : index
    %c0_276 = arith.constant 0 : index
    %322 = vector.load %arg26[%c3_275, %c0_276] : memref<12x128xf32, #tpu.memory_space<vmem>>, vector<1x128xf32>
    tpu.vector_store %arg26[%c3_275, %c0_276], %321 {strides = array<i32>} : memref<12x128xf32, #tpu.memory_space<vmem>>, vector<1x128xf32>,
    %c6_277 = arith.constant 6 : index
    %c0_278 = arith.constant 0 : index
    %323 = vector.load %arg25[%c6_277, %c0_278] : memref<10x128xf32, #tpu.memory_space<vmem>>, vector<1x128xf32>
    %c9_279 = arith.constant 9 : index
    %c0_280 = arith.constant 0 : index
    %324 = vector.load %arg26[%c9_279, %c0_280] : memref<12x128xf32, #tpu.memory_space<vmem>>, vector<1x128xf32>
    tpu.vector_store %arg26[%c9_279, %c0_280], %323 {strides = array<i32>} : memref<12x128xf32, #tpu.memory_space<vmem>>, vector<1x128xf32>,
    %c7_281 = arith.constant 7 : index
    %c0_282 = arith.constant 0 : index
    %325 = vector.load %arg25[%c7_281, %c0_282] : memref<10x128xf32, #tpu.memory_space<vmem>>, vector<1x128xf32>
    %c4_283 = arith.constant 4 : index
    %c0_284 = arith.constant 0 : index
    %326 = vector.load %arg26[%c4_283, %c0_284] : memref<12x128xf32, #tpu.memory_space<vmem>>, vector<1x128xf32>
    tpu.vector_store %arg26[%c4_283, %c0_284], %325 {strides = array<i32>} : memref<12x128xf32, #tpu.memory_space<vmem>>, vector<1x128xf32>,
    %c8_285 = arith.constant 8 : index
    %c0_286 = arith.constant 0 : index
    %327 = vector.load %arg25[%c8_285, %c0_286] : memref<10x128xf32, #tpu.memory_space<vmem>>, vector<1x128xf32>
    %c10_287 = arith.constant 10 : index
    %c0_288 = arith.constant 0 : index
    %328 = vector.load %arg26[%c10_287, %c0_288] : memref<12x128xf32, #tpu.memory_space<vmem>>, vector<1x128xf32>
    tpu.vector_store %arg26[%c10_287, %c0_288], %327 {strides = array<i32>} : memref<12x128xf32, #tpu.memory_space<vmem>>, vector<1x128xf32>,
    %c0_289 = arith.constant 0 : index
    %c0_290 = arith.constant 0 : index
    %329 = vector.load %arg26[%c0_289, %c0_290] : memref<12x128xf32, #tpu.memory_space<vmem>>, vector<4x128xf32>
    %c0_291 = arith.constant 0 : index
    %c0_292 = arith.constant 0 : index
    %c0_293 = arith.constant 0 : index
    %330 = vector.load %arg7[%c0_291, %c0_292, %c0_293] : memref<5x128x128xf32, #tpu.memory_space<vmem>>, vector<1x128x128xf32>
    %331 = vector.shape_cast %330 : vector<1x128x128xf32> to vector<128x128xf32>
    %cst_294 = arith.constant dense<0.000000e+00> : vector<4x128xf32>
    %332 = tpu.matmul %329, %331, %cst_294 {dimension_numbers = #tpu.dot_dimension_numbers<[1], [0], [0], [1], [0, 0, 1, 1], [], []>} : vector<4x128xf32>, vector<128x128xf32>, vector<4x128xf32> -> vector<4x128xf32>
    %c6_295 = arith.constant 6 : index
    %c0_296 = arith.constant 0 : index
    %333 = vector.load %arg26[%c6_295, %c0_296] : memref<12x128xf32, #tpu.memory_space<vmem>>, vector<4x128xf32>
    %c1_297 = arith.constant 1 : index
    %c0_298 = arith.constant 0 : index
    %c0_299 = arith.constant 0 : index
    %334 = vector.load %arg7[%c1_297, %c0_298, %c0_299] : memref<5x128x128xf32, #tpu.memory_space<vmem>>, vector<1x128x128xf32>
    %335 = vector.shape_cast %334 : vector<1x128x128xf32> to vector<128x128xf32>
    %cst_300 = arith.constant dense<0.000000e+00> : vector<4x128xf32>
    %336 = tpu.matmul %333, %335, %cst_300 {dimension_numbers = #tpu.dot_dimension_numbers<[1], [0], [0], [1], [0, 0, 1, 1], [], []>} : vector<4x128xf32>, vector<128x128xf32>, vector<4x128xf32> -> vector<4x128xf32>
    %337 = arith.addf %332, %336 : vector<4x128xf32>
    %c1_301 = arith.constant 1 : index
    %c0_302 = arith.constant 0 : index
    %338 = vector.load %arg26[%c1_301, %c0_302] : memref<12x128xf32, #tpu.memory_space<vmem>>, vector<4x128xf32>
    %c2_303 = arith.constant 2 : index
    %c0_304 = arith.constant 0 : index
    %c0_305 = arith.constant 0 : index
    %339 = vector.load %arg7[%c2_303, %c0_304, %c0_305] : memref<5x128x128xf32, #tpu.memory_space<vmem>>, vector<1x128x128xf32>
    %340 = vector.shape_cast %339 : vector<1x128x128xf32> to vector<128x128xf32>
    %cst_306 = arith.constant dense<0.000000e+00> : vector<4x128xf32>
    %341 = tpu.matmul %338, %340, %cst_306 {dimension_numbers = #tpu.dot_dimension_numbers<[1], [0], [0], [1], [0, 0, 1, 1], [], []>} : vector<4x128xf32>, vector<128x128xf32>, vector<4x128xf32> -> vector<4x128xf32>
    %342 = arith.addf %337, %341 : vector<4x128xf32>
    %c7_307 = arith.constant 7 : index
    %c0_308 = arith.constant 0 : index
    %343 = vector.load %arg26[%c7_307, %c0_308] : memref<12x128xf32, #tpu.memory_space<vmem>>, vector<4x128xf32>
    %c3_309 = arith.constant 3 : index
    %c0_310 = arith.constant 0 : index
    %c0_311 = arith.constant 0 : index
    %344 = vector.load %arg7[%c3_309, %c0_310, %c0_311] : memref<5x128x128xf32, #tpu.memory_space<vmem>>, vector<1x128x128xf32>
    %345 = vector.shape_cast %344 : vector<1x128x128xf32> to vector<128x128xf32>
    %cst_312 = arith.constant dense<0.000000e+00> : vector<4x128xf32>
    %346 = tpu.matmul %343, %345, %cst_312 {dimension_numbers = #tpu.dot_dimension_numbers<[1], [0], [0], [1], [0, 0, 1, 1], [], []>} : vector<4x128xf32>, vector<128x128xf32>, vector<4x128xf32> -> vector<4x128xf32>
    %347 = arith.addf %342, %346 : vector<4x128xf32>
    %c2_313 = arith.constant 2 : index
    %c0_314 = arith.constant 0 : index
    %348 = vector.load %arg26[%c2_313, %c0_314] : memref<12x128xf32, #tpu.memory_space<vmem>>, vector<4x128xf32>
    %c4_315 = arith.constant 4 : index
    %c0_316 = arith.constant 0 : index
    %c0_317 = arith.constant 0 : index
    %349 = vector.load %arg7[%c4_315, %c0_316, %c0_317] : memref<5x128x128xf32, #tpu.memory_space<vmem>>, vector<1x128x128xf32>
    %350 = vector.shape_cast %349 : vector<1x128x128xf32> to vector<128x128xf32>
    %cst_318 = arith.constant dense<0.000000e+00> : vector<4x128xf32>
    %351 = tpu.matmul %348, %350, %cst_318 {dimension_numbers = #tpu.dot_dimension_numbers<[1], [0], [0], [1], [0, 0, 1, 1], [], []>} : vector<4x128xf32>, vector<128x128xf32>, vector<4x128xf32> -> vector<4x128xf32>
    %352 = arith.addf %347, %351 : vector<4x128xf32>
    %cst_319 = arith.constant dense<0.000000e+00> : vector<128xf32>
    %353 = vector.multi_reduction <add>, %352, %cst_319 [0] : vector<4x128xf32> to vector<128xf32>
    %354 = vector.shape_cast %353 : vector<128xf32> to vector<1x128xf32>
    %355 = arith.mulf %352, %352 : vector<4x128xf32>
    %cst_320 = arith.constant dense<0.000000e+00> : vector<128xf32>
    %356 = vector.multi_reduction <add>, %355, %cst_320 [0] : vector<4x128xf32> to vector<128xf32>
    %357 = vector.shape_cast %356 : vector<128xf32> to vector<1x128xf32>
    %cst_321 = arith.constant dense<0.000000e+00> : vector<1x128xf32>
    %358 = tpu.matmul %354, %55, %cst_321 {dimension_numbers = #tpu.dot_dimension_numbers<[1], [0], [0], [1], [0, 0, 1, 1], [], []>} : vector<1x128xf32>, vector<128x128xf32>, vector<1x128xf32> -> vector<1x128xf32>
    %cst_322 = arith.constant 3.125000e-02 : f32
    %359 = vector.broadcast %cst_322 : f32 to vector<1x128xf32>
    %360 = arith.mulf %358, %359 : vector<1x128xf32>
    %cst_323 = arith.constant dense<0.000000e+00> : vector<1x128xf32>
    %361 = tpu.matmul %357, %55, %cst_323 {dimension_numbers = #tpu.dot_dimension_numbers<[1], [0], [0], [1], [0, 0, 1, 1], [], []>} : vector<1x128xf32>, vector<128x128xf32>, vector<1x128xf32> -> vector<1x128xf32>
    %cst_324 = arith.constant 3.125000e-02 : f32
    %362 = vector.broadcast %cst_324 : f32 to vector<1x128xf32>
    %363 = arith.mulf %361, %362 : vector<1x128xf32>
    %364 = arith.mulf %360, %360 : vector<1x128xf32>
    %365 = arith.subf %363, %364 : vector<1x128xf32>
    %cst_325 = arith.constant 0.000000e+00 : f32
    %366 = vector.broadcast %cst_325 : f32 to vector<1x128xf32>
    %367 = arith.maximumf %365, %366 : vector<1x128xf32>
    %cst_326 = arith.constant 9.99999974E-6 : f32
    %368 = vector.broadcast %cst_326 : f32 to vector<1x128xf32>
    %369 = arith.addf %367, %368 : vector<1x128xf32>
    %370 = math.rsqrt %369 : vector<1x128xf32>
    %371 = vector.broadcast %360 : vector<1x128xf32> to vector<4x128xf32>
    %372 = arith.subf %352, %371 : vector<4x128xf32>
    %373 = vector.broadcast %370 : vector<1x128xf32> to vector<4x128xf32>
    %374 = arith.mulf %372, %373 : vector<4x128xf32>
    %cst_327 = arith.constant 0.000000e+00 : f32
    %375 = vector.broadcast %cst_327 : f32 to vector<4x128xf32>
    %376 = arith.maximumf %374, %375 : vector<4x128xf32>
    %c1_328 = arith.constant 1 : index
    %c0_329 = arith.constant 0 : index
    %377 = vector.load %arg27[%c1_328, %c0_329] : memref<6x128xf32, #tpu.memory_space<vmem>>, vector<4x128xf32>
    tpu.vector_store %arg27[%c1_328, %c0_329], %376 {strides = array<i32>} : memref<6x128xf32, #tpu.memory_space<vmem>>, vector<4x128xf32>,
    %c0_330 = arith.constant 0 : index
    %c0_331 = arith.constant 0 : index
    %378 = vector.load %arg27[%c0_330, %c0_331] : memref<6x128xf32, #tpu.memory_space<vmem>>, vector<4x128xf32>
    %c0_332 = arith.constant 0 : index
    %c0_333 = arith.constant 0 : index
    %c0_334 = arith.constant 0 : index
    %379 = vector.load %arg8[%c0_332, %c0_333, %c0_334] : memref<3x128x128xf32, #tpu.memory_space<vmem>>, vector<1x128x128xf32>
    %380 = vector.shape_cast %379 : vector<1x128x128xf32> to vector<128x128xf32>
    %cst_335 = arith.constant dense<0.000000e+00> : vector<4x128xf32>
    %381 = tpu.matmul %378, %380, %cst_335 {dimension_numbers = #tpu.dot_dimension_numbers<[1], [0], [0], [1], [0, 0, 1, 1], [], []>} : vector<4x128xf32>, vector<128x128xf32>, vector<4x128xf32> -> vector<4x128xf32>
    %c1_336 = arith.constant 1 : index
    %c0_337 = arith.constant 0 : index
    %382 = vector.load %arg27[%c1_336, %c0_337] : memref<6x128xf32, #tpu.memory_space<vmem>>, vector<4x128xf32>
    %c1_338 = arith.constant 1 : index
    %c0_339 = arith.constant 0 : index
    %c0_340 = arith.constant 0 : index
    %383 = vector.load %arg8[%c1_338, %c0_339, %c0_340] : memref<3x128x128xf32, #tpu.memory_space<vmem>>, vector<1x128x128xf32>
    %384 = vector.shape_cast %383 : vector<1x128x128xf32> to vector<128x128xf32>
    %cst_341 = arith.constant dense<0.000000e+00> : vector<4x128xf32>
    %385 = tpu.matmul %382, %384, %cst_341 {dimension_numbers = #tpu.dot_dimension_numbers<[1], [0], [0], [1], [0, 0, 1, 1], [], []>} : vector<4x128xf32>, vector<128x128xf32>, vector<4x128xf32> -> vector<4x128xf32>
    %386 = arith.addf %381, %385 : vector<4x128xf32>
    %c2_342 = arith.constant 2 : index
    %c0_343 = arith.constant 0 : index
    %387 = vector.load %arg27[%c2_342, %c0_343] : memref<6x128xf32, #tpu.memory_space<vmem>>, vector<4x128xf32>
    %c2_344 = arith.constant 2 : index
    %c0_345 = arith.constant 0 : index
    %c0_346 = arith.constant 0 : index
    %388 = vector.load %arg8[%c2_344, %c0_345, %c0_346] : memref<3x128x128xf32, #tpu.memory_space<vmem>>, vector<1x128x128xf32>
    %389 = vector.shape_cast %388 : vector<1x128x128xf32> to vector<128x128xf32>
    %cst_347 = arith.constant dense<0.000000e+00> : vector<4x128xf32>
    %390 = tpu.matmul %387, %389, %cst_347 {dimension_numbers = #tpu.dot_dimension_numbers<[1], [0], [0], [1], [0, 0, 1, 1], [], []>} : vector<4x128xf32>, vector<128x128xf32>, vector<4x128xf32> -> vector<4x128xf32>
    %391 = arith.addf %386, %390 : vector<4x128xf32>
    %cst_348 = arith.constant dense<0.000000e+00> : vector<128xf32>
    %392 = vector.multi_reduction <add>, %391, %cst_348 [0] : vector<4x128xf32> to vector<128xf32>
    %393 = vector.shape_cast %392 : vector<128xf32> to vector<1x128xf32>
    %394 = arith.mulf %391, %391 : vector<4x128xf32>
    %cst_349 = arith.constant dense<0.000000e+00> : vector<128xf32>
    %395 = vector.multi_reduction <add>, %394, %cst_349 [0] : vector<4x128xf32> to vector<128xf32>
    %396 = vector.shape_cast %395 : vector<128xf32> to vector<1x128xf32>
    %cst_350 = arith.constant dense<0.000000e+00> : vector<1x128xf32>
    %397 = tpu.matmul %393, %55, %cst_350 {dimension_numbers = #tpu.dot_dimension_numbers<[1], [0], [0], [1], [0, 0, 1, 1], [], []>} : vector<1x128xf32>, vector<128x128xf32>, vector<1x128xf32> -> vector<1x128xf32>
    %cst_351 = arith.constant 3.125000e-02 : f32
    %398 = vector.broadcast %cst_351 : f32 to vector<1x128xf32>
    %399 = arith.mulf %397, %398 : vector<1x128xf32>
    %cst_352 = arith.constant dense<0.000000e+00> : vector<1x128xf32>
    %400 = tpu.matmul %396, %55, %cst_352 {dimension_numbers = #tpu.dot_dimension_numbers<[1], [0], [0], [1], [0, 0, 1, 1], [], []>} : vector<1x128xf32>, vector<128x128xf32>, vector<1x128xf32> -> vector<1x128xf32>
    %cst_353 = arith.constant 3.125000e-02 : f32
    %401 = vector.broadcast %cst_353 : f32 to vector<1x128xf32>
    %402 = arith.mulf %400, %401 : vector<1x128xf32>
    %403 = arith.mulf %399, %399 : vector<1x128xf32>
    %404 = arith.subf %402, %403 : vector<1x128xf32>
    %cst_354 = arith.constant 0.000000e+00 : f32
    %405 = vector.broadcast %cst_354 : f32 to vector<1x128xf32>
    %406 = arith.maximumf %404, %405 : vector<1x128xf32>
    %cst_355 = arith.constant 9.99999974E-6 : f32
    %407 = vector.broadcast %cst_355 : f32 to vector<1x128xf32>
    %408 = arith.addf %406, %407 : vector<1x128xf32>
    %409 = math.rsqrt %408 : vector<1x128xf32>
    %410 = vector.broadcast %399 : vector<1x128xf32> to vector<4x128xf32>
    %411 = arith.subf %391, %410 : vector<4x128xf32>
    %412 = vector.broadcast %409 : vector<1x128xf32> to vector<4x128xf32>
    %413 = arith.mulf %411, %412 : vector<4x128xf32>
    %cst_356 = arith.constant 0.000000e+00 : f32
    %414 = vector.broadcast %cst_356 : f32 to vector<4x128xf32>
    %415 = arith.maximumf %413, %414 : vector<4x128xf32>
    %c1_357 = arith.constant 1 : index
    %c0_358 = arith.constant 0 : index
    %416 = vector.load %arg28[%c1_357, %c0_358] : memref<6x128xf32, #tpu.memory_space<vmem>>, vector<4x128xf32>
    tpu.vector_store %arg28[%c1_357, %c0_358], %415 {strides = array<i32>} : memref<6x128xf32, #tpu.memory_space<vmem>>, vector<4x128xf32>,
    %c0_359 = arith.constant 0 : index
    %c0_360 = arith.constant 0 : index
    %417 = vector.load %arg28[%c0_359, %c0_360] : memref<6x128xf32, #tpu.memory_space<vmem>>, vector<4x128xf32>
    %c0_361 = arith.constant 0 : index
    %c0_362 = arith.constant 0 : index
    %c0_363 = arith.constant 0 : index
    %418 = vector.load %arg9[%c0_361, %c0_362, %c0_363] : memref<3x128x128xf32, #tpu.memory_space<vmem>>, vector<1x128x128xf32>
    %419 = vector.shape_cast %418 : vector<1x128x128xf32> to vector<128x128xf32>
    %cst_364 = arith.constant dense<0.000000e+00> : vector<4x128xf32>
    %420 = tpu.matmul %417, %419, %cst_364 {dimension_numbers = #tpu.dot_dimension_numbers<[1], [0], [0], [1], [0, 0, 1, 1], [], []>} : vector<4x128xf32>, vector<128x128xf32>, vector<4x128xf32> -> vector<4x128xf32>
    %c1_365 = arith.constant 1 : index
    %c0_366 = arith.constant 0 : index
    %421 = vector.load %arg28[%c1_365, %c0_366] : memref<6x128xf32, #tpu.memory_space<vmem>>, vector<4x128xf32>
    %c1_367 = arith.constant 1 : index
    %c0_368 = arith.constant 0 : index
    %c0_369 = arith.constant 0 : index
    %422 = vector.load %arg9[%c1_367, %c0_368, %c0_369] : memref<3x128x128xf32, #tpu.memory_space<vmem>>, vector<1x128x128xf32>
    %423 = vector.shape_cast %422 : vector<1x128x128xf32> to vector<128x128xf32>
    %cst_370 = arith.constant dense<0.000000e+00> : vector<4x128xf32>
    %424 = tpu.matmul %421, %423, %cst_370 {dimension_numbers = #tpu.dot_dimension_numbers<[1], [0], [0], [1], [0, 0, 1, 1], [], []>} : vector<4x128xf32>, vector<128x128xf32>, vector<4x128xf32> -> vector<4x128xf32>
    %425 = arith.addf %420, %424 : vector<4x128xf32>
    %c2_371 = arith.constant 2 : index
    %c0_372 = arith.constant 0 : index
    %426 = vector.load %arg28[%c2_371, %c0_372] : memref<6x128xf32, #tpu.memory_space<vmem>>, vector<4x128xf32>
    %c2_373 = arith.constant 2 : index
    %c0_374 = arith.constant 0 : index
    %c0_375 = arith.constant 0 : index
    %427 = vector.load %arg9[%c2_373, %c0_374, %c0_375] : memref<3x128x128xf32, #tpu.memory_space<vmem>>, vector<1x128x128xf32>
    %428 = vector.shape_cast %427 : vector<1x128x128xf32> to vector<128x128xf32>
    %cst_376 = arith.constant dense<0.000000e+00> : vector<4x128xf32>
    %429 = tpu.matmul %426, %428, %cst_376 {dimension_numbers = #tpu.dot_dimension_numbers<[1], [0], [0], [1], [0, 0, 1, 1], [], []>} : vector<4x128xf32>, vector<128x128xf32>, vector<4x128xf32> -> vector<4x128xf32>
    %430 = arith.addf %425, %429 : vector<4x128xf32>
    %cst_377 = arith.constant dense<0.000000e+00> : vector<128xf32>
    %431 = vector.multi_reduction <add>, %430, %cst_377 [0] : vector<4x128xf32> to vector<128xf32>
    %432 = vector.shape_cast %431 : vector<128xf32> to vector<1x128xf32>
    %433 = arith.mulf %430, %430 : vector<4x128xf32>
    %cst_378 = arith.constant dense<0.000000e+00> : vector<128xf32>
    %434 = vector.multi_reduction <add>, %433, %cst_378 [0] : vector<4x128xf32> to vector<128xf32>
    %435 = vector.shape_cast %434 : vector<128xf32> to vector<1x128xf32>
    %cst_379 = arith.constant dense<0.000000e+00> : vector<1x128xf32>
    %436 = tpu.matmul %432, %55, %cst_379 {dimension_numbers = #tpu.dot_dimension_numbers<[1], [0], [0], [1], [0, 0, 1, 1], [], []>} : vector<1x128xf32>, vector<128x128xf32>, vector<1x128xf32> -> vector<1x128xf32>
    %cst_380 = arith.constant 3.125000e-02 : f32
    %437 = vector.broadcast %cst_380 : f32 to vector<1x128xf32>
    %438 = arith.mulf %436, %437 : vector<1x128xf32>
    %cst_381 = arith.constant dense<0.000000e+00> : vector<1x128xf32>
    %439 = tpu.matmul %435, %55, %cst_381 {dimension_numbers = #tpu.dot_dimension_numbers<[1], [0], [0], [1], [0, 0, 1, 1], [], []>} : vector<1x128xf32>, vector<128x128xf32>, vector<1x128xf32> -> vector<1x128xf32>
    %cst_382 = arith.constant 3.125000e-02 : f32
    %440 = vector.broadcast %cst_382 : f32 to vector<1x128xf32>
    %441 = arith.mulf %439, %440 : vector<1x128xf32>
    %442 = arith.mulf %438, %438 : vector<1x128xf32>
    %443 = arith.subf %441, %442 : vector<1x128xf32>
    %cst_383 = arith.constant 0.000000e+00 : f32
    %444 = vector.broadcast %cst_383 : f32 to vector<1x128xf32>
    %445 = arith.maximumf %443, %444 : vector<1x128xf32>
    %cst_384 = arith.constant 9.99999974E-6 : f32
    %446 = vector.broadcast %cst_384 : f32 to vector<1x128xf32>
    %447 = arith.addf %445, %446 : vector<1x128xf32>
    %448 = math.rsqrt %447 : vector<1x128xf32>
    %449 = vector.broadcast %438 : vector<1x128xf32> to vector<4x128xf32>
    %450 = arith.subf %430, %449 : vector<4x128xf32>
    %451 = vector.broadcast %448 : vector<1x128xf32> to vector<4x128xf32>
    %452 = arith.mulf %450, %451 : vector<4x128xf32>
    %cst_385 = arith.constant 0.000000e+00 : f32
    %453 = vector.broadcast %cst_385 : f32 to vector<4x128xf32>
    %454 = arith.maximumf %452, %453 : vector<4x128xf32>
    %c0_386 = arith.constant 0 : index
    %c0_387 = arith.constant 0 : index
    %455 = vector.load %arg29[%c0_386, %c0_387] : memref<5x128xf32, #tpu.memory_space<vmem>>, vector<4x128xf32>
    tpu.vector_store %arg29[%c0_386, %c0_387], %454 {strides = array<i32>} : memref<5x128xf32, #tpu.memory_space<vmem>>, vector<4x128xf32>,
    %c0_388 = arith.constant 0 : index
    %c0_389 = arith.constant 0 : index
    %456 = vector.load %arg10[%c0_388, %c0_389] : memref<128x128xf32, #tpu.memory_space<vmem>>, vector<128x128xf32>
    %cst_390 = arith.constant dense<0.000000e+00> : vector<4x128xf32>
    %457 = tpu.matmul %454, %456, %cst_390 {dimension_numbers = #tpu.dot_dimension_numbers<[1], [0], [0], [1], [0, 0, 1, 1], [], []>} : vector<4x128xf32>, vector<128x128xf32>, vector<4x128xf32> -> vector<4x128xf32>
    %c0_391 = arith.constant 0 : index
    %c0_392 = arith.constant 0 : index
    %458 = vector.load %arg17[%c0_391, %c0_392] : memref<4x128xf32, #tpu.memory_space<vmem>>, vector<4x128xf32>
    tpu.vector_store %arg17[%c0_391, %c0_392], %457 {strides = array<i32>} : memref<4x128xf32, #tpu.memory_space<vmem>>, vector<4x128xf32>,
    %c0_393 = arith.constant 0 : index
    %c0_394 = arith.constant 0 : index
    %459 = vector.load %arg29[%c0_393, %c0_394] : memref<5x128xf32, #tpu.memory_space<vmem>>, vector<4x128xf32>
    %c0_395 = arith.constant 0 : index
    %c0_396 = arith.constant 0 : index
    %c0_397 = arith.constant 0 : index
    %460 = vector.load %arg11[%c0_395, %c0_396, %c0_397] : memref<2x128x256xf32, #tpu.memory_space<vmem>>, vector<1x128x256xf32>
    %461 = vector.shape_cast %460 : vector<1x128x256xf32> to vector<128x256xf32>
    %cst_398 = arith.constant dense<0.000000e+00> : vector<4x256xf32>
    %462 = tpu.matmul %459, %461, %cst_398 {dimension_numbers = #tpu.dot_dimension_numbers<[1], [0], [0], [1], [0, 0, 1, 1], [], []>} : vector<4x128xf32>, vector<128x256xf32>, vector<4x256xf32> -> vector<4x256xf32>
    %c1_399 = arith.constant 1 : index
    %c0_400 = arith.constant 0 : index
    %463 = vector.load %arg29[%c1_399, %c0_400] : memref<5x128xf32, #tpu.memory_space<vmem>>, vector<4x128xf32>
    %c1_401 = arith.constant 1 : index
    %c0_402 = arith.constant 0 : index
    %c0_403 = arith.constant 0 : index
    %464 = vector.load %arg11[%c1_401, %c0_402, %c0_403] : memref<2x128x256xf32, #tpu.memory_space<vmem>>, vector<1x128x256xf32>
    %465 = vector.shape_cast %464 : vector<1x128x256xf32> to vector<128x256xf32>
    %cst_404 = arith.constant dense<0.000000e+00> : vector<4x256xf32>
    %466 = tpu.matmul %463, %465, %cst_404 {dimension_numbers = #tpu.dot_dimension_numbers<[1], [0], [0], [1], [0, 0, 1, 1], [], []>} : vector<4x128xf32>, vector<128x256xf32>, vector<4x256xf32> -> vector<4x256xf32>
    %467 = arith.addf %462, %466 : vector<4x256xf32>
    %cst_405 = arith.constant dense<0.000000e+00> : vector<256xf32>
    %468 = vector.multi_reduction <add>, %467, %cst_405 [0] : vector<4x256xf32> to vector<256xf32>
    %469 = vector.shape_cast %468 : vector<256xf32> to vector<1x256xf32>
    %470 = arith.mulf %467, %467 : vector<4x256xf32>
    %cst_406 = arith.constant dense<0.000000e+00> : vector<256xf32>
    %471 = vector.multi_reduction <add>, %470, %cst_406 [0] : vector<4x256xf32> to vector<256xf32>
    %472 = vector.shape_cast %471 : vector<256xf32> to vector<1x256xf32>
    %cst_407 = arith.constant dense<0.000000e+00> : vector<1x256xf32>
    %473 = tpu.matmul %469, %65, %cst_407 {dimension_numbers = #tpu.dot_dimension_numbers<[1], [0], [0], [1], [0, 0, 1, 1], [], []>} : vector<1x256xf32>, vector<256x256xf32>, vector<1x256xf32> -> vector<1x256xf32>
    %cst_408 = arith.constant 7.812500e-03 : f32
    %474 = vector.broadcast %cst_408 : f32 to vector<1x256xf32>
    %475 = arith.mulf %473, %474 : vector<1x256xf32>
    %cst_409 = arith.constant dense<0.000000e+00> : vector<1x256xf32>
    %476 = tpu.matmul %472, %65, %cst_409 {dimension_numbers = #tpu.dot_dimension_numbers<[1], [0], [0], [1], [0, 0, 1, 1], [], []>} : vector<1x256xf32>, vector<256x256xf32>, vector<1x256xf32> -> vector<1x256xf32>
    %cst_410 = arith.constant 7.812500e-03 : f32
    %477 = vector.broadcast %cst_410 : f32 to vector<1x256xf32>
    %478 = arith.mulf %476, %477 : vector<1x256xf32>
    %479 = arith.mulf %475, %475 : vector<1x256xf32>
    %480 = arith.subf %478, %479 : vector<1x256xf32>
    %cst_411 = arith.constant 0.000000e+00 : f32
    %481 = vector.broadcast %cst_411 : f32 to vector<1x256xf32>
    %482 = arith.maximumf %480, %481 : vector<1x256xf32>
    %cst_412 = arith.constant 9.99999974E-6 : f32
    %483 = vector.broadcast %cst_412 : f32 to vector<1x256xf32>
    %484 = arith.addf %482, %483 : vector<1x256xf32>
    %485 = math.rsqrt %484 : vector<1x256xf32>
    %486 = vector.broadcast %475 : vector<1x256xf32> to vector<4x256xf32>
    %487 = arith.subf %467, %486 : vector<4x256xf32>
    %488 = vector.broadcast %485 : vector<1x256xf32> to vector<4x256xf32>
    %489 = arith.mulf %487, %488 : vector<4x256xf32>
    %cst_413 = arith.constant 0.000000e+00 : f32
    %490 = vector.broadcast %cst_413 : f32 to vector<4x256xf32>
    %491 = arith.maximumf %489, %490 : vector<4x256xf32>
    %492 = vector.extract_strided_slice %491 {offsets = [0, 0], sizes = [1, 128], strides = [1, 1]} : vector<4x256xf32> to vector<1x128xf32>
    %c1_414 = arith.constant 1 : index
    %c0_415 = arith.constant 0 : index
    %493 = vector.load %arg30[%c1_414, %c0_415] : memref<10x256xf32, #tpu.memory_space<vmem>>, vector<1x128xf32>
    tpu.vector_store %arg30[%c1_414, %c0_415], %492 {strides = array<i32>} : memref<10x256xf32, #tpu.memory_space<vmem>>, vector<1x128xf32>,
    %494 = vector.extract_strided_slice %491 {offsets = [0, 128], sizes = [1, 128], strides = [1, 1]} : vector<4x256xf32> to vector<1x128xf32>
    %c2_416 = arith.constant 2 : index
    %c0_417 = arith.constant 0 : index
    %495 = vector.load %arg30[%c2_416, %c0_417] : memref<10x256xf32, #tpu.memory_space<vmem>>, vector<1x128xf32>
    tpu.vector_store %arg30[%c2_416, %c0_417], %494 {strides = array<i32>} : memref<10x256xf32, #tpu.memory_space<vmem>>, vector<1x128xf32>,
    %496 = vector.extract_strided_slice %491 {offsets = [1, 0], sizes = [1, 128], strides = [1, 1]} : vector<4x256xf32> to vector<1x128xf32>
    %c3_418 = arith.constant 3 : index
    %c0_419 = arith.constant 0 : index
    %497 = vector.load %arg30[%c3_418, %c0_419] : memref<10x256xf32, #tpu.memory_space<vmem>>, vector<1x128xf32>
    tpu.vector_store %arg30[%c3_418, %c0_419], %496 {strides = array<i32>} : memref<10x256xf32, #tpu.memory_space<vmem>>, vector<1x128xf32>,
    %498 = vector.extract_strided_slice %491 {offsets = [1, 128], sizes = [1, 128], strides = [1, 1]} : vector<4x256xf32> to vector<1x128xf32>
    %c4_420 = arith.constant 4 : index
    %c0_421 = arith.constant 0 : index
    %499 = vector.load %arg30[%c4_420, %c0_421] : memref<10x256xf32, #tpu.memory_space<vmem>>, vector<1x128xf32>
    tpu.vector_store %arg30[%c4_420, %c0_421], %498 {strides = array<i32>} : memref<10x256xf32, #tpu.memory_space<vmem>>, vector<1x128xf32>,
    %500 = vector.extract_strided_slice %491 {offsets = [2, 0], sizes = [1, 128], strides = [1, 1]} : vector<4x256xf32> to vector<1x128xf32>
    %c5_422 = arith.constant 5 : index
    %c0_423 = arith.constant 0 : index
    %501 = vector.load %arg30[%c5_422, %c0_423] : memref<10x256xf32, #tpu.memory_space<vmem>>, vector<1x128xf32>
    tpu.vector_store %arg30[%c5_422, %c0_423], %500 {strides = array<i32>} : memref<10x256xf32, #tpu.memory_space<vmem>>, vector<1x128xf32>,
    %502 = vector.extract_strided_slice %491 {offsets = [2, 128], sizes = [1, 128], strides = [1, 1]} : vector<4x256xf32> to vector<1x128xf32>
    %c6_424 = arith.constant 6 : index
    %c0_425 = arith.constant 0 : index
    %503 = vector.load %arg30[%c6_424, %c0_425] : memref<10x256xf32, #tpu.memory_space<vmem>>, vector<1x128xf32>
    tpu.vector_store %arg30[%c6_424, %c0_425], %502 {strides = array<i32>} : memref<10x256xf32, #tpu.memory_space<vmem>>, vector<1x128xf32>,
    %504 = vector.extract_strided_slice %491 {offsets = [3, 0], sizes = [1, 128], strides = [1, 1]} : vector<4x256xf32> to vector<1x128xf32>
    %c7_426 = arith.constant 7 : index
    %c0_427 = arith.constant 0 : index
    %505 = vector.load %arg30[%c7_426, %c0_427] : memref<10x256xf32, #tpu.memory_space<vmem>>, vector<1x128xf32>
    tpu.vector_store %arg30[%c7_426, %c0_427], %504 {strides = array<i32>} : memref<10x256xf32, #tpu.memory_space<vmem>>, vector<1x128xf32>,
    %506 = vector.extract_strided_slice %491 {offsets = [3, 128], sizes = [1, 128], strides = [1, 1]} : vector<4x256xf32> to vector<1x128xf32>
    %c8_428 = arith.constant 8 : index
    %c0_429 = arith.constant 0 : index
    %507 = vector.load %arg30[%c8_428, %c0_429] : memref<10x256xf32, #tpu.memory_space<vmem>>, vector<1x128xf32>
    tpu.vector_store %arg30[%c8_428, %c0_429], %506 {strides = array<i32>} : memref<10x256xf32, #tpu.memory_space<vmem>>, vector<1x128xf32>,
    %c1_430 = arith.constant 1 : index
    %c0_431 = arith.constant 0 : index
    %508 = vector.load %arg25[%c1_430, %c0_431] : memref<10x128xf32, #tpu.memory_space<vmem>>, vector<8x128xf32>
    %c1_432 = arith.constant 1 : index
    %c128 = arith.constant 128 : index
    %509 = vector.load %arg30[%c1_432, %c128] : memref<10x256xf32, #tpu.memory_space<vmem>>, vector<8x128xf32>
    tpu.vector_store %arg30[%c1_432, %c128], %508 {strides = array<i32>} : memref<10x256xf32, #tpu.memory_space<vmem>>, vector<8x128xf32>,
    %c0_433 = arith.constant 0 : index
    %c0_434 = arith.constant 0 : index
    %510 = vector.load %arg30[%c0_433, %c0_434] : memref<10x256xf32, #tpu.memory_space<vmem>>, vector<8x256xf32>
    %c0_435 = arith.constant 0 : index
    %c0_436 = arith.constant 0 : index
    %c0_437 = arith.constant 0 : index
    %511 = vector.load %arg12[%c0_435, %c0_436, %c0_437] : memref<3x256x128xf32, #tpu.memory_space<vmem>>, vector<1x256x128xf32>
    %512 = vector.shape_cast %511 : vector<1x256x128xf32> to vector<256x128xf32>
    %cst_438 = arith.constant dense<0.000000e+00> : vector<8x128xf32>
    %513 = tpu.matmul %510, %512, %cst_438 {dimension_numbers = #tpu.dot_dimension_numbers<[1], [0], [0], [1], [0, 0, 1, 1], [], []>} : vector<8x256xf32>, vector<256x128xf32>, vector<8x128xf32> -> vector<8x128xf32>
    %c1_439 = arith.constant 1 : index
    %c0_440 = arith.constant 0 : index
    %514 = vector.load %arg30[%c1_439, %c0_440] : memref<10x256xf32, #tpu.memory_space<vmem>>, vector<8x256xf32>
    %c1_441 = arith.constant 1 : index
    %c0_442 = arith.constant 0 : index
    %c0_443 = arith.constant 0 : index
    %515 = vector.load %arg12[%c1_441, %c0_442, %c0_443] : memref<3x256x128xf32, #tpu.memory_space<vmem>>, vector<1x256x128xf32>
    %516 = vector.shape_cast %515 : vector<1x256x128xf32> to vector<256x128xf32>
    %cst_444 = arith.constant dense<0.000000e+00> : vector<8x128xf32>
    %517 = tpu.matmul %514, %516, %cst_444 {dimension_numbers = #tpu.dot_dimension_numbers<[1], [0], [0], [1], [0, 0, 1, 1], [], []>} : vector<8x256xf32>, vector<256x128xf32>, vector<8x128xf32> -> vector<8x128xf32>
    %518 = arith.addf %513, %517 : vector<8x128xf32>
    %c2_445 = arith.constant 2 : index
    %c0_446 = arith.constant 0 : index
    %519 = vector.load %arg30[%c2_445, %c0_446] : memref<10x256xf32, #tpu.memory_space<vmem>>, vector<8x256xf32>
    %c2_447 = arith.constant 2 : index
    %c0_448 = arith.constant 0 : index
    %c0_449 = arith.constant 0 : index
    %520 = vector.load %arg12[%c2_447, %c0_448, %c0_449] : memref<3x256x128xf32, #tpu.memory_space<vmem>>, vector<1x256x128xf32>
    %521 = vector.shape_cast %520 : vector<1x256x128xf32> to vector<256x128xf32>
    %cst_450 = arith.constant dense<0.000000e+00> : vector<8x128xf32>
    %522 = tpu.matmul %519, %521, %cst_450 {dimension_numbers = #tpu.dot_dimension_numbers<[1], [0], [0], [1], [0, 0, 1, 1], [], []>} : vector<8x256xf32>, vector<256x128xf32>, vector<8x128xf32> -> vector<8x128xf32>
    %523 = arith.addf %518, %522 : vector<8x128xf32>
    %cst_451 = arith.constant dense<0.000000e+00> : vector<128xf32>
    %524 = vector.multi_reduction <add>, %523, %cst_451 [0] : vector<8x128xf32> to vector<128xf32>
    %525 = vector.shape_cast %524 : vector<128xf32> to vector<1x128xf32>
    %526 = arith.mulf %523, %523 : vector<8x128xf32>
    %cst_452 = arith.constant dense<0.000000e+00> : vector<128xf32>
    %527 = vector.multi_reduction <add>, %526, %cst_452 [0] : vector<8x128xf32> to vector<128xf32>
    %528 = vector.shape_cast %527 : vector<128xf32> to vector<1x128xf32>
    %cst_453 = arith.constant dense<0.000000e+00> : vector<1x128xf32>
    %529 = tpu.matmul %525, %45, %cst_453 {dimension_numbers = #tpu.dot_dimension_numbers<[1], [0], [0], [1], [0, 0, 1, 1], [], []>} : vector<1x128xf32>, vector<128x128xf32>, vector<1x128xf32> -> vector<1x128xf32>
    %cst_454 = arith.constant 7.812500e-03 : f32
    %530 = vector.broadcast %cst_454 : f32 to vector<1x128xf32>
    %531 = arith.mulf %529, %530 : vector<1x128xf32>
    %cst_455 = arith.constant dense<0.000000e+00> : vector<1x128xf32>
    %532 = tpu.matmul %528, %45, %cst_455 {dimension_numbers = #tpu.dot_dimension_numbers<[1], [0], [0], [1], [0, 0, 1, 1], [], []>} : vector<1x128xf32>, vector<128x128xf32>, vector<1x128xf32> -> vector<1x128xf32>
    %cst_456 = arith.constant 7.812500e-03 : f32
    %533 = vector.broadcast %cst_456 : f32 to vector<1x128xf32>
    %534 = arith.mulf %532, %533 : vector<1x128xf32>
    %535 = arith.mulf %531, %531 : vector<1x128xf32>
    %536 = arith.subf %534, %535 : vector<1x128xf32>
    %cst_457 = arith.constant 0.000000e+00 : f32
    %537 = vector.broadcast %cst_457 : f32 to vector<1x128xf32>
    %538 = arith.maximumf %536, %537 : vector<1x128xf32>
    %cst_458 = arith.constant 9.99999974E-6 : f32
    %539 = vector.broadcast %cst_458 : f32 to vector<1x128xf32>
    %540 = arith.addf %538, %539 : vector<1x128xf32>
    %541 = math.rsqrt %540 : vector<1x128xf32>
    %542 = vector.broadcast %531 : vector<1x128xf32> to vector<8x128xf32>
    %543 = arith.subf %523, %542 : vector<8x128xf32>
    %544 = vector.broadcast %541 : vector<1x128xf32> to vector<8x128xf32>
    %545 = arith.mulf %543, %544 : vector<8x128xf32>
    %cst_459 = arith.constant 0.000000e+00 : f32
    %546 = vector.broadcast %cst_459 : f32 to vector<8x128xf32>
    %547 = arith.maximumf %545, %546 : vector<8x128xf32>
    %c0_460 = arith.constant 0 : index
    %c0_461 = arith.constant 0 : index
    %548 = vector.load %arg13[%c0_460, %c0_461] : memref<128x128xf32, #tpu.memory_space<vmem>>, vector<128x128xf32>
    %cst_462 = arith.constant dense<0.000000e+00> : vector<8x128xf32>
    %549 = tpu.matmul %547, %548, %cst_462 {dimension_numbers = #tpu.dot_dimension_numbers<[1], [0], [0], [1], [0, 0, 1, 1], [], []>} : vector<8x128xf32>, vector<128x128xf32>, vector<8x128xf32> -> vector<8x128xf32>
    %c0_463 = arith.constant 0 : index
    %c0_464 = arith.constant 0 : index
    %550 = vector.load %arg18[%c0_463, %c0_464] : memref<8x128xf32, #tpu.memory_space<vmem>>, vector<8x128xf32>
    tpu.vector_store %arg18[%c0_463, %c0_464], %549 {strides = array<i32>} : memref<8x128xf32, #tpu.memory_space<vmem>>, vector<8x128xf32>,
    %c0_465 = arith.constant 0 : index
    %c0_466 = arith.constant 0 : index
    %551 = vector.load %arg31[%c0_465, %c0_466] : memref<9x128xf32, #tpu.memory_space<vmem>>, vector<8x128xf32>
    tpu.vector_store %arg31[%c0_465, %c0_466], %547 {strides = array<i32>} : memref<9x128xf32, #tpu.memory_space<vmem>>, vector<8x128xf32>,
    %c0_467 = arith.constant 0 : index
    %c0_468 = arith.constant 0 : index
    %552 = vector.load %arg31[%c0_467, %c0_468] : memref<9x128xf32, #tpu.memory_space<vmem>>, vector<8x128xf32>
    %c0_469 = arith.constant 0 : index
    %c0_470 = arith.constant 0 : index
    %c0_471 = arith.constant 0 : index
    %553 = vector.load %arg14[%c0_469, %c0_470, %c0_471] : memref<2x128x256xf32, #tpu.memory_space<vmem>>, vector<1x128x256xf32>
    %554 = vector.shape_cast %553 : vector<1x128x256xf32> to vector<128x256xf32>
    %cst_472 = arith.constant dense<0.000000e+00> : vector<8x256xf32>
    %555 = tpu.matmul %552, %554, %cst_472 {dimension_numbers = #tpu.dot_dimension_numbers<[1], [0], [0], [1], [0, 0, 1, 1], [], []>} : vector<8x128xf32>, vector<128x256xf32>, vector<8x256xf32> -> vector<8x256xf32>
    %c1_473 = arith.constant 1 : index
    %c0_474 = arith.constant 0 : index
    %556 = vector.load %arg31[%c1_473, %c0_474] : memref<9x128xf32, #tpu.memory_space<vmem>>, vector<8x128xf32>
    %c1_475 = arith.constant 1 : index
    %c0_476 = arith.constant 0 : index
    %c0_477 = arith.constant 0 : index
    %557 = vector.load %arg14[%c1_475, %c0_476, %c0_477] : memref<2x128x256xf32, #tpu.memory_space<vmem>>, vector<1x128x256xf32>
    %558 = vector.shape_cast %557 : vector<1x128x256xf32> to vector<128x256xf32>
    %cst_478 = arith.constant dense<0.000000e+00> : vector<8x256xf32>
    %559 = tpu.matmul %556, %558, %cst_478 {dimension_numbers = #tpu.dot_dimension_numbers<[1], [0], [0], [1], [0, 0, 1, 1], [], []>} : vector<8x128xf32>, vector<128x256xf32>, vector<8x256xf32> -> vector<8x256xf32>
    %560 = arith.addf %555, %559 : vector<8x256xf32>
    %cst_479 = arith.constant dense<0.000000e+00> : vector<256xf32>
    %561 = vector.multi_reduction <add>, %560, %cst_479 [0] : vector<8x256xf32> to vector<256xf32>
    %562 = vector.shape_cast %561 : vector<256xf32> to vector<1x256xf32>
    %563 = arith.mulf %560, %560 : vector<8x256xf32>
    %cst_480 = arith.constant dense<0.000000e+00> : vector<256xf32>
    %564 = vector.multi_reduction <add>, %563, %cst_480 [0] : vector<8x256xf32> to vector<256xf32>
    %565 = vector.shape_cast %564 : vector<256xf32> to vector<1x256xf32>
    %cst_481 = arith.constant dense<0.000000e+00> : vector<1x256xf32>
    %566 = tpu.matmul %562, %75, %cst_481 {dimension_numbers = #tpu.dot_dimension_numbers<[1], [0], [0], [1], [0, 0, 1, 1], [], []>} : vector<1x256xf32>, vector<256x256xf32>, vector<1x256xf32> -> vector<1x256xf32>
    %cst_482 = arith.constant 0.001953125 : f32
    %567 = vector.broadcast %cst_482 : f32 to vector<1x256xf32>
    %568 = arith.mulf %566, %567 : vector<1x256xf32>
    %cst_483 = arith.constant dense<0.000000e+00> : vector<1x256xf32>
    %569 = tpu.matmul %565, %75, %cst_483 {dimension_numbers = #tpu.dot_dimension_numbers<[1], [0], [0], [1], [0, 0, 1, 1], [], []>} : vector<1x256xf32>, vector<256x256xf32>, vector<1x256xf32> -> vector<1x256xf32>
    %cst_484 = arith.constant 0.001953125 : f32
    %570 = vector.broadcast %cst_484 : f32 to vector<1x256xf32>
    %571 = arith.mulf %569, %570 : vector<1x256xf32>
    %572 = arith.mulf %568, %568 : vector<1x256xf32>
    %573 = arith.subf %571, %572 : vector<1x256xf32>
    %cst_485 = arith.constant 0.000000e+00 : f32
    %574 = vector.broadcast %cst_485 : f32 to vector<1x256xf32>
    %575 = arith.maximumf %573, %574 : vector<1x256xf32>
    %cst_486 = arith.constant 9.99999974E-6 : f32
    %576 = vector.broadcast %cst_486 : f32 to vector<1x256xf32>
    %577 = arith.addf %575, %576 : vector<1x256xf32>
    %578 = math.rsqrt %577 : vector<1x256xf32>
    %579 = vector.broadcast %568 : vector<1x256xf32> to vector<8x256xf32>
    %580 = arith.subf %560, %579 : vector<8x256xf32>
    %581 = vector.broadcast %578 : vector<1x256xf32> to vector<8x256xf32>
    %582 = arith.mulf %580, %581 : vector<8x256xf32>
    %cst_487 = arith.constant 0.000000e+00 : f32
    %583 = vector.broadcast %cst_487 : f32 to vector<8x256xf32>
    %584 = arith.maximumf %582, %583 : vector<8x256xf32>
    %585 = vector.extract_strided_slice %584 {offsets = [0, 0], sizes = [1, 128], strides = [1, 1]} : vector<8x256xf32> to vector<1x128xf32>
    %c1_488 = arith.constant 1 : index
    %c0_489 = arith.constant 0 : index
    %586 = vector.load %arg32[%c1_488, %c0_489] : memref<18x256xf32, #tpu.memory_space<vmem>>, vector<1x128xf32>
    tpu.vector_store %arg32[%c1_488, %c0_489], %585 {strides = array<i32>} : memref<18x256xf32, #tpu.memory_space<vmem>>, vector<1x128xf32>,
    %587 = vector.extract_strided_slice %584 {offsets = [0, 128], sizes = [1, 128], strides = [1, 1]} : vector<8x256xf32> to vector<1x128xf32>
    %c2_490 = arith.constant 2 : index
    %c0_491 = arith.constant 0 : index
    %588 = vector.load %arg32[%c2_490, %c0_491] : memref<18x256xf32, #tpu.memory_space<vmem>>, vector<1x128xf32>
    tpu.vector_store %arg32[%c2_490, %c0_491], %587 {strides = array<i32>} : memref<18x256xf32, #tpu.memory_space<vmem>>, vector<1x128xf32>,
    %589 = vector.extract_strided_slice %584 {offsets = [1, 0], sizes = [1, 128], strides = [1, 1]} : vector<8x256xf32> to vector<1x128xf32>
    %c3_492 = arith.constant 3 : index
    %c0_493 = arith.constant 0 : index
    %590 = vector.load %arg32[%c3_492, %c0_493] : memref<18x256xf32, #tpu.memory_space<vmem>>, vector<1x128xf32>
    tpu.vector_store %arg32[%c3_492, %c0_493], %589 {strides = array<i32>} : memref<18x256xf32, #tpu.memory_space<vmem>>, vector<1x128xf32>,
    %591 = vector.extract_strided_slice %584 {offsets = [1, 128], sizes = [1, 128], strides = [1, 1]} : vector<8x256xf32> to vector<1x128xf32>
    %c4_494 = arith.constant 4 : index
    %c0_495 = arith.constant 0 : index
    %592 = vector.load %arg32[%c4_494, %c0_495] : memref<18x256xf32, #tpu.memory_space<vmem>>, vector<1x128xf32>
    tpu.vector_store %arg32[%c4_494, %c0_495], %591 {strides = array<i32>} : memref<18x256xf32, #tpu.memory_space<vmem>>, vector<1x128xf32>,
    %593 = vector.extract_strided_slice %584 {offsets = [2, 0], sizes = [1, 128], strides = [1, 1]} : vector<8x256xf32> to vector<1x128xf32>
    %c5_496 = arith.constant 5 : index
    %c0_497 = arith.constant 0 : index
    %594 = vector.load %arg32[%c5_496, %c0_497] : memref<18x256xf32, #tpu.memory_space<vmem>>, vector<1x128xf32>
    tpu.vector_store %arg32[%c5_496, %c0_497], %593 {strides = array<i32>} : memref<18x256xf32, #tpu.memory_space<vmem>>, vector<1x128xf32>,
    %595 = vector.extract_strided_slice %584 {offsets = [2, 128], sizes = [1, 128], strides = [1, 1]} : vector<8x256xf32> to vector<1x128xf32>
    %c6_498 = arith.constant 6 : index
    %c0_499 = arith.constant 0 : index
    %596 = vector.load %arg32[%c6_498, %c0_499] : memref<18x256xf32, #tpu.memory_space<vmem>>, vector<1x128xf32>
    tpu.vector_store %arg32[%c6_498, %c0_499], %595 {strides = array<i32>} : memref<18x256xf32, #tpu.memory_space<vmem>>, vector<1x128xf32>,
    %597 = vector.extract_strided_slice %584 {offsets = [3, 0], sizes = [1, 128], strides = [1, 1]} : vector<8x256xf32> to vector<1x128xf32>
    %c7_500 = arith.constant 7 : index
    %c0_501 = arith.constant 0 : index
    %598 = vector.load %arg32[%c7_500, %c0_501] : memref<18x256xf32, #tpu.memory_space<vmem>>, vector<1x128xf32>
    tpu.vector_store %arg32[%c7_500, %c0_501], %597 {strides = array<i32>} : memref<18x256xf32, #tpu.memory_space<vmem>>, vector<1x128xf32>,
    %599 = vector.extract_strided_slice %584 {offsets = [3, 128], sizes = [1, 128], strides = [1, 1]} : vector<8x256xf32> to vector<1x128xf32>
    %c8_502 = arith.constant 8 : index
    %c0_503 = arith.constant 0 : index
    %600 = vector.load %arg32[%c8_502, %c0_503] : memref<18x256xf32, #tpu.memory_space<vmem>>, vector<1x128xf32>
    tpu.vector_store %arg32[%c8_502, %c0_503], %599 {strides = array<i32>} : memref<18x256xf32, #tpu.memory_space<vmem>>, vector<1x128xf32>,
    %601 = vector.extract_strided_slice %584 {offsets = [4, 0], sizes = [1, 128], strides = [1, 1]} : vector<8x256xf32> to vector<1x128xf32>
    %c9_504 = arith.constant 9 : index
    %c0_505 = arith.constant 0 : index
    %602 = vector.load %arg32[%c9_504, %c0_505] : memref<18x256xf32, #tpu.memory_space<vmem>>, vector<1x128xf32>
    tpu.vector_store %arg32[%c9_504, %c0_505], %601 {strides = array<i32>} : memref<18x256xf32, #tpu.memory_space<vmem>>, vector<1x128xf32>,
    %603 = vector.extract_strided_slice %584 {offsets = [4, 128], sizes = [1, 128], strides = [1, 1]} : vector<8x256xf32> to vector<1x128xf32>
    %c10_506 = arith.constant 10 : index
    %c0_507 = arith.constant 0 : index
    %604 = vector.load %arg32[%c10_506, %c0_507] : memref<18x256xf32, #tpu.memory_space<vmem>>, vector<1x128xf32>
    tpu.vector_store %arg32[%c10_506, %c0_507], %603 {strides = array<i32>} : memref<18x256xf32, #tpu.memory_space<vmem>>, vector<1x128xf32>,
    %605 = vector.extract_strided_slice %584 {offsets = [5, 0], sizes = [1, 128], strides = [1, 1]} : vector<8x256xf32> to vector<1x128xf32>
    %c11_508 = arith.constant 11 : index
    %c0_509 = arith.constant 0 : index
    %606 = vector.load %arg32[%c11_508, %c0_509] : memref<18x256xf32, #tpu.memory_space<vmem>>, vector<1x128xf32>
    tpu.vector_store %arg32[%c11_508, %c0_509], %605 {strides = array<i32>} : memref<18x256xf32, #tpu.memory_space<vmem>>, vector<1x128xf32>,
    %607 = vector.extract_strided_slice %584 {offsets = [5, 128], sizes = [1, 128], strides = [1, 1]} : vector<8x256xf32> to vector<1x128xf32>
    %c12_510 = arith.constant 12 : index
    %c0_511 = arith.constant 0 : index
    %608 = vector.load %arg32[%c12_510, %c0_511] : memref<18x256xf32, #tpu.memory_space<vmem>>, vector<1x128xf32>
    tpu.vector_store %arg32[%c12_510, %c0_511], %607 {strides = array<i32>} : memref<18x256xf32, #tpu.memory_space<vmem>>, vector<1x128xf32>,
    %609 = vector.extract_strided_slice %584 {offsets = [6, 0], sizes = [1, 128], strides = [1, 1]} : vector<8x256xf32> to vector<1x128xf32>
    %c13_512 = arith.constant 13 : index
    %c0_513 = arith.constant 0 : index
    %610 = vector.load %arg32[%c13_512, %c0_513] : memref<18x256xf32, #tpu.memory_space<vmem>>, vector<1x128xf32>
    tpu.vector_store %arg32[%c13_512, %c0_513], %609 {strides = array<i32>} : memref<18x256xf32, #tpu.memory_space<vmem>>, vector<1x128xf32>,
    %611 = vector.extract_strided_slice %584 {offsets = [6, 128], sizes = [1, 128], strides = [1, 1]} : vector<8x256xf32> to vector<1x128xf32>
    %c14_514 = arith.constant 14 : index
    %c0_515 = arith.constant 0 : index
    %612 = vector.load %arg32[%c14_514, %c0_515] : memref<18x256xf32, #tpu.memory_space<vmem>>, vector<1x128xf32>
    tpu.vector_store %arg32[%c14_514, %c0_515], %611 {strides = array<i32>} : memref<18x256xf32, #tpu.memory_space<vmem>>, vector<1x128xf32>,
    %613 = vector.extract_strided_slice %584 {offsets = [7, 0], sizes = [1, 128], strides = [1, 1]} : vector<8x256xf32> to vector<1x128xf32>
    %c15_516 = arith.constant 15 : index
    %c0_517 = arith.constant 0 : index
    %614 = vector.load %arg32[%c15_516, %c0_517] : memref<18x256xf32, #tpu.memory_space<vmem>>, vector<1x128xf32>
    tpu.vector_store %arg32[%c15_516, %c0_517], %613 {strides = array<i32>} : memref<18x256xf32, #tpu.memory_space<vmem>>, vector<1x128xf32>,
    %615 = vector.extract_strided_slice %584 {offsets = [7, 128], sizes = [1, 128], strides = [1, 1]} : vector<8x256xf32> to vector<1x128xf32>
    %c16_518 = arith.constant 16 : index
    %c0_519 = arith.constant 0 : index
    %616 = vector.load %arg32[%c16_518, %c0_519] : memref<18x256xf32, #tpu.memory_space<vmem>>, vector<1x128xf32>
    tpu.vector_store %arg32[%c16_518, %c0_519], %615 {strides = array<i32>} : memref<18x256xf32, #tpu.memory_space<vmem>>, vector<1x128xf32>,
    %c1_520 = arith.constant 1 : index
    %c0_521 = arith.constant 0 : index
    %617 = vector.load %arg21[%c1_520, %c0_521] : memref<18x128xf32, #tpu.memory_space<vmem>>, vector<16x128xf32>
    %c1_522 = arith.constant 1 : index
    %c128_523 = arith.constant 128 : index
    %618 = vector.load %arg32[%c1_522, %c128_523] : memref<18x256xf32, #tpu.memory_space<vmem>>, vector<16x128xf32>
    tpu.vector_store %arg32[%c1_522, %c128_523], %617 {strides = array<i32>} : memref<18x256xf32, #tpu.memory_space<vmem>>, vector<16x128xf32>,
    %c0_524 = arith.constant 0 : index
    %c0_525 = arith.constant 0 : index
    %619 = vector.load %arg32[%c0_524, %c0_525] : memref<18x256xf32, #tpu.memory_space<vmem>>, vector<16x256xf32>
    %c0_526 = arith.constant 0 : index
    %c0_527 = arith.constant 0 : index
    %c0_528 = arith.constant 0 : index
    %620 = vector.load %arg15[%c0_526, %c0_527, %c0_528] : memref<3x256x128xf32, #tpu.memory_space<vmem>>, vector<1x256x128xf32>
    %621 = vector.shape_cast %620 : vector<1x256x128xf32> to vector<256x128xf32>
    %cst_529 = arith.constant dense<0.000000e+00> : vector<16x128xf32>
    %622 = tpu.matmul %619, %621, %cst_529 {dimension_numbers = #tpu.dot_dimension_numbers<[1], [0], [0], [1], [0, 0, 1, 1], [], []>} : vector<16x256xf32>, vector<256x128xf32>, vector<16x128xf32> -> vector<16x128xf32>
    %c1_530 = arith.constant 1 : index
    %c0_531 = arith.constant 0 : index
    %623 = vector.load %arg32[%c1_530, %c0_531] : memref<18x256xf32, #tpu.memory_space<vmem>>, vector<16x256xf32>
    %c1_532 = arith.constant 1 : index
    %c0_533 = arith.constant 0 : index
    %c0_534 = arith.constant 0 : index
    %624 = vector.load %arg15[%c1_532, %c0_533, %c0_534] : memref<3x256x128xf32, #tpu.memory_space<vmem>>, vector<1x256x128xf32>
    %625 = vector.shape_cast %624 : vector<1x256x128xf32> to vector<256x128xf32>
    %cst_535 = arith.constant dense<0.000000e+00> : vector<16x128xf32>
    %626 = tpu.matmul %623, %625, %cst_535 {dimension_numbers = #tpu.dot_dimension_numbers<[1], [0], [0], [1], [0, 0, 1, 1], [], []>} : vector<16x256xf32>, vector<256x128xf32>, vector<16x128xf32> -> vector<16x128xf32>
    %627 = arith.addf %622, %626 : vector<16x128xf32>
    %c2_536 = arith.constant 2 : index
    %c0_537 = arith.constant 0 : index
    %628 = vector.load %arg32[%c2_536, %c0_537] : memref<18x256xf32, #tpu.memory_space<vmem>>, vector<16x256xf32>
    %c2_538 = arith.constant 2 : index
    %c0_539 = arith.constant 0 : index
    %c0_540 = arith.constant 0 : index
    %629 = vector.load %arg15[%c2_538, %c0_539, %c0_540] : memref<3x256x128xf32, #tpu.memory_space<vmem>>, vector<1x256x128xf32>
    %630 = vector.shape_cast %629 : vector<1x256x128xf32> to vector<256x128xf32>
    %cst_541 = arith.constant dense<0.000000e+00> : vector<16x128xf32>
    %631 = tpu.matmul %628, %630, %cst_541 {dimension_numbers = #tpu.dot_dimension_numbers<[1], [0], [0], [1], [0, 0, 1, 1], [], []>} : vector<16x256xf32>, vector<256x128xf32>, vector<16x128xf32> -> vector<16x128xf32>
    %632 = arith.addf %627, %631 : vector<16x128xf32>
    %cst_542 = arith.constant dense<0.000000e+00> : vector<128xf32>
    %633 = vector.multi_reduction <add>, %632, %cst_542 [0] : vector<16x128xf32> to vector<128xf32>
    %634 = vector.shape_cast %633 : vector<128xf32> to vector<1x128xf32>
    %635 = arith.mulf %632, %632 : vector<16x128xf32>
    %cst_543 = arith.constant dense<0.000000e+00> : vector<128xf32>
    %636 = vector.multi_reduction <add>, %635, %cst_543 [0] : vector<16x128xf32> to vector<128xf32>
    %637 = vector.shape_cast %636 : vector<128xf32> to vector<1x128xf32>
    %cst_544 = arith.constant dense<0.000000e+00> : vector<1x128xf32>
    %638 = tpu.matmul %634, %35, %cst_544 {dimension_numbers = #tpu.dot_dimension_numbers<[1], [0], [0], [1], [0, 0, 1, 1], [], []>} : vector<1x128xf32>, vector<128x128xf32>, vector<1x128xf32> -> vector<1x128xf32>
    %cst_545 = arith.constant 0.001953125 : f32
    %639 = vector.broadcast %cst_545 : f32 to vector<1x128xf32>
    %640 = arith.mulf %638, %639 : vector<1x128xf32>
    %cst_546 = arith.constant dense<0.000000e+00> : vector<1x128xf32>
    %641 = tpu.matmul %637, %35, %cst_546 {dimension_numbers = #tpu.dot_dimension_numbers<[1], [0], [0], [1], [0, 0, 1, 1], [], []>} : vector<1x128xf32>, vector<128x128xf32>, vector<1x128xf32> -> vector<1x128xf32>
    %cst_547 = arith.constant 0.001953125 : f32
    %642 = vector.broadcast %cst_547 : f32 to vector<1x128xf32>
    %643 = arith.mulf %641, %642 : vector<1x128xf32>
    %644 = arith.mulf %640, %640 : vector<1x128xf32>
    %645 = arith.subf %643, %644 : vector<1x128xf32>
    %cst_548 = arith.constant 0.000000e+00 : f32
    %646 = vector.broadcast %cst_548 : f32 to vector<1x128xf32>
    %647 = arith.maximumf %645, %646 : vector<1x128xf32>
    %cst_549 = arith.constant 9.99999974E-6 : f32
    %648 = vector.broadcast %cst_549 : f32 to vector<1x128xf32>
    %649 = arith.addf %647, %648 : vector<1x128xf32>
    %650 = math.rsqrt %649 : vector<1x128xf32>
    %651 = vector.broadcast %640 : vector<1x128xf32> to vector<16x128xf32>
    %652 = arith.subf %632, %651 : vector<16x128xf32>
    %653 = vector.broadcast %650 : vector<1x128xf32> to vector<16x128xf32>
    %654 = arith.mulf %652, %653 : vector<16x128xf32>
    %cst_550 = arith.constant 0.000000e+00 : f32
    %655 = vector.broadcast %cst_550 : f32 to vector<16x128xf32>
    %656 = arith.maximumf %654, %655 : vector<16x128xf32>
    %c0_551 = arith.constant 0 : index
    %c0_552 = arith.constant 0 : index
    %657 = vector.load %arg16[%c0_551, %c0_552] : memref<128x128xf32, #tpu.memory_space<vmem>>, vector<128x128xf32>
    %cst_553 = arith.constant dense<0.000000e+00> : vector<16x128xf32>
    %658 = tpu.matmul %656, %657, %cst_553 {dimension_numbers = #tpu.dot_dimension_numbers<[1], [0], [0], [1], [0, 0, 1, 1], [], []>} : vector<16x128xf32>, vector<128x128xf32>, vector<16x128xf32> -> vector<16x128xf32>
    %c0_554 = arith.constant 0 : index
    %c0_555 = arith.constant 0 : index
    %659 = vector.load %arg19[%c0_554, %c0_555] : memref<16x128xf32, #tpu.memory_space<vmem>>, vector<16x128xf32>
    tpu.vector_store %arg19[%c0_554, %c0_555], %658 {strides = array<i32>} : memref<16x128xf32, #tpu.memory_space<vmem>>, vector<16x128xf32>,
    return
  }
  func.func @transform_0(%arg0: i32) -> (i32, i32) {
    %c0_i32 = arith.constant 0 : i32
    %c0_i32_0 = arith.constant 0 : i32
    %c0_i32_1 = arith.constant 0 : i32
    return %c0_i32, %c0_i32_0 : i32, i32
  }
  func.func @transform_1(%arg0: i32) -> (i32, i32, i32) {
    %c0_i32 = arith.constant 0 : i32
    %c0_i32_0 = arith.constant 0 : i32
    %c0_i32_1 = arith.constant 0 : i32
    %c0_i32_2 = arith.constant 0 : i32
    return %c0_i32, %c0_i32_0, %c0_i32_1 : i32, i32, i32
  }
  func.func @transform_2(%arg0: i32) -> (i32, i32, i32) {
    %c0_i32 = arith.constant 0 : i32
    %c0_i32_0 = arith.constant 0 : i32
    %c0_i32_1 = arith.constant 0 : i32
    %c0_i32_2 = arith.constant 0 : i32
    return %c0_i32, %c0_i32_0, %c0_i32_1 : i32, i32, i32
  }
  func.func @transform_3(%arg0: i32) -> (i32, i32, i32) {
    %c0_i32 = arith.constant 0 : i32
    %c0_i32_0 = arith.constant 0 : i32
    %c0_i32_1 = arith.constant 0 : i32
    %c0_i32_2 = arith.constant 0 : i32
    return %c0_i32, %c0_i32_0, %c0_i32_1 : i32, i32, i32
  }
  func.func @transform_4(%arg0: i32) -> (i32, i32, i32) {
    %c0_i32 = arith.constant 0 : i32
    %c0_i32_0 = arith.constant 0 : i32
    %c0_i32_1 = arith.constant 0 : i32
    %c0_i32_2 = arith.constant 0 : i32
    return %c0_i32, %c0_i32_0, %c0_i32_1 : i32, i32, i32
  }
  func.func @transform_5(%arg0: i32) -> (i32, i32, i32) {
    %c0_i32 = arith.constant 0 : i32
    %c0_i32_0 = arith.constant 0 : i32
    %c0_i32_1 = arith.constant 0 : i32
    %c0_i32_2 = arith.constant 0 : i32
    return %c0_i32, %c0_i32_0, %c0_i32_1 : i32, i32, i32
  }
  func.func @transform_6(%arg0: i32) -> (i32, i32, i32) {
    %c0_i32 = arith.constant 0 : i32
    %c0_i32_0 = arith.constant 0 : i32
    %c0_i32_1 = arith.constant 0 : i32
    %c0_i32_2 = arith.constant 0 : i32
    return %c0_i32, %c0_i32_0, %c0_i32_1 : i32, i32, i32
  }
  func.func @transform_7(%arg0: i32) -> (i32, i32, i32) {
    %c0_i32 = arith.constant 0 : i32
    %c0_i32_0 = arith.constant 0 : i32
    %c0_i32_1 = arith.constant 0 : i32
    %c0_i32_2 = arith.constant 0 : i32
    return %c0_i32, %c0_i32_0, %c0_i32_1 : i32, i32, i32
  }
  func.func @transform_8(%arg0: i32) -> (i32, i32, i32) {
    %c0_i32 = arith.constant 0 : i32
    %c0_i32_0 = arith.constant 0 : i32
    %c0_i32_1 = arith.constant 0 : i32
    %c0_i32_2 = arith.constant 0 : i32
    return %c0_i32, %c0_i32_0, %c0_i32_1 : i32, i32, i32
  }
  func.func @transform_9(%arg0: i32) -> (i32, i32) {
    %c0_i32 = arith.constant 0 : i32
    %c0_i32_0 = arith.constant 0 : i32
    %c0_i32_1 = arith.constant 0 : i32
    return %c0_i32, %c0_i32_0 : i32, i32
  }
  func.func @transform_10(%arg0: i32) -> (i32, i32, i32) {
    %c0_i32 = arith.constant 0 : i32
    %c0_i32_0 = arith.constant 0 : i32
    %c0_i32_1 = arith.constant 0 : i32
    %c0_i32_2 = arith.constant 0 : i32
    return %c0_i32, %c0_i32_0, %c0_i32_1 : i32, i32, i32
  }
  func.func @transform_11(%arg0: i32) -> (i32, i32, i32) {
    %c0_i32 = arith.constant 0 : i32
    %c0_i32_0 = arith.constant 0 : i32
    %c0_i32_1 = arith.constant 0 : i32
    %c0_i32_2 = arith.constant 0 : i32
    return %c0_i32, %c0_i32_0, %c0_i32_1 : i32, i32, i32
  }
  func.func @transform_12(%arg0: i32) -> (i32, i32) {
    %c0_i32 = arith.constant 0 : i32
    %c0_i32_0 = arith.constant 0 : i32
    %c0_i32_1 = arith.constant 0 : i32
    return %c0_i32, %c0_i32_0 : i32, i32
  }
  func.func @transform_13(%arg0: i32) -> (i32, i32, i32) {
    %c0_i32 = arith.constant 0 : i32
    %c0_i32_0 = arith.constant 0 : i32
    %c0_i32_1 = arith.constant 0 : i32
    %c0_i32_2 = arith.constant 0 : i32
    return %c0_i32, %c0_i32_0, %c0_i32_1 : i32, i32, i32
  }
  func.func @transform_14(%arg0: i32) -> (i32, i32, i32) {
    %c0_i32 = arith.constant 0 : i32
    %c0_i32_0 = arith.constant 0 : i32
    %c0_i32_1 = arith.constant 0 : i32
    %c0_i32_2 = arith.constant 0 : i32
    return %c0_i32, %c0_i32_0, %c0_i32_1 : i32, i32, i32
  }
  func.func @transform_15(%arg0: i32) -> (i32, i32) {
    %c0_i32 = arith.constant 0 : i32
    %c0_i32_0 = arith.constant 0 : i32
    %c0_i32_1 = arith.constant 0 : i32
    return %c0_i32, %c0_i32_0 : i32, i32
  }
  func.func @transform_16(%arg0: i32) -> (i32, i32) {
    %c0_i32 = arith.constant 0 : i32
    %c0_i32_0 = arith.constant 0 : i32
    %c0_i32_1 = arith.constant 0 : i32
    return %c0_i32, %c0_i32_0 : i32, i32
  }
  func.func @transform_17(%arg0: i32) -> (i32, i32) {
    %c0_i32 = arith.constant 0 : i32
    %c0_i32_0 = arith.constant 0 : i32
    %c0_i32_1 = arith.constant 0 : i32
    return %c0_i32, %c0_i32_0 : i32, i32
  }
  func.func @transform_18(%arg0: i32) -> (i32, i32) {
    %c0_i32 = arith.constant 0 : i32
    %c0_i32_0 = arith.constant 0 : i32
    %c0_i32_1 = arith.constant 0 : i32
    return %c0_i32, %c0_i32_0 : i32, i32
  }
}

</mosaic_0001>

<llo_original>
// kernel: feature_net_forward.1
$region0: #{feature_net_forward.1}
  #allocation0 [shape = 'u32[]', space=smem, size = 0x4, offset = 0x4, fixed_abs, tag = 'smem constant byte address 0x4 - core index']
  #allocation1 [shape = 'u32[144,128]{1,0:T(1,128)}', space=vmem, size = 0x12000, scoped, tag = 'internal scratch']
  #allocation2 [shape = 'f32[18,128]{1,0:T(8,128)}', space=vmem, size = 0x3000, scoped, tag = 'scratch operand']
  #allocation3 [shape = 'f32[18,128]{1,0:T(8,128)}', space=vmem, size = 0x3000, scoped, tag = 'scratch operand']
  #allocation4 [shape = 'f32[20,128]{1,0:T(8,128)}', space=vmem, size = 0x3000, scoped, tag = 'scratch operand']
  #allocation5 [shape = 'f32[10,128]{1,0:T(8,128)}', space=vmem, size = 0x2000, scoped, tag = 'scratch operand']
  #allocation6 [shape = 'f32[10,128]{1,0:T(8,128)}', space=vmem, size = 0x2000, scoped, tag = 'scratch operand']
  #allocation7 [shape = 'f32[10,128]{1,0:T(8,128)}', space=vmem, size = 0x2000, scoped, tag = 'scratch operand']
  #allocation8 [shape = 'f32[12,128]{1,0:T(8,128)}', space=vmem, size = 0x2000, scoped, tag = 'scratch operand']
  #allocation9 [shape = 'f32[6,128]{1,0:T(8,128)}', space=vmem, size = 0x1000, scoped, tag = 'scratch operand']
  #allocation10 [shape = 'f32[6,128]{1,0:T(8,128)}', space=vmem, size = 0x1000, scoped, tag = 'scratch operand']
  #allocation11 [shape = 'f32[5,128]{1,0:T(8,128)}', space=vmem, size = 0x1000, scoped, tag = 'scratch operand']
  #allocation12 [shape = 'f32[10,256]{1,0:T(8,128)}', space=vmem, size = 0x4000, scoped, tag = 'scratch operand']
  #allocation13 [shape = 'f32[9,128]{1,0:T(8,128)}', space=vmem, size = 0x2000, scoped, tag = 'scratch operand']
  #allocation14 [shape = 'f32[18,256]{1,0:T(8,128)}', space=vmem, size = 0x6000, scoped, tag = 'scratch operand']
  %s0 = inlined_call_operand.vmem [shape: f32[18,96], index: 0, kind: input, shape index: {}]
  %s1 = inlined_call_operand.hbm [shape: f32[3,96,128], index: 1, kind: input, shape index: {}]
  %s2 = inlined_call_operand.hbm [shape: f32[3,128,128], index: 2, kind: input, shape index: {}]
  %s3 = inlined_call_operand.hbm [shape: f32[5,128,128], index: 3, kind: input, shape index: {}]
  %s4 = inlined_call_operand.hbm [shape: f32[3,128,128], index: 4, kind: input, shape index: {}]
  %s5 = inlined_call_operand.hbm [shape: f32[3,128,128], index: 5, kind: input, shape index: {}]
  %s6 = inlined_call_operand.hbm [shape: f32[5,128,128], index: 6, kind: input, shape index: {}]
  %s7 = inlined_call_operand.hbm [shape: f32[3,128,128], index: 7, kind: input, shape index: {}]
  %s8 = inlined_call_operand.hbm [shape: f32[3,128,128], index: 8, kind: input, shape index: {}]
  %s9 = inlined_call_operand.hbm [shape: f32[128,128], index: 9, kind: input, shape index: {}]
  %s10 = inlined_call_operand.vmem [shape: f32[2,128,256], index: 10, kind: input, shape index: {}]
  %s11 = inlined_call_operand.hbm [shape: f32[3,256,128], index: 11, kind: input, shape index: {}]
  %s12 = inlined_call_operand.hbm [shape: f32[128,128], index: 12, kind: input, shape index: {}]
  %s13 = inlined_call_operand.hbm [shape: f32[2,128,256], index: 13, kind: input, shape index: {}]
  %s14 = inlined_call_operand.hbm [shape: f32[3,256,128], index: 14, kind: input, shape index: {}]
  %s15 = inlined_call_operand.hbm [shape: f32[128,128], index: 15, kind: input, shape index: {}]
  %s16 = inlined_call_operand.vmem [shape: f32[4,128], index: 16, kind: output, shape index: {0}]
  %s17 = inlined_call_operand.vmem [shape: f32[8,128], index: 17, kind: output, shape index: {1}]
  %s18 = inlined_call_operand.vmem [shape: f32[16,128], index: 18, kind: output, shape index: {2}]
  %19 = xla_tuple %s16, %s17, %s18
  %s20 = sld [smem:[#allocation0]]
  $region146: #{feature_net_forward.1} parent=0
    _
  %s22 = ssub.s32 1, %s20
  %s23 = scalar_select 0, %s22, %s20
  $region1: #{feature_net_forward.1} parent=0
    #allocation15 [shape = 'u8[147456]{0}', space=vmem, size = 0x24000, scoped, tag = 'input window, operand 1, single buffered']
    #allocation16 [shape = 's32[1]{0}', space=sflag, size = 0x4, scoped, tag = 'scoped memory for feature_net_forward.1']
    #allocation17 [shape = 'u8[196608]{0}', space=vmem, size = 0x30000, scoped, tag = 'input window, operand 2, single buffered']
    #allocation18 [shape = 's32[1]{0}', space=sflag, size = 0x4, scoped, tag = 'scoped memory for feature_net_forward.1']
    #allocation19 [shape = 'u8[327680]{0}', space=vmem, size = 0x50000, scoped, tag = 'input window, operand 3, single buffered']
    #allocation20 [shape = 'u8[196608]{0}', space=vmem, size = 0x30000, scoped, tag = 'input window, operand 4, single buffered']
    #allocation21 [shape = 's32[1]{0}', space=sflag, size = 0x4, scoped, tag = 'scoped memory for feature_net_forward.1']
    #allocation22 [shape = 'u8[196608]{0}', space=vmem, size = 0x30000, scoped, tag = 'input window, operand 5, single buffered']
    #allocation23 [shape = 'u8[327680]{0}', space=vmem, size = 0x50000, scoped, tag = 'input window, operand 6, single buffered']
    #allocation24 [shape = 's32[1]{0}', space=sflag, size = 0x4, scoped, tag = 'scoped memory for feature_net_forward.1']
    #allocation25 [shape = 'u8[196608]{0}', space=vmem, size = 0x30000, scoped, tag = 'input window, operand 7, single buffered']
    #allocation26 [shape = 'u8[196608]{0}', space=vmem, size = 0x30000, scoped, tag = 'input window, operand 8, single buffered']
    #allocation27 [shape = 's32[1]{0}', space=sflag, size = 0x4, scoped, tag = 'scoped memory for feature_net_forward.1']
    #allocation28 [shape = 'u8[65536]{0}', space=vmem, size = 0x10000, scoped, tag = 'input window, operand 9, single buffered']
    #allocation29 [shape = 'u8[393216]{0}', space=vmem, size = 0x60000, scoped, tag = 'input window, operand 11, single buffered']
    #allocation30 [shape = 's32[1]{0}', space=sflag, size = 0x4, scoped, tag = 'scoped memory for feature_net_forward.1']
    #allocation31 [shape = 'u8[65536]{0}', space=vmem, size = 0x10000, scoped, tag = 'input window, operand 12, single buffered']
    #allocation32 [shape = 'u8[262144]{0}', space=vmem, size = 0x40000, scoped, tag = 'input window, operand 13, single buffered']
    #allocation33 [shape = 's32[1]{0}', space=sflag, size = 0x4, scoped, tag = 'scoped memory for feature_net_forward.1']
    #allocation34 [shape = 'u8[393216]{0}', space=vmem, size = 0x60000, scoped, tag = 'input window, operand 14, single buffered']
    #allocation35 [shape = 'u8[65536]{0}', space=vmem, size = 0x10000, scoped, tag = 'input window, operand 15, single buffered']
    #allocation36 [shape = 's32[1]{0}', space=sflag, size = 0x4, scoped, tag = 'scoped memory for feature_net_forward.1']
    %24 = vsyncpa [#allocation16], 0
    %25 = vsyncpa [#allocation18], 0
    %26 = vsyncpa [#allocation21], 0
    %27 = vsyncpa [#allocation24], 0
    %28 = vsyncpa [#allocation27], 0
    %29 = vsyncpa [#allocation30], 0
    %30 = vsyncpa [#allocation33], 0
    %31 = vsyncpa [#allocation36], 0
    // Predicated region
    $region2: #{feature_net_forward.1} parent=1 // pred_check
      _
    $region3: #{feature_net_forward.1} parent=1 // pred_check_branch
      %33 = sbr.rel (0) target = $region5
    $region4: #{feature_net_forward.1} parent=1 // pred_region
      _
    $region5: #{feature_net_forward.1} parent=1 // pred_fallthru
      _
    // Predicated region
    $region6: #{feature_net_forward.1} parent=1 // pred_check
      _
    $region7: #{feature_net_forward.1} parent=1 // pred_check_branch
      %35 = sbr.rel (0) target = $region9
    $region8: #{feature_net_forward.1} parent=1 // pred_region
      %s37 = ssub.s32 4608, 4608
      %38 = vsyncadd [#allocation16], %s37
      %s39 = sshll.u32 [#allocation15], 4
      %s40 = int_to_ptr.vmem [resolvable:$true] %s39
      %45 = dma.hbm_to_vmem [thread:$0]  %s1, 4608, %s40, [#allocation16], 128, 128, 8
    $region9: #{feature_net_forward.1} parent=1 // pred_fallthru
      _
    // Predicated region
    $region10: #{feature_net_forward.1} parent=1 // pred_check
      _
    $region11: #{feature_net_forward.1} parent=1 // pred_check_branch
      %47 = sbr.rel (0) target = $region13
    $region12: #{feature_net_forward.1} parent=1 // pred_region
      %s49 = ssub.s32 6144, 6144
      %50 = vsyncadd [#allocation18], %s49
      %s51 = sshll.u32 [#allocation17], 4
      %s52 = int_to_ptr.vmem [resolvable:$true] %s51
      %57 = dma.hbm_to_vmem [thread:$0]  %s2, 6144, %s52, [#allocation18], 128, 128, 8
    $region13: #{feature_net_forward.1} parent=1 // pred_fallthru
      _
    // Predicated region
    $region14: #{feature_net_forward.1} parent=1 // pred_check
      _
    $region15: #{feature_net_forward.1} parent=1 // pred_check_branch
      %59 = sbr.rel (0) target = $region17
    $region16: #{feature_net_forward.1} parent=1 // pred_region
      %s61 = ssub.s32 10240, 10240
      %62 = vsyncadd [#allocation18], %s61
      %s63 = sshll.u32 [#allocation19], 4
      %s64 = int_to_ptr.vmem [resolvable:$true] %s63
      %69 = dma.hbm_to_vmem [thread:$0]  %s3, 10240, %s64, [#allocation18], 128, 128, 8
    $region17: #{feature_net_forward.1} parent=1 // pred_fallthru
      _
    // Predicated region
    $region18: #{feature_net_forward.1} parent=1 // pred_check
      _
    $region19: #{feature_net_forward.1} parent=1 // pred_check_branch
      %71 = sbr.rel (0) target = $region21
    $region20: #{feature_net_forward.1} parent=1 // pred_region
      %s73 = ssub.s32 6144, 6144
      %74 = vsyncadd [#allocation21], %s73
      %s75 = sshll.u32 [#allocation20], 4
      %s76 = int_to_ptr.vmem [resolvable:$true] %s75
      %81 = dma.hbm_to_vmem [thread:$0]  %s4, 6144, %s76, [#allocation21], 128, 128, 8
    $region21: #{feature_net_forward.1} parent=1 // pred_fallthru
      _
    // Predicated region
    $region22: #{feature_net_forward.1} parent=1 // pred_check
      _
    $region23: #{feature_net_forward.1} parent=1 // pred_check_branch
      %83 = sbr.rel (0) target = $region25
    $region24: #{feature_net_forward.1} parent=1 // pred_region
      %s85 = ssub.s32 6144, 6144
      %86 = vsyncadd [#allocation21], %s85
      %s87 = sshll.u32 [#allocation22], 4
      %s88 = int_to_ptr.vmem [resolvable:$true] %s87
      %93 = dma.hbm_to_vmem [thread:$0]  %s5, 6144, %s88, [#allocation21], 128, 128, 8
    $region25: #{feature_net_forward.1} parent=1 // pred_fallthru
      _
    // Predicated region
    $region26: #{feature_net_forward.1} parent=1 // pred_check
      _
    $region27: #{feature_net_forward.1} parent=1 // pred_check_branch
      %95 = sbr.rel (0) target = $region29
    $region28: #{feature_net_forward.1} parent=1 // pred_region
      %s97 = ssub.s32 10240, 10240
      %98 = vsyncadd [#allocation24], %s97
      %s99 = sshll.u32 [#allocation23], 4
      %s100 = int_to_ptr.vmem [resolvable:$true] %s99
      %105 = dma.hbm_to_vmem [thread:$0]  %s6, 10240, %s100, [#allocation24], 128, 128, 8
    $region29: #{feature_net_forward.1} parent=1 // pred_fallthru
      _
    // Predicated region
    $region30: #{feature_net_forward.1} parent=1 // pred_check
      _
    $region31: #{feature_net_forward.1} parent=1 // pred_check_branch
      %107 = sbr.rel (0) target = $region33
    $region32: #{feature_net_forward.1} parent=1 // pred_region
      %s109 = ssub.s32 6144, 6144
      %110 = vsyncadd [#allocation24], %s109
      %s111 = sshll.u32 [#allocation25], 4
      %s112 = int_to_ptr.vmem [resolvable:$true] %s111
      %117 = dma.hbm_to_vmem [thread:$0]  %s7, 6144, %s112, [#allocation24], 128, 128, 8
    $region33: #{feature_net_forward.1} parent=1 // pred_fallthru
      _
    // Predicated region
    $region34: #{feature_net_forward.1} parent=1 // pred_check
      _
    $region35: #{feature_net_forward.1} parent=1 // pred_check_branch
      %119 = sbr.rel (0) target = $region37
    $region36: #{feature_net_forward.1} parent=1 // pred_region
      %s121 = ssub.s32 6144, 6144
      %122 = vsyncadd [#allocation27], %s121
      %s123 = sshll.u32 [#allocation26], 4
      %s124 = int_to_ptr.vmem [resolvable:$true] %s123
      %129 = dma.hbm_to_vmem [thread:$0]  %s8, 6144, %s124, [#allocation27], 128, 128, 8
    $region37: #{feature_net_forward.1} parent=1 // pred_fallthru
      _
    // Predicated region
    $region38: #{feature_net_forward.1} parent=1 // pred_check
      _
    $region39: #{feature_net_forward.1} parent=1 // pred_check_branch
      %131 = sbr.rel (0) target = $region41
    $region40: #{feature_net_forward.1} parent=1 // pred_region
      %s133 = ssub.s32 2048, 2048
      %134 = vsyncadd [#allocation27], %s133
      %s135 = sshll.u32 [#allocation28], 4
      %s136 = int_to_ptr.vmem [resolvable:$true] %s135
      %141 = dma.hbm_to_vmem [thread:$0]  %s9, 2048, %s136, [#allocation27], 128, 128, 8
    $region41: #{feature_net_forward.1} parent=1 // pred_fallthru
      _
    // Predicated region
    $region42: #{feature_net_forward.1} parent=1 // pred_check
      _
    $region43: #{feature_net_forward.1} parent=1 // pred_check_branch
      %143 = sbr.rel (0) target = $region45
    $region44: #{feature_net_forward.1} parent=1 // pred_region
      _
    $region45: #{feature_net_forward.1} parent=1 // pred_fallthru
      _
    // Predicated region
    $region46: #{feature_net_forward.1} parent=1 // pred_check
      _
    $region47: #{feature_net_forward.1} parent=1 // pred_check_branch
      %145 = sbr.rel (0) target = $region49
    $region48: #{feature_net_forward.1} parent=1 // pred_region
      %s147 = ssub.s32 12288, 12288
      %148 = vsyncadd [#allocation30], %s147
      %s149 = sshll.u32 [#allocation29], 4
      %s150 = int_to_ptr.vmem [resolvable:$true] %s149
      %155 = dma.hbm_to_vmem [thread:$0]  %s11, 12288, %s150, [#allocation30], 128, 128, 8
    $region49: #{feature_net_forward.1} parent=1 // pred_fallthru
      _
    // Predicated region
    $region50: #{feature_net_forward.1} parent=1 // pred_check
      _
    $region51: #{feature_net_forward.1} parent=1 // pred_check_branch
      %157 = sbr.rel (0) target = $region53
    $region52: #{feature_net_forward.1} parent=1 // pred_region
      %s159 = ssub.s32 2048, 2048
      %160 = vsyncadd [#allocation30], %s159
      %s161 = sshll.u32 [#allocation31], 4
      %s162 = int_to_ptr.vmem [resolvable:$true] %s161
      %167 = dma.hbm_to_vmem [thread:$0]  %s12, 2048, %s162, [#allocation30], 128, 128, 8
    $region53: #{feature_net_forward.1} parent=1 // pred_fallthru
      _
    // Predicated region
    $region54: #{feature_net_forward.1} parent=1 // pred_check
      _
    $region55: #{feature_net_forward.1} parent=1 // pred_check_branch
      %169 = sbr.rel (0) target = $region57
    $region56: #{feature_net_forward.1} parent=1 // pred_region
      %s171 = ssub.s32 8192, 8192
      %172 = vsyncadd [#allocation33], %s171
      %s173 = sshll.u32 [#allocation32], 4
      %s174 = int_to_ptr.vmem [resolvable:$true] %s173
      %179 = dma.hbm_to_vmem [thread:$0]  %s13, 8192, %s174, [#allocation33], 256, 256, 16
    $region57: #{feature_net_forward.1} parent=1 // pred_fallthru
      _
    // Predicated region
    $region58: #{feature_net_forward.1} parent=1 // pred_check
      _
    $region59: #{feature_net_forward.1} parent=1 // pred_check_branch
      %181 = sbr.rel (0) target = $region61
    $region60: #{feature_net_forward.1} parent=1 // pred_region
      %s183 = ssub.s32 12288, 12288
      %184 = vsyncadd [#allocation33], %s183
      %s185 = sshll.u32 [#allocation34], 4
      %s186 = int_to_ptr.vmem [resolvable:$true] %s185
      %191 = dma.hbm_to_vmem [thread:$0]  %s14, 12288, %s186, [#allocation33], 128, 128, 8
    $region61: #{feature_net_forward.1} parent=1 // pred_fallthru
      _
    // Predicated region
    $region62: #{feature_net_forward.1} parent=1 // pred_check
      _
    $region63: #{feature_net_forward.1} parent=1 // pred_check_branch
      %193 = sbr.rel (0) target = $region65
    $region64: #{feature_net_forward.1} parent=1 // pred_region
      %s195 = ssub.s32 2048, 2048
      %196 = vsyncadd [#allocation36], %s195
      %s197 = sshll.u32 [#allocation35], 4
      %s198 = int_to_ptr.vmem [resolvable:$true] %s197
      %203 = dma.hbm_to_vmem [thread:$0]  %s15, 2048, %s198, [#allocation36], 128, 128, 8
    $region65: #{feature_net_forward.1} parent=1 // pred_fallthru
      _
    // Predicated region
    $region66: #{feature_net_forward.1} parent=1 // pred_check
      _
    $region67: #{feature_net_forward.1} parent=1 // pred_check_branch
      %205 = sbr.rel (0) target = $region69
    $region68: #{feature_net_forward.1} parent=1 // pred_region
      %206 = dma.done [#allocation16], 4608
    $region69: #{feature_net_forward.1} parent=1 // pred_fallthru
      _
    // Predicated region
    $region70: #{feature_net_forward.1} parent=1 // pred_check
      _
    $region71: #{feature_net_forward.1} parent=1 // pred_check_branch
      %208 = sbr.rel (0) target = $region73
    $region72: #{feature_net_forward.1} parent=1 // pred_region
      %209 = dma.done [#allocation18], 6144
    $region73: #{feature_net_forward.1} parent=1 // pred_fallthru
      _
    // Predicated region
    $region74: #{feature_net_forward.1} parent=1 // pred_check
      _
    $region75: #{feature_net_forward.1} parent=1 // pred_check_branch
      %211 = sbr.rel (0) target = $region77
    $region76: #{feature_net_forward.1} parent=1 // pred_region
      %212 = dma.done [#allocation18], 10240
    $region77: #{feature_net_forward.1} parent=1 // pred_fallthru
      _
    // Predicated region
    $region78: #{feature_net_forward.1} parent=1 // pred_check
      _
    $region79: #{feature_net_forward.1} parent=1 // pred_check_branch
      %214 = sbr.rel (0) target = $region81
    $region80: #{feature_net_forward.1} parent=1 // pred_region
      %215 = dma.done [#allocation21], 6144
    $region81: #{feature_net_forward.1} parent=1 // pred_fallthru
      _
    // Predicated region
    $region82: #{feature_net_forward.1} parent=1 // pred_check
      _
    $region83: #{feature_net_forward.1} parent=1 // pred_check_branch
      %217 = sbr.rel (0) target = $region85
    $region84: #{feature_net_forward.1} parent=1 // pred_region
      %218 = dma.done [#allocation21], 6144
    $region85: #{feature_net_forward.1} parent=1 // pred_fallthru
      _
    // Predicated region
    $region86: #{feature_net_forward.1} parent=1 // pred_check
      _
    $region87: #{feature_net_forward.1} parent=1 // pred_check_branch
      %220 = sbr.rel (0) target = $region89
    $region88: #{feature_net_forward.1} parent=1 // pred_region
      %221 = dma.done [#allocation24], 10240
    $region89: #{feature_net_forward.1} parent=1 // pred_fallthru
      _
    // Predicated region
    $region90: #{feature_net_forward.1} parent=1 // pred_check
      _
    $region91: #{feature_net_forward.1} parent=1 // pred_check_branch
      %223 = sbr.rel (0) target = $region93
    $region92: #{feature_net_forward.1} parent=1 // pred_region
      %224 = dma.done [#allocation24], 6144
    $region93: #{feature_net_forward.1} parent=1 // pred_fallthru
      _
    // Predicated region
    $region94: #{feature_net_forward.1} parent=1 // pred_check
      _
    $region95: #{feature_net_forward.1} parent=1 // pred_check_branch
      %226 = sbr.rel (0) target = $region97
    $region96: #{feature_net_forward.1} parent=1 // pred_region
      %227 = dma.done [#allocation27], 6144
    $region97: #{feature_net_forward.1} parent=1 // pred_fallthru
      _
    // Predicated region
    $region98: #{feature_net_forward.1} parent=1 // pred_check
      _
    $region99: #{feature_net_forward.1} parent=1 // pred_check_branch
      %229 = sbr.rel (0) target = $region101
    $region100: #{feature_net_forward.1} parent=1 // pred_region
      %230 = dma.done [#allocation27], 2048
    $region101: #{feature_net_forward.1} parent=1 // pred_fallthru
      _
    // Predicated region
    $region102: #{feature_net_forward.1} parent=1 // pred_check
      _
    $region103: #{feature_net_forward.1} parent=1 // pred_check_branch
      %232 = sbr.rel (0) target = $region105
    $region104: #{feature_net_forward.1} parent=1 // pred_region
      %233 = dma.done [#allocation30], 12288
    $region105: #{feature_net_forward.1} parent=1 // pred_fallthru
      _
    // Predicated region
    $region106: #{feature_net_forward.1} parent=1 // pred_check
      _
    $region107: #{feature_net_forward.1} parent=1 // pred_check_branch
      %235 = sbr.rel (0) target = $region109
    $region108: #{feature_net_forward.1} parent=1 // pred_region
      %236 = dma.done [#allocation30], 2048
    $region109: #{feature_net_forward.1} parent=1 // pred_fallthru
      _
    // Predicated region
    $region110: #{feature_net_forward.1} parent=1 // pred_check
      _
    $region111: #{feature_net_forward.1} parent=1 // pred_check_branch
      %238 = sbr.rel (0) target = $region113
    $region112: #{feature_net_forward.1} parent=1 // pred_region
      %239 = dma.done [#allocation33], 8192
    $region113: #{feature_net_forward.1} parent=1 // pred_fallthru
      _
    // Predicated region
    $region114: #{feature_net_forward.1} parent=1 // pred_check
      _
    $region115: #{feature_net_forward.1} parent=1 // pred_check_branch
      %241 = sbr.rel (0) target = $region117
    $region116: #{feature_net_forward.1} parent=1 // pred_region
      %242 = dma.done [#allocation33], 12288
    $region117: #{feature_net_forward.1} parent=1 // pred_fallthru
      _
    // Predicated region
    $region118: #{feature_net_forward.1} parent=1 // pred_check
      _
    $region119: #{feature_net_forward.1} parent=1 // pred_check_branch
      %244 = sbr.rel (0) target = $region121
    $region120: #{feature_net_forward.1} parent=1 // pred_region
      %245 = dma.done [#allocation36], 2048
    $region121: #{feature_net_forward.1} parent=1 // pred_fallthru
      _
    %246 = vst [vmem:[#allocation2] sm:$0xff] 0.0
    %247 = vst [vmem:[#allocation2 + $0x8] sm:$0xff] 0.0
    %248 = vst [vmem:[#allocation2 + $0x10] sm:$0x3] 0.0
    %249 = vst [vmem:[#allocation3] sm:$0xff] 0.0
    %250 = vst [vmem:[#allocation3 + $0x8] sm:$0xff] 0.0
    %251 = vst [vmem:[#allocation3 + $0x10] sm:$0x3] 0.0
    %252 = vst [vmem:[#allocation4] sm:$0xff] 0.0
    %253 = vst [vmem:[#allocation4 + $0x8] sm:$0xff] 0.0
    %254 = vst [vmem:[#allocation4 + $0x10] sm:$0xf] 0.0
    %255 = vst [vmem:[#allocation5] sm:$0xff] 0.0
    %256 = vst [vmem:[#allocation5 + $0x8] sm:$0x3] 0.0
    %257 = vst [vmem:[#allocation6] sm:$0xff] 0.0
    %258 = vst [vmem:[#allocation6 + $0x8] sm:$0x3] 0.0
    %259 = vst [vmem:[#allocation7] sm:$0xff] 0.0
    %260 = vst [vmem:[#allocation7 + $0x8] sm:$0x3] 0.0
    %261 = vst [vmem:[#allocation8] sm:$0xff] 0.0
    %262 = vst [vmem:[#allocation8 + $0x8] sm:$0xf] 0.0
    %263 = vst [vmem:[#allocation9] sm:$0x3f] 0.0
    %264 = vst [vmem:[#allocation10] sm:$0x3f] 0.0
    %265 = vst [vmem:[#allocation11] sm:$0x1f] 0.0
    %266 = vst [vmem:[#allocation12] sm:$0xff] 0.0
    %267 = vst [vmem:[#allocation12 + $0x8] sm:$0xff] 0.0
    %268 = vst [vmem:[#allocation12 + $0x10] sm:$0x3] 0.0
    %269 = vst [vmem:[#allocation12 + $0x18] sm:$0x3] 0.0
    %270 = vst [vmem:[#allocation13] sm:$0xff] 0.0
    %271 = vst [vmem:[#allocation13 + $0x8] sm:$0x1] 0.0
    %272 = vst [vmem:[#allocation14] sm:$0xff] 0.0
    %273 = vst [vmem:[#allocation14 + $0x8] sm:$0xff] 0.0
    %274 = vst [vmem:[#allocation14 + $0x10] sm:$0xff] 0.0
    %275 = vst [vmem:[#allocation14 + $0x18] sm:$0xff] 0.0
    %276 = vst [vmem:[#allocation14 + $0x20] sm:$0x3] 0.0
    %277 = vst [vmem:[#allocation14 + $0x28] sm:$0x3] 0.0
    %v278 = vlaneseq
    %v279 = vshrl.u32 %v278, 7
    %v280 = vadd.s32 %v279, 8
    %v281 = vadd.s32 %v279, 16
    %v282 = vadd.s32 %v279, 24
    %v283 = vadd.s32 %v279, 32
    %v284 = vadd.s32 %v279, 40
    %v285 = vadd.s32 %v279, 48
    %v286 = vadd.s32 %v279, 56
    %v287 = vadd.s32 %v279, 64
    %v288 = vadd.s32 %v279, 72
    %v289 = vadd.s32 %v279, 80
    %v290 = vadd.s32 %v279, 88
    %v291 = vadd.s32 %v279, 96
    %v292 = vadd.s32 %v279, 104
    %v293 = vadd.s32 %v279, 112
    %v294 = vadd.s32 %v279, 120
    %v295 = vlaneseq
    %v296 = vand.u32 %v295, 127
    %v297 = vand.u32 %v279, 3
    %v298 = vand.u32 %v280, 3
    %v299 = vand.u32 %v281, 3
    %v300 = vand.u32 %v282, 3
    %v301 = vand.u32 %v283, 3
    %v302 = vand.u32 %v284, 3
    %v303 = vand.u32 %v285, 3
    %v304 = vand.u32 %v286, 3
    %v305 = vand.u32 %v287, 3
    %v306 = vand.u32 %v288, 3
    %v307 = vand.u32 %v289, 3
    %v308 = vand.u32 %v290, 3
    %v309 = vand.u32 %v291, 3
    %v310 = vand.u32 %v292, 3
    %v311 = vand.u32 %v293, 3
    %v312 = vand.u32 %v294, 3
    %v313 = vand.u32 %v296, 3
    %vm314 = vcmp.eq.s32.totalorder %v297, %v313
    %vm315 = vcmp.eq.s32.totalorder %v298, %v313
    %vm316 = vcmp.eq.s32.totalorder %v299, %v313
    %vm317 = vcmp.eq.s32.totalorder %v300, %v313
    %vm318 = vcmp.eq.s32.totalorder %v301, %v313
    %vm319 = vcmp.eq.s32.totalorder %v302, %v313
    %vm320 = vcmp.eq.s32.totalorder %v303, %v313
    %vm321 = vcmp.eq.s32.totalorder %v304, %v313
    %vm322 = vcmp.eq.s32.totalorder %v305, %v313
    %vm323 = vcmp.eq.s32.totalorder %v306, %v313
    %vm324 = vcmp.eq.s32.totalorder %v307, %v313
    %vm325 = vcmp.eq.s32.totalorder %v308, %v313
    %vm326 = vcmp.eq.s32.totalorder %v309, %v313
    %vm327 = vcmp.eq.s32.totalorder %v310, %v313
    %vm328 = vcmp.eq.s32.totalorder %v311, %v313
    %vm329 = vcmp.eq.s32.totalorder %v312, %v313
    %v330 = vsel %vm314, 1.0, 0.0
    %v331 = vsel %vm315, 1.0, 0.0
    %v332 = vsel %vm316, 1.0, 0.0
    %v333 = vsel %vm317, 1.0, 0.0
    %v334 = vsel %vm318, 1.0, 0.0
    %v335 = vsel %vm319, 1.0, 0.0
    %v336 = vsel %vm320, 1.0, 0.0
    %v337 = vsel %vm321, 1.0, 0.0
    %v338 = vsel %vm322, 1.0, 0.0
    %v339 = vsel %vm323, 1.0, 0.0
    %v340 = vsel %vm324, 1.0, 0.0
    %v341 = vsel %vm325, 1.0, 0.0
    %v342 = vsel %vm326, 1.0, 0.0
    %v343 = vsel %vm327, 1.0, 0.0
    %v344 = vsel %vm328, 1.0, 0.0
    %v345 = vsel %vm329, 1.0, 0.0
    %v346 = vand.u32 %v279, 7
    %v347 = vand.u32 %v280, 7
    %v348 = vand.u32 %v281, 7
    %v349 = vand.u32 %v282, 7
    %v350 = vand.u32 %v283, 7
    %v351 = vand.u32 %v284, 7
    %v352 = vand.u32 %v285, 7
    %v353 = vand.u32 %v286, 7
    %v354 = vand.u32 %v287, 7
    %v355 = vand.u32 %v288, 7
    %v356 = vand.u32 %v289, 7
    %v357 = vand.u32 %v290, 7
    %v358 = vand.u32 %v291, 7
    %v359 = vand.u32 %v292, 7
    %v360 = vand.u32 %v293, 7
    %v361 = vand.u32 %v294, 7
    %v362 = vand.u32 %v296, 7
    %vm363 = vcmp.eq.s32.totalorder %v346, %v362
    %vm364 = vcmp.eq.s32.totalorder %v347, %v362
    %vm365 = vcmp.eq.s32.totalorder %v348, %v362
    %vm366 = vcmp.eq.s32.totalorder %v349, %v362
    %vm367 = vcmp.eq.s32.totalorder %v350, %v362
    %vm368 = vcmp.eq.s32.totalorder %v351, %v362
    %vm369 = vcmp.eq.s32.totalorder %v352, %v362
    %vm370 = vcmp.eq.s32.totalorder %v353, %v362
    %vm371 = vcmp.eq.s32.totalorder %v354, %v362
    %vm372 = vcmp.eq.s32.totalorder %v355, %v362
    %vm373 = vcmp.eq.s32.totalorder %v356, %v362
    %vm374 = vcmp.eq.s32.totalorder %v357, %v362
    %vm375 = vcmp.eq.s32.totalorder %v358, %v362
    %vm376 = vcmp.eq.s32.totalorder %v359, %v362
    %vm377 = vcmp.eq.s32.totalorder %v360, %v362
    %vm378 = vcmp.eq.s32.totalorder %v361, %v362
    %v379 = vsel %vm363, 1.0, 0.0
    %v380 = vsel %vm364, 1.0, 0.0
    %v381 = vsel %vm365, 1.0, 0.0
    %v382 = vsel %vm366, 1.0, 0.0
    %v383 = vsel %vm367, 1.0, 0.0
    %v384 = vsel %vm368, 1.0, 0.0
    %v385 = vsel %vm369, 1.0, 0.0
    %v386 = vsel %vm370, 1.0, 0.0
    %v387 = vsel %vm371, 1.0, 0.0
    %v388 = vsel %vm372, 1.0, 0.0
    %v389 = vsel %vm373, 1.0, 0.0
    %v390 = vsel %vm374, 1.0, 0.0
    %v391 = vsel %vm375, 1.0, 0.0
    %v392 = vsel %vm376, 1.0, 0.0
    %v393 = vsel %vm377, 1.0, 0.0
    %v394 = vsel %vm378, 1.0, 0.0
    %v395 = vand.u32 %v279, 15
    %v396 = vand.u32 %v280, 15
    %v397 = vand.u32 %v281, 15
    %v398 = vand.u32 %v282, 15
    %v399 = vand.u32 %v283, 15
    %v400 = vand.u32 %v284, 15
    %v401 = vand.u32 %v285, 15
    %v402 = vand.u32 %v286, 15
    %v403 = vand.u32 %v287, 15
    %v404 = vand.u32 %v288, 15
    %v405 = vand.u32 %v289, 15
    %v406 = vand.u32 %v290, 15
    %v407 = vand.u32 %v291, 15
    %v408 = vand.u32 %v292, 15
    %v409 = vand.u32 %v293, 15
    %v410 = vand.u32 %v294, 15
    %v411 = vand.u32 %v296, 15
    %vm412 = vcmp.eq.s32.totalorder %v395, %v411
    %vm413 = vcmp.eq.s32.totalorder %v396, %v411
    %vm414 = vcmp.eq.s32.totalorder %v397, %v411
    %vm415 = vcmp.eq.s32.totalorder %v398, %v411
    %vm416 = vcmp.eq.s32.totalorder %v399, %v411
    %vm417 = vcmp.eq.s32.totalorder %v400, %v411
    %vm418 = vcmp.eq.s32.totalorder %v401, %v411
    %vm419 = vcmp.eq.s32.totalorder %v402, %v411
    %vm420 = vcmp.eq.s32.totalorder %v403, %v411
    %vm421 = vcmp.eq.s32.totalorder %v404, %v411
    %vm422 = vcmp.eq.s32.totalorder %v405, %v411
    %vm423 = vcmp.eq.s32.totalorder %v406, %v411
    %vm424 = vcmp.eq.s32.totalorder %v407, %v411
    %vm425 = vcmp.eq.s32.totalorder %v408, %v411
    %vm426 = vcmp.eq.s32.totalorder %v409, %v411
    %vm427 = vcmp.eq.s32.totalorder %v410, %v411
    %v428 = vsel %vm412, 1.0, 0.0
    %v429 = vsel %vm413, 1.0, 0.0
    %v430 = vsel %vm414, 1.0, 0.0
    %v431 = vsel %vm415, 1.0, 0.0
    %v432 = vsel %vm416, 1.0, 0.0
    %v433 = vsel %vm417, 1.0, 0.0
    %v434 = vsel %vm418, 1.0, 0.0
    %v435 = vsel %vm419, 1.0, 0.0
    %v436 = vsel %vm420, 1.0, 0.0
    %v437 = vsel %vm421, 1.0, 0.0
    %v438 = vsel %vm422, 1.0, 0.0
    %v439 = vsel %vm423, 1.0, 0.0
    %v440 = vsel %vm424, 1.0, 0.0
    %v441 = vsel %vm425, 1.0, 0.0
    %v442 = vsel %vm426, 1.0, 0.0
    %v443 = vsel %vm427, 1.0, 0.0
    %v444 = vadd.s32 %v279, 128
    %v445 = vadd.s32 %v279, 136
    %v446 = vadd.s32 %v279, 144
    %v447 = vadd.s32 %v279, 152
    %v448 = vadd.s32 %v279, 160
    %v449 = vadd.s32 %v279, 168
    %v450 = vadd.s32 %v279, 176
    %v451 = vadd.s32 %v279, 184
    %v452 = vadd.s32 %v279, 192
    %v453 = vadd.s32 %v279, 200
    %v454 = vadd.s32 %v279, 208
    %v455 = vadd.s32 %v279, 216
    %v456 = vadd.s32 %v279, 224
    %v457 = vadd.s32 %v279, 232
    %v458 = vadd.s32 %v279, 240
    %v459 = vadd.s32 %v279, 248
    %v460 = vadd.s32 %v296, 128
    %v461 = vand.u32 %v444, 7
    %v462 = vand.u32 %v445, 7
    %v463 = vand.u32 %v446, 7
    %v464 = vand.u32 %v447, 7
    %v465 = vand.u32 %v448, 7
    %v466 = vand.u32 %v449, 7
    %v467 = vand.u32 %v450, 7
    %v468 = vand.u32 %v451, 7
    %v469 = vand.u32 %v452, 7
    %v470 = vand.u32 %v453, 7
    %v471 = vand.u32 %v454, 7
    %v472 = vand.u32 %v455, 7
    %v473 = vand.u32 %v456, 7
    %v474 = vand.u32 %v457, 7
    %v475 = vand.u32 %v458, 7
    %v476 = vand.u32 %v459, 7
    %v477 = vand.u32 %v460, 7
    %vm478 = vcmp.eq.s32.totalorder %v346, %v477
    %vm479 = vcmp.eq.s32.totalorder %v347, %v477
    %vm480 = vcmp.eq.s32.totalorder %v348, %v477
    %vm481 = vcmp.eq.s32.totalorder %v349, %v477
    %vm482 = vcmp.eq.s32.totalorder %v350, %v477
    %vm483 = vcmp.eq.s32.totalorder %v351, %v477
    %vm484 = vcmp.eq.s32.totalorder %v352, %v477
    %vm485 = vcmp.eq.s32.totalorder %v353, %v477
    %vm486 = vcmp.eq.s32.totalorder %v354, %v477
    %vm487 = vcmp.eq.s32.totalorder %v355, %v477
    %vm488 = vcmp.eq.s32.totalorder %v356, %v477
    %vm489 = vcmp.eq.s32.totalorder %v357, %v477
    %vm490 = vcmp.eq.s32.totalorder %v358, %v477
    %vm491 = vcmp.eq.s32.totalorder %v359, %v477
    %vm492 = vcmp.eq.s32.totalorder %v360, %v477
    %vm493 = vcmp.eq.s32.totalorder %v361, %v477
    %vm494 = vcmp.eq.s32.totalorder %v461, %v362
    %vm495 = vcmp.eq.s32.totalorder %v461, %v477
    %vm496 = vcmp.eq.s32.totalorder %v462, %v362
    %vm497 = vcmp.eq.s32.totalorder %v462, %v477
    %vm498 = vcmp.eq.s32.totalorder %v463, %v362
    %vm499 = vcmp.eq.s32.totalorder %v463, %v477
    %vm500 = vcmp.eq.s32.totalorder %v464, %v362
    %vm501 = vcmp.eq.s32.totalorder %v464, %v477
    %vm502 = vcmp.eq.s32.totalorder %v465, %v362
    %vm503 = vcmp.eq.s32.totalorder %v465, %v477
    %vm504 = vcmp.eq.s32.totalorder %v466, %v362
    %vm505 = vcmp.eq.s32.totalorder %v466, %v477
    %vm506 = vcmp.eq.s32.totalorder %v467, %v362
    %vm507 = vcmp.eq.s32.totalorder %v467, %v477
    %vm508 = vcmp.eq.s32.totalorder %v468, %v362
    %vm509 = vcmp.eq.s32.totalorder %v468, %v477
    %vm510 = vcmp.eq.s32.totalorder %v469, %v362
    %vm511 = vcmp.eq.s32.totalorder %v469, %v477
    %vm512 = vcmp.eq.s32.totalorder %v470, %v362
    %vm513 = vcmp.eq.s32.totalorder %v470, %v477
    %vm514 = vcmp.eq.s32.totalorder %v471, %v362
    %vm515 = vcmp.eq.s32.totalorder %v471, %v477
    %vm516 = vcmp.eq.s32.totalorder %v472, %v362
    %vm517 = vcmp.eq.s32.totalorder %v472, %v477
    %vm518 = vcmp.eq.s32.totalorder %v473, %v362
    %vm519 = vcmp.eq.s32.totalorder %v473, %v477
    %vm520 = vcmp.eq.s32.totalorder %v474, %v362
    %vm521 = vcmp.eq.s32.totalorder %v474, %v477
    %vm522 = vcmp.eq.s32.totalorder %v475, %v362
    %vm523 = vcmp.eq.s32.totalorder %v475, %v477
    %vm524 = vcmp.eq.s32.totalorder %v476, %v362
    %vm525 = vcmp.eq.s32.totalorder %v476, %v477
    %v526 = vsel %vm478, 1.0, 0.0
    %v527 = vsel %vm479, 1.0, 0.0
    %v528 = vsel %vm480, 1.0, 0.0
    %v529 = vsel %vm481, 1.0, 0.0
    %v530 = vsel %vm482, 1.0, 0.0
    %v531 = vsel %vm483, 1.0, 0.0
    %v532 = vsel %vm484, 1.0, 0.0
    %v533 = vsel %vm485, 1.0, 0.0
    %v534 = vsel %vm486, 1.0, 0.0
    %v535 = vsel %vm487, 1.0, 0.0
    %v536 = vsel %vm488, 1.0, 0.0
    %v537 = vsel %vm489, 1.0, 0.0
    %v538 = vsel %vm490, 1.0, 0.0
    %v539 = vsel %vm491, 1.0, 0.0
    %v540 = vsel %vm492, 1.0, 0.0
    %v541 = vsel %vm493, 1.0, 0.0
    %v542 = vsel %vm494, 1.0, 0.0
    %v543 = vsel %vm495, 1.0, 0.0
    %v544 = vsel %vm496, 1.0, 0.0
    %v545 = vsel %vm497, 1.0, 0.0
    %v546 = vsel %vm498, 1.0, 0.0
    %v547 = vsel %vm499, 1.0, 0.0
    %v548 = vsel %vm500, 1.0, 0.0
    %v549 = vsel %vm501, 1.0, 0.0
    %v550 = vsel %vm502, 1.0, 0.0
    %v551 = vsel %vm503, 1.0, 0.0
    %v552 = vsel %vm504, 1.0, 0.0
    %v553 = vsel %vm505, 1.0, 0.0
    %v554 = vsel %vm506, 1.0, 0.0
    %v555 = vsel %vm507, 1.0, 0.0
    %v556 = vsel %vm508, 1.0, 0.0
    %v557 = vsel %vm509, 1.0, 0.0
    %v558 = vsel %vm510, 1.0, 0.0
    %v559 = vsel %vm511, 1.0, 0.0
    %v560 = vsel %vm512, 1.0, 0.0
    %v561 = vsel %vm513, 1.0, 0.0
    %v562 = vsel %vm514, 1.0, 0.0
    %v563 = vsel %vm515, 1.0, 0.0
    %v564 = vsel %vm516, 1.0, 0.0
    %v565 = vsel %vm517, 1.0, 0.0
    %v566 = vsel %vm518, 1.0, 0.0
    %v567 = vsel %vm519, 1.0, 0.0
    %v568 = vsel %vm520, 1.0, 0.0
    %v569 = vsel %vm521, 1.0, 0.0
    %v570 = vsel %vm522, 1.0, 0.0
    %v571 = vsel %vm523, 1.0, 0.0
    %v572 = vsel %vm524, 1.0, 0.0
    %v573 = vsel %vm525, 1.0, 0.0
    %v574 = vand.u32 %v444, 3
    %v575 = vand.u32 %v445, 3
    %v576 = vand.u32 %v446, 3
    %v577 = vand.u32 %v447, 3
    %v578 = vand.u32 %v448, 3
    %v579 = vand.u32 %v449, 3
    %v580 = vand.u32 %v450, 3
    %v581 = vand.u32 %v451, 3
    %v582 = vand.u32 %v452, 3
    %v583 = vand.u32 %v453, 3
    %v584 = vand.u32 %v454, 3
    %v585 = vand.u32 %v455, 3
    %v586 = vand.u32 %v456, 3
    %v587 = vand.u32 %v457, 3
    %v588 = vand.u32 %v458, 3
    %v589 = vand.u32 %v459, 3
    %v590 = vand.u32 %v460, 3
    %vm591 = vcmp.eq.s32.totalorder %v297, %v590
    %vm592 = vcmp.eq.s32.totalorder %v298, %v590
    %vm593 = vcmp.eq.s32.totalorder %v299, %v590
    %vm594 = vcmp.eq.s32.totalorder %v300, %v590
    %vm595 = vcmp.eq.s32.totalorder %v301, %v590
    %vm596 = vcmp.eq.s32.totalorder %v302, %v590
    %vm597 = vcmp.eq.s32.totalorder %v303, %v590
    %vm598 = vcmp.eq.s32.totalorder %v304, %v590
    %vm599 = vcmp.eq.s32.totalorder %v305, %v590
    %vm600 = vcmp.eq.s32.totalorder %v306, %v590
    %vm601 = vcmp.eq.s32.totalorder %v307, %v590
    %vm602 = vcmp.eq.s32.totalorder %v308, %v590
    %vm603 = vcmp.eq.s32.totalorder %v309, %v590
    %vm604 = vcmp.eq.s32.totalorder %v310, %v590
    %vm605 = vcmp.eq.s32.totalorder %v311, %v590
    %vm606 = vcmp.eq.s32.totalorder %v312, %v590
    %vm607 = vcmp.eq.s32.totalorder %v574, %v313
    %vm608 = vcmp.eq.s32.totalorder %v574, %v590
    %vm609 = vcmp.eq.s32.totalorder %v575, %v313
    %vm610 = vcmp.eq.s32.totalorder %v575, %v590
    %vm611 = vcmp.eq.s32.totalorder %v576, %v313
    %vm612 = vcmp.eq.s32.totalorder %v576, %v590
    %vm613 = vcmp.eq.s32.totalorder %v577, %v313
    %vm614 = vcmp.eq.s32.totalorder %v577, %v590
    %vm615 = vcmp.eq.s32.totalorder %v578, %v313
    %vm616 = vcmp.eq.s32.totalorder %v578, %v590
    %vm617 = vcmp.eq.s32.totalorder %v579, %v313
    %vm618 = vcmp.eq.s32.totalorder %v579, %v590
    %vm619 = vcmp.eq.s32.totalorder %v580, %v313
    %vm620 = vcmp.eq.s32.totalorder %v580, %v590
    %vm621 = vcmp.eq.s32.totalorder %v581, %v313
    %vm622 = vcmp.eq.s32.totalorder %v581, %v590
    %vm623 = vcmp.eq.s32.totalorder %v582, %v313
    %vm624 = vcmp.eq.s32.totalorder %v582, %v590
    %vm625 = vcmp.eq.s32.totalorder %v583, %v313
    %vm626 = vcmp.eq.s32.totalorder %v583, %v590
    %vm627 = vcmp.eq.s32.totalorder %v584, %v313
    %vm628 = vcmp.eq.s32.totalorder %v584, %v590
    %vm629 = vcmp.eq.s32.totalorder %v585, %v313
    %vm630 = vcmp.eq.s32.totalorder %v585, %v590
    %vm631 = vcmp.eq.s32.totalorder %v586, %v313
    %vm632 = vcmp.eq.s32.totalorder %v586, %v590
    %vm633 = vcmp.eq.s32.totalorder %v587, %v313
    %vm634 = vcmp.eq.s32.totalorder %v587, %v590
    %vm635 = vcmp.eq.s32.totalorder %v588, %v313
    %vm636 = vcmp.eq.s32.totalorder %v588, %v590
    %vm637 = vcmp.eq.s32.totalorder %v589, %v313
    %vm638 = vcmp.eq.s32.totalorder %v589, %v590
    %v639 = vsel %vm591, 1.0, 0.0
    %v640 = vsel %vm592, 1.0, 0.0
    %v641 = vsel %vm593, 1.0, 0.0
    %v642 = vsel %vm594, 1.0, 0.0
    %v643 = vsel %vm595, 1.0, 0.0
    %v644 = vsel %vm596, 1.0, 0.0
    %v645 = vsel %vm597, 1.0, 0.0
    %v646 = vsel %vm598, 1.0, 0.0
    %v647 = vsel %vm599, 1.0, 0.0
    %v648 = vsel %vm600, 1.0, 0.0
    %v649 = vsel %vm601, 1.0, 0.0
    %v650 = vsel %vm602, 1.0, 0.0
    %v651 = vsel %vm603, 1.0, 0.0
    %v652 = vsel %vm604, 1.0, 0.0
    %v653 = vsel %vm605, 1.0, 0.0
    %v654 = vsel %vm606, 1.0, 0.0
    %v655 = vsel %vm607, 1.0, 0.0
    %v656 = vsel %vm608, 1.0, 0.0
    %v657 = vsel %vm609, 1.0, 0.0
    %v658 = vsel %vm610, 1.0, 0.0
    %v659 = vsel %vm611, 1.0, 0.0
    %v660 = vsel %vm612, 1.0, 0.0
    %v661 = vsel %vm613, 1.0, 0.0
    %v662 = vsel %vm614, 1.0, 0.0
    %v663 = vsel %vm615, 1.0, 0.0
    %v664 = vsel %vm616, 1.0, 0.0
    %v665 = vsel %vm617, 1.0, 0.0
    %v666 = vsel %vm618, 1.0, 0.0
    %v667 = vsel %vm619, 1.0, 0.0
    %v668 = vsel %vm620, 1.0, 0.0
    %v669 = vsel %vm621, 1.0, 0.0
    %v670 = vsel %vm622, 1.0, 0.0
    %v671 = vsel %vm623, 1.0, 0.0
    %v672 = vsel %vm624, 1.0, 0.0
    %v673 = vsel %vm625, 1.0, 0.0
    %v674 = vsel %vm626, 1.0, 0.0
    %v675 = vsel %vm627, 1.0, 0.0
    %v676 = vsel %vm628, 1.0, 0.0
    %v677 = vsel %vm629, 1.0, 0.0
    %v678 = vsel %vm630, 1.0, 0.0
    %v679 = vsel %vm631, 1.0, 0.0
    %v680 = vsel %vm632, 1.0, 0.0
    %v681 = vsel %vm633, 1.0, 0.0
    %v682 = vsel %vm634, 1.0, 0.0
    %v683 = vsel %vm635, 1.0, 0.0
    %v684 = vsel %vm636, 1.0, 0.0
    %v685 = vsel %vm637, 1.0, 0.0
    %v686 = vsel %vm638, 1.0, 0.0
    %v687 = vld [vmem:[%s0] sm:$0xff]
    %v688 = vld [vmem:[%s0 + $0x8] sm:$0xff]
    %v689 = vld [vmem:[#allocation15] sm:$0xff]
    %v690 = vld [vmem:[#allocation15 + $0x8] sm:$0xff]
    %v691 = vld [vmem:[#allocation15 + $0x10] sm:$0xff]
    %v692 = vld [vmem:[#allocation15 + $0x18] sm:$0xff]
    %v693 = vld [vmem:[#allocation15 + $0x20] sm:$0xff]
    %v694 = vld [vmem:[#allocation15 + $0x28] sm:$0xff]
    %v695 = vld [vmem:[#allocation15 + $0x30] sm:$0xff]
    %v696 = vld [vmem:[#allocation15 + $0x38] sm:$0xff]
    %v697 = vld [vmem:[#allocation15 + $0x40] sm:$0xff]
    %v698 = vld [vmem:[#allocation15 + $0x48] sm:$0xff]
    %v699 = vld [vmem:[#allocation15 + $0x50] sm:$0xff]
    %v700 = vld [vmem:[#allocation15 + $0x58] sm:$0xff]
    %v701 = vld [vmem:[%s0 + $0x1] sm:$0xff]
    %v702 = vld [vmem:[%s0 + $0x9] sm:$0xff]
    %s703 = scalar_lea.vmem [#allocation15], 96
    %v704 = vld [vmem:[%s703] sm:$0xff]
    %v705 = vld [vmem:[%s703 + $0x8] sm:$0xff]
    %v706 = vld [vmem:[%s703 + $0x10] sm:$0xff]
    %v707 = vld [vmem:[%s703 + $0x18] sm:$0xff]
    %v708 = vld [vmem:[%s703 + $0x20] sm:$0xff]
    %v709 = vld [vmem:[%s703 + $0x28] sm:$0xff]
    %v710 = vld [vmem:[%s703 + $0x30] sm:$0xff]
    %v711 = vld [vmem:[%s703 + $0x38] sm:$0xff]
    %v712 = vld [vmem:[%s703 + $0x40] sm:$0xff]
    %v713 = vld [vmem:[%s703 + $0x48] sm:$0xff]
    %v714 = vld [vmem:[%s703 + $0x50] sm:$0xff]
    %v715 = vld [vmem:[%s703 + $0x58] sm:$0xff]
    %vm716 = vcmask 785408
    %v718 = vsel %vm716, %v701, 0
    %v721 = vsel %vm716, %v702, 0
    %723 = vmatprep.subr.mxu0 0.0
    %724 = vmatpush1.msra.mxu0 0.0
    %725 = vmatprep.subr.mxu0 0.0
    %726 = vmatpush1.msra.mxu0 0.0
    %727 = vmatprep.subr.mxu0 0.0
    %728 = vmatpush1.msra.mxu0 0.0
    %729 = vmatprep.subr.mxu0 0.0
    %730 = vmatpush1.msra.mxu0 0.0
    %731 = vmatprep.subr.mxu0 0.0
    %732 = vmatpush1.msra.mxu0 %v715
    %733 = vmatprep.subr.mxu0 0.0
    %734 = vmatpush1.msra.mxu0 %v714
    %735 = vmatprep.subr.mxu0 0.0
    %736 = vmatpush1.msra.mxu0 %v713
    %737 = vmatprep.subr.mxu0 0.0
    %738 = vmatpush1.msra.mxu0 %v712
    %739 = vmatprep.subr.mxu0 0.0
    %740 = vmatpush1.msra.mxu0 %v711
    %741 = vmatprep.subr.mxu0 0.0
    %742 = vmatpush1.msra.mxu0 %v710
    %743 = vmatprep.subr.mxu0 0.0
    %744 = vmatpush1.msra.mxu0 %v709
    %745 = vmatprep.subr.mxu0 0.0
    %746 = vmatpush1.msra.mxu0 %v708
    %747 = vmatprep.subr.mxu0 0.0
    %748 = vmatpush1.msra.mxu0 %v707
    %749 = vmatprep.subr.mxu0 0.0
    %750 = vmatpush1.msra.mxu0 %v706
    %751 = vmatprep.subr.mxu0 0.0
    %752 = vmatpush1.msra.mxu0 %v705
    %753 = vmatprep.subr.mxu0 0.0
    %754 = vmatpush1.msra.mxu0 %v704
    %755 = vmatprep.subr.mxu0 0.0
    %756 = vmatpush2.msra.mxu0 0.0
    %757 = vmatprep.subr.mxu0 0.0
    %758 = vmatpush2.msra.mxu0 0.0
    %759 = vmatprep.subr.mxu0 0.0
    %760 = vmatpush2.msra.mxu0 0.0
    %761 = vmatprep.subr.mxu0 0.0
    %762 = vmatpush2.msra.mxu0 0.0
    %763 = vmatprep.subr.mxu0 0.0
    %764 = vmatpush2.msra.mxu0 0.0
    %765 = vmatprep.subr.mxu0 0.0
    %766 = vmatpush2.msra.mxu0 0.0
    %767 = vmatprep.subr.mxu0 0.0
    %768 = vmatpush2.msra.mxu0 0.0
    %769 = vmatprep.subr.mxu0 0.0
    %770 = vmatpush2.msra.mxu0 0.0
    %771 = vmatprep.subr.mxu0 0.0
    %772 = vmatpush2.msra.mxu0 0.0
    %773 = vmatprep.subr.mxu0 0.0
    %774 = vmatpush2.msra.mxu0 0.0
    %775 = vmatprep.subr.mxu0 0.0
    %776 = vmatpush2.msra.mxu0 0.0
    %777 = vmatprep.subr.mxu0 0.0
    %778 = vmatpush2.msra.mxu0 0.0
    %779 = vmatprep.subr.mxu0 0.0
    %780 = vmatpush2.msra.mxu0 0.0
    %781 = vmatprep.subr.mxu0 0.0
    %782 = vmatpush2.msra.mxu0 0.0
    %783 = vmatprep.subr.mxu0 0.0
    %784 = vmatpush2.msra.mxu0 0.0
    %785 = vmatprep.subr.mxu0 0.0
    %786 = vmatpush2.msra.mxu0 0.0
    %787 = vmatprep.mubr.f32.mxu0 0.0
    %788 = vmatmul.mubr.f32.gmra.mxu0 %v718
    %v789 = vpop.f32.mrf.mxu0
    %v790 = vadd.f32 0.0, %v789
    %v791 = vpop.f32.mrf.mxu0
    %792 = vmatprep.mubr.f32.mxu0 0.0
    %793 = vmatmul.mubr.f32.gmra.mxu0 %v721
    %v794 = vpop.f32.mrf.mxu0
    %v795 = vadd.f32 0.0, %v794
    %v796 = vpop.f32.mrf.mxu0
    %797 = vdwg.mxu0
    %v799 = vsel %vm716, %v687, 0
    %v802 = vsel %vm716, %v688, 0
    %804 = vmatprep.subr.mxu0 0.0
    %805 = vmatpush1.msra.mxu0 0.0
    %806 = vmatprep.subr.mxu0 0.0
    %807 = vmatpush1.msra.mxu0 0.0
    %808 = vmatprep.subr.mxu0 0.0
    %809 = vmatpush1.msra.mxu0 0.0
    %810 = vmatprep.subr.mxu0 0.0
    %811 = vmatpush1.msra.mxu0 0.0
    %812 = vmatprep.subr.mxu0 0.0
    %813 = vmatpush1.msra.mxu0 %v700
    %814 = vmatprep.subr.mxu0 0.0
    %815 = vmatpush1.msra.mxu0 %v699
    %816 = vmatprep.subr.mxu0 0.0
    %817 = vmatpush1.msra.mxu0 %v698
    %818 = vmatprep.subr.mxu0 0.0
    %819 = vmatpush1.msra.mxu0 %v697
    %820 = vmatprep.subr.mxu0 0.0
    %821 = vmatpush1.msra.mxu0 %v696
    %822 = vmatprep.subr.mxu0 0.0
    %823 = vmatpush1.msra.mxu0 %v695
    %824 = vmatprep.subr.mxu0 0.0
    %825 = vmatpush1.msra.mxu0 %v694
    %826 = vmatprep.subr.mxu0 0.0
    %827 = vmatpush1.msra.mxu0 %v693
    %828 = vmatprep.subr.mxu0 0.0
    %829 = vmatpush1.msra.mxu0 %v692
    %830 = vmatprep.subr.mxu0 0.0
    %831 = vmatpush1.msra.mxu0 %v691
    %832 = vmatprep.subr.mxu0 0.0
    %833 = vmatpush1.msra.mxu0 %v690
    %834 = vmatprep.subr.mxu0 0.0
    %835 = vmatpush1.msra.mxu0 %v689
    %836 = vmatprep.subr.mxu0 0.0
    %837 = vmatpush2.msra.mxu0 0.0
    %838 = vmatprep.subr.mxu0 0.0
    %839 = vmatpush2.msra.mxu0 0.0
    %840 = vmatprep.subr.mxu0 0.0
    %841 = vmatpush2.msra.mxu0 0.0
    %842 = vmatprep.subr.mxu0 0.0
    %843 = vmatpush2.msra.mxu0 0.0
    %844 = vmatprep.subr.mxu0 0.0
    %845 = vmatpush2.msra.mxu0 0.0
    %846 = vmatprep.subr.mxu0 0.0
    %847 = vmatpush2.msra.mxu0 0.0
    %848 = vmatprep.subr.mxu0 0.0
    %849 = vmatpush2.msra.mxu0 0.0
    %850 = vmatprep.subr.mxu0 0.0
    %851 = vmatpush2.msra.mxu0 0.0
    %852 = vmatprep.subr.mxu0 0.0
    %853 = vmatpush2.msra.mxu0 0.0
    %854 = vmatprep.subr.mxu0 0.0
    %855 = vmatpush2.msra.mxu0 0.0
    %856 = vmatprep.subr.mxu0 0.0
    %857 = vmatpush2.msra.mxu0 0.0
    %858 = vmatprep.subr.mxu0 0.0
    %859 = vmatpush2.msra.mxu0 0.0
    %860 = vmatprep.subr.mxu0 0.0
    %861 = vmatpush2.msra.mxu0 0.0
    %862 = vmatprep.subr.mxu0 0.0
    %863 = vmatpush2.msra.mxu0 0.0
    %864 = vmatprep.subr.mxu0 0.0
    %865 = vmatpush2.msra.mxu0 0.0
    %866 = vmatprep.subr.mxu0 0.0
    %867 = vmatpush2.msra.mxu0 0.0
    %868 = vmatprep.mubr.f32.mxu0 0.0
    %869 = vmatmul.mubr.f32.gmra.mxu0 %v799
    %v870 = vpop.f32.mrf.mxu0
    %v871 = vadd.f32 %v790, %v870
    %v872 = vpop.f32.mrf.mxu0
    %873 = vmatprep.mubr.f32.mxu0 0.0
    %874 = vmatmul.mubr.f32.gmra.mxu0 %v802
    %v875 = vpop.f32.mrf.mxu0
    %v876 = vadd.f32 %v795, %v875
    %v877 = vpop.f32.mrf.mxu0
    %878 = vdwg.mxu0
    %v879 = vld [vmem:[%s0 + $0x2] sm:$0xff]
    %v880 = vld [vmem:[%s0 + $0xa] sm:$0xff]
    %s881 = scalar_lea.vmem [#allocation15], 192
    %v882 = vld [vmem:[%s881] sm:$0xff]
    %v883 = vld [vmem:[%s881 + $0x8] sm:$0xff]
    %v884 = vld [vmem:[%s881 + $0x10] sm:$0xff]
    %v885 = vld [vmem:[%s881 + $0x18] sm:$0xff]
    %v886 = vld [vmem:[%s881 + $0x20] sm:$0xff]
    %v887 = vld [vmem:[%s881 + $0x28] sm:$0xff]
    %v888 = vld [vmem:[%s881 + $0x30] sm:$0xff]
    %v889 = vld [vmem:[%s881 + $0x38] sm:$0xff]
    %v890 = vld [vmem:[%s881 + $0x40] sm:$0xff]
    %v891 = vld [vmem:[%s881 + $0x48] sm:$0xff]
    %v892 = vld [vmem:[%s881 + $0x50] sm:$0xff]
    %v893 = vld [vmem:[%s881 + $0x58] sm:$0xff]
    %v895 = vsel %vm716, %v879, 0
    %v898 = vsel %vm716, %v880, 0
    %900 = vmatprep.subr.mxu0 0.0
    %901 = vmatpush1.msra.mxu0 0.0
    %902 = vmatprep.subr.mxu0 0.0
    %903 = vmatpush1.msra.mxu0 0.0
    %904 = vmatprep.subr.mxu0 0.0
    %905 = vmatpush1.msra.mxu0 0.0
    %906 = vmatprep.subr.mxu0 0.0
    %907 = vmatpush1.msra.mxu0 0.0
    %908 = vmatprep.subr.mxu0 0.0
    %909 = vmatpush1.msra.mxu0 %v893
    %910 = vmatprep.subr.mxu0 0.0
    %911 = vmatpush1.msra.mxu0 %v892
    %912 = vmatprep.subr.mxu0 0.0
    %913 = vmatpush1.msra.mxu0 %v891
    %914 = vmatprep.subr.mxu0 0.0
    %915 = vmatpush1.msra.mxu0 %v890
    %916 = vmatprep.subr.mxu0 0.0
    %917 = vmatpush1.msra.mxu0 %v889
    %918 = vmatprep.subr.mxu0 0.0
    %919 = vmatpush1.msra.mxu0 %v888
    %920 = vmatprep.subr.mxu0 0.0
    %921 = vmatpush1.msra.mxu0 %v887
    %922 = vmatprep.subr.mxu0 0.0
    %923 = vmatpush1.msra.mxu0 %v886
    %924 = vmatprep.subr.mxu0 0.0
    %925 = vmatpush1.msra.mxu0 %v885
    %926 = vmatprep.subr.mxu0 0.0
    %927 = vmatpush1.msra.mxu0 %v884
    %928 = vmatprep.subr.mxu0 0.0
    %929 = vmatpush1.msra.mxu0 %v883
    %930 = vmatprep.subr.mxu0 0.0
    %931 = vmatpush1.msra.mxu0 %v882
    %932 = vmatprep.subr.mxu0 0.0
    %933 = vmatpush2.msra.mxu0 0.0
    %934 = vmatprep.subr.mxu0 0.0
    %935 = vmatpush2.msra.mxu0 0.0
    %936 = vmatprep.subr.mxu0 0.0
    %937 = vmatpush2.msra.mxu0 0.0
    %938 = vmatprep.subr.mxu0 0.0
    %939 = vmatpush2.msra.mxu0 0.0
    %940 = vmatprep.subr.mxu0 0.0
    %941 = vmatpush2.msra.mxu0 0.0
    %942 = vmatprep.subr.mxu0 0.0
    %943 = vmatpush2.msra.mxu0 0.0
    %944 = vmatprep.subr.mxu0 0.0
    %945 = vmatpush2.msra.mxu0 0.0
    %946 = vmatprep.subr.mxu0 0.0
    %947 = vmatpush2.msra.mxu0 0.0
    %948 = vmatprep.subr.mxu0 0.0
    %949 = vmatpush2.msra.mxu0 0.0
    %950 = vmatprep.subr.mxu0 0.0
    %951 = vmatpush2.msra.mxu0 0.0
    %952 = vmatprep.subr.mxu0 0.0
    %953 = vmatpush2.msra.mxu0 0.0
    %954 = vmatprep.subr.mxu0 0.0
    %955 = vmatpush2.msra.mxu0 0.0
    %956 = vmatprep.subr.mxu0 0.0
    %957 = vmatpush2.msra.mxu0 0.0
    %958 = vmatprep.subr.mxu0 0.0
    %959 = vmatpush2.msra.mxu0 0.0
    %960 = vmatprep.subr.mxu0 0.0
    %961 = vmatpush2.msra.mxu0 0.0
    %962 = vmatprep.subr.mxu0 0.0
    %963 = vmatpush2.msra.mxu0 0.0
    %964 = vmatprep.mubr.f32.mxu0 0.0
    %965 = vmatmul.mubr.f32.gmra.mxu0 %v895
    %v966 = vpop.f32.mrf.mxu0
    %v967 = vadd.f32 0.0, %v966
    %v968 = vpop.f32.mrf.mxu0
    %969 = vmatprep.mubr.f32.mxu0 0.0
    %970 = vmatmul.mubr.f32.gmra.mxu0 %v898
    %v971 = vpop.f32.mrf.mxu0
    %v972 = vadd.f32 0.0, %v971
    %v973 = vpop.f32.mrf.mxu0
    %974 = vdwg.mxu0
    %v975 = vadd.f32 %v871, %v967
    %v976 = vadd.f32 %v876, %v972
    %v977 = vadd.f32 %v975, %v976
    %v978 = vrot.slane %v977, 4
    %v979 = vadd.f32 %v977, %v978
    %v980 = vrot.slane %v979, 2
    %v981 = vadd.f32 %v979, %v980
    %v982 = vrot.slane %v981, 1
    %v983 = vadd.f32 %v981, %v982
    %v984 = vmul.f32 %v975, %v975
    %v985 = vmul.f32 %v976, %v976
    %v986 = vadd.f32 %v984, %v985
    %v987 = vrot.slane %v986, 4
    %v988 = vadd.f32 %v986, %v987
    %v989 = vrot.slane %v988, 2
    %v990 = vadd.f32 %v988, %v989
    %v991 = vrot.slane %v990, 1
    %v992 = vadd.f32 %v990, %v991
    %993 = vmatprep.subr.mxu0 0.0
    %994 = vmatpush1.msra.mxu0 %v345
    %995 = vmatprep.subr.mxu0 0.0
    %996 = vmatpush1.msra.mxu0 %v344
    %997 = vmatprep.subr.mxu0 0.0
    %998 = vmatpush1.msra.mxu0 %v343
    %999 = vmatprep.subr.mxu0 0.0
    %1000 = vmatpush1.msra.mxu0 %v342
    %1001 = vmatprep.subr.mxu0 0.0
    %1002 = vmatpush1.msra.mxu0 %v341
    %1003 = vmatprep.subr.mxu0 0.0
    %1004 = vmatpush1.msra.mxu0 %v340
    %1005 = vmatprep.subr.mxu0 0.0
    %1006 = vmatpush1.msra.mxu0 %v339
    %1007 = vmatprep.subr.mxu0 0.0
    %1008 = vmatpush1.msra.mxu0 %v338
    %1009 = vmatprep.subr.mxu0 0.0
    %1010 = vmatpush1.msra.mxu0 %v337
    %1011 = vmatprep.subr.mxu0 0.0
    %1012 = vmatpush1.msra.mxu0 %v336
    %1013 = vmatprep.subr.mxu0 0.0
    %1014 = vmatpush1.msra.mxu0 %v335
    %1015 = vmatprep.subr.mxu0 0.0
    %1016 = vmatpush1.msra.mxu0 %v334
    %1017 = vmatprep.subr.mxu0 0.0
    %1018 = vmatpush1.msra.mxu0 %v333
    %1019 = vmatprep.subr.mxu0 0.0
    %1020 = vmatpush1.msra.mxu0 %v332
    %1021 = vmatprep.subr.mxu0 0.0
    %1022 = vmatpush1.msra.mxu0 %v331
    %1023 = vmatprep.subr.mxu0 0.0
    %1024 = vmatpush1.msra.mxu0 %v330
    %1025 = vmatprep.subr.mxu0 0.0
    %1026 = vmatpush2.msra.mxu0 0.0
    %1027 = vmatprep.subr.mxu0 0.0
    %1028 = vmatpush2.msra.mxu0 0.0
    %1029 = vmatprep.subr.mxu0 0.0
    %1030 = vmatpush2.msra.mxu0 0.0
    %1031 = vmatprep.subr.mxu0 0.0
    %1032 = vmatpush2.msra.mxu0 0.0
    %1033 = vmatprep.subr.mxu0 0.0
    %1034 = vmatpush2.msra.mxu0 0.0
    %1035 = vmatprep.subr.mxu0 0.0
    %1036 = vmatpush2.msra.mxu0 0.0
    %1037 = vmatprep.subr.mxu0 0.0
    %1038 = vmatpush2.msra.mxu0 0.0
    %1039 = vmatprep.subr.mxu0 0.0
    %1040 = vmatpush2.msra.mxu0 0.0
    %1041 = vmatprep.subr.mxu0 0.0
    %1042 = vmatpush2.msra.mxu0 0.0
    %1043 = vmatprep.subr.mxu0 0.0
    %1044 = vmatpush2.msra.mxu0 0.0
    %1045 = vmatprep.subr.mxu0 0.0
    %1046 = vmatpush2.msra.mxu0 0.0
    %1047 = vmatprep.subr.mxu0 0.0
    %1048 = vmatpush2.msra.mxu0 0.0
    %1049 = vmatprep.subr.mxu0 0.0
    %1050 = vmatpush2.msra.mxu0 0.0
    %1051 = vmatprep.subr.mxu0 0.0
    %1052 = vmatpush2.msra.mxu0 0.0
    %1053 = vmatprep.subr.mxu0 0.0
    %1054 = vmatpush2.msra.mxu0 0.0
    %1055 = vmatprep.subr.mxu0 0.0
    %1056 = vmatpush2.msra.mxu0 0.0
    %1057 = vmatprep.mubr.f32.mxu0 0.0
    %1058 = vmatmul.mubr.f32.gmra.mxu0 %v983
    %v1059 = vpop.f32.mrf.mxu0
    %v1060 = vadd.f32 0.0, %v1059
    %v1061 = vpop.f32.mrf.mxu0
    %1062 = vdwg.mxu0
    %v1063 = vmul.f32 %v1060, 0.001953125
    %1064 = vmatprep.subr.mxu0 0.0
    %1065 = vmatpush1.msra.mxu0 %v345
    %1066 = vmatprep.subr.mxu0 0.0
    %1067 = vmatpush1.msra.mxu0 %v344
    %1068 = vmatprep.subr.mxu0 0.0
    %1069 = vmatpush1.msra.mxu0 %v343
    %1070 = vmatprep.subr.mxu0 0.0
    %1071 = vmatpush1.msra.mxu0 %v342
    %1072 = vmatprep.subr.mxu0 0.0
    %1073 = vmatpush1.msra.mxu0 %v341
    %1074 = vmatprep.subr.mxu0 0.0
    %1075 = vmatpush1.msra.mxu0 %v340
    %1076 = vmatprep.subr.mxu0 0.0
    %1077 = vmatpush1.msra.mxu0 %v339
    %1078 = vmatprep.subr.mxu0 0.0
    %1079 = vmatpush1.msra.mxu0 %v338
    %1080 = vmatprep.subr.mxu0 0.0
    %1081 = vmatpush1.msra.mxu0 %v337
    %1082 = vmatprep.subr.mxu0 0.0
    %1083 = vmatpush1.msra.mxu0 %v336
    %1084 = vmatprep.subr.mxu0 0.0
    %1085 = vmatpush1.msra.mxu0 %v335
    %1086 = vmatprep.subr.mxu0 0.0
    %1087 = vmatpush1.msra.mxu0 %v334
    %1088 = vmatprep.subr.mxu0 0.0
    %1089 = vmatpush1.msra.mxu0 %v333
    %1090 = vmatprep.subr.mxu0 0.0
    %1091 = vmatpush1.msra.mxu0 %v332
    %1092 = vmatprep.subr.mxu0 0.0
    %1093 = vmatpush1.msra.mxu0 %v331
    %1094 = vmatprep.subr.mxu0 0.0
    %1095 = vmatpush1.msra.mxu0 %v330
    %1096 = vmatprep.subr.mxu0 0.0
    %1097 = vmatpush2.msra.mxu0 0.0
    %1098 = vmatprep.subr.mxu0 0.0
    %1099 = vmatpush2.msra.mxu0 0.0
    %1100 = vmatprep.subr.mxu0 0.0
    %1101 = vmatpush2.msra.mxu0 0.0
    %1102 = vmatprep.subr.mxu0 0.0
    %1103 = vmatpush2.msra.mxu0 0.0
    %1104 = vmatprep.subr.mxu0 0.0
    %1105 = vmatpush2.msra.mxu0 0.0
    %1106 = vmatprep.subr.mxu0 0.0
    %1107 = vmatpush2.msra.mxu0 0.0
    %1108 = vmatprep.subr.mxu0 0.0
    %1109 = vmatpush2.msra.mxu0 0.0
    %1110 = vmatprep.subr.mxu0 0.0
    %1111 = vmatpush2.msra.mxu0 0.0
    %1112 = vmatprep.subr.mxu0 0.0
    %1113 = vmatpush2.msra.mxu0 0.0
    %1114 = vmatprep.subr.mxu0 0.0
    %1115 = vmatpush2.msra.mxu0 0.0
    %1116 = vmatprep.subr.mxu0 0.0
    %1117 = vmatpush2.msra.mxu0 0.0
    %1118 = vmatprep.subr.mxu0 0.0
    %1119 = vmatpush2.msra.mxu0 0.0
    %1120 = vmatprep.subr.mxu0 0.0
    %1121 = vmatpush2.msra.mxu0 0.0
    %1122 = vmatprep.subr.mxu0 0.0
    %1123 = vmatpush2.msra.mxu0 0.0
    %1124 = vmatprep.subr.mxu0 0.0
    %1125 = vmatpush2.msra.mxu0 0.0
    %1126 = vmatprep.subr.mxu0 0.0
    %1127 = vmatpush2.msra.mxu0 0.0
    %1128 = vmatprep.mubr.f32.mxu0 0.0
    %1129 = vmatmul.mubr.f32.gmra.mxu0 %v992
    %v1130 = vpop.f32.mrf.mxu0
    %v1131 = vadd.f32 0.0, %v1130
    %v1132 = vpop.f32.mrf.mxu0
    %1133 = vdwg.mxu0
    %v1134 = vmul.f32 %v1131, 0.001953125
    %v1135 = vmul.f32 %v1063, %v1063
    %v1136 = vsub.f32 %v1134, %v1135
    %v1137 = vmax.f32 %v1136, 0.0
    %v1138 = vadd.f32 %v1137, 1e-05
    %v1139 = vrsqrt.pop %v1138
    %v1140 = vlaneseq
    %v1141 = vshrl.u32 %v1140, 7
    %v1142 = vsub.s32 0, %v1141
    %v1143 = vrot.slane %v1063, %v1142
    %v1144 = vsub.f32 %v975, %v1143
    %v1145 = vsub.f32 %v976, %v1143
    %v1146 = vlaneseq
    %v1147 = vshrl.u32 %v1146, 7
    %v1148 = vsub.s32 0, %v1147
    %v1149 = vrot.slane %v1139, %v1148
    %v1150 = vmul.f32 %v1144, %v1149
    %v1151 = vmul.f32 %v1145, %v1149
    %v1152 = vmax.f32 %v1150, 0.0
    %v1153 = vmax.f32 %v1151, 0.0
    %1154 = vst [vmem:[#allocation2 + $0x1] sm:$0xff] %v1152
    %1155 = vst [vmem:[#allocation2 + $0x9] sm:$0xff] %v1153
    %v1156 = vld [vmem:[#allocation2] sm:$0xff]
    %v1157 = vld [vmem:[#allocation2 + $0x8] sm:$0xff]
    %v1158 = vld [vmem:[#allocation17] sm:$0xff]
    %v1159 = vld [vmem:[#allocation17 + $0x8] sm:$0xff]
    %v1160 = vld [vmem:[#allocation17 + $0x10] sm:$0xff]
    %v1161 = vld [vmem:[#allocation17 + $0x18] sm:$0xff]
    %v1162 = vld [vmem:[#allocation17 + $0x20] sm:$0xff]
    %v1163 = vld [vmem:[#allocation17 + $0x28] sm:$0xff]
    %v1164 = vld [vmem:[#allocation17 + $0x30] sm:$0xff]
    %v1165 = vld [vmem:[#allocation17 + $0x38] sm:$0xff]
    %v1166 = vld [vmem:[#allocation17 + $0x40] sm:$0xff]
    %v1167 = vld [vmem:[#allocation17 + $0x48] sm:$0xff]
    %v1168 = vld [vmem:[#allocation17 + $0x50] sm:$0xff]
    %v1169 = vld [vmem:[#allocation17 + $0x58] sm:$0xff]
    %v1170 = vld [vmem:[#allocation17 + $0x60] sm:$0xff]
    %v1171 = vld [vmem:[#allocation17 + $0x68] sm:$0xff]
    %v1172 = vld [vmem:[#allocation17 + $0x70] sm:$0xff]
    %v1173 = vld [vmem:[#allocation17 + $0x78] sm:$0xff]
    %v1174 = vld [vmem:[#allocation2 + $0x1] sm:$0xff]
    %v1175 = vld [vmem:[#allocation2 + $0x9] sm:$0xff]
    %s1176 = scalar_lea.vmem [#allocation17], 128
    %v1177 = vld [vmem:[%s1176] sm:$0xff]
    %v1178 = vld [vmem:[%s1176 + $0x8] sm:$0xff]
    %v1179 = vld [vmem:[%s1176 + $0x10] sm:$0xff]
    %v1180 = vld [vmem:[%s1176 + $0x18] sm:$0xff]
    %v1181 = vld [vmem:[%s1176 + $0x20] sm:$0xff]
    %v1182 = vld [vmem:[%s1176 + $0x28] sm:$0xff]
    %v1183 = vld [vmem:[%s1176 + $0x30] sm:$0xff]
    %v1184 = vld [vmem:[%s1176 + $0x38] sm:$0xff]
    %v1185 = vld [vmem:[%s1176 + $0x40] sm:$0xff]
    %v1186 = vld [vmem:[%s1176 + $0x48] sm:$0xff]
    %v1187 = vld [vmem:[%s1176 + $0x50] sm:$0xff]
    %v1188 = vld [vmem:[%s1176 + $0x58] sm:$0xff]
    %v1189 = vld [vmem:[%s1176 + $0x60] sm:$0xff]
    %v1190 = vld [vmem:[%s1176 + $0x68] sm:$0xff]
    %v1191 = vld [vmem:[%s1176 + $0x70] sm:$0xff]
    %v1192 = vld [vmem:[%s1176 + $0x78] sm:$0xff]
    %1193 = vmatprep.subr.mxu0 0.0
    %1194 = vmatpush1.msra.mxu0 %v1192
    %1195 = vmatprep.subr.mxu0 0.0
    %1196 = vmatpush1.msra.mxu0 %v1191
    %1197 = vmatprep.subr.mxu0 0.0
    %1198 = vmatpush1.msra.mxu0 %v1190
    %1199 = vmatprep.subr.mxu0 0.0
    %1200 = vmatpush1.msra.mxu0 %v1189
    %1201 = vmatprep.subr.mxu0 0.0
    %1202 = vmatpush1.msra.mxu0 %v1188
    %1203 = vmatprep.subr.mxu0 0.0
    %1204 = vmatpush1.msra.mxu0 %v1187
    %1205 = vmatprep.subr.mxu0 0.0
    %1206 = vmatpush1.msra.mxu0 %v1186
    %1207 = vmatprep.subr.mxu0 0.0
    %1208 = vmatpush1.msra.mxu0 %v1185
    %1209 = vmatprep.subr.mxu0 0.0
    %1210 = vmatpush1.msra.mxu0 %v1184
    %1211 = vmatprep.subr.mxu0 0.0
    %1212 = vmatpush1.msra.mxu0 %v1183
    %1213 = vmatprep.subr.mxu0 0.0
    %1214 = vmatpush1.msra.mxu0 %v1182
    %1215 = vmatprep.subr.mxu0 0.0
    %1216 = vmatpush1.msra.mxu0 %v1181
    %1217 = vmatprep.subr.mxu0 0.0
    %1218 = vmatpush1.msra.mxu0 %v1180
    %1219 = vmatprep.subr.mxu0 0.0
    %1220 = vmatpush1.msra.mxu0 %v1179
    %1221 = vmatprep.subr.mxu0 0.0
    %1222 = vmatpush1.msra.mxu0 %v1178
    %1223 = vmatprep.subr.mxu0 0.0
    %1224 = vmatpush1.msra.mxu0 %v1177
    %1225 = vmatprep.subr.mxu0 0.0
    %1226 = vmatpush2.msra.mxu0 0.0
    %1227 = vmatprep.subr.mxu0 0.0
    %1228 = vmatpush2.msra.mxu0 0.0
    %1229 = vmatprep.subr.mxu0 0.0
    %1230 = vmatpush2.msra.mxu0 0.0
    %1231 = vmatprep.subr.mxu0 0.0
    %1232 = vmatpush2.msra.mxu0 0.0
    %1233 = vmatprep.subr.mxu0 0.0
    %1234 = vmatpush2.msra.mxu0 0.0
    %1235 = vmatprep.subr.mxu0 0.0
    %1236 = vmatpush2.msra.mxu0 0.0
    %1237 = vmatprep.subr.mxu0 0.0
    %1238 = vmatpush2.msra.mxu0 0.0
    %1239 = vmatprep.subr.mxu0 0.0
    %1240 = vmatpush2.msra.mxu0 0.0
    %1241 = vmatprep.subr.mxu0 0.0
    %1242 = vmatpush2.msra.mxu0 0.0
    %1243 = vmatprep.subr.mxu0 0.0
    %1244 = vmatpush2.msra.mxu0 0.0
    %1245 = vmatprep.subr.mxu0 0.0
    %1246 = vmatpush2.msra.mxu0 0.0
    %1247 = vmatprep.subr.mxu0 0.0
    %1248 = vmatpush2.msra.mxu0 0.0
    %1249 = vmatprep.subr.mxu0 0.0
    %1250 = vmatpush2.msra.mxu0 0.0
    %1251 = vmatprep.subr.mxu0 0.0
    %1252 = vmatpush2.msra.mxu0 0.0
    %1253 = vmatprep.subr.mxu0 0.0
    %1254 = vmatpush2.msra.mxu0 0.0
    %1255 = vmatprep.subr.mxu0 0.0
    %1256 = vmatpush2.msra.mxu0 0.0
    %1257 = vmatprep.mubr.f32.mxu0 0.0
    %1258 = vmatmul.mubr.f32.gmra.mxu0 %v1174
    %v1259 = vpop.f32.mrf.mxu0
    %v1260 = vadd.f32 0.0, %v1259
    %v1261 = vpop.f32.mrf.mxu0
    %1262 = vmatprep.mubr.f32.mxu0 0.0
    %1263 = vmatmul.mubr.f32.gmra.mxu0 %v1175
    %v1264 = vpop.f32.mrf.mxu0
    %v1265 = vadd.f32 0.0, %v1264
    %v1266 = vpop.f32.mrf.mxu0
    %1267 = vdwg.mxu0
    %1268 = vmatprep.subr.mxu0 0.0
    %1269 = vmatpush1.msra.mxu0 %v1173
    %1270 = vmatprep.subr.mxu0 0.0
    %1271 = vmatpush1.msra.mxu0 %v1172
    %1272 = vmatprep.subr.mxu0 0.0
    %1273 = vmatpush1.msra.mxu0 %v1171
    %1274 = vmatprep.subr.mxu0 0.0
    %1275 = vmatpush1.msra.mxu0 %v1170
    %1276 = vmatprep.subr.mxu0 0.0
    %1277 = vmatpush1.msra.mxu0 %v1169
    %1278 = vmatprep.subr.mxu0 0.0
    %1279 = vmatpush1.msra.mxu0 %v1168
    %1280 = vmatprep.subr.mxu0 0.0
    %1281 = vmatpush1.msra.mxu0 %v1167
    %1282 = vmatprep.subr.mxu0 0.0
    %1283 = vmatpush1.msra.mxu0 %v1166
    %1284 = vmatprep.subr.mxu0 0.0
    %1285 = vmatpush1.msra.mxu0 %v1165
    %1286 = vmatprep.subr.mxu0 0.0
    %1287 = vmatpush1.msra.mxu0 %v1164
    %1288 = vmatprep.subr.mxu0 0.0
    %1289 = vmatpush1.msra.mxu0 %v1163
    %1290 = vmatprep.subr.mxu0 0.0
    %1291 = vmatpush1.msra.mxu0 %v1162
    %1292 = vmatprep.subr.mxu0 0.0
    %1293 = vmatpush1.msra.mxu0 %v1161
    %1294 = vmatprep.subr.mxu0 0.0
    %1295 = vmatpush1.msra.mxu0 %v1160
    %1296 = vmatprep.subr.mxu0 0.0
    %1297 = vmatpush1.msra.mxu0 %v1159
    %1298 = vmatprep.subr.mxu0 0.0
    %1299 = vmatpush1.msra.mxu0 %v1158
    %1300 = vmatprep.subr.mxu0 0.0
    %1301 = vmatpush2.msra.mxu0 0.0
    %1302 = vmatprep.subr.mxu0 0.0
    %1303 = vmatpush2.msra.mxu0 0.0
    %1304 = vmatprep.subr.mxu0 0.0
    %1305 = vmatpush2.msra.mxu0 0.0
    %1306 = vmatprep.subr.mxu0 0.0
    %1307 = vmatpush2.msra.mxu0 0.0
    %1308 = vmatprep.subr.mxu0 0.0
    %1309 = vmatpush2.msra.mxu0 0.0
    %1310 = vmatprep.subr.mxu0 0.0
    %1311 = vmatpush2.msra.mxu0 0.0
    %1312 = vmatprep.subr.mxu0 0.0
    %1313 = vmatpush2.msra.mxu0 0.0
    %1314 = vmatprep.subr.mxu0 0.0
    %1315 = vmatpush2.msra.mxu0 0.0
    %1316 = vmatprep.subr.mxu0 0.0
    %1317 = vmatpush2.msra.mxu0 0.0
    %1318 = vmatprep.subr.mxu0 0.0
    %1319 = vmatpush2.msra.mxu0 0.0
    %1320 = vmatprep.subr.mxu0 0.0
    %1321 = vmatpush2.msra.mxu0 0.0
    %1322 = vmatprep.subr.mxu0 0.0
    %1323 = vmatpush2.msra.mxu0 0.0
    %1324 = vmatprep.subr.mxu0 0.0
    %1325 = vmatpush2.msra.mxu0 0.0
    %1326 = vmatprep.subr.mxu0 0.0
    %1327 = vmatpush2.msra.mxu0 0.0
    %1328 = vmatprep.subr.mxu0 0.0
    %1329 = vmatpush2.msra.mxu0 0.0
    %1330 = vmatprep.subr.mxu0 0.0
    %1331 = vmatpush2.msra.mxu0 0.0
    %1332 = vmatprep.mubr.f32.mxu0 0.0
    %1333 = vmatmul.mubr.f32.gmra.mxu0 %v1156
    %v1334 = vpop.f32.mrf.mxu0
    %v1335 = vadd.f32 %v1260, %v1334
    %v1336 = vpop.f32.mrf.mxu0
    %1337 = vmatprep.mubr.f32.mxu0 0.0
    %1338 = vmatmul.mubr.f32.gmra.mxu0 %v1157
    %v1339 = vpop.f32.mrf.mxu0
    %v1340 = vadd.f32 %v1265, %v1339
    %v1341 = vpop.f32.mrf.mxu0
    %1342 = vdwg.mxu0
    %v1343 = vld [vmem:[#allocation2 + $0x2] sm:$0xff]
    %v1344 = vld [vmem:[#allocation2 + $0xa] sm:$0xff]
    %s1345 = scalar_lea.vmem [#allocation17], 256
    %v1346 = vld [vmem:[%s1345] sm:$0xff]
    %v1347 = vld [vmem:[%s1345 + $0x8] sm:$0xff]
    %v1348 = vld [vmem:[%s1345 + $0x10] sm:$0xff]
    %v1349 = vld [vmem:[%s1345 + $0x18] sm:$0xff]
    %v1350 = vld [vmem:[%s1345 + $0x20] sm:$0xff]
    %v1351 = vld [vmem:[%s1345 + $0x28] sm:$0xff]
    %v1352 = vld [vmem:[%s1345 + $0x30] sm:$0xff]
    %v1353 = vld [vmem:[%s1345 + $0x38] sm:$0xff]
    %v1354 = vld [vmem:[%s1345 + $0x40] sm:$0xff]
    %v1355 = vld [vmem:[%s1345 + $0x48] sm:$0xff]
    %v1356 = vld [vmem:[%s1345 + $0x50] sm:$0xff]
    %v1357 = vld [vmem:[%s1345 + $0x58] sm:$0xff]
    %v1358 = vld [vmem:[%s1345 + $0x60] sm:$0xff]
    %v1359 = vld [vmem:[%s1345 + $0x68] sm:$0xff]
    %v1360 = vld [vmem:[%s1345 + $0x70] sm:$0xff]
    %v1361 = vld [vmem:[%s1345 + $0x78] sm:$0xff]
    %1362 = vmatprep.subr.mxu0 0.0
    %1363 = vmatpush1.msra.mxu0 %v1361
    %1364 = vmatprep.subr.mxu0 0.0
    %1365 = vmatpush1.msra.mxu0 %v1360
    %1366 = vmatprep.subr.mxu0 0.0
    %1367 = vmatpush1.msra.mxu0 %v1359
    %1368 = vmatprep.subr.mxu0 0.0
    %1369 = vmatpush1.msra.mxu0 %v1358
    %1370 = vmatprep.subr.mxu0 0.0
    %1371 = vmatpush1.msra.mxu0 %v1357
    %1372 = vmatprep.subr.mxu0 0.0
    %1373 = vmatpush1.msra.mxu0 %v1356
    %1374 = vmatprep.subr.mxu0 0.0
    %1375 = vmatpush1.msra.mxu0 %v1355
    %1376 = vmatprep.subr.mxu0 0.0
    %1377 = vmatpush1.msra.mxu0 %v1354
    %1378 = vmatprep.subr.mxu0 0.0
    %1379 = vmatpush1.msra.mxu0 %v1353
    %1380 = vmatprep.subr.mxu0 0.0
    %1381 = vmatpush1.msra.mxu0 %v1352
    %1382 = vmatprep.subr.mxu0 0.0
    %1383 = vmatpush1.msra.mxu0 %v1351
    %1384 = vmatprep.subr.mxu0 0.0
    %1385 = vmatpush1.msra.mxu0 %v1350
    %1386 = vmatprep.subr.mxu0 0.0
    %1387 = vmatpush1.msra.mxu0 %v1349
    %1388 = vmatprep.subr.mxu0 0.0
    %1389 = vmatpush1.msra.mxu0 %v1348
    %1390 = vmatprep.subr.mxu0 0.0
    %1391 = vmatpush1.msra.mxu0 %v1347
    %1392 = vmatprep.subr.mxu0 0.0
    %1393 = vmatpush1.msra.mxu0 %v1346
    %1394 = vmatprep.subr.mxu0 0.0
    %1395 = vmatpush2.msra.mxu0 0.0
    %1396 = vmatprep.subr.mxu0 0.0
    %1397 = vmatpush2.msra.mxu0 0.0
    %1398 = vmatprep.subr.mxu0 0.0
    %1399 = vmatpush2.msra.mxu0 0.0
    %1400 = vmatprep.subr.mxu0 0.0
    %1401 = vmatpush2.msra.mxu0 0.0
    %1402 = vmatprep.subr.mxu0 0.0
    %1403 = vmatpush2.msra.mxu0 0.0
    %1404 = vmatprep.subr.mxu0 0.0
    %1405 = vmatpush2.msra.mxu0 0.0
    %1406 = vmatprep.subr.mxu0 0.0
    %1407 = vmatpush2.msra.mxu0 0.0
    %1408 = vmatprep.subr.mxu0 0.0
    %1409 = vmatpush2.msra.mxu0 0.0
    %1410 = vmatprep.subr.mxu0 0.0
    %1411 = vmatpush2.msra.mxu0 0.0
    %1412 = vmatprep.subr.mxu0 0.0
    %1413 = vmatpush2.msra.mxu0 0.0
    %1414 = vmatprep.subr.mxu0 0.0
    %1415 = vmatpush2.msra.mxu0 0.0
    %1416 = vmatprep.subr.mxu0 0.0
    %1417 = vmatpush2.msra.mxu0 0.0
    %1418 = vmatprep.subr.mxu0 0.0
    %1419 = vmatpush2.msra.mxu0 0.0
    %1420 = vmatprep.subr.mxu0 0.0
    %1421 = vmatpush2.msra.mxu0 0.0
    %1422 = vmatprep.subr.mxu0 0.0
    %1423 = vmatpush2.msra.mxu0 0.0
    %1424 = vmatprep.subr.mxu0 0.0
    %1425 = vmatpush2.msra.mxu0 0.0
    %1426 = vmatprep.mubr.f32.mxu0 0.0
    %1427 = vmatmul.mubr.f32.gmra.mxu0 %v1343
    %v1428 = vpop.f32.mrf.mxu0
    %v1429 = vadd.f32 0.0, %v1428
    %v1430 = vpop.f32.mrf.mxu0
    %1431 = vmatprep.mubr.f32.mxu0 0.0
    %1432 = vmatmul.mubr.f32.gmra.mxu0 %v1344
    %v1433 = vpop.f32.mrf.mxu0
    %v1434 = vadd.f32 0.0, %v1433
    %v1435 = vpop.f32.mrf.mxu0
    %1436 = vdwg.mxu0
    %v1437 = vadd.f32 %v1335, %v1429
    %v1438 = vadd.f32 %v1340, %v1434
    %v1439 = vadd.f32 %v1437, %v1438
    %v1440 = vrot.slane %v1439, 4
    %v1441 = vadd.f32 %v1439, %v1440
    %v1442 = vrot.slane %v1441, 2
    %v1443 = vadd.f32 %v1441, %v1442
    %v1444 = vrot.slane %v1443, 1
    %v1445 = vadd.f32 %v1443, %v1444
    %v1446 = vmul.f32 %v1437, %v1437
    %v1447 = vmul.f32 %v1438, %v1438
    %v1448 = vadd.f32 %v1446, %v1447
    %v1449 = vrot.slane %v1448, 4
    %v1450 = vadd.f32 %v1448, %v1449
    %v1451 = vrot.slane %v1450, 2
    %v1452 = vadd.f32 %v1450, %v1451
    %v1453 = vrot.slane %v1452, 1
    %v1454 = vadd.f32 %v1452, %v1453
    %1455 = vmatprep.subr.mxu0 0.0
    %1456 = vmatpush1.msra.mxu0 %v345
    %1457 = vmatprep.subr.mxu0 0.0
    %1458 = vmatpush1.msra.mxu0 %v344
    %1459 = vmatprep.subr.mxu0 0.0
    %1460 = vmatpush1.msra.mxu0 %v343
    %1461 = vmatprep.subr.mxu0 0.0
    %1462 = vmatpush1.msra.mxu0 %v342
    %1463 = vmatprep.subr.mxu0 0.0
    %1464 = vmatpush1.msra.mxu0 %v341
    %1465 = vmatprep.subr.mxu0 0.0
    %1466 = vmatpush1.msra.mxu0 %v340
    %1467 = vmatprep.subr.mxu0 0.0
    %1468 = vmatpush1.msra.mxu0 %v339
    %1469 = vmatprep.subr.mxu0 0.0
    %1470 = vmatpush1.msra.mxu0 %v338
    %1471 = vmatprep.subr.mxu0 0.0
    %1472 = vmatpush1.msra.mxu0 %v337
    %1473 = vmatprep.subr.mxu0 0.0
    %1474 = vmatpush1.msra.mxu0 %v336
    %1475 = vmatprep.subr.mxu0 0.0
    %1476 = vmatpush1.msra.mxu0 %v335
    %1477 = vmatprep.subr.mxu0 0.0
    %1478 = vmatpush1.msra.mxu0 %v334
    %1479 = vmatprep.subr.mxu0 0.0
    %1480 = vmatpush1.msra.mxu0 %v333
    %1481 = vmatprep.subr.mxu0 0.0
    %1482 = vmatpush1.msra.mxu0 %v332
    %1483 = vmatprep.subr.mxu0 0.0
    %1484 = vmatpush1.msra.mxu0 %v331
    %1485 = vmatprep.subr.mxu0 0.0
    %1486 = vmatpush1.msra.mxu0 %v330
    %1487 = vmatprep.subr.mxu0 0.0
    %1488 = vmatpush2.msra.mxu0 0.0
    %1489 = vmatprep.subr.mxu0 0.0
    %1490 = vmatpush2.msra.mxu0 0.0
    %1491 = vmatprep.subr.mxu0 0.0
    %1492 = vmatpush2.msra.mxu0 0.0
    %1493 = vmatprep.subr.mxu0 0.0
    %1494 = vmatpush2.msra.mxu0 0.0
    %1495 = vmatprep.subr.mxu0 0.0
    %1496 = vmatpush2.msra.mxu0 0.0
    %1497 = vmatprep.subr.mxu0 0.0
    %1498 = vmatpush2.msra.mxu0 0.0
    %1499 = vmatprep.subr.mxu0 0.0
    %1500 = vmatpush2.msra.mxu0 0.0
    %1501 = vmatprep.subr.mxu0 0.0
    %1502 = vmatpush2.msra.mxu0 0.0
    %1503 = vmatprep.subr.mxu0 0.0
    %1504 = vmatpush2.msra.mxu0 0.0
    %1505 = vmatprep.subr.mxu0 0.0
    %1506 = vmatpush2.msra.mxu0 0.0
    %1507 = vmatprep.subr.mxu0 0.0
    %1508 = vmatpush2.msra.mxu0 0.0
    %1509 = vmatprep.subr.mxu0 0.0
    %1510 = vmatpush2.msra.mxu0 0.0
    %1511 = vmatprep.subr.mxu0 0.0
    %1512 = vmatpush2.msra.mxu0 0.0
    %1513 = vmatprep.subr.mxu0 0.0
    %1514 = vmatpush2.msra.mxu0 0.0
    %1515 = vmatprep.subr.mxu0 0.0
    %1516 = vmatpush2.msra.mxu0 0.0
    %1517 = vmatprep.subr.mxu0 0.0
    %1518 = vmatpush2.msra.mxu0 0.0
    %1519 = vmatprep.mubr.f32.mxu0 0.0
    %1520 = vmatmul.mubr.f32.gmra.mxu0 %v1445
    %v1521 = vpop.f32.mrf.mxu0
    %v1522 = vadd.f32 0.0, %v1521
    %v1523 = vpop.f32.mrf.mxu0
    %1524 = vdwg.mxu0
    %v1525 = vmul.f32 %v1522, 0.001953125
    %1526 = vmatprep.subr.mxu0 0.0
    %1527 = vmatpush1.msra.mxu0 %v345
    %1528 = vmatprep.subr.mxu0 0.0
    %1529 = vmatpush1.msra.mxu0 %v344
    %1530 = vmatprep.subr.mxu0 0.0
    %1531 = vmatpush1.msra.mxu0 %v343
    %1532 = vmatprep.subr.mxu0 0.0
    %1533 = vmatpush1.msra.mxu0 %v342
    %1534 = vmatprep.subr.mxu0 0.0
    %1535 = vmatpush1.msra.mxu0 %v341
    %1536 = vmatprep.subr.mxu0 0.0
    %1537 = vmatpush1.msra.mxu0 %v340
    %1538 = vmatprep.subr.mxu0 0.0
    %1539 = vmatpush1.msra.mxu0 %v339
    %1540 = vmatprep.subr.mxu0 0.0
    %1541 = vmatpush1.msra.mxu0 %v338
    %1542 = vmatprep.subr.mxu0 0.0
    %1543 = vmatpush1.msra.mxu0 %v337
    %1544 = vmatprep.subr.mxu0 0.0
    %1545 = vmatpush1.msra.mxu0 %v336
    %1546 = vmatprep.subr.mxu0 0.0
    %1547 = vmatpush1.msra.mxu0 %v335
    %1548 = vmatprep.subr.mxu0 0.0
    %1549 = vmatpush1.msra.mxu0 %v334
    %1550 = vmatprep.subr.mxu0 0.0
    %1551 = vmatpush1.msra.mxu0 %v333
    %1552 = vmatprep.subr.mxu0 0.0
    %1553 = vmatpush1.msra.mxu0 %v332
    %1554 = vmatprep.subr.mxu0 0.0
    %1555 = vmatpush1.msra.mxu0 %v331
    %1556 = vmatprep.subr.mxu0 0.0
    %1557 = vmatpush1.msra.mxu0 %v330
    %1558 = vmatprep.subr.mxu0 0.0
    %1559 = vmatpush2.msra.mxu0 0.0
    %1560 = vmatprep.subr.mxu0 0.0
    %1561 = vmatpush2.msra.mxu0 0.0
    %1562 = vmatprep.subr.mxu0 0.0
    %1563 = vmatpush2.msra.mxu0 0.0
    %1564 = vmatprep.subr.mxu0 0.0
    %1565 = vmatpush2.msra.mxu0 0.0
    %1566 = vmatprep.subr.mxu0 0.0
    %1567 = vmatpush2.msra.mxu0 0.0
    %1568 = vmatprep.subr.mxu0 0.0
    %1569 = vmatpush2.msra.mxu0 0.0
    %1570 = vmatprep.subr.mxu0 0.0
    %1571 = vmatpush2.msra.mxu0 0.0
    %1572 = vmatprep.subr.mxu0 0.0
    %1573 = vmatpush2.msra.mxu0 0.0
    %1574 = vmatprep.subr.mxu0 0.0
    %1575 = vmatpush2.msra.mxu0 0.0
    %1576 = vmatprep.subr.mxu0 0.0
    %1577 = vmatpush2.msra.mxu0 0.0
    %1578 = vmatprep.subr.mxu0 0.0
    %1579 = vmatpush2.msra.mxu0 0.0
    %1580 = vmatprep.subr.mxu0 0.0
    %1581 = vmatpush2.msra.mxu0 0.0
    %1582 = vmatprep.subr.mxu0 0.0
    %1583 = vmatpush2.msra.mxu0 0.0
    %1584 = vmatprep.subr.mxu0 0.0
    %1585 = vmatpush2.msra.mxu0 0.0
    %1586 = vmatprep.subr.mxu0 0.0
    %1587 = vmatpush2.msra.mxu0 0.0
    %1588 = vmatprep.subr.mxu0 0.0
    %1589 = vmatpush2.msra.mxu0 0.0
    %1590 = vmatprep.mubr.f32.mxu0 0.0
    %1591 = vmatmul.mubr.f32.gmra.mxu0 %v1454
    %v1592 = vpop.f32.mrf.mxu0
    %v1593 = vadd.f32 0.0, %v1592
    %v1594 = vpop.f32.mrf.mxu0
    %1595 = vdwg.mxu0
    %v1596 = vmul.f32 %v1593, 0.001953125
    %v1597 = vmul.f32 %v1525, %v1525
    %v1598 = vsub.f32 %v1596, %v1597
    %v1599 = vmax.f32 %v1598, 0.0
    %v1600 = vadd.f32 %v1599, 1e-05
    %v1601 = vrsqrt.pop %v1600
    %v1602 = vlaneseq
    %v1603 = vshrl.u32 %v1602, 7
    %v1604 = vsub.s32 0, %v1603
    %v1605 = vrot.slane %v1525, %v1604
    %v1606 = vsub.f32 %v1437, %v1605
    %v1607 = vsub.f32 %v1438, %v1605
    %v1608 = vlaneseq
    %v1609 = vshrl.u32 %v1608, 7
    %v1610 = vsub.s32 0, %v1609
    %v1611 = vrot.slane %v1601, %v1610
    %v1612 = vmul.f32 %v1606, %v1611
    %v1613 = vmul.f32 %v1607, %v1611
    %v1614 = vmax.f32 %v1612, 0.0
    %v1615 = vmax.f32 %v1613, 0.0
    %1616 = vst [vmem:[#allocation3 + $0x1] sm:$0xff] %v1614
    %1617 = vst [vmem:[#allocation3 + $0x9] sm:$0xff] %v1615
    %v1618 = vld [vmem:[#allocation3 + $0x1] sm:$0x1]
    %1619 = vst [vmem:[#allocation4 + $0x1] sm:$0x1] %v1618
    %v1620 = vld [vmem:[#allocation3 + $0x2] sm:$0x1]
    %1621 = vst [vmem:[#allocation4 + $0xb] sm:$0x1] %v1620
    %v1622 = vld [vmem:[#allocation3 + $0x3] sm:$0x1]
    %1623 = vst [vmem:[#allocation4 + $0x2] sm:$0x1] %v1622
    %v1624 = vld [vmem:[#allocation3 + $0x4] sm:$0x1]
    %1625 = vst [vmem:[#allocation4 + $0xc] sm:$0x1] %v1624
    %v1626 = vld [vmem:[#allocation3 + $0x5] sm:$0x1]
    %1627 = vst [vmem:[#allocation4 + $0x3] sm:$0x1] %v1626
    %v1628 = vld [vmem:[#allocation3 + $0x6] sm:$0x1]
    %1629 = vst [vmem:[#allocation4 + $0xd] sm:$0x1] %v1628
    %v1630 = vld [vmem:[#allocation3 + $0x7] sm:$0x1]
    %1631 = vst [vmem:[#allocation4 + $0x4] sm:$0x1] %v1630
    %v1632 = vld [vmem:[#allocation3 + $0x8] sm:$0x1]
    %1633 = vst [vmem:[#allocation4 + $0xe] sm:$0x1] %v1632
    %v1634 = vld [vmem:[#allocation3 + $0x9] sm:$0x1]
    %1635 = vst [vmem:[#allocation4 + $0x5] sm:$0x1] %v1634
    %v1636 = vld [vmem:[#allocation3 + $0xa] sm:$0x1]
    %1637 = vst [vmem:[#allocation4 + $0xf] sm:$0x1] %v1636
    %v1638 = vld [vmem:[#allocation3 + $0xb] sm:$0x1]
    %1639 = vst [vmem:[#allocation4 + $0x6] sm:$0x1] %v1638
    %v1640 = vld [vmem:[#allocation3 + $0xc] sm:$0x1]
    %1641 = vst [vmem:[#allocation4 + $0x10] sm:$0x1] %v1640
    %v1642 = vld [vmem:[#allocation3 + $0xd] sm:$0x1]
    %1643 = vst [vmem:[#allocation4 + $0x7] sm:$0x1] %v1642
    %v1644 = vld [vmem:[#allocation3 + $0xe] sm:$0x1]
    %1645 = vst [vmem:[#allocation4 + $0x11] sm:$0x1] %v1644
    %v1646 = vld [vmem:[#allocation3 + $0xf] sm:$0x1]
    %1647 = vst [vmem:[#allocation4 + $0x8] sm:$0x1] %v1646
    %v1648 = vld [vmem:[#allocation3 + $0x10] sm:$0x1]
    %1649 = vst [vmem:[#allocation4 + $0x12] sm:$0x1] %v1648
    %v1650 = vld [vmem:[#allocation4] sm:$0xff]
    %v1651 = vld [vmem:[#allocation19] sm:$0xff]
    %v1652 = vld [vmem:[#allocation19 + $0x8] sm:$0xff]
    %v1653 = vld [vmem:[#allocation19 + $0x10] sm:$0xff]
    %v1654 = vld [vmem:[#allocation19 + $0x18] sm:$0xff]
    %v1655 = vld [vmem:[#allocation19 + $0x20] sm:$0xff]
    %v1656 = vld [vmem:[#allocation19 + $0x28] sm:$0xff]
    %v1657 = vld [vmem:[#allocation19 + $0x30] sm:$0xff]
    %v1658 = vld [vmem:[#allocation19 + $0x38] sm:$0xff]
    %v1659 = vld [vmem:[#allocation19 + $0x40] sm:$0xff]
    %v1660 = vld [vmem:[#allocation19 + $0x48] sm:$0xff]
    %v1661 = vld [vmem:[#allocation19 + $0x50] sm:$0xff]
    %v1662 = vld [vmem:[#allocation19 + $0x58] sm:$0xff]
    %v1663 = vld [vmem:[#allocation19 + $0x60] sm:$0xff]
    %v1664 = vld [vmem:[#allocation19 + $0x68] sm:$0xff]
    %v1665 = vld [vmem:[#allocation19 + $0x70] sm:$0xff]
    %v1666 = vld [vmem:[#allocation19 + $0x78] sm:$0xff]
    %v1667 = vld [vmem:[#allocation4 + $0xa] sm:$0xff]
    %s1668 = scalar_lea.vmem [#allocation19], 128
    %v1669 = vld [vmem:[%s1668] sm:$0xff]
    %v1670 = vld [vmem:[%s1668 + $0x8] sm:$0xff]
    %v1671 = vld [vmem:[%s1668 + $0x10] sm:$0xff]
    %v1672 = vld [vmem:[%s1668 + $0x18] sm:$0xff]
    %v1673 = vld [vmem:[%s1668 + $0x20] sm:$0xff]
    %v1674 = vld [vmem:[%s1668 + $0x28] sm:$0xff]
    %v1675 = vld [vmem:[%s1668 + $0x30] sm:$0xff]
    %v1676 = vld [vmem:[%s1668 + $0x38] sm:$0xff]
    %v1677 = vld [vmem:[%s1668 + $0x40] sm:$0xff]
    %v1678 = vld [vmem:[%s1668 + $0x48] sm:$0xff]
    %v1679 = vld [vmem:[%s1668 + $0x50] sm:$0xff]
    %v1680 = vld [vmem:[%s1668 + $0x58] sm:$0xff]
    %v1681 = vld [vmem:[%s1668 + $0x60] sm:$0xff]
    %v1682 = vld [vmem:[%s1668 + $0x68] sm:$0xff]
    %v1683 = vld [vmem:[%s1668 + $0x70] sm:$0xff]
    %v1684 = vld [vmem:[%s1668 + $0x78] sm:$0xff]
    %1685 = vmatprep.subr.mxu0 0.0
    %1686 = vmatpush1.msra.mxu0 %v1684
    %1687 = vmatprep.subr.mxu0 0.0
    %1688 = vmatpush1.msra.mxu0 %v1683
    %1689 = vmatprep.subr.mxu0 0.0
    %1690 = vmatpush1.msra.mxu0 %v1682
    %1691 = vmatprep.subr.mxu0 0.0
    %1692 = vmatpush1.msra.mxu0 %v1681
    %1693 = vmatprep.subr.mxu0 0.0
    %1694 = vmatpush1.msra.mxu0 %v1680
    %1695 = vmatprep.subr.mxu0 0.0
    %1696 = vmatpush1.msra.mxu0 %v1679
    %1697 = vmatprep.subr.mxu0 0.0
    %1698 = vmatpush1.msra.mxu0 %v1678
    %1699 = vmatprep.subr.mxu0 0.0
    %1700 = vmatpush1.msra.mxu0 %v1677
    %1701 = vmatprep.subr.mxu0 0.0
    %1702 = vmatpush1.msra.mxu0 %v1676
    %1703 = vmatprep.subr.mxu0 0.0
    %1704 = vmatpush1.msra.mxu0 %v1675
    %1705 = vmatprep.subr.mxu0 0.0
    %1706 = vmatpush1.msra.mxu0 %v1674
    %1707 = vmatprep.subr.mxu0 0.0
    %1708 = vmatpush1.msra.mxu0 %v1673
    %1709 = vmatprep.subr.mxu0 0.0
    %1710 = vmatpush1.msra.mxu0 %v1672
    %1711 = vmatprep.subr.mxu0 0.0
    %1712 = vmatpush1.msra.mxu0 %v1671
    %1713 = vmatprep.subr.mxu0 0.0
    %1714 = vmatpush1.msra.mxu0 %v1670
    %1715 = vmatprep.subr.mxu0 0.0
    %1716 = vmatpush1.msra.mxu0 %v1669
    %1717 = vmatprep.subr.mxu0 0.0
    %1718 = vmatpush2.msra.mxu0 0.0
    %1719 = vmatprep.subr.mxu0 0.0
    %1720 = vmatpush2.msra.mxu0 0.0
    %1721 = vmatprep.subr.mxu0 0.0
    %1722 = vmatpush2.msra.mxu0 0.0
    %1723 = vmatprep.subr.mxu0 0.0
    %1724 = vmatpush2.msra.mxu0 0.0
    %1725 = vmatprep.subr.mxu0 0.0
    %1726 = vmatpush2.msra.mxu0 0.0
    %1727 = vmatprep.subr.mxu0 0.0
    %1728 = vmatpush2.msra.mxu0 0.0
    %1729 = vmatprep.subr.mxu0 0.0
    %1730 = vmatpush2.msra.mxu0 0.0
    %1731 = vmatprep.subr.mxu0 0.0
    %1732 = vmatpush2.msra.mxu0 0.0
    %1733 = vmatprep.subr.mxu0 0.0
    %1734 = vmatpush2.msra.mxu0 0.0
    %1735 = vmatprep.subr.mxu0 0.0
    %1736 = vmatpush2.msra.mxu0 0.0
    %1737 = vmatprep.subr.mxu0 0.0
    %1738 = vmatpush2.msra.mxu0 0.0
    %1739 = vmatprep.subr.mxu0 0.0
    %1740 = vmatpush2.msra.mxu0 0.0
    %1741 = vmatprep.subr.mxu0 0.0
    %1742 = vmatpush2.msra.mxu0 0.0
    %1743 = vmatprep.subr.mxu0 0.0
    %1744 = vmatpush2.msra.mxu0 0.0
    %1745 = vmatprep.subr.mxu0 0.0
    %1746 = vmatpush2.msra.mxu0 0.0
    %1747 = vmatprep.subr.mxu0 0.0
    %1748 = vmatpush2.msra.mxu0 0.0
    %1749 = vmatprep.mubr.f32.mxu0 0.0
    %1750 = vmatmul.mubr.f32.gmra.mxu0 %v1667
    %v1751 = vpop.f32.mrf.mxu0
    %v1752 = vadd.f32 0.0, %v1751
    %v1753 = vpop.f32.mrf.mxu0
    %1754 = vdwg.mxu0
    %1755 = vmatprep.subr.mxu0 0.0
    %1756 = vmatpush1.msra.mxu0 %v1666
    %1757 = vmatprep.subr.mxu0 0.0
    %1758 = vmatpush1.msra.mxu0 %v1665
    %1759 = vmatprep.subr.mxu0 0.0
    %1760 = vmatpush1.msra.mxu0 %v1664
    %1761 = vmatprep.subr.mxu0 0.0
    %1762 = vmatpush1.msra.mxu0 %v1663
    %1763 = vmatprep.subr.mxu0 0.0
    %1764 = vmatpush1.msra.mxu0 %v1662
    %1765 = vmatprep.subr.mxu0 0.0
    %1766 = vmatpush1.msra.mxu0 %v1661
    %1767 = vmatprep.subr.mxu0 0.0
    %1768 = vmatpush1.msra.mxu0 %v1660
    %1769 = vmatprep.subr.mxu0 0.0
    %1770 = vmatpush1.msra.mxu0 %v1659
    %1771 = vmatprep.subr.mxu0 0.0
    %1772 = vmatpush1.msra.mxu0 %v1658
    %1773 = vmatprep.subr.mxu0 0.0
    %1774 = vmatpush1.msra.mxu0 %v1657
    %1775 = vmatprep.subr.mxu0 0.0
    %1776 = vmatpush1.msra.mxu0 %v1656
    %1777 = vmatprep.subr.mxu0 0.0
    %1778 = vmatpush1.msra.mxu0 %v1655
    %1779 = vmatprep.subr.mxu0 0.0
    %1780 = vmatpush1.msra.mxu0 %v1654
    %1781 = vmatprep.subr.mxu0 0.0
    %1782 = vmatpush1.msra.mxu0 %v1653
    %1783 = vmatprep.subr.mxu0 0.0
    %1784 = vmatpush1.msra.mxu0 %v1652
    %1785 = vmatprep.subr.mxu0 0.0
    %1786 = vmatpush1.msra.mxu0 %v1651
    %1787 = vmatprep.subr.mxu0 0.0
    %1788 = vmatpush2.msra.mxu0 0.0
    %1789 = vmatprep.subr.mxu0 0.0
    %1790 = vmatpush2.msra.mxu0 0.0
    %1791 = vmatprep.subr.mxu0 0.0
    %1792 = vmatpush2.msra.mxu0 0.0
    %1793 = vmatprep.subr.mxu0 0.0
    %1794 = vmatpush2.msra.mxu0 0.0
    %1795 = vmatprep.subr.mxu0 0.0
    %1796 = vmatpush2.msra.mxu0 0.0
    %1797 = vmatprep.subr.mxu0 0.0
    %1798 = vmatpush2.msra.mxu0 0.0
    %1799 = vmatprep.subr.mxu0 0.0
    %1800 = vmatpush2.msra.mxu0 0.0
    %1801 = vmatprep.subr.mxu0 0.0
    %1802 = vmatpush2.msra.mxu0 0.0
    %1803 = vmatprep.subr.mxu0 0.0
    %1804 = vmatpush2.msra.mxu0 0.0
    %1805 = vmatprep.subr.mxu0 0.0
    %1806 = vmatpush2.msra.mxu0 0.0
    %1807 = vmatprep.subr.mxu0 0.0
    %1808 = vmatpush2.msra.mxu0 0.0
    %1809 = vmatprep.subr.mxu0 0.0
    %1810 = vmatpush2.msra.mxu0 0.0
    %1811 = vmatprep.subr.mxu0 0.0
    %1812 = vmatpush2.msra.mxu0 0.0
    %1813 = vmatprep.subr.mxu0 0.0
    %1814 = vmatpush2.msra.mxu0 0.0
    %1815 = vmatprep.subr.mxu0 0.0
    %1816 = vmatpush2.msra.mxu0 0.0
    %1817 = vmatprep.subr.mxu0 0.0
    %1818 = vmatpush2.msra.mxu0 0.0
    %1819 = vmatprep.mubr.f32.mxu0 0.0
    %1820 = vmatmul.mubr.f32.gmra.mxu0 %v1650
    %v1821 = vpop.f32.mrf.mxu0
    %v1822 = vadd.f32 %v1752, %v1821
    %v1823 = vpop.f32.mrf.mxu0
    %1824 = vdwg.mxu0
    %v1825 = vld [vmem:[#allocation4 + $0x1] sm:$0xff]
    %s1826 = scalar_lea.vmem [#allocation19], 256
    %v1827 = vld [vmem:[%s1826] sm:$0xff]
    %v1828 = vld [vmem:[%s1826 + $0x8] sm:$0xff]
    %v1829 = vld [vmem:[%s1826 + $0x10] sm:$0xff]
    %v1830 = vld [vmem:[%s1826 + $0x18] sm:$0xff]
    %v1831 = vld [vmem:[%s1826 + $0x20] sm:$0xff]
    %v1832 = vld [vmem:[%s1826 + $0x28] sm:$0xff]
    %v1833 = vld [vmem:[%s1826 + $0x30] sm:$0xff]
    %v1834 = vld [vmem:[%s1826 + $0x38] sm:$0xff]
    %v1835 = vld [vmem:[%s1826 + $0x40] sm:$0xff]
    %v1836 = vld [vmem:[%s1826 + $0x48] sm:$0xff]
    %v1837 = vld [vmem:[%s1826 + $0x50] sm:$0xff]
    %v1838 = vld [vmem:[%s1826 + $0x58] sm:$0xff]
    %v1839 = vld [vmem:[%s1826 + $0x60] sm:$0xff]
    %v1840 = vld [vmem:[%s1826 + $0x68] sm:$0xff]
    %v1841 = vld [vmem:[%s1826 + $0x70] sm:$0xff]
    %v1842 = vld [vmem:[%s1826 + $0x78] sm:$0xff]
    %1843 = vmatprep.subr.mxu0 0.0
    %1844 = vmatpush1.msra.mxu0 %v1842
    %1845 = vmatprep.subr.mxu0 0.0
    %1846 = vmatpush1.msra.mxu0 %v1841
    %1847 = vmatprep.subr.mxu0 0.0
    %1848 = vmatpush1.msra.mxu0 %v1840
    %1849 = vmatprep.subr.mxu0 0.0
    %1850 = vmatpush1.msra.mxu0 %v1839
    %1851 = vmatprep.subr.mxu0 0.0
    %1852 = vmatpush1.msra.mxu0 %v1838
    %1853 = vmatprep.subr.mxu0 0.0
    %1854 = vmatpush1.msra.mxu0 %v1837
    %1855 = vmatprep.subr.mxu0 0.0
    %1856 = vmatpush1.msra.mxu0 %v1836
    %1857 = vmatprep.subr.mxu0 0.0
    %1858 = vmatpush1.msra.mxu0 %v1835
    %1859 = vmatprep.subr.mxu0 0.0
    %1860 = vmatpush1.msra.mxu0 %v1834
    %1861 = vmatprep.subr.mxu0 0.0
    %1862 = vmatpush1.msra.mxu0 %v1833
    %1863 = vmatprep.subr.mxu0 0.0
    %1864 = vmatpush1.msra.mxu0 %v1832
    %1865 = vmatprep.subr.mxu0 0.0
    %1866 = vmatpush1.msra.mxu0 %v1831
    %1867 = vmatprep.subr.mxu0 0.0
    %1868 = vmatpush1.msra.mxu0 %v1830
    %1869 = vmatprep.subr.mxu0 0.0
    %1870 = vmatpush1.msra.mxu0 %v1829
    %1871 = vmatprep.subr.mxu0 0.0
    %1872 = vmatpush1.msra.mxu0 %v1828
    %1873 = vmatprep.subr.mxu0 0.0
    %1874 = vmatpush1.msra.mxu0 %v1827
    %1875 = vmatprep.subr.mxu0 0.0
    %1876 = vmatpush2.msra.mxu0 0.0
    %1877 = vmatprep.subr.mxu0 0.0
    %1878 = vmatpush2.msra.mxu0 0.0
    %1879 = vmatprep.subr.mxu0 0.0
    %1880 = vmatpush2.msra.mxu0 0.0
    %1881 = vmatprep.subr.mxu0 0.0
    %1882 = vmatpush2.msra.mxu0 0.0
    %1883 = vmatprep.subr.mxu0 0.0
    %1884 = vmatpush2.msra.mxu0 0.0
    %1885 = vmatprep.subr.mxu0 0.0
    %1886 = vmatpush2.msra.mxu0 0.0
    %1887 = vmatprep.subr.mxu0 0.0
    %1888 = vmatpush2.msra.mxu0 0.0
    %1889 = vmatprep.subr.mxu0 0.0
    %1890 = vmatpush2.msra.mxu0 0.0
    %1891 = vmatprep.subr.mxu0 0.0
    %1892 = vmatpush2.msra.mxu0 0.0
    %1893 = vmatprep.subr.mxu0 0.0
    %1894 = vmatpush2.msra.mxu0 0.0
    %1895 = vmatprep.subr.mxu0 0.0
    %1896 = vmatpush2.msra.mxu0 0.0
    %1897 = vmatprep.subr.mxu0 0.0
    %1898 = vmatpush2.msra.mxu0 0.0
    %1899 = vmatprep.subr.mxu0 0.0
    %1900 = vmatpush2.msra.mxu0 0.0
    %1901 = vmatprep.subr.mxu0 0.0
    %1902 = vmatpush2.msra.mxu0 0.0
    %1903 = vmatprep.subr.mxu0 0.0
    %1904 = vmatpush2.msra.mxu0 0.0
    %1905 = vmatprep.subr.mxu0 0.0
    %1906 = vmatpush2.msra.mxu0 0.0
    %1907 = vmatprep.mubr.f32.mxu0 0.0
    %1908 = vmatmul.mubr.f32.gmra.mxu0 %v1825
    %v1909 = vpop.f32.mrf.mxu0
    %v1910 = vadd.f32 0.0, %v1909
    %v1911 = vpop.f32.mrf.mxu0
    %1912 = vdwg.mxu0
    %v1913 = vadd.f32 %v1822, %v1910
    %v1914 = vld [vmem:[#allocation4 + $0xb] sm:$0xff]
    %s1915 = scalar_lea.vmem [#allocation19], 384
    %v1916 = vld [vmem:[%s1915] sm:$0xff]
    %v1917 = vld [vmem:[%s1915 + $0x8] sm:$0xff]
    %v1918 = vld [vmem:[%s1915 + $0x10] sm:$0xff]
    %v1919 = vld [vmem:[%s1915 + $0x18] sm:$0xff]
    %v1920 = vld [vmem:[%s1915 + $0x20] sm:$0xff]
    %v1921 = vld [vmem:[%s1915 + $0x28] sm:$0xff]
    %v1922 = vld [vmem:[%s1915 + $0x30] sm:$0xff]
    %v1923 = vld [vmem:[%s1915 + $0x38] sm:$0xff]
    %v1924 = vld [vmem:[%s1915 + $0x40] sm:$0xff]
    %v1925 = vld [vmem:[%s1915 + $0x48] sm:$0xff]
    %v1926 = vld [vmem:[%s1915 + $0x50] sm:$0xff]
    %v1927 = vld [vmem:[%s1915 + $0x58] sm:$0xff]
    %v1928 = vld [vmem:[%s1915 + $0x60] sm:$0xff]
    %v1929 = vld [vmem:[%s1915 + $0x68] sm:$0xff]
    %v1930 = vld [vmem:[%s1915 + $0x70] sm:$0xff]
    %v1931 = vld [vmem:[%s1915 + $0x78] sm:$0xff]
    %1932 = vmatprep.subr.mxu0 0.0
    %1933 = vmatpush1.msra.mxu0 %v1931
    %1934 = vmatprep.subr.mxu0 0.0
    %1935 = vmatpush1.msra.mxu0 %v1930
    %1936 = vmatprep.subr.mxu0 0.0
    %1937 = vmatpush1.msra.mxu0 %v1929
    %1938 = vmatprep.subr.mxu0 0.0
    %1939 = vmatpush1.msra.mxu0 %v1928
    %1940 = vmatprep.subr.mxu0 0.0
    %1941 = vmatpush1.msra.mxu0 %v1927
    %1942 = vmatprep.subr.mxu0 0.0
    %1943 = vmatpush1.msra.mxu0 %v1926
    %1944 = vmatprep.subr.mxu0 0.0
    %1945 = vmatpush1.msra.mxu0 %v1925
    %1946 = vmatprep.subr.mxu0 0.0
    %1947 = vmatpush1.msra.mxu0 %v1924
    %1948 = vmatprep.subr.mxu0 0.0
    %1949 = vmatpush1.msra.mxu0 %v1923
    %1950 = vmatprep.subr.mxu0 0.0
    %1951 = vmatpush1.msra.mxu0 %v1922
    %1952 = vmatprep.subr.mxu0 0.0
    %1953 = vmatpush1.msra.mxu0 %v1921
    %1954 = vmatprep.subr.mxu0 0.0
    %1955 = vmatpush1.msra.mxu0 %v1920
    %1956 = vmatprep.subr.mxu0 0.0
    %1957 = vmatpush1.msra.mxu0 %v1919
    %1958 = vmatprep.subr.mxu0 0.0
    %1959 = vmatpush1.msra.mxu0 %v1918
    %1960 = vmatprep.subr.mxu0 0.0
    %1961 = vmatpush1.msra.mxu0 %v1917
    %1962 = vmatprep.subr.mxu0 0.0
    %1963 = vmatpush1.msra.mxu0 %v1916
    %1964 = vmatprep.subr.mxu0 0.0
    %1965 = vmatpush2.msra.mxu0 0.0
    %1966 = vmatprep.subr.mxu0 0.0
    %1967 = vmatpush2.msra.mxu0 0.0
    %1968 = vmatprep.subr.mxu0 0.0
    %1969 = vmatpush2.msra.mxu0 0.0
    %1970 = vmatprep.subr.mxu0 0.0
    %1971 = vmatpush2.msra.mxu0 0.0
    %1972 = vmatprep.subr.mxu0 0.0
    %1973 = vmatpush2.msra.mxu0 0.0
    %1974 = vmatprep.subr.mxu0 0.0
    %1975 = vmatpush2.msra.mxu0 0.0
    %1976 = vmatprep.subr.mxu0 0.0
    %1977 = vmatpush2.msra.mxu0 0.0
    %1978 = vmatprep.subr.mxu0 0.0
    %1979 = vmatpush2.msra.mxu0 0.0
    %1980 = vmatprep.subr.mxu0 0.0
    %1981 = vmatpush2.msra.mxu0 0.0
    %1982 = vmatprep.subr.mxu0 0.0
    %1983 = vmatpush2.msra.mxu0 0.0
    %1984 = vmatprep.subr.mxu0 0.0
    %1985 = vmatpush2.msra.mxu0 0.0
    %1986 = vmatprep.subr.mxu0 0.0
    %1987 = vmatpush2.msra.mxu0 0.0
    %1988 = vmatprep.subr.mxu0 0.0
    %1989 = vmatpush2.msra.mxu0 0.0
    %1990 = vmatprep.subr.mxu0 0.0
    %1991 = vmatpush2.msra.mxu0 0.0
    %1992 = vmatprep.subr.mxu0 0.0
    %1993 = vmatpush2.msra.mxu0 0.0
    %1994 = vmatprep.subr.mxu0 0.0
    %1995 = vmatpush2.msra.mxu0 0.0
    %1996 = vmatprep.mubr.f32.mxu0 0.0
    %1997 = vmatmul.mubr.f32.gmra.mxu0 %v1914
    %v1998 = vpop.f32.mrf.mxu0
    %v1999 = vadd.f32 0.0, %v1998
    %v2000 = vpop.f32.mrf.mxu0
    %2001 = vdwg.mxu0
    %v2002 = vadd.f32 %v1913, %v1999
    %v2003 = vld [vmem:[#allocation4 + $0x2] sm:$0xff]
    %s2004 = scalar_lea.vmem [#allocation19], 512
    %v2005 = vld [vmem:[%s2004] sm:$0xff]
    %v2006 = vld [vmem:[%s2004 + $0x8] sm:$0xff]
    %v2007 = vld [vmem:[%s2004 + $0x10] sm:$0xff]
    %v2008 = vld [vmem:[%s2004 + $0x18] sm:$0xff]
    %v2009 = vld [vmem:[%s2004 + $0x20] sm:$0xff]
    %v2010 = vld [vmem:[%s2004 + $0x28] sm:$0xff]
    %v2011 = vld [vmem:[%s2004 + $0x30] sm:$0xff]
    %v2012 = vld [vmem:[%s2004 + $0x38] sm:$0xff]
    %v2013 = vld [vmem:[%s2004 + $0x40] sm:$0xff]
    %v2014 = vld [vmem:[%s2004 + $0x48] sm:$0xff]
    %v2015 = vld [vmem:[%s2004 + $0x50] sm:$0xff]
    %v2016 = vld [vmem:[%s2004 + $0x58] sm:$0xff]
    %v2017 = vld [vmem:[%s2004 + $0x60] sm:$0xff]
    %v2018 = vld [vmem:[%s2004 + $0x68] sm:$0xff]
    %v2019 = vld [vmem:[%s2004 + $0x70] sm:$0xff]
    %v2020 = vld [vmem:[%s2004 + $0x78] sm:$0xff]
    %2021 = vmatprep.subr.mxu0 0.0
    %2022 = vmatpush1.msra.mxu0 %v2020
    %2023 = vmatprep.subr.mxu0 0.0
    %2024 = vmatpush1.msra.mxu0 %v2019
    %2025 = vmatprep.subr.mxu0 0.0
    %2026 = vmatpush1.msra.mxu0 %v2018
    %2027 = vmatprep.subr.mxu0 0.0
    %2028 = vmatpush1.msra.mxu0 %v2017
    %2029 = vmatprep.subr.mxu0 0.0
    %2030 = vmatpush1.msra.mxu0 %v2016
    %2031 = vmatprep.subr.mxu0 0.0
    %2032 = vmatpush1.msra.mxu0 %v2015
    %2033 = vmatprep.subr.mxu0 0.0
    %2034 = vmatpush1.msra.mxu0 %v2014
    %2035 = vmatprep.subr.mxu0 0.0
    %2036 = vmatpush1.msra.mxu0 %v2013
    %2037 = vmatprep.subr.mxu0 0.0
    %2038 = vmatpush1.msra.mxu0 %v2012
    %2039 = vmatprep.subr.mxu0 0.0
    %2040 = vmatpush1.msra.mxu0 %v2011
    %2041 = vmatprep.subr.mxu0 0.0
    %2042 = vmatpush1.msra.mxu0 %v2010
    %2043 = vmatprep.subr.mxu0 0.0
    %2044 = vmatpush1.msra.mxu0 %v2009
    %2045 = vmatprep.subr.mxu0 0.0
    %2046 = vmatpush1.msra.mxu0 %v2008
    %2047 = vmatprep.subr.mxu0 0.0
    %2048 = vmatpush1.msra.mxu0 %v2007
    %2049 = vmatprep.subr.mxu0 0.0
    %2050 = vmatpush1.msra.mxu0 %v2006
    %2051 = vmatprep.subr.mxu0 0.0
    %2052 = vmatpush1.msra.mxu0 %v2005
    %2053 = vmatprep.subr.mxu0 0.0
    %2054 = vmatpush2.msra.mxu0 0.0
    %2055 = vmatprep.subr.mxu0 0.0
    %2056 = vmatpush2.msra.mxu0 0.0
    %2057 = vmatprep.subr.mxu0 0.0
    %2058 = vmatpush2.msra.mxu0 0.0
    %2059 = vmatprep.subr.mxu0 0.0
    %2060 = vmatpush2.msra.mxu0 0.0
    %2061 = vmatprep.subr.mxu0 0.0
    %2062 = vmatpush2.msra.mxu0 0.0
    %2063 = vmatprep.subr.mxu0 0.0
    %2064 = vmatpush2.msra.mxu0 0.0
    %2065 = vmatprep.subr.mxu0 0.0
    %2066 = vmatpush2.msra.mxu0 0.0
    %2067 = vmatprep.subr.mxu0 0.0
    %2068 = vmatpush2.msra.mxu0 0.0
    %2069 = vmatprep.subr.mxu0 0.0
    %2070 = vmatpush2.msra.mxu0 0.0
    %2071 = vmatprep.subr.mxu0 0.0
    %2072 = vmatpush2.msra.mxu0 0.0
    %2073 = vmatprep.subr.mxu0 0.0
    %2074 = vmatpush2.msra.mxu0 0.0
    %2075 = vmatprep.subr.mxu0 0.0
    %2076 = vmatpush2.msra.mxu0 0.0
    %2077 = vmatprep.subr.mxu0 0.0
    %2078 = vmatpush2.msra.mxu0 0.0
    %2079 = vmatprep.subr.mxu0 0.0
    %2080 = vmatpush2.msra.mxu0 0.0
    %2081 = vmatprep.subr.mxu0 0.0
    %2082 = vmatpush2.msra.mxu0 0.0
    %2083 = vmatprep.subr.mxu0 0.0
    %2084 = vmatpush2.msra.mxu0 0.0
    %2085 = vmatprep.mubr.f32.mxu0 0.0
    %2086 = vmatmul.mubr.f32.gmra.mxu0 %v2003
    %v2087 = vpop.f32.mrf.mxu0
    %v2088 = vadd.f32 0.0, %v2087
    %v2089 = vpop.f32.mrf.mxu0
    %2090 = vdwg.mxu0
    %v2091 = vadd.f32 %v2002, %v2088
    %v2092 = vrot.slane %v2091, 4
    %v2093 = vadd.f32 %v2091, %v2092
    %v2094 = vrot.slane %v2093, 2
    %v2095 = vadd.f32 %v2093, %v2094
    %v2096 = vrot.slane %v2095, 1
    %v2097 = vadd.f32 %v2095, %v2096
    %v2098 = vmul.f32 %v2091, %v2091
    %v2099 = vrot.slane %v2098, 4
    %v2100 = vadd.f32 %v2098, %v2099
    %v2101 = vrot.slane %v2100, 2
    %v2102 = vadd.f32 %v2100, %v2101
    %v2103 = vrot.slane %v2102, 1
    %v2104 = vadd.f32 %v2102, %v2103
    %2105 = vmatprep.subr.mxu0 0.0
    %2106 = vmatpush1.msra.mxu0 %v394
    %2107 = vmatprep.subr.mxu0 0.0
    %2108 = vmatpush1.msra.mxu0 %v393
    %2109 = vmatprep.subr.mxu0 0.0
    %2110 = vmatpush1.msra.mxu0 %v392
    %2111 = vmatprep.subr.mxu0 0.0
    %2112 = vmatpush1.msra.mxu0 %v391
    %2113 = vmatprep.subr.mxu0 0.0
    %2114 = vmatpush1.msra.mxu0 %v390
    %2115 = vmatprep.subr.mxu0 0.0
    %2116 = vmatpush1.msra.mxu0 %v389
    %2117 = vmatprep.subr.mxu0 0.0
    %2118 = vmatpush1.msra.mxu0 %v388
    %2119 = vmatprep.subr.mxu0 0.0
    %2120 = vmatpush1.msra.mxu0 %v387
    %2121 = vmatprep.subr.mxu0 0.0
    %2122 = vmatpush1.msra.mxu0 %v386
    %2123 = vmatprep.subr.mxu0 0.0
    %2124 = vmatpush1.msra.mxu0 %v385
    %2125 = vmatprep.subr.mxu0 0.0
    %2126 = vmatpush1.msra.mxu0 %v384
    %2127 = vmatprep.subr.mxu0 0.0
    %2128 = vmatpush1.msra.mxu0 %v383
    %2129 = vmatprep.subr.mxu0 0.0
    %2130 = vmatpush1.msra.mxu0 %v382
    %2131 = vmatprep.subr.mxu0 0.0
    %2132 = vmatpush1.msra.mxu0 %v381
    %2133 = vmatprep.subr.mxu0 0.0
    %2134 = vmatpush1.msra.mxu0 %v380
    %2135 = vmatprep.subr.mxu0 0.0
    %2136 = vmatpush1.msra.mxu0 %v379
    %2137 = vmatprep.subr.mxu0 0.0
    %2138 = vmatpush2.msra.mxu0 0.0
    %2139 = vmatprep.subr.mxu0 0.0
    %2140 = vmatpush2.msra.mxu0 0.0
    %2141 = vmatprep.subr.mxu0 0.0
    %2142 = vmatpush2.msra.mxu0 0.0
    %2143 = vmatprep.subr.mxu0 0.0
    %2144 = vmatpush2.msra.mxu0 0.0
    %2145 = vmatprep.subr.mxu0 0.0
    %2146 = vmatpush2.msra.mxu0 0.0
    %2147 = vmatprep.subr.mxu0 0.0
    %2148 = vmatpush2.msra.mxu0 0.0
    %2149 = vmatprep.subr.mxu0 0.0
    %2150 = vmatpush2.msra.mxu0 0.0
    %2151 = vmatprep.subr.mxu0 0.0
    %2152 = vmatpush2.msra.mxu0 0.0
    %2153 = vmatprep.subr.mxu0 0.0
    %2154 = vmatpush2.msra.mxu0 0.0
    %2155 = vmatprep.subr.mxu0 0.0
    %2156 = vmatpush2.msra.mxu0 0.0
    %2157 = vmatprep.subr.mxu0 0.0
    %2158 = vmatpush2.msra.mxu0 0.0
    %2159 = vmatprep.subr.mxu0 0.0
    %2160 = vmatpush2.msra.mxu0 0.0
    %2161 = vmatprep.subr.mxu0 0.0
    %2162 = vmatpush2.msra.mxu0 0.0
    %2163 = vmatprep.subr.mxu0 0.0
    %2164 = vmatpush2.msra.mxu0 0.0
    %2165 = vmatprep.subr.mxu0 0.0
    %2166 = vmatpush2.msra.mxu0 0.0
    %2167 = vmatprep.subr.mxu0 0.0
    %2168 = vmatpush2.msra.mxu0 0.0
    %2169 = vmatprep.mubr.f32.mxu0 0.0
    %2170 = vmatmul.mubr.f32.gmra.mxu0 %v2097
    %v2171 = vpop.f32.mrf.mxu0
    %v2172 = vadd.f32 0.0, %v2171
    %v2173 = vpop.f32.mrf.mxu0
    %2174 = vdwg.mxu0
    %v2175 = vmul.f32 %v2172, 0.0078125
    %2176 = vmatprep.subr.mxu0 0.0
    %2177 = vmatpush1.msra.mxu0 %v394
    %2178 = vmatprep.subr.mxu0 0.0
    %2179 = vmatpush1.msra.mxu0 %v393
    %2180 = vmatprep.subr.mxu0 0.0
    %2181 = vmatpush1.msra.mxu0 %v392
    %2182 = vmatprep.subr.mxu0 0.0
    %2183 = vmatpush1.msra.mxu0 %v391
    %2184 = vmatprep.subr.mxu0 0.0
    %2185 = vmatpush1.msra.mxu0 %v390
    %2186 = vmatprep.subr.mxu0 0.0
    %2187 = vmatpush1.msra.mxu0 %v389
    %2188 = vmatprep.subr.mxu0 0.0
    %2189 = vmatpush1.msra.mxu0 %v388
    %2190 = vmatprep.subr.mxu0 0.0
    %2191 = vmatpush1.msra.mxu0 %v387
    %2192 = vmatprep.subr.mxu0 0.0
    %2193 = vmatpush1.msra.mxu0 %v386
    %2194 = vmatprep.subr.mxu0 0.0
    %2195 = vmatpush1.msra.mxu0 %v385
    %2196 = vmatprep.subr.mxu0 0.0
    %2197 = vmatpush1.msra.mxu0 %v384
    %2198 = vmatprep.subr.mxu0 0.0
    %2199 = vmatpush1.msra.mxu0 %v383
    %2200 = vmatprep.subr.mxu0 0.0
    %2201 = vmatpush1.msra.mxu0 %v382
    %2202 = vmatprep.subr.mxu0 0.0
    %2203 = vmatpush1.msra.mxu0 %v381
    %2204 = vmatprep.subr.mxu0 0.0
    %2205 = vmatpush1.msra.mxu0 %v380
    %2206 = vmatprep.subr.mxu0 0.0
    %2207 = vmatpush1.msra.mxu0 %v379
    %2208 = vmatprep.subr.mxu0 0.0
    %2209 = vmatpush2.msra.mxu0 0.0
    %2210 = vmatprep.subr.mxu0 0.0
    %2211 = vmatpush2.msra.mxu0 0.0
    %2212 = vmatprep.subr.mxu0 0.0
    %2213 = vmatpush2.msra.mxu0 0.0
    %2214 = vmatprep.subr.mxu0 0.0
    %2215 = vmatpush2.msra.mxu0 0.0
    %2216 = vmatprep.subr.mxu0 0.0
    %2217 = vmatpush2.msra.mxu0 0.0
    %2218 = vmatprep.subr.mxu0 0.0
    %2219 = vmatpush2.msra.mxu0 0.0
    %2220 = vmatprep.subr.mxu0 0.0
    %2221 = vmatpush2.msra.mxu0 0.0
    %2222 = vmatprep.subr.mxu0 0.0
    %2223 = vmatpush2.msra.mxu0 0.0
    %2224 = vmatprep.subr.mxu0 0.0
    %2225 = vmatpush2.msra.mxu0 0.0
    %2226 = vmatprep.subr.mxu0 0.0
    %2227 = vmatpush2.msra.mxu0 0.0
    %2228 = vmatprep.subr.mxu0 0.0
    %2229 = vmatpush2.msra.mxu0 0.0
    %2230 = vmatprep.subr.mxu0 0.0
    %2231 = vmatpush2.msra.mxu0 0.0
    %2232 = vmatprep.subr.mxu0 0.0
    %2233 = vmatpush2.msra.mxu0 0.0
    %2234 = vmatprep.subr.mxu0 0.0
    %2235 = vmatpush2.msra.mxu0 0.0
    %2236 = vmatprep.subr.mxu0 0.0
    %2237 = vmatpush2.msra.mxu0 0.0
    %2238 = vmatprep.subr.mxu0 0.0
    %2239 = vmatpush2.msra.mxu0 0.0
    %2240 = vmatprep.mubr.f32.mxu0 0.0
    %2241 = vmatmul.mubr.f32.gmra.mxu0 %v2104
    %v2242 = vpop.f32.mrf.mxu0
    %v2243 = vadd.f32 0.0, %v2242
    %v2244 = vpop.f32.mrf.mxu0
    %2245 = vdwg.mxu0
    %v2246 = vmul.f32 %v2243, 0.0078125
    %v2247 = vmul.f32 %v2175, %v2175
    %v2248 = vsub.f32 %v2246, %v2247
    %v2249 = vmax.f32 %v2248, 0.0
    %v2250 = vadd.f32 %v2249, 1e-05
    %v2251 = vrsqrt.pop %v2250
    %v2252 = vlaneseq
    %v2253 = vshrl.u32 %v2252, 7
    %v2254 = vsub.s32 0, %v2253
    %v2255 = vrot.slane %v2175, %v2254
    %v2256 = vsub.f32 %v2091, %v2255
    %v2257 = vlaneseq
    %v2258 = vshrl.u32 %v2257, 7
    %v2259 = vsub.s32 0, %v2258
    %v2260 = vrot.slane %v2251, %v2259
    %v2261 = vmul.f32 %v2256, %v2260
    %v2262 = vmax.f32 %v2261, 0.0
    %2263 = vst [vmem:[#allocation5 + $0x1] sm:$0xff] %v2262
    %v2264 = vld [vmem:[#allocation5] sm:$0xff]
    %v2265 = vld [vmem:[#allocation20] sm:$0xff]
    %v2266 = vld [vmem:[#allocation20 + $0x8] sm:$0xff]
    %v2267 = vld [vmem:[#allocation20 + $0x10] sm:$0xff]
    %v2268 = vld [vmem:[#allocation20 + $0x18] sm:$0xff]
    %v2269 = vld [vmem:[#allocation20 + $0x20] sm:$0xff]
    %v2270 = vld [vmem:[#allocation20 + $0x28] sm:$0xff]
    %v2271 = vld [vmem:[#allocation20 + $0x30] sm:$0xff]
    %v2272 = vld [vmem:[#allocation20 + $0x38] sm:$0xff]
    %v2273 = vld [vmem:[#allocation20 + $0x40] sm:$0xff]
    %v2274 = vld [vmem:[#allocation20 + $0x48] sm:$0xff]
    %v2275 = vld [vmem:[#allocation20 + $0x50] sm:$0xff]
    %v2276 = vld [vmem:[#allocation20 + $0x58] sm:$0xff]
    %v2277 = vld [vmem:[#allocation20 + $0x60] sm:$0xff]
    %v2278 = vld [vmem:[#allocation20 + $0x68] sm:$0xff]
    %v2279 = vld [vmem:[#allocation20 + $0x70] sm:$0xff]
    %v2280 = vld [vmem:[#allocation20 + $0x78] sm:$0xff]
    %v2281 = vld [vmem:[#allocation5 + $0x1] sm:$0xff]
    %s2282 = scalar_lea.vmem [#allocation20], 128
    %v2283 = vld [vmem:[%s2282] sm:$0xff]
    %v2284 = vld [vmem:[%s2282 + $0x8] sm:$0xff]
    %v2285 = vld [vmem:[%s2282 + $0x10] sm:$0xff]
    %v2286 = vld [vmem:[%s2282 + $0x18] sm:$0xff]
    %v2287 = vld [vmem:[%s2282 + $0x20] sm:$0xff]
    %v2288 = vld [vmem:[%s2282 + $0x28] sm:$0xff]
    %v2289 = vld [vmem:[%s2282 + $0x30] sm:$0xff]
    %v2290 = vld [vmem:[%s2282 + $0x38] sm:$0xff]
    %v2291 = vld [vmem:[%s2282 + $0x40] sm:$0xff]
    %v2292 = vld [vmem:[%s2282 + $0x48] sm:$0xff]
    %v2293 = vld [vmem:[%s2282 + $0x50] sm:$0xff]
    %v2294 = vld [vmem:[%s2282 + $0x58] sm:$0xff]
    %v2295 = vld [vmem:[%s2282 + $0x60] sm:$0xff]
    %v2296 = vld [vmem:[%s2282 + $0x68] sm:$0xff]
    %v2297 = vld [vmem:[%s2282 + $0x70] sm:$0xff]
    %v2298 = vld [vmem:[%s2282 + $0x78] sm:$0xff]
    %2299 = vmatprep.subr.mxu0 0.0
    %2300 = vmatpush1.msra.mxu0 %v2298
    %2301 = vmatprep.subr.mxu0 0.0
    %2302 = vmatpush1.msra.mxu0 %v2297
    %2303 = vmatprep.subr.mxu0 0.0
    %2304 = vmatpush1.msra.mxu0 %v2296
    %2305 = vmatprep.subr.mxu0 0.0
    %2306 = vmatpush1.msra.mxu0 %v2295
    %2307 = vmatprep.subr.mxu0 0.0
    %2308 = vmatpush1.msra.mxu0 %v2294
    %2309 = vmatprep.subr.mxu0 0.0
    %2310 = vmatpush1.msra.mxu0 %v2293
    %2311 = vmatprep.subr.mxu0 0.0
    %2312 = vmatpush1.msra.mxu0 %v2292
    %2313 = vmatprep.subr.mxu0 0.0
    %2314 = vmatpush1.msra.mxu0 %v2291
    %2315 = vmatprep.subr.mxu0 0.0
    %2316 = vmatpush1.msra.mxu0 %v2290
    %2317 = vmatprep.subr.mxu0 0.0
    %2318 = vmatpush1.msra.mxu0 %v2289
    %2319 = vmatprep.subr.mxu0 0.0
    %2320 = vmatpush1.msra.mxu0 %v2288
    %2321 = vmatprep.subr.mxu0 0.0
    %2322 = vmatpush1.msra.mxu0 %v2287
    %2323 = vmatprep.subr.mxu0 0.0
    %2324 = vmatpush1.msra.mxu0 %v2286
    %2325 = vmatprep.subr.mxu0 0.0
    %2326 = vmatpush1.msra.mxu0 %v2285
    %2327 = vmatprep.subr.mxu0 0.0
    %2328 = vmatpush1.msra.mxu0 %v2284
    %2329 = vmatprep.subr.mxu0 0.0
    %2330 = vmatpush1.msra.mxu0 %v2283
    %2331 = vmatprep.subr.mxu0 0.0
    %2332 = vmatpush2.msra.mxu0 0.0
    %2333 = vmatprep.subr.mxu0 0.0
    %2334 = vmatpush2.msra.mxu0 0.0
    %2335 = vmatprep.subr.mxu0 0.0
    %2336 = vmatpush2.msra.mxu0 0.0
    %2337 = vmatprep.subr.mxu0 0.0
    %2338 = vmatpush2.msra.mxu0 0.0
    %2339 = vmatprep.subr.mxu0 0.0
    %2340 = vmatpush2.msra.mxu0 0.0
    %2341 = vmatprep.subr.mxu0 0.0
    %2342 = vmatpush2.msra.mxu0 0.0
    %2343 = vmatprep.subr.mxu0 0.0
    %2344 = vmatpush2.msra.mxu0 0.0
    %2345 = vmatprep.subr.mxu0 0.0
    %2346 = vmatpush2.msra.mxu0 0.0
    %2347 = vmatprep.subr.mxu0 0.0
    %2348 = vmatpush2.msra.mxu0 0.0
    %2349 = vmatprep.subr.mxu0 0.0
    %2350 = vmatpush2.msra.mxu0 0.0
    %2351 = vmatprep.subr.mxu0 0.0
    %2352 = vmatpush2.msra.mxu0 0.0
    %2353 = vmatprep.subr.mxu0 0.0
    %2354 = vmatpush2.msra.mxu0 0.0
    %2355 = vmatprep.subr.mxu0 0.0
    %2356 = vmatpush2.msra.mxu0 0.0
    %2357 = vmatprep.subr.mxu0 0.0
    %2358 = vmatpush2.msra.mxu0 0.0
    %2359 = vmatprep.subr.mxu0 0.0
    %2360 = vmatpush2.msra.mxu0 0.0
    %2361 = vmatprep.subr.mxu0 0.0
    %2362 = vmatpush2.msra.mxu0 0.0
    %2363 = vmatprep.mubr.f32.mxu0 0.0
    %2364 = vmatmul.mubr.f32.gmra.mxu0 %v2281
    %v2365 = vpop.f32.mrf.mxu0
    %v2366 = vadd.f32 0.0, %v2365
    %v2367 = vpop.f32.mrf.mxu0
    %2368 = vdwg.mxu0
    %2369 = vmatprep.subr.mxu0 0.0
    %2370 = vmatpush1.msra.mxu0 %v2280
    %2371 = vmatprep.subr.mxu0 0.0
    %2372 = vmatpush1.msra.mxu0 %v2279
    %2373 = vmatprep.subr.mxu0 0.0
    %2374 = vmatpush1.msra.mxu0 %v2278
    %2375 = vmatprep.subr.mxu0 0.0
    %2376 = vmatpush1.msra.mxu0 %v2277
    %2377 = vmatprep.subr.mxu0 0.0
    %2378 = vmatpush1.msra.mxu0 %v2276
    %2379 = vmatprep.subr.mxu0 0.0
    %2380 = vmatpush1.msra.mxu0 %v2275
    %2381 = vmatprep.subr.mxu0 0.0
    %2382 = vmatpush1.msra.mxu0 %v2274
    %2383 = vmatprep.subr.mxu0 0.0
    %2384 = vmatpush1.msra.mxu0 %v2273
    %2385 = vmatprep.subr.mxu0 0.0
    %2386 = vmatpush1.msra.mxu0 %v2272
    %2387 = vmatprep.subr.mxu0 0.0
    %2388 = vmatpush1.msra.mxu0 %v2271
    %2389 = vmatprep.subr.mxu0 0.0
    %2390 = vmatpush1.msra.mxu0 %v2270
    %2391 = vmatprep.subr.mxu0 0.0
    %2392 = vmatpush1.msra.mxu0 %v2269
    %2393 = vmatprep.subr.mxu0 0.0
    %2394 = vmatpush1.msra.mxu0 %v2268
    %2395 = vmatprep.subr.mxu0 0.0
    %2396 = vmatpush1.msra.mxu0 %v2267
    %2397 = vmatprep.subr.mxu0 0.0
    %2398 = vmatpush1.msra.mxu0 %v2266
    %2399 = vmatprep.subr.mxu0 0.0
    %2400 = vmatpush1.msra.mxu0 %v2265
    %2401 = vmatprep.subr.mxu0 0.0
    %2402 = vmatpush2.msra.mxu0 0.0
    %2403 = vmatprep.subr.mxu0 0.0
    %2404 = vmatpush2.msra.mxu0 0.0
    %2405 = vmatprep.subr.mxu0 0.0
    %2406 = vmatpush2.msra.mxu0 0.0
    %2407 = vmatprep.subr.mxu0 0.0
    %2408 = vmatpush2.msra.mxu0 0.0
    %2409 = vmatprep.subr.mxu0 0.0
    %2410 = vmatpush2.msra.mxu0 0.0
    %2411 = vmatprep.subr.mxu0 0.0
    %2412 = vmatpush2.msra.mxu0 0.0
    %2413 = vmatprep.subr.mxu0 0.0
    %2414 = vmatpush2.msra.mxu0 0.0
    %2415 = vmatprep.subr.mxu0 0.0
    %2416 = vmatpush2.msra.mxu0 0.0
    %2417 = vmatprep.subr.mxu0 0.0
    %2418 = vmatpush2.msra.mxu0 0.0
    %2419 = vmatprep.subr.mxu0 0.0
    %2420 = vmatpush2.msra.mxu0 0.0
    %2421 = vmatprep.subr.mxu0 0.0
    %2422 = vmatpush2.msra.mxu0 0.0
    %2423 = vmatprep.subr.mxu0 0.0
    %2424 = vmatpush2.msra.mxu0 0.0
    %2425 = vmatprep.subr.mxu0 0.0
    %2426 = vmatpush2.msra.mxu0 0.0
    %2427 = vmatprep.subr.mxu0 0.0
    %2428 = vmatpush2.msra.mxu0 0.0
    %2429 = vmatprep.subr.mxu0 0.0
    %2430 = vmatpush2.msra.mxu0 0.0
    %2431 = vmatprep.subr.mxu0 0.0
    %2432 = vmatpush2.msra.mxu0 0.0
    %2433 = vmatprep.mubr.f32.mxu0 0.0
    %2434 = vmatmul.mubr.f32.gmra.mxu0 %v2264
    %v2435 = vpop.f32.mrf.mxu0
    %v2436 = vadd.f32 %v2366, %v2435
    %v2437 = vpop.f32.mrf.mxu0
    %2438 = vdwg.mxu0
    %v2439 = vld [vmem:[#allocation5 + $0x2] sm:$0xff]
    %s2440 = scalar_lea.vmem [#allocation20], 256
    %v2441 = vld [vmem:[%s2440] sm:$0xff]
    %v2442 = vld [vmem:[%s2440 + $0x8] sm:$0xff]
    %v2443 = vld [vmem:[%s2440 + $0x10] sm:$0xff]
    %v2444 = vld [vmem:[%s2440 + $0x18] sm:$0xff]
    %v2445 = vld [vmem:[%s2440 + $0x20] sm:$0xff]
    %v2446 = vld [vmem:[%s2440 + $0x28] sm:$0xff]
    %v2447 = vld [vmem:[%s2440 + $0x30] sm:$0xff]
    %v2448 = vld [vmem:[%s2440 + $0x38] sm:$0xff]
    %v2449 = vld [vmem:[%s2440 + $0x40] sm:$0xff]
    %v2450 = vld [vmem:[%s2440 + $0x48] sm:$0xff]
    %v2451 = vld [vmem:[%s2440 + $0x50] sm:$0xff]
    %v2452 = vld [vmem:[%s2440 + $0x58] sm:$0xff]
    %v2453 = vld [vmem:[%s2440 + $0x60] sm:$0xff]
    %v2454 = vld [vmem:[%s2440 + $0x68] sm:$0xff]
    %v2455 = vld [vmem:[%s2440 + $0x70] sm:$0xff]
    %v2456 = vld [vmem:[%s2440 + $0x78] sm:$0xff]
    %2457 = vmatprep.subr.mxu0 0.0
    %2458 = vmatpush1.msra.mxu0 %v2456
    %2459 = vmatprep.subr.mxu0 0.0
    %2460 = vmatpush1.msra.mxu0 %v2455
    %2461 = vmatprep.subr.mxu0 0.0
    %2462 = vmatpush1.msra.mxu0 %v2454
    %2463 = vmatprep.subr.mxu0 0.0
    %2464 = vmatpush1.msra.mxu0 %v2453
    %2465 = vmatprep.subr.mxu0 0.0
    %2466 = vmatpush1.msra.mxu0 %v2452
    %2467 = vmatprep.subr.mxu0 0.0
    %2468 = vmatpush1.msra.mxu0 %v2451
    %2469 = vmatprep.subr.mxu0 0.0
    %2470 = vmatpush1.msra.mxu0 %v2450
    %2471 = vmatprep.subr.mxu0 0.0
    %2472 = vmatpush1.msra.mxu0 %v2449
    %2473 = vmatprep.subr.mxu0 0.0
    %2474 = vmatpush1.msra.mxu0 %v2448
    %2475 = vmatprep.subr.mxu0 0.0
    %2476 = vmatpush1.msra.mxu0 %v2447
    %2477 = vmatprep.subr.mxu0 0.0
    %2478 = vmatpush1.msra.mxu0 %v2446
    %2479 = vmatprep.subr.mxu0 0.0
    %2480 = vmatpush1.msra.mxu0 %v2445
    %2481 = vmatprep.subr.mxu0 0.0
    %2482 = vmatpush1.msra.mxu0 %v2444
    %2483 = vmatprep.subr.mxu0 0.0
    %2484 = vmatpush1.msra.mxu0 %v2443
    %2485 = vmatprep.subr.mxu0 0.0
    %2486 = vmatpush1.msra.mxu0 %v2442
    %2487 = vmatprep.subr.mxu0 0.0
    %2488 = vmatpush1.msra.mxu0 %v2441
    %2489 = vmatprep.subr.mxu0 0.0
    %2490 = vmatpush2.msra.mxu0 0.0
    %2491 = vmatprep.subr.mxu0 0.0
    %2492 = vmatpush2.msra.mxu0 0.0
    %2493 = vmatprep.subr.mxu0 0.0
    %2494 = vmatpush2.msra.mxu0 0.0
    %2495 = vmatprep.subr.mxu0 0.0
    %2496 = vmatpush2.msra.mxu0 0.0
    %2497 = vmatprep.subr.mxu0 0.0
    %2498 = vmatpush2.msra.mxu0 0.0
    %2499 = vmatprep.subr.mxu0 0.0
    %2500 = vmatpush2.msra.mxu0 0.0
    %2501 = vmatprep.subr.mxu0 0.0
    %2502 = vmatpush2.msra.mxu0 0.0
    %2503 = vmatprep.subr.mxu0 0.0
    %2504 = vmatpush2.msra.mxu0 0.0
    %2505 = vmatprep.subr.mxu0 0.0
    %2506 = vmatpush2.msra.mxu0 0.0
    %2507 = vmatprep.subr.mxu0 0.0
    %2508 = vmatpush2.msra.mxu0 0.0
    %2509 = vmatprep.subr.mxu0 0.0
    %2510 = vmatpush2.msra.mxu0 0.0
    %2511 = vmatprep.subr.mxu0 0.0
    %2512 = vmatpush2.msra.mxu0 0.0
    %2513 = vmatprep.subr.mxu0 0.0
    %2514 = vmatpush2.msra.mxu0 0.0
    %2515 = vmatprep.subr.mxu0 0.0
    %2516 = vmatpush2.msra.mxu0 0.0
    %2517 = vmatprep.subr.mxu0 0.0
    %2518 = vmatpush2.msra.mxu0 0.0
    %2519 = vmatprep.subr.mxu0 0.0
    %2520 = vmatpush2.msra.mxu0 0.0
    %2521 = vmatprep.mubr.f32.mxu0 0.0
    %2522 = vmatmul.mubr.f32.gmra.mxu0 %v2439
    %v2523 = vpop.f32.mrf.mxu0
    %v2524 = vadd.f32 0.0, %v2523
    %v2525 = vpop.f32.mrf.mxu0
    %2526 = vdwg.mxu0
    %v2527 = vadd.f32 %v2436, %v2524
    %v2528 = vrot.slane %v2527, 4
    %v2529 = vadd.f32 %v2527, %v2528
    %v2530 = vrot.slane %v2529, 2
    %v2531 = vadd.f32 %v2529, %v2530
    %v2532 = vrot.slane %v2531, 1
    %v2533 = vadd.f32 %v2531, %v2532
    %v2534 = vmul.f32 %v2527, %v2527
    %v2535 = vrot.slane %v2534, 4
    %v2536 = vadd.f32 %v2534, %v2535
    %v2537 = vrot.slane %v2536, 2
    %v2538 = vadd.f32 %v2536, %v2537
    %v2539 = vrot.slane %v2538, 1
    %v2540 = vadd.f32 %v2538, %v2539
    %2541 = vmatprep.subr.mxu0 0.0
    %2542 = vmatpush1.msra.mxu0 %v394
    %2543 = vmatprep.subr.mxu0 0.0
    %2544 = vmatpush1.msra.mxu0 %v393
    %2545 = vmatprep.subr.mxu0 0.0
    %2546 = vmatpush1.msra.mxu0 %v392
    %2547 = vmatprep.subr.mxu0 0.0
    %2548 = vmatpush1.msra.mxu0 %v391
    %2549 = vmatprep.subr.mxu0 0.0
    %2550 = vmatpush1.msra.mxu0 %v390
    %2551 = vmatprep.subr.mxu0 0.0
    %2552 = vmatpush1.msra.mxu0 %v389
    %2553 = vmatprep.subr.mxu0 0.0
    %2554 = vmatpush1.msra.mxu0 %v388
    %2555 = vmatprep.subr.mxu0 0.0
    %2556 = vmatpush1.msra.mxu0 %v387
    %2557 = vmatprep.subr.mxu0 0.0
    %2558 = vmatpush1.msra.mxu0 %v386
    %2559 = vmatprep.subr.mxu0 0.0
    %2560 = vmatpush1.msra.mxu0 %v385
    %2561 = vmatprep.subr.mxu0 0.0
    %2562 = vmatpush1.msra.mxu0 %v384
    %2563 = vmatprep.subr.mxu0 0.0
    %2564 = vmatpush1.msra.mxu0 %v383
    %2565 = vmatprep.subr.mxu0 0.0
    %2566 = vmatpush1.msra.mxu0 %v382
    %2567 = vmatprep.subr.mxu0 0.0
    %2568 = vmatpush1.msra.mxu0 %v381
    %2569 = vmatprep.subr.mxu0 0.0
    %2570 = vmatpush1.msra.mxu0 %v380
    %2571 = vmatprep.subr.mxu0 0.0
    %2572 = vmatpush1.msra.mxu0 %v379
    %2573 = vmatprep.subr.mxu0 0.0
    %2574 = vmatpush2.msra.mxu0 0.0
    %2575 = vmatprep.subr.mxu0 0.0
    %2576 = vmatpush2.msra.mxu0 0.0
    %2577 = vmatprep.subr.mxu0 0.0
    %2578 = vmatpush2.msra.mxu0 0.0
    %2579 = vmatprep.subr.mxu0 0.0
    %2580 = vmatpush2.msra.mxu0 0.0
    %2581 = vmatprep.subr.mxu0 0.0
    %2582 = vmatpush2.msra.mxu0 0.0
    %2583 = vmatprep.subr.mxu0 0.0
    %2584 = vmatpush2.msra.mxu0 0.0
    %2585 = vmatprep.subr.mxu0 0.0
    %2586 = vmatpush2.msra.mxu0 0.0
    %2587 = vmatprep.subr.mxu0 0.0
    %2588 = vmatpush2.msra.mxu0 0.0
    %2589 = vmatprep.subr.mxu0 0.0
    %2590 = vmatpush2.msra.mxu0 0.0
    %2591 = vmatprep.subr.mxu0 0.0
    %2592 = vmatpush2.msra.mxu0 0.0
    %2593 = vmatprep.subr.mxu0 0.0
    %2594 = vmatpush2.msra.mxu0 0.0
    %2595 = vmatprep.subr.mxu0 0.0
    %2596 = vmatpush2.msra.mxu0 0.0
    %2597 = vmatprep.subr.mxu0 0.0
    %2598 = vmatpush2.msra.mxu0 0.0
    %2599 = vmatprep.subr.mxu0 0.0
    %2600 = vmatpush2.msra.mxu0 0.0
    %2601 = vmatprep.subr.mxu0 0.0
    %2602 = vmatpush2.msra.mxu0 0.0
    %2603 = vmatprep.subr.mxu0 0.0
    %2604 = vmatpush2.msra.mxu0 0.0
    %2605 = vmatprep.mubr.f32.mxu0 0.0
    %2606 = vmatmul.mubr.f32.gmra.mxu0 %v2533
    %v2607 = vpop.f32.mrf.mxu0
    %v2608 = vadd.f32 0.0, %v2607
    %v2609 = vpop.f32.mrf.mxu0
    %2610 = vdwg.mxu0
    %v2611 = vmul.f32 %v2608, 0.0078125
    %2612 = vmatprep.subr.mxu0 0.0
    %2613 = vmatpush1.msra.mxu0 %v394
    %2614 = vmatprep.subr.mxu0 0.0
    %2615 = vmatpush1.msra.mxu0 %v393
    %2616 = vmatprep.subr.mxu0 0.0
    %2617 = vmatpush1.msra.mxu0 %v392
    %2618 = vmatprep.subr.mxu0 0.0
    %2619 = vmatpush1.msra.mxu0 %v391
    %2620 = vmatprep.subr.mxu0 0.0
    %2621 = vmatpush1.msra.mxu0 %v390
    %2622 = vmatprep.subr.mxu0 0.0
    %2623 = vmatpush1.msra.mxu0 %v389
    %2624 = vmatprep.subr.mxu0 0.0
    %2625 = vmatpush1.msra.mxu0 %v388
    %2626 = vmatprep.subr.mxu0 0.0
    %2627 = vmatpush1.msra.mxu0 %v387
    %2628 = vmatprep.subr.mxu0 0.0
    %2629 = vmatpush1.msra.mxu0 %v386
    %2630 = vmatprep.subr.mxu0 0.0
    %2631 = vmatpush1.msra.mxu0 %v385
    %2632 = vmatprep.subr.mxu0 0.0
    %2633 = vmatpush1.msra.mxu0 %v384
    %2634 = vmatprep.subr.mxu0 0.0
    %2635 = vmatpush1.msra.mxu0 %v383
    %2636 = vmatprep.subr.mxu0 0.0
    %2637 = vmatpush1.msra.mxu0 %v382
    %2638 = vmatprep.subr.mxu0 0.0
    %2639 = vmatpush1.msra.mxu0 %v381
    %2640 = vmatprep.subr.mxu0 0.0
    %2641 = vmatpush1.msra.mxu0 %v380
    %2642 = vmatprep.subr.mxu0 0.0
    %2643 = vmatpush1.msra.mxu0 %v379
    %2644 = vmatprep.subr.mxu0 0.0
    %2645 = vmatpush2.msra.mxu0 0.0
    %2646 = vmatprep.subr.mxu0 0.0
    %2647 = vmatpush2.msra.mxu0 0.0
    %2648 = vmatprep.subr.mxu0 0.0
    %2649 = vmatpush2.msra.mxu0 0.0
    %2650 = vmatprep.subr.mxu0 0.0
    %2651 = vmatpush2.msra.mxu0 0.0
    %2652 = vmatprep.subr.mxu0 0.0
    %2653 = vmatpush2.msra.mxu0 0.0
    %2654 = vmatprep.subr.mxu0 0.0
    %2655 = vmatpush2.msra.mxu0 0.0
    %2656 = vmatprep.subr.mxu0 0.0
    %2657 = vmatpush2.msra.mxu0 0.0
    %2658 = vmatprep.subr.mxu0 0.0
    %2659 = vmatpush2.msra.mxu0 0.0
    %2660 = vmatprep.subr.mxu0 0.0
    %2661 = vmatpush2.msra.mxu0 0.0
    %2662 = vmatprep.subr.mxu0 0.0
    %2663 = vmatpush2.msra.mxu0 0.0
    %2664 = vmatprep.subr.mxu0 0.0
    %2665 = vmatpush2.msra.mxu0 0.0
    %2666 = vmatprep.subr.mxu0 0.0
    %2667 = vmatpush2.msra.mxu0 0.0
    %2668 = vmatprep.subr.mxu0 0.0
    %2669 = vmatpush2.msra.mxu0 0.0
    %2670 = vmatprep.subr.mxu0 0.0
    %2671 = vmatpush2.msra.mxu0 0.0
    %2672 = vmatprep.subr.mxu0 0.0
    %2673 = vmatpush2.msra.mxu0 0.0
    %2674 = vmatprep.subr.mxu0 0.0
    %2675 = vmatpush2.msra.mxu0 0.0
    %2676 = vmatprep.mubr.f32.mxu0 0.0
    %2677 = vmatmul.mubr.f32.gmra.mxu0 %v2540
    %v2678 = vpop.f32.mrf.mxu0
    %v2679 = vadd.f32 0.0, %v2678
    %v2680 = vpop.f32.mrf.mxu0
    %2681 = vdwg.mxu0
    %v2682 = vmul.f32 %v2679, 0.0078125
    %v2683 = vmul.f32 %v2611, %v2611
    %v2684 = vsub.f32 %v2682, %v2683
    %v2685 = vmax.f32 %v2684, 0.0
    %v2686 = vadd.f32 %v2685, 1e-05
    %v2687 = vrsqrt.pop %v2686
    %v2688 = vlaneseq
    %v2689 = vshrl.u32 %v2688, 7
    %v2690 = vsub.s32 0, %v2689
    %v2691 = vrot.slane %v2611, %v2690
    %v2692 = vsub.f32 %v2527, %v2691
    %v2693 = vlaneseq
    %v2694 = vshrl.u32 %v2693, 7
    %v2695 = vsub.s32 0, %v2694
    %v2696 = vrot.slane %v2687, %v2695
    %v2697 = vmul.f32 %v2692, %v2696
    %v2698 = vmax.f32 %v2697, 0.0
    %2699 = vst [vmem:[#allocation6 + $0x1] sm:$0xff] %v2698
    %v2700 = vld [vmem:[#allocation6] sm:$0xff]
    %v2701 = vld [vmem:[#allocation22] sm:$0xff]
    %v2702 = vld [vmem:[#allocation22 + $0x8] sm:$0xff]
    %v2703 = vld [vmem:[#allocation22 + $0x10] sm:$0xff]
    %v2704 = vld [vmem:[#allocation22 + $0x18] sm:$0xff]
    %v2705 = vld [vmem:[#allocation22 + $0x20] sm:$0xff]
    %v2706 = vld [vmem:[#allocation22 + $0x28] sm:$0xff]
    %v2707 = vld [vmem:[#allocation22 + $0x30] sm:$0xff]
    %v2708 = vld [vmem:[#allocation22 + $0x38] sm:$0xff]
    %v2709 = vld [vmem:[#allocation22 + $0x40] sm:$0xff]
    %v2710 = vld [vmem:[#allocation22 + $0x48] sm:$0xff]
    %v2711 = vld [vmem:[#allocation22 + $0x50] sm:$0xff]
    %v2712 = vld [vmem:[#allocation22 + $0x58] sm:$0xff]
    %v2713 = vld [vmem:[#allocation22 + $0x60] sm:$0xff]
    %v2714 = vld [vmem:[#allocation22 + $0x68] sm:$0xff]
    %v2715 = vld [vmem:[#allocation22 + $0x70] sm:$0xff]
    %v2716 = vld [vmem:[#allocation22 + $0x78] sm:$0xff]
    %v2717 = vld [vmem:[#allocation6 + $0x1] sm:$0xff]
    %s2718 = scalar_lea.vmem [#allocation22], 128
    %v2719 = vld [vmem:[%s2718] sm:$0xff]
    %v2720 = vld [vmem:[%s2718 + $0x8] sm:$0xff]
    %v2721 = vld [vmem:[%s2718 + $0x10] sm:$0xff]
    %v2722 = vld [vmem:[%s2718 + $0x18] sm:$0xff]
    %v2723 = vld [vmem:[%s2718 + $0x20] sm:$0xff]
    %v2724 = vld [vmem:[%s2718 + $0x28] sm:$0xff]
    %v2725 = vld [vmem:[%s2718 + $0x30] sm:$0xff]
    %v2726 = vld [vmem:[%s2718 + $0x38] sm:$0xff]
    %v2727 = vld [vmem:[%s2718 + $0x40] sm:$0xff]
    %v2728 = vld [vmem:[%s2718 + $0x48] sm:$0xff]
    %v2729 = vld [vmem:[%s2718 + $0x50] sm:$0xff]
    %v2730 = vld [vmem:[%s2718 + $0x58] sm:$0xff]
    %v2731 = vld [vmem:[%s2718 + $0x60] sm:$0xff]
    %v2732 = vld [vmem:[%s2718 + $0x68] sm:$0xff]
    %v2733 = vld [vmem:[%s2718 + $0x70] sm:$0xff]
    %v2734 = vld [vmem:[%s2718 + $0x78] sm:$0xff]
    %2735 = vmatprep.subr.mxu0 0.0
    %2736 = vmatpush1.msra.mxu0 %v2734
    %2737 = vmatprep.subr.mxu0 0.0
    %2738 = vmatpush1.msra.mxu0 %v2733
    %2739 = vmatprep.subr.mxu0 0.0
    %2740 = vmatpush1.msra.mxu0 %v2732
    %2741 = vmatprep.subr.mxu0 0.0
    %2742 = vmatpush1.msra.mxu0 %v2731
    %2743 = vmatprep.subr.mxu0 0.0
    %2744 = vmatpush1.msra.mxu0 %v2730
    %2745 = vmatprep.subr.mxu0 0.0
    %2746 = vmatpush1.msra.mxu0 %v2729
    %2747 = vmatprep.subr.mxu0 0.0
    %2748 = vmatpush1.msra.mxu0 %v2728
    %2749 = vmatprep.subr.mxu0 0.0
    %2750 = vmatpush1.msra.mxu0 %v2727
    %2751 = vmatprep.subr.mxu0 0.0
    %2752 = vmatpush1.msra.mxu0 %v2726
    %2753 = vmatprep.subr.mxu0 0.0
    %2754 = vmatpush1.msra.mxu0 %v2725
    %2755 = vmatprep.subr.mxu0 0.0
    %2756 = vmatpush1.msra.mxu0 %v2724
    %2757 = vmatprep.subr.mxu0 0.0
    %2758 = vmatpush1.msra.mxu0 %v2723
    %2759 = vmatprep.subr.mxu0 0.0
    %2760 = vmatpush1.msra.mxu0 %v2722
    %2761 = vmatprep.subr.mxu0 0.0
    %2762 = vmatpush1.msra.mxu0 %v2721
    %2763 = vmatprep.subr.mxu0 0.0
    %2764 = vmatpush1.msra.mxu0 %v2720
    %2765 = vmatprep.subr.mxu0 0.0
    %2766 = vmatpush1.msra.mxu0 %v2719
    %2767 = vmatprep.subr.mxu0 0.0
    %2768 = vmatpush2.msra.mxu0 0.0
    %2769 = vmatprep.subr.mxu0 0.0
    %2770 = vmatpush2.msra.mxu0 0.0
    %2771 = vmatprep.subr.mxu0 0.0
    %2772 = vmatpush2.msra.mxu0 0.0
    %2773 = vmatprep.subr.mxu0 0.0
    %2774 = vmatpush2.msra.mxu0 0.0
    %2775 = vmatprep.subr.mxu0 0.0
    %2776 = vmatpush2.msra.mxu0 0.0
    %2777 = vmatprep.subr.mxu0 0.0
    %2778 = vmatpush2.msra.mxu0 0.0
    %2779 = vmatprep.subr.mxu0 0.0
    %2780 = vmatpush2.msra.mxu0 0.0
    %2781 = vmatprep.subr.mxu0 0.0
    %2782 = vmatpush2.msra.mxu0 0.0
    %2783 = vmatprep.subr.mxu0 0.0
    %2784 = vmatpush2.msra.mxu0 0.0
    %2785 = vmatprep.subr.mxu0 0.0
    %2786 = vmatpush2.msra.mxu0 0.0
    %2787 = vmatprep.subr.mxu0 0.0
    %2788 = vmatpush2.msra.mxu0 0.0
    %2789 = vmatprep.subr.mxu0 0.0
    %2790 = vmatpush2.msra.mxu0 0.0
    %2791 = vmatprep.subr.mxu0 0.0
    %2792 = vmatpush2.msra.mxu0 0.0
    %2793 = vmatprep.subr.mxu0 0.0
    %2794 = vmatpush2.msra.mxu0 0.0
    %2795 = vmatprep.subr.mxu0 0.0
    %2796 = vmatpush2.msra.mxu0 0.0
    %2797 = vmatprep.subr.mxu0 0.0
    %2798 = vmatpush2.msra.mxu0 0.0
    %2799 = vmatprep.mubr.f32.mxu0 0.0
    %2800 = vmatmul.mubr.f32.gmra.mxu0 %v2717
    %v2801 = vpop.f32.mrf.mxu0
    %v2802 = vadd.f32 0.0, %v2801
    %v2803 = vpop.f32.mrf.mxu0
    %2804 = vdwg.mxu0
    %2805 = vmatprep.subr.mxu0 0.0
    %2806 = vmatpush1.msra.mxu0 %v2716
    %2807 = vmatprep.subr.mxu0 0.0
    %2808 = vmatpush1.msra.mxu0 %v2715
    %2809 = vmatprep.subr.mxu0 0.0
    %2810 = vmatpush1.msra.mxu0 %v2714
    %2811 = vmatprep.subr.mxu0 0.0
    %2812 = vmatpush1.msra.mxu0 %v2713
    %2813 = vmatprep.subr.mxu0 0.0
    %2814 = vmatpush1.msra.mxu0 %v2712
    %2815 = vmatprep.subr.mxu0 0.0
    %2816 = vmatpush1.msra.mxu0 %v2711
    %2817 = vmatprep.subr.mxu0 0.0
    %2818 = vmatpush1.msra.mxu0 %v2710
    %2819 = vmatprep.subr.mxu0 0.0
    %2820 = vmatpush1.msra.mxu0 %v2709
    %2821 = vmatprep.subr.mxu0 0.0
    %2822 = vmatpush1.msra.mxu0 %v2708
    %2823 = vmatprep.subr.mxu0 0.0
    %2824 = vmatpush1.msra.mxu0 %v2707
    %2825 = vmatprep.subr.mxu0 0.0
    %2826 = vmatpush1.msra.mxu0 %v2706
    %2827 = vmatprep.subr.mxu0 0.0
    %2828 = vmatpush1.msra.mxu0 %v2705
    %2829 = vmatprep.subr.mxu0 0.0
    %2830 = vmatpush1.msra.mxu0 %v2704
    %2831 = vmatprep.subr.mxu0 0.0
    %2832 = vmatpush1.msra.mxu0 %v2703
    %2833 = vmatprep.subr.mxu0 0.0
    %2834 = vmatpush1.msra.mxu0 %v2702
    %2835 = vmatprep.subr.mxu0 0.0
    %2836 = vmatpush1.msra.mxu0 %v2701
    %2837 = vmatprep.subr.mxu0 0.0
    %2838 = vmatpush2.msra.mxu0 0.0
    %2839 = vmatprep.subr.mxu0 0.0
    %2840 = vmatpush2.msra.mxu0 0.0
    %2841 = vmatprep.subr.mxu0 0.0
    %2842 = vmatpush2.msra.mxu0 0.0
    %2843 = vmatprep.subr.mxu0 0.0
    %2844 = vmatpush2.msra.mxu0 0.0
    %2845 = vmatprep.subr.mxu0 0.0
    %2846 = vmatpush2.msra.mxu0 0.0
    %2847 = vmatprep.subr.mxu0 0.0
    %2848 = vmatpush2.msra.mxu0 0.0
    %2849 = vmatprep.subr.mxu0 0.0
    %2850 = vmatpush2.msra.mxu0 0.0
    %2851 = vmatprep.subr.mxu0 0.0
    %2852 = vmatpush2.msra.mxu0 0.0
    %2853 = vmatprep.subr.mxu0 0.0
    %2854 = vmatpush2.msra.mxu0 0.0
    %2855 = vmatprep.subr.mxu0 0.0
    %2856 = vmatpush2.msra.mxu0 0.0
    %2857 = vmatprep.subr.mxu0 0.0
    %2858 = vmatpush2.msra.mxu0 0.0
    %2859 = vmatprep.subr.mxu0 0.0
    %2860 = vmatpush2.msra.mxu0 0.0
    %2861 = vmatprep.subr.mxu0 0.0
    %2862 = vmatpush2.msra.mxu0 0.0
    %2863 = vmatprep.subr.mxu0 0.0
    %2864 = vmatpush2.msra.mxu0 0.0
    %2865 = vmatprep.subr.mxu0 0.0
    %2866 = vmatpush2.msra.mxu0 0.0
    %2867 = vmatprep.subr.mxu0 0.0
    %2868 = vmatpush2.msra.mxu0 0.0
    %2869 = vmatprep.mubr.f32.mxu0 0.0
    %2870 = vmatmul.mubr.f32.gmra.mxu0 %v2700
    %v2871 = vpop.f32.mrf.mxu0
    %v2872 = vadd.f32 %v2802, %v2871
    %v2873 = vpop.f32.mrf.mxu0
    %2874 = vdwg.mxu0
    %v2875 = vld [vmem:[#allocation6 + $0x2] sm:$0xff]
    %s2876 = scalar_lea.vmem [#allocation22], 256
    %v2877 = vld [vmem:[%s2876] sm:$0xff]
    %v2878 = vld [vmem:[%s2876 + $0x8] sm:$0xff]
    %v2879 = vld [vmem:[%s2876 + $0x10] sm:$0xff]
    %v2880 = vld [vmem:[%s2876 + $0x18] sm:$0xff]
    %v2881 = vld [vmem:[%s2876 + $0x20] sm:$0xff]
    %v2882 = vld [vmem:[%s2876 + $0x28] sm:$0xff]
    %v2883 = vld [vmem:[%s2876 + $0x30] sm:$0xff]
    %v2884 = vld [vmem:[%s2876 + $0x38] sm:$0xff]
    %v2885 = vld [vmem:[%s2876 + $0x40] sm:$0xff]
    %v2886 = vld [vmem:[%s2876 + $0x48] sm:$0xff]
    %v2887 = vld [vmem:[%s2876 + $0x50] sm:$0xff]
    %v2888 = vld [vmem:[%s2876 + $0x58] sm:$0xff]
    %v2889 = vld [vmem:[%s2876 + $0x60] sm:$0xff]
    %v2890 = vld [vmem:[%s2876 + $0x68] sm:$0xff]
    %v2891 = vld [vmem:[%s2876 + $0x70] sm:$0xff]
    %v2892 = vld [vmem:[%s2876 + $0x78] sm:$0xff]
    %2893 = vmatprep.subr.mxu0 0.0
    %2894 = vmatpush1.msra.mxu0 %v2892
    %2895 = vmatprep.subr.mxu0 0.0
    %2896 = vmatpush1.msra.mxu0 %v2891
    %2897 = vmatprep.subr.mxu0 0.0
    %2898 = vmatpush1.msra.mxu0 %v2890
    %2899 = vmatprep.subr.mxu0 0.0
    %2900 = vmatpush1.msra.mxu0 %v2889
    %2901 = vmatprep.subr.mxu0 0.0
    %2902 = vmatpush1.msra.mxu0 %v2888
    %2903 = vmatprep.subr.mxu0 0.0
    %2904 = vmatpush1.msra.mxu0 %v2887
    %2905 = vmatprep.subr.mxu0 0.0
    %2906 = vmatpush1.msra.mxu0 %v2886
    %2907 = vmatprep.subr.mxu0 0.0
    %2908 = vmatpush1.msra.mxu0 %v2885
    %2909 = vmatprep.subr.mxu0 0.0
    %2910 = vmatpush1.msra.mxu0 %v2884
    %2911 = vmatprep.subr.mxu0 0.0
    %2912 = vmatpush1.msra.mxu0 %v2883
    %2913 = vmatprep.subr.mxu0 0.0
    %2914 = vmatpush1.msra.mxu0 %v2882
    %2915 = vmatprep.subr.mxu0 0.0
    %2916 = vmatpush1.msra.mxu0 %v2881
    %2917 = vmatprep.subr.mxu0 0.0
    %2918 = vmatpush1.msra.mxu0 %v2880
    %2919 = vmatprep.subr.mxu0 0.0
    %2920 = vmatpush1.msra.mxu0 %v2879
    %2921 = vmatprep.subr.mxu0 0.0
    %2922 = vmatpush1.msra.mxu0 %v2878
    %2923 = vmatprep.subr.mxu0 0.0
    %2924 = vmatpush1.msra.mxu0 %v2877
    %2925 = vmatprep.subr.mxu0 0.0
    %2926 = vmatpush2.msra.mxu0 0.0
    %2927 = vmatprep.subr.mxu0 0.0
    %2928 = vmatpush2.msra.mxu0 0.0
    %2929 = vmatprep.subr.mxu0 0.0
    %2930 = vmatpush2.msra.mxu0 0.0
    %2931 = vmatprep.subr.mxu0 0.0
    %2932 = vmatpush2.msra.mxu0 0.0
    %2933 = vmatprep.subr.mxu0 0.0
    %2934 = vmatpush2.msra.mxu0 0.0
    %2935 = vmatprep.subr.mxu0 0.0
    %2936 = vmatpush2.msra.mxu0 0.0
    %2937 = vmatprep.subr.mxu0 0.0
    %2938 = vmatpush2.msra.mxu0 0.0
    %2939 = vmatprep.subr.mxu0 0.0
    %2940 = vmatpush2.msra.mxu0 0.0
    %2941 = vmatprep.subr.mxu0 0.0
    %2942 = vmatpush2.msra.mxu0 0.0
    %2943 = vmatprep.subr.mxu0 0.0
    %2944 = vmatpush2.msra.mxu0 0.0
    %2945 = vmatprep.subr.mxu0 0.0
    %2946 = vmatpush2.msra.mxu0 0.0
    %2947 = vmatprep.subr.mxu0 0.0
    %2948 = vmatpush2.msra.mxu0 0.0
    %2949 = vmatprep.subr.mxu0 0.0
    %2950 = vmatpush2.msra.mxu0 0.0
    %2951 = vmatprep.subr.mxu0 0.0
    %2952 = vmatpush2.msra.mxu0 0.0
    %2953 = vmatprep.subr.mxu0 0.0
    %2954 = vmatpush2.msra.mxu0 0.0
    %2955 = vmatprep.subr.mxu0 0.0
    %2956 = vmatpush2.msra.mxu0 0.0
    %2957 = vmatprep.mubr.f32.mxu0 0.0
    %2958 = vmatmul.mubr.f32.gmra.mxu0 %v2875
    %v2959 = vpop.f32.mrf.mxu0
    %v2960 = vadd.f32 0.0, %v2959
    %v2961 = vpop.f32.mrf.mxu0
    %2962 = vdwg.mxu0
    %v2963 = vadd.f32 %v2872, %v2960
    %v2964 = vrot.slane %v2963, 4
    %v2965 = vadd.f32 %v2963, %v2964
    %v2966 = vrot.slane %v2965, 2
    %v2967 = vadd.f32 %v2965, %v2966
    %v2968 = vrot.slane %v2967, 1
    %v2969 = vadd.f32 %v2967, %v2968
    %v2970 = vmul.f32 %v2963, %v2963
    %v2971 = vrot.slane %v2970, 4
    %v2972 = vadd.f32 %v2970, %v2971
    %v2973 = vrot.slane %v2972, 2
    %v2974 = vadd.f32 %v2972, %v2973
    %v2975 = vrot.slane %v2974, 1
    %v2976 = vadd.f32 %v2974, %v2975
    %2977 = vmatprep.subr.mxu0 0.0
    %2978 = vmatpush1.msra.mxu0 %v394
    %2979 = vmatprep.subr.mxu0 0.0
    %2980 = vmatpush1.msra.mxu0 %v393
    %2981 = vmatprep.subr.mxu0 0.0
    %2982 = vmatpush1.msra.mxu0 %v392
    %2983 = vmatprep.subr.mxu0 0.0
    %2984 = vmatpush1.msra.mxu0 %v391
    %2985 = vmatprep.subr.mxu0 0.0
    %2986 = vmatpush1.msra.mxu0 %v390
    %2987 = vmatprep.subr.mxu0 0.0
    %2988 = vmatpush1.msra.mxu0 %v389
    %2989 = vmatprep.subr.mxu0 0.0
    %2990 = vmatpush1.msra.mxu0 %v388
    %2991 = vmatprep.subr.mxu0 0.0
    %2992 = vmatpush1.msra.mxu0 %v387
    %2993 = vmatprep.subr.mxu0 0.0
    %2994 = vmatpush1.msra.mxu0 %v386
    %2995 = vmatprep.subr.mxu0 0.0
    %2996 = vmatpush1.msra.mxu0 %v385
    %2997 = vmatprep.subr.mxu0 0.0
    %2998 = vmatpush1.msra.mxu0 %v384
    %2999 = vmatprep.subr.mxu0 0.0
    %3000 = vmatpush1.msra.mxu0 %v383
    %3001 = vmatprep.subr.mxu0 0.0
    %3002 = vmatpush1.msra.mxu0 %v382
    %3003 = vmatprep.subr.mxu0 0.0
    %3004 = vmatpush1.msra.mxu0 %v381
    %3005 = vmatprep.subr.mxu0 0.0
    %3006 = vmatpush1.msra.mxu0 %v380
    %3007 = vmatprep.subr.mxu0 0.0
    %3008 = vmatpush1.msra.mxu0 %v379
    %3009 = vmatprep.subr.mxu0 0.0
    %3010 = vmatpush2.msra.mxu0 0.0
    %3011 = vmatprep.subr.mxu0 0.0
    %3012 = vmatpush2.msra.mxu0 0.0
    %3013 = vmatprep.subr.mxu0 0.0
    %3014 = vmatpush2.msra.mxu0 0.0
    %3015 = vmatprep.subr.mxu0 0.0
    %3016 = vmatpush2.msra.mxu0 0.0
    %3017 = vmatprep.subr.mxu0 0.0
    %3018 = vmatpush2.msra.mxu0 0.0
    %3019 = vmatprep.subr.mxu0 0.0
    %3020 = vmatpush2.msra.mxu0 0.0
    %3021 = vmatprep.subr.mxu0 0.0
    %3022 = vmatpush2.msra.mxu0 0.0
    %3023 = vmatprep.subr.mxu0 0.0
    %3024 = vmatpush2.msra.mxu0 0.0
    %3025 = vmatprep.subr.mxu0 0.0
    %3026 = vmatpush2.msra.mxu0 0.0
    %3027 = vmatprep.subr.mxu0 0.0
    %3028 = vmatpush2.msra.mxu0 0.0
    %3029 = vmatprep.subr.mxu0 0.0
    %3030 = vmatpush2.msra.mxu0 0.0
    %3031 = vmatprep.subr.mxu0 0.0
    %3032 = vmatpush2.msra.mxu0 0.0
    %3033 = vmatprep.subr.mxu0 0.0
    %3034 = vmatpush2.msra.mxu0 0.0
    %3035 = vmatprep.subr.mxu0 0.0
    %3036 = vmatpush2.msra.mxu0 0.0
    %3037 = vmatprep.subr.mxu0 0.0
    %3038 = vmatpush2.msra.mxu0 0.0
    %3039 = vmatprep.subr.mxu0 0.0
    %3040 = vmatpush2.msra.mxu0 0.0
    %3041 = vmatprep.mubr.f32.mxu0 0.0
    %3042 = vmatmul.mubr.f32.gmra.mxu0 %v2969
    %v3043 = vpop.f32.mrf.mxu0
    %v3044 = vadd.f32 0.0, %v3043
    %v3045 = vpop.f32.mrf.mxu0
    %3046 = vdwg.mxu0
    %v3047 = vmul.f32 %v3044, 0.0078125
    %3048 = vmatprep.subr.mxu0 0.0
    %3049 = vmatpush1.msra.mxu0 %v394
    %3050 = vmatprep.subr.mxu0 0.0
    %3051 = vmatpush1.msra.mxu0 %v393
    %3052 = vmatprep.subr.mxu0 0.0
    %3053 = vmatpush1.msra.mxu0 %v392
    %3054 = vmatprep.subr.mxu0 0.0
    %3055 = vmatpush1.msra.mxu0 %v391
    %3056 = vmatprep.subr.mxu0 0.0
    %3057 = vmatpush1.msra.mxu0 %v390
    %3058 = vmatprep.subr.mxu0 0.0
    %3059 = vmatpush1.msra.mxu0 %v389
    %3060 = vmatprep.subr.mxu0 0.0
    %3061 = vmatpush1.msra.mxu0 %v388
    %3062 = vmatprep.subr.mxu0 0.0
    %3063 = vmatpush1.msra.mxu0 %v387
    %3064 = vmatprep.subr.mxu0 0.0
    %3065 = vmatpush1.msra.mxu0 %v386
    %3066 = vmatprep.subr.mxu0 0.0
    %3067 = vmatpush1.msra.mxu0 %v385
    %3068 = vmatprep.subr.mxu0 0.0
    %3069 = vmatpush1.msra.mxu0 %v384
    %3070 = vmatprep.subr.mxu0 0.0
    %3071 = vmatpush1.msra.mxu0 %v383
    %3072 = vmatprep.subr.mxu0 0.0
    %3073 = vmatpush1.msra.mxu0 %v382
    %3074 = vmatprep.subr.mxu0 0.0
    %3075 = vmatpush1.msra.mxu0 %v381
    %3076 = vmatprep.subr.mxu0 0.0
    %3077 = vmatpush1.msra.mxu0 %v380
    %3078 = vmatprep.subr.mxu0 0.0
    %3079 = vmatpush1.msra.mxu0 %v379
    %3080 = vmatprep.subr.mxu0 0.0
    %3081 = vmatpush2.msra.mxu0 0.0
    %3082 = vmatprep.subr.mxu0 0.0
    %3083 = vmatpush2.msra.mxu0 0.0
    %3084 = vmatprep.subr.mxu0 0.0
    %3085 = vmatpush2.msra.mxu0 0.0
    %3086 = vmatprep.subr.mxu0 0.0
    %3087 = vmatpush2.msra.mxu0 0.0
    %3088 = vmatprep.subr.mxu0 0.0
    %3089 = vmatpush2.msra.mxu0 0.0
    %3090 = vmatprep.subr.mxu0 0.0
    %3091 = vmatpush2.msra.mxu0 0.0
    %3092 = vmatprep.subr.mxu0 0.0
    %3093 = vmatpush2.msra.mxu0 0.0
    %3094 = vmatprep.subr.mxu0 0.0
    %3095 = vmatpush2.msra.mxu0 0.0
    %3096 = vmatprep.subr.mxu0 0.0
    %3097 = vmatpush2.msra.mxu0 0.0
    %3098 = vmatprep.subr.mxu0 0.0
    %3099 = vmatpush2.msra.mxu0 0.0
    %3100 = vmatprep.subr.mxu0 0.0
    %3101 = vmatpush2.msra.mxu0 0.0
    %3102 = vmatprep.subr.mxu0 0.0
    %3103 = vmatpush2.msra.mxu0 0.0
    %3104 = vmatprep.subr.mxu0 0.0
    %3105 = vmatpush2.msra.mxu0 0.0
    %3106 = vmatprep.subr.mxu0 0.0
    %3107 = vmatpush2.msra.mxu0 0.0
    %3108 = vmatprep.subr.mxu0 0.0
    %3109 = vmatpush2.msra.mxu0 0.0
    %3110 = vmatprep.subr.mxu0 0.0
    %3111 = vmatpush2.msra.mxu0 0.0
    %3112 = vmatprep.mubr.f32.mxu0 0.0
    %3113 = vmatmul.mubr.f32.gmra.mxu0 %v2976
    %v3114 = vpop.f32.mrf.mxu0
    %v3115 = vadd.f32 0.0, %v3114
    %v3116 = vpop.f32.mrf.mxu0
    %3117 = vdwg.mxu0
    %v3118 = vmul.f32 %v3115, 0.0078125
    %v3119 = vmul.f32 %v3047, %v3047
    %v3120 = vsub.f32 %v3118, %v3119
    %v3121 = vmax.f32 %v3120, 0.0
    %v3122 = vadd.f32 %v3121, 1e-05
    %v3123 = vrsqrt.pop %v3122
    %v3124 = vlaneseq
    %v3125 = vshrl.u32 %v3124, 7
    %v3126 = vsub.s32 0, %v3125
    %v3127 = vrot.slane %v3047, %v3126
    %v3128 = vsub.f32 %v2963, %v3127
    %v3129 = vlaneseq
    %v3130 = vshrl.u32 %v3129, 7
    %v3131 = vsub.s32 0, %v3130
    %v3132 = vrot.slane %v3123, %v3131
    %v3133 = vmul.f32 %v3128, %v3132
    %v3134 = vmax.f32 %v3133, 0.0
    %3135 = vst [vmem:[#allocation7 + $0x1] sm:$0xff] %v3134
    %v3136 = vld [vmem:[#allocation7 + $0x1] sm:$0x1]
    %3137 = vst [vmem:[#allocation8 + $0x1] sm:$0x1] %v3136
    %v3138 = vld [vmem:[#allocation7 + $0x2] sm:$0x1]
    %3139 = vst [vmem:[#allocation8 + $0x7] sm:$0x1] %v3138
    %v3140 = vld [vmem:[#allocation7 + $0x3] sm:$0x1]
    %3141 = vst [vmem:[#allocation8 + $0x2] sm:$0x1] %v3140
    %v3142 = vld [vmem:[#allocation7 + $0x4] sm:$0x1]
    %3143 = vst [vmem:[#allocation8 + $0x8] sm:$0x1] %v3142
    %v3144 = vld [vmem:[#allocation7 + $0x5] sm:$0x1]
    %3145 = vst [vmem:[#allocation8 + $0x3] sm:$0x1] %v3144
    %v3146 = vld [vmem:[#allocation7 + $0x6] sm:$0x1]
    %3147 = vst [vmem:[#allocation8 + $0x9] sm:$0x1] %v3146
    %v3148 = vld [vmem:[#allocation7 + $0x7] sm:$0x1]
    %3149 = vst [vmem:[#allocation8 + $0x4] sm:$0x1] %v3148
    %v3150 = vld [vmem:[#allocation7 + $0x8] sm:$0x1]
    %3151 = vst [vmem:[#allocation8 + $0xa] sm:$0x1] %v3150
    %v3152 = vld [vmem:[#allocation8] sm:$0xf]
    %v3153 = vld [vmem:[#allocation23] sm:$0xff]
    %v3154 = vld [vmem:[#allocation23 + $0x8] sm:$0xff]
    %v3155 = vld [vmem:[#allocation23 + $0x10] sm:$0xff]
    %v3156 = vld [vmem:[#allocation23 + $0x18] sm:$0xff]
    %v3157 = vld [vmem:[#allocation23 + $0x20] sm:$0xff]
    %v3158 = vld [vmem:[#allocation23 + $0x28] sm:$0xff]
    %v3159 = vld [vmem:[#allocation23 + $0x30] sm:$0xff]
    %v3160 = vld [vmem:[#allocation23 + $0x38] sm:$0xff]
    %v3161 = vld [vmem:[#allocation23 + $0x40] sm:$0xff]
    %v3162 = vld [vmem:[#allocation23 + $0x48] sm:$0xff]
    %v3163 = vld [vmem:[#allocation23 + $0x50] sm:$0xff]
    %v3164 = vld [vmem:[#allocation23 + $0x58] sm:$0xff]
    %v3165 = vld [vmem:[#allocation23 + $0x60] sm:$0xff]
    %v3166 = vld [vmem:[#allocation23 + $0x68] sm:$0xff]
    %v3167 = vld [vmem:[#allocation23 + $0x70] sm:$0xff]
    %v3168 = vld [vmem:[#allocation23 + $0x78] sm:$0xff]
    %v3169 = vld [vmem:[#allocation8 + $0x6] sm:$0xf]
    %s3170 = scalar_lea.vmem [#allocation23], 128
    %v3171 = vld [vmem:[%s3170] sm:$0xff]
    %v3172 = vld [vmem:[%s3170 + $0x8] sm:$0xff]
    %v3173 = vld [vmem:[%s3170 + $0x10] sm:$0xff]
    %v3174 = vld [vmem:[%s3170 + $0x18] sm:$0xff]
    %v3175 = vld [vmem:[%s3170 + $0x20] sm:$0xff]
    %v3176 = vld [vmem:[%s3170 + $0x28] sm:$0xff]
    %v3177 = vld [vmem:[%s3170 + $0x30] sm:$0xff]
    %v3178 = vld [vmem:[%s3170 + $0x38] sm:$0xff]
    %v3179 = vld [vmem:[%s3170 + $0x40] sm:$0xff]
    %v3180 = vld [vmem:[%s3170 + $0x48] sm:$0xff]
    %v3181 = vld [vmem:[%s3170 + $0x50] sm:$0xff]
    %v3182 = vld [vmem:[%s3170 + $0x58] sm:$0xff]
    %v3183 = vld [vmem:[%s3170 + $0x60] sm:$0xff]
    %v3184 = vld [vmem:[%s3170 + $0x68] sm:$0xff]
    %v3185 = vld [vmem:[%s3170 + $0x70] sm:$0xff]
    %v3186 = vld [vmem:[%s3170 + $0x78] sm:$0xff]
    %3187 = vmatprep.subr.mxu0 0.0
    %3188 = vmatpush1.msra.mxu0 %v3186
    %3189 = vmatprep.subr.mxu0 0.0
    %3190 = vmatpush1.msra.mxu0 %v3185
    %3191 = vmatprep.subr.mxu0 0.0
    %3192 = vmatpush1.msra.mxu0 %v3184
    %3193 = vmatprep.subr.mxu0 0.0
    %3194 = vmatpush1.msra.mxu0 %v3183
    %3195 = vmatprep.subr.mxu0 0.0
    %3196 = vmatpush1.msra.mxu0 %v3182
    %3197 = vmatprep.subr.mxu0 0.0
    %3198 = vmatpush1.msra.mxu0 %v3181
    %3199 = vmatprep.subr.mxu0 0.0
    %3200 = vmatpush1.msra.mxu0 %v3180
    %3201 = vmatprep.subr.mxu0 0.0
    %3202 = vmatpush1.msra.mxu0 %v3179
    %3203 = vmatprep.subr.mxu0 0.0
    %3204 = vmatpush1.msra.mxu0 %v3178
    %3205 = vmatprep.subr.mxu0 0.0
    %3206 = vmatpush1.msra.mxu0 %v3177
    %3207 = vmatprep.subr.mxu0 0.0
    %3208 = vmatpush1.msra.mxu0 %v3176
    %3209 = vmatprep.subr.mxu0 0.0
    %3210 = vmatpush1.msra.mxu0 %v3175
    %3211 = vmatprep.subr.mxu0 0.0
    %3212 = vmatpush1.msra.mxu0 %v3174
    %3213 = vmatprep.subr.mxu0 0.0
    %3214 = vmatpush1.msra.mxu0 %v3173
    %3215 = vmatprep.subr.mxu0 0.0
    %3216 = vmatpush1.msra.mxu0 %v3172
    %3217 = vmatprep.subr.mxu0 0.0
    %3218 = vmatpush1.msra.mxu0 %v3171
    %3219 = vmatprep.subr.mxu0 0.0
    %3220 = vmatpush2.msra.mxu0 0.0
    %3221 = vmatprep.subr.mxu0 0.0
    %3222 = vmatpush2.msra.mxu0 0.0
    %3223 = vmatprep.subr.mxu0 0.0
    %3224 = vmatpush2.msra.mxu0 0.0
    %3225 = vmatprep.subr.mxu0 0.0
    %3226 = vmatpush2.msra.mxu0 0.0
    %3227 = vmatprep.subr.mxu0 0.0
    %3228 = vmatpush2.msra.mxu0 0.0
    %3229 = vmatprep.subr.mxu0 0.0
    %3230 = vmatpush2.msra.mxu0 0.0
    %3231 = vmatprep.subr.mxu0 0.0
    %3232 = vmatpush2.msra.mxu0 0.0
    %3233 = vmatprep.subr.mxu0 0.0
    %3234 = vmatpush2.msra.mxu0 0.0
    %3235 = vmatprep.subr.mxu0 0.0
    %3236 = vmatpush2.msra.mxu0 0.0
    %3237 = vmatprep.subr.mxu0 0.0
    %3238 = vmatpush2.msra.mxu0 0.0
    %3239 = vmatprep.subr.mxu0 0.0
    %3240 = vmatpush2.msra.mxu0 0.0
    %3241 = vmatprep.subr.mxu0 0.0
    %3242 = vmatpush2.msra.mxu0 0.0
    %3243 = vmatprep.subr.mxu0 0.0
    %3244 = vmatpush2.msra.mxu0 0.0
    %3245 = vmatprep.subr.mxu0 0.0
    %3246 = vmatpush2.msra.mxu0 0.0
    %3247 = vmatprep.subr.mxu0 0.0
    %3248 = vmatpush2.msra.mxu0 0.0
    %3249 = vmatprep.subr.mxu0 0.0
    %3250 = vmatpush2.msra.mxu0 0.0
    %3251 = vmatprep.mubr.f32.mxu0 0.0
    %3252 = vmatmul.mubr.f32.gmra.mxu0 %v3169
    %v3253 = vpop.f32.mrf.mxu0
    %v3254 = vadd.f32 0.0, %v3253
    %v3255 = vpop.f32.mrf.mxu0
    %3256 = vdwg.mxu0
    %3257 = vmatprep.subr.mxu0 0.0
    %3258 = vmatpush1.msra.mxu0 %v3168
    %3259 = vmatprep.subr.mxu0 0.0
    %3260 = vmatpush1.msra.mxu0 %v3167
    %3261 = vmatprep.subr.mxu0 0.0
    %3262 = vmatpush1.msra.mxu0 %v3166
    %3263 = vmatprep.subr.mxu0 0.0
    %3264 = vmatpush1.msra.mxu0 %v3165
    %3265 = vmatprep.subr.mxu0 0.0
    %3266 = vmatpush1.msra.mxu0 %v3164
    %3267 = vmatprep.subr.mxu0 0.0
    %3268 = vmatpush1.msra.mxu0 %v3163
    %3269 = vmatprep.subr.mxu0 0.0
    %3270 = vmatpush1.msra.mxu0 %v3162
    %3271 = vmatprep.subr.mxu0 0.0
    %3272 = vmatpush1.msra.mxu0 %v3161
    %3273 = vmatprep.subr.mxu0 0.0
    %3274 = vmatpush1.msra.mxu0 %v3160
    %3275 = vmatprep.subr.mxu0 0.0
    %3276 = vmatpush1.msra.mxu0 %v3159
    %3277 = vmatprep.subr.mxu0 0.0
    %3278 = vmatpush1.msra.mxu0 %v3158
    %3279 = vmatprep.subr.mxu0 0.0
    %3280 = vmatpush1.msra.mxu0 %v3157
    %3281 = vmatprep.subr.mxu0 0.0
    %3282 = vmatpush1.msra.mxu0 %v3156
    %3283 = vmatprep.subr.mxu0 0.0
    %3284 = vmatpush1.msra.mxu0 %v3155
    %3285 = vmatprep.subr.mxu0 0.0
    %3286 = vmatpush1.msra.mxu0 %v3154
    %3287 = vmatprep.subr.mxu0 0.0
    %3288 = vmatpush1.msra.mxu0 %v3153
    %3289 = vmatprep.subr.mxu0 0.0
    %3290 = vmatpush2.msra.mxu0 0.0
    %3291 = vmatprep.subr.mxu0 0.0
    %3292 = vmatpush2.msra.mxu0 0.0
    %3293 = vmatprep.subr.mxu0 0.0
    %3294 = vmatpush2.msra.mxu0 0.0
    %3295 = vmatprep.subr.mxu0 0.0
    %3296 = vmatpush2.msra.mxu0 0.0
    %3297 = vmatprep.subr.mxu0 0.0
    %3298 = vmatpush2.msra.mxu0 0.0
    %3299 = vmatprep.subr.mxu0 0.0
    %3300 = vmatpush2.msra.mxu0 0.0
    %3301 = vmatprep.subr.mxu0 0.0
    %3302 = vmatpush2.msra.mxu0 0.0
    %3303 = vmatprep.subr.mxu0 0.0
    %3304 = vmatpush2.msra.mxu0 0.0
    %3305 = vmatprep.subr.mxu0 0.0
    %3306 = vmatpush2.msra.mxu0 0.0
    %3307 = vmatprep.subr.mxu0 0.0
    %3308 = vmatpush2.msra.mxu0 0.0
    %3309 = vmatprep.subr.mxu0 0.0
    %3310 = vmatpush2.msra.mxu0 0.0
    %3311 = vmatprep.subr.mxu0 0.0
    %3312 = vmatpush2.msra.mxu0 0.0
    %3313 = vmatprep.subr.mxu0 0.0
    %3314 = vmatpush2.msra.mxu0 0.0
    %3315 = vmatprep.subr.mxu0 0.0
    %3316 = vmatpush2.msra.mxu0 0.0
    %3317 = vmatprep.subr.mxu0 0.0
    %3318 = vmatpush2.msra.mxu0 0.0
    %3319 = vmatprep.subr.mxu0 0.0
    %3320 = vmatpush2.msra.mxu0 0.0
    %3321 = vmatprep.mubr.f32.mxu0 0.0
    %3322 = vmatmul.mubr.f32.gmra.mxu0 %v3152
    %v3323 = vpop.f32.mrf.mxu0
    %v3324 = vadd.f32 %v3254, %v3323
    %v3325 = vpop.f32.mrf.mxu0
    %3326 = vdwg.mxu0
    %v3327 = vld [vmem:[#allocation8 + $0x1] sm:$0xf]
    %s3328 = scalar_lea.vmem [#allocation23], 256
    %v3329 = vld [vmem:[%s3328] sm:$0xff]
    %v3330 = vld [vmem:[%s3328 + $0x8] sm:$0xff]
    %v3331 = vld [vmem:[%s3328 + $0x10] sm:$0xff]
    %v3332 = vld [vmem:[%s3328 + $0x18] sm:$0xff]
    %v3333 = vld [vmem:[%s3328 + $0x20] sm:$0xff]
    %v3334 = vld [vmem:[%s3328 + $0x28] sm:$0xff]
    %v3335 = vld [vmem:[%s3328 + $0x30] sm:$0xff]
    %v3336 = vld [vmem:[%s3328 + $0x38] sm:$0xff]
    %v3337 = vld [vmem:[%s3328 + $0x40] sm:$0xff]
    %v3338 = vld [vmem:[%s3328 + $0x48] sm:$0xff]
    %v3339 = vld [vmem:[%s3328 + $0x50] sm:$0xff]
    %v3340 = vld [vmem:[%s3328 + $0x58] sm:$0xff]
    %v3341 = vld [vmem:[%s3328 + $0x60] sm:$0xff]
    %v3342 = vld [vmem:[%s3328 + $0x68] sm:$0xff]
    %v3343 = vld [vmem:[%s3328 + $0x70] sm:$0xff]
    %v3344 = vld [vmem:[%s3328 + $0x78] sm:$0xff]
    %3345 = vmatprep.subr.mxu0 0.0
    %3346 = vmatpush1.msra.mxu0 %v3344
    %3347 = vmatprep.subr.mxu0 0.0
    %3348 = vmatpush1.msra.mxu0 %v3343
    %3349 = vmatprep.subr.mxu0 0.0
    %3350 = vmatpush1.msra.mxu0 %v3342
    %3351 = vmatprep.subr.mxu0 0.0
    %3352 = vmatpush1.msra.mxu0 %v3341
    %3353 = vmatprep.subr.mxu0 0.0
    %3354 = vmatpush1.msra.mxu0 %v3340
    %3355 = vmatprep.subr.mxu0 0.0
    %3356 = vmatpush1.msra.mxu0 %v3339
    %3357 = vmatprep.subr.mxu0 0.0
    %3358 = vmatpush1.msra.mxu0 %v3338
    %3359 = vmatprep.subr.mxu0 0.0
    %3360 = vmatpush1.msra.mxu0 %v3337
    %3361 = vmatprep.subr.mxu0 0.0
    %3362 = vmatpush1.msra.mxu0 %v3336
    %3363 = vmatprep.subr.mxu0 0.0
    %3364 = vmatpush1.msra.mxu0 %v3335
    %3365 = vmatprep.subr.mxu0 0.0
    %3366 = vmatpush1.msra.mxu0 %v3334
    %3367 = vmatprep.subr.mxu0 0.0
    %3368 = vmatpush1.msra.mxu0 %v3333
    %3369 = vmatprep.subr.mxu0 0.0
    %3370 = vmatpush1.msra.mxu0 %v3332
    %3371 = vmatprep.subr.mxu0 0.0
    %3372 = vmatpush1.msra.mxu0 %v3331
    %3373 = vmatprep.subr.mxu0 0.0
    %3374 = vmatpush1.msra.mxu0 %v3330
    %3375 = vmatprep.subr.mxu0 0.0
    %3376 = vmatpush1.msra.mxu0 %v3329
    %3377 = vmatprep.subr.mxu0 0.0
    %3378 = vmatpush2.msra.mxu0 0.0
    %3379 = vmatprep.subr.mxu0 0.0
    %3380 = vmatpush2.msra.mxu0 0.0
    %3381 = vmatprep.subr.mxu0 0.0
    %3382 = vmatpush2.msra.mxu0 0.0
    %3383 = vmatprep.subr.mxu0 0.0
    %3384 = vmatpush2.msra.mxu0 0.0
    %3385 = vmatprep.subr.mxu0 0.0
    %3386 = vmatpush2.msra.mxu0 0.0
    %3387 = vmatprep.subr.mxu0 0.0
    %3388 = vmatpush2.msra.mxu0 0.0
    %3389 = vmatprep.subr.mxu0 0.0
    %3390 = vmatpush2.msra.mxu0 0.0
    %3391 = vmatprep.subr.mxu0 0.0
    %3392 = vmatpush2.msra.mxu0 0.0
    %3393 = vmatprep.subr.mxu0 0.0
    %3394 = vmatpush2.msra.mxu0 0.0
    %3395 = vmatprep.subr.mxu0 0.0
    %3396 = vmatpush2.msra.mxu0 0.0
    %3397 = vmatprep.subr.mxu0 0.0
    %3398 = vmatpush2.msra.mxu0 0.0
    %3399 = vmatprep.subr.mxu0 0.0
    %3400 = vmatpush2.msra.mxu0 0.0
    %3401 = vmatprep.subr.mxu0 0.0
    %3402 = vmatpush2.msra.mxu0 0.0
    %3403 = vmatprep.subr.mxu0 0.0
    %3404 = vmatpush2.msra.mxu0 0.0
    %3405 = vmatprep.subr.mxu0 0.0
    %3406 = vmatpush2.msra.mxu0 0.0
    %3407 = vmatprep.subr.mxu0 0.0
    %3408 = vmatpush2.msra.mxu0 0.0
    %3409 = vmatprep.mubr.f32.mxu0 0.0
    %3410 = vmatmul.mubr.f32.gmra.mxu0 %v3327
    %v3411 = vpop.f32.mrf.mxu0
    %v3412 = vadd.f32 0.0, %v3411
    %v3413 = vpop.f32.mrf.mxu0
    %3414 = vdwg.mxu0
    %v3415 = vadd.f32 %v3324, %v3412
    %v3416 = vld [vmem:[#allocation8 + $0x7] sm:$0xf]
    %s3417 = scalar_lea.vmem [#allocation23], 384
    %v3418 = vld [vmem:[%s3417] sm:$0xff]
    %v3419 = vld [vmem:[%s3417 + $0x8] sm:$0xff]
    %v3420 = vld [vmem:[%s3417 + $0x10] sm:$0xff]
    %v3421 = vld [vmem:[%s3417 + $0x18] sm:$0xff]
    %v3422 = vld [vmem:[%s3417 + $0x20] sm:$0xff]
    %v3423 = vld [vmem:[%s3417 + $0x28] sm:$0xff]
    %v3424 = vld [vmem:[%s3417 + $0x30] sm:$0xff]
    %v3425 = vld [vmem:[%s3417 + $0x38] sm:$0xff]
    %v3426 = vld [vmem:[%s3417 + $0x40] sm:$0xff]
    %v3427 = vld [vmem:[%s3417 + $0x48] sm:$0xff]
    %v3428 = vld [vmem:[%s3417 + $0x50] sm:$0xff]
    %v3429 = vld [vmem:[%s3417 + $0x58] sm:$0xff]
    %v3430 = vld [vmem:[%s3417 + $0x60] sm:$0xff]
    %v3431 = vld [vmem:[%s3417 + $0x68] sm:$0xff]
    %v3432 = vld [vmem:[%s3417 + $0x70] sm:$0xff]
    %v3433 = vld [vmem:[%s3417 + $0x78] sm:$0xff]
    %3434 = vmatprep.subr.mxu0 0.0
    %3435 = vmatpush1.msra.mxu0 %v3433
    %3436 = vmatprep.subr.mxu0 0.0
    %3437 = vmatpush1.msra.mxu0 %v3432
    %3438 = vmatprep.subr.mxu0 0.0
    %3439 = vmatpush1.msra.mxu0 %v3431
    %3440 = vmatprep.subr.mxu0 0.0
    %3441 = vmatpush1.msra.mxu0 %v3430
    %3442 = vmatprep.subr.mxu0 0.0
    %3443 = vmatpush1.msra.mxu0 %v3429
    %3444 = vmatprep.subr.mxu0 0.0
    %3445 = vmatpush1.msra.mxu0 %v3428
    %3446 = vmatprep.subr.mxu0 0.0
    %3447 = vmatpush1.msra.mxu0 %v3427
    %3448 = vmatprep.subr.mxu0 0.0
    %3449 = vmatpush1.msra.mxu0 %v3426
    %3450 = vmatprep.subr.mxu0 0.0
    %3451 = vmatpush1.msra.mxu0 %v3425
    %3452 = vmatprep.subr.mxu0 0.0
    %3453 = vmatpush1.msra.mxu0 %v3424
    %3454 = vmatprep.subr.mxu0 0.0
    %3455 = vmatpush1.msra.mxu0 %v3423
    %3456 = vmatprep.subr.mxu0 0.0
    %3457 = vmatpush1.msra.mxu0 %v3422
    %3458 = vmatprep.subr.mxu0 0.0
    %3459 = vmatpush1.msra.mxu0 %v3421
    %3460 = vmatprep.subr.mxu0 0.0
    %3461 = vmatpush1.msra.mxu0 %v3420
    %3462 = vmatprep.subr.mxu0 0.0
    %3463 = vmatpush1.msra.mxu0 %v3419
    %3464 = vmatprep.subr.mxu0 0.0
    %3465 = vmatpush1.msra.mxu0 %v3418
    %3466 = vmatprep.subr.mxu0 0.0
    %3467 = vmatpush2.msra.mxu0 0.0
    %3468 = vmatprep.subr.mxu0 0.0
    %3469 = vmatpush2.msra.mxu0 0.0
    %3470 = vmatprep.subr.mxu0 0.0
    %3471 = vmatpush2.msra.mxu0 0.0
    %3472 = vmatprep.subr.mxu0 0.0
    %3473 = vmatpush2.msra.mxu0 0.0
    %3474 = vmatprep.subr.mxu0 0.0
    %3475 = vmatpush2.msra.mxu0 0.0
    %3476 = vmatprep.subr.mxu0 0.0
    %3477 = vmatpush2.msra.mxu0 0.0
    %3478 = vmatprep.subr.mxu0 0.0
    %3479 = vmatpush2.msra.mxu0 0.0
    %3480 = vmatprep.subr.mxu0 0.0
    %3481 = vmatpush2.msra.mxu0 0.0
    %3482 = vmatprep.subr.mxu0 0.0
    %3483 = vmatpush2.msra.mxu0 0.0
    %3484 = vmatprep.subr.mxu0 0.0
    %3485 = vmatpush2.msra.mxu0 0.0
    %3486 = vmatprep.subr.mxu0 0.0
    %3487 = vmatpush2.msra.mxu0 0.0
    %3488 = vmatprep.subr.mxu0 0.0
    %3489 = vmatpush2.msra.mxu0 0.0
    %3490 = vmatprep.subr.mxu0 0.0
    %3491 = vmatpush2.msra.mxu0 0.0
    %3492 = vmatprep.subr.mxu0 0.0
    %3493 = vmatpush2.msra.mxu0 0.0
    %3494 = vmatprep.subr.mxu0 0.0
    %3495 = vmatpush2.msra.mxu0 0.0
    %3496 = vmatprep.subr.mxu0 0.0
    %3497 = vmatpush2.msra.mxu0 0.0
    %3498 = vmatprep.mubr.f32.mxu0 0.0
    %3499 = vmatmul.mubr.f32.gmra.mxu0 %v3416
    %v3500 = vpop.f32.mrf.mxu0
    %v3501 = vadd.f32 0.0, %v3500
    %v3502 = vpop.f32.mrf.mxu0
    %3503 = vdwg.mxu0
    %v3504 = vadd.f32 %v3415, %v3501
    %v3505 = vld [vmem:[#allocation8 + $0x2] sm:$0xf]
    %s3506 = scalar_lea.vmem [#allocation23], 512
    %v3507 = vld [vmem:[%s3506] sm:$0xff]
    %v3508 = vld [vmem:[%s3506 + $0x8] sm:$0xff]
    %v3509 = vld [vmem:[%s3506 + $0x10] sm:$0xff]
    %v3510 = vld [vmem:[%s3506 + $0x18] sm:$0xff]
    %v3511 = vld [vmem:[%s3506 + $0x20] sm:$0xff]
    %v3512 = vld [vmem:[%s3506 + $0x28] sm:$0xff]
    %v3513 = vld [vmem:[%s3506 + $0x30] sm:$0xff]
    %v3514 = vld [vmem:[%s3506 + $0x38] sm:$0xff]
    %v3515 = vld [vmem:[%s3506 + $0x40] sm:$0xff]
    %v3516 = vld [vmem:[%s3506 + $0x48] sm:$0xff]
    %v3517 = vld [vmem:[%s3506 + $0x50] sm:$0xff]
    %v3518 = vld [vmem:[%s3506 + $0x58] sm:$0xff]
    %v3519 = vld [vmem:[%s3506 + $0x60] sm:$0xff]
    %v3520 = vld [vmem:[%s3506 + $0x68] sm:$0xff]
    %v3521 = vld [vmem:[%s3506 + $0x70] sm:$0xff]
    %v3522 = vld [vmem:[%s3506 + $0x78] sm:$0xff]
    %3523 = vmatprep.subr.mxu0 0.0
    %3524 = vmatpush1.msra.mxu0 %v3522
    %3525 = vmatprep.subr.mxu0 0.0
    %3526 = vmatpush1.msra.mxu0 %v3521
    %3527 = vmatprep.subr.mxu0 0.0
    %3528 = vmatpush1.msra.mxu0 %v3520
    %3529 = vmatprep.subr.mxu0 0.0
    %3530 = vmatpush1.msra.mxu0 %v3519
    %3531 = vmatprep.subr.mxu0 0.0
    %3532 = vmatpush1.msra.mxu0 %v3518
    %3533 = vmatprep.subr.mxu0 0.0
    %3534 = vmatpush1.msra.mxu0 %v3517
    %3535 = vmatprep.subr.mxu0 0.0
    %3536 = vmatpush1.msra.mxu0 %v3516
    %3537 = vmatprep.subr.mxu0 0.0
    %3538 = vmatpush1.msra.mxu0 %v3515
    %3539 = vmatprep.subr.mxu0 0.0
    %3540 = vmatpush1.msra.mxu0 %v3514
    %3541 = vmatprep.subr.mxu0 0.0
    %3542 = vmatpush1.msra.mxu0 %v3513
    %3543 = vmatprep.subr.mxu0 0.0
    %3544 = vmatpush1.msra.mxu0 %v3512
    %3545 = vmatprep.subr.mxu0 0.0
    %3546 = vmatpush1.msra.mxu0 %v3511
    %3547 = vmatprep.subr.mxu0 0.0
    %3548 = vmatpush1.msra.mxu0 %v3510
    %3549 = vmatprep.subr.mxu0 0.0
    %3550 = vmatpush1.msra.mxu0 %v3509
    %3551 = vmatprep.subr.mxu0 0.0
    %3552 = vmatpush1.msra.mxu0 %v3508
    %3553 = vmatprep.subr.mxu0 0.0
    %3554 = vmatpush1.msra.mxu0 %v3507
    %3555 = vmatprep.subr.mxu0 0.0
    %3556 = vmatpush2.msra.mxu0 0.0
    %3557 = vmatprep.subr.mxu0 0.0
    %3558 = vmatpush2.msra.mxu0 0.0
    %3559 = vmatprep.subr.mxu0 0.0
    %3560 = vmatpush2.msra.mxu0 0.0
    %3561 = vmatprep.subr.mxu0 0.0
    %3562 = vmatpush2.msra.mxu0 0.0
    %3563 = vmatprep.subr.mxu0 0.0
    %3564 = vmatpush2.msra.mxu0 0.0
    %3565 = vmatprep.subr.mxu0 0.0
    %3566 = vmatpush2.msra.mxu0 0.0
    %3567 = vmatprep.subr.mxu0 0.0
    %3568 = vmatpush2.msra.mxu0 0.0
    %3569 = vmatprep.subr.mxu0 0.0
    %3570 = vmatpush2.msra.mxu0 0.0
    %3571 = vmatprep.subr.mxu0 0.0
    %3572 = vmatpush2.msra.mxu0 0.0
    %3573 = vmatprep.subr.mxu0 0.0
    %3574 = vmatpush2.msra.mxu0 0.0
    %3575 = vmatprep.subr.mxu0 0.0
    %3576 = vmatpush2.msra.mxu0 0.0
    %3577 = vmatprep.subr.mxu0 0.0
    %3578 = vmatpush2.msra.mxu0 0.0
    %3579 = vmatprep.subr.mxu0 0.0
    %3580 = vmatpush2.msra.mxu0 0.0
    %3581 = vmatprep.subr.mxu0 0.0
    %3582 = vmatpush2.msra.mxu0 0.0
    %3583 = vmatprep.subr.mxu0 0.0
    %3584 = vmatpush2.msra.mxu0 0.0
    %3585 = vmatprep.subr.mxu0 0.0
    %3586 = vmatpush2.msra.mxu0 0.0
    %3587 = vmatprep.mubr.f32.mxu0 0.0
    %3588 = vmatmul.mubr.f32.gmra.mxu0 %v3505
    %v3589 = vpop.f32.mrf.mxu0
    %v3590 = vadd.f32 0.0, %v3589
    %v3591 = vpop.f32.mrf.mxu0
    %3592 = vdwg.mxu0
    %v3593 = vadd.f32 %v3504, %v3590
    %vm3594 = vcmask 1043456
    %v3595 = vsel %vm3594, %v3593, 0.0
    %v3596 = vrot.slane %v3595, 4
    %v3597 = vadd.f32 %v3595, %v3596
    %v3598 = vrot.slane %v3597, 2
    %v3599 = vadd.f32 %v3597, %v3598
    %v3600 = vrot.slane %v3599, 1
    %v3601 = vadd.f32 %v3599, %v3600
    %v3602 = vmul.f32 %v3593, %v3593
    %v3603 = vsel %vm3594, %v3602, 0.0
    %v3604 = vrot.slane %v3603, 4
    %v3605 = vadd.f32 %v3603, %v3604
    %v3606 = vrot.slane %v3605, 2
    %v3607 = vadd.f32 %v3605, %v3606
    %v3608 = vrot.slane %v3607, 1
    %v3609 = vadd.f32 %v3607, %v3608
    %3610 = vmatprep.subr.mxu0 0.0
    %3611 = vmatpush1.msra.mxu0 %v443
    %3612 = vmatprep.subr.mxu0 0.0
    %3613 = vmatpush1.msra.mxu0 %v442
    %3614 = vmatprep.subr.mxu0 0.0
    %3615 = vmatpush1.msra.mxu0 %v441
    %3616 = vmatprep.subr.mxu0 0.0
    %3617 = vmatpush1.msra.mxu0 %v440
    %3618 = vmatprep.subr.mxu0 0.0
    %3619 = vmatpush1.msra.mxu0 %v439
    %3620 = vmatprep.subr.mxu0 0.0
    %3621 = vmatpush1.msra.mxu0 %v438
    %3622 = vmatprep.subr.mxu0 0.0
    %3623 = vmatpush1.msra.mxu0 %v437
    %3624 = vmatprep.subr.mxu0 0.0
    %3625 = vmatpush1.msra.mxu0 %v436
    %3626 = vmatprep.subr.mxu0 0.0
    %3627 = vmatpush1.msra.mxu0 %v435
    %3628 = vmatprep.subr.mxu0 0.0
    %3629 = vmatpush1.msra.mxu0 %v434
    %3630 = vmatprep.subr.mxu0 0.0
    %3631 = vmatpush1.msra.mxu0 %v433
    %3632 = vmatprep.subr.mxu0 0.0
    %3633 = vmatpush1.msra.mxu0 %v432
    %3634 = vmatprep.subr.mxu0 0.0
    %3635 = vmatpush1.msra.mxu0 %v431
    %3636 = vmatprep.subr.mxu0 0.0
    %3637 = vmatpush1.msra.mxu0 %v430
    %3638 = vmatprep.subr.mxu0 0.0
    %3639 = vmatpush1.msra.mxu0 %v429
    %3640 = vmatprep.subr.mxu0 0.0
    %3641 = vmatpush1.msra.mxu0 %v428
    %3642 = vmatprep.subr.mxu0 0.0
    %3643 = vmatpush2.msra.mxu0 0.0
    %3644 = vmatprep.subr.mxu0 0.0
    %3645 = vmatpush2.msra.mxu0 0.0
    %3646 = vmatprep.subr.mxu0 0.0
    %3647 = vmatpush2.msra.mxu0 0.0
    %3648 = vmatprep.subr.mxu0 0.0
    %3649 = vmatpush2.msra.mxu0 0.0
    %3650 = vmatprep.subr.mxu0 0.0
    %3651 = vmatpush2.msra.mxu0 0.0
    %3652 = vmatprep.subr.mxu0 0.0
    %3653 = vmatpush2.msra.mxu0 0.0
    %3654 = vmatprep.subr.mxu0 0.0
    %3655 = vmatpush2.msra.mxu0 0.0
    %3656 = vmatprep.subr.mxu0 0.0
    %3657 = vmatpush2.msra.mxu0 0.0
    %3658 = vmatprep.subr.mxu0 0.0
    %3659 = vmatpush2.msra.mxu0 0.0
    %3660 = vmatprep.subr.mxu0 0.0
    %3661 = vmatpush2.msra.mxu0 0.0
    %3662 = vmatprep.subr.mxu0 0.0
    %3663 = vmatpush2.msra.mxu0 0.0
    %3664 = vmatprep.subr.mxu0 0.0
    %3665 = vmatpush2.msra.mxu0 0.0
    %3666 = vmatprep.subr.mxu0 0.0
    %3667 = vmatpush2.msra.mxu0 0.0
    %3668 = vmatprep.subr.mxu0 0.0
    %3669 = vmatpush2.msra.mxu0 0.0
    %3670 = vmatprep.subr.mxu0 0.0
    %3671 = vmatpush2.msra.mxu0 0.0
    %3672 = vmatprep.subr.mxu0 0.0
    %3673 = vmatpush2.msra.mxu0 0.0
    %3674 = vmatprep.mubr.f32.mxu0 0.0
    %3675 = vmatmul.mubr.f32.gmra.mxu0 %v3601
    %v3676 = vpop.f32.mrf.mxu0
    %v3677 = vadd.f32 0.0, %v3676
    %v3678 = vpop.f32.mrf.mxu0
    %3679 = vdwg.mxu0
    %v3680 = vmul.f32 %v3677, 0.03125
    %3681 = vmatprep.subr.mxu0 0.0
    %3682 = vmatpush1.msra.mxu0 %v443
    %3683 = vmatprep.subr.mxu0 0.0
    %3684 = vmatpush1.msra.mxu0 %v442
    %3685 = vmatprep.subr.mxu0 0.0
    %3686 = vmatpush1.msra.mxu0 %v441
    %3687 = vmatprep.subr.mxu0 0.0
    %3688 = vmatpush1.msra.mxu0 %v440
    %3689 = vmatprep.subr.mxu0 0.0
    %3690 = vmatpush1.msra.mxu0 %v439
    %3691 = vmatprep.subr.mxu0 0.0
    %3692 = vmatpush1.msra.mxu0 %v438
    %3693 = vmatprep.subr.mxu0 0.0
    %3694 = vmatpush1.msra.mxu0 %v437
    %3695 = vmatprep.subr.mxu0 0.0
    %3696 = vmatpush1.msra.mxu0 %v436
    %3697 = vmatprep.subr.mxu0 0.0
    %3698 = vmatpush1.msra.mxu0 %v435
    %3699 = vmatprep.subr.mxu0 0.0
    %3700 = vmatpush1.msra.mxu0 %v434
    %3701 = vmatprep.subr.mxu0 0.0
    %3702 = vmatpush1.msra.mxu0 %v433
    %3703 = vmatprep.subr.mxu0 0.0
    %3704 = vmatpush1.msra.mxu0 %v432
    %3705 = vmatprep.subr.mxu0 0.0
    %3706 = vmatpush1.msra.mxu0 %v431
    %3707 = vmatprep.subr.mxu0 0.0
    %3708 = vmatpush1.msra.mxu0 %v430
    %3709 = vmatprep.subr.mxu0 0.0
    %3710 = vmatpush1.msra.mxu0 %v429
    %3711 = vmatprep.subr.mxu0 0.0
    %3712 = vmatpush1.msra.mxu0 %v428
    %3713 = vmatprep.subr.mxu0 0.0
    %3714 = vmatpush2.msra.mxu0 0.0
    %3715 = vmatprep.subr.mxu0 0.0
    %3716 = vmatpush2.msra.mxu0 0.0
    %3717 = vmatprep.subr.mxu0 0.0
    %3718 = vmatpush2.msra.mxu0 0.0
    %3719 = vmatprep.subr.mxu0 0.0
    %3720 = vmatpush2.msra.mxu0 0.0
    %3721 = vmatprep.subr.mxu0 0.0
    %3722 = vmatpush2.msra.mxu0 0.0
    %3723 = vmatprep.subr.mxu0 0.0
    %3724 = vmatpush2.msra.mxu0 0.0
    %3725 = vmatprep.subr.mxu0 0.0
    %3726 = vmatpush2.msra.mxu0 0.0
    %3727 = vmatprep.subr.mxu0 0.0
    %3728 = vmatpush2.msra.mxu0 0.0
    %3729 = vmatprep.subr.mxu0 0.0
    %3730 = vmatpush2.msra.mxu0 0.0
    %3731 = vmatprep.subr.mxu0 0.0
    %3732 = vmatpush2.msra.mxu0 0.0
    %3733 = vmatprep.subr.mxu0 0.0
    %3734 = vmatpush2.msra.mxu0 0.0
    %3735 = vmatprep.subr.mxu0 0.0
    %3736 = vmatpush2.msra.mxu0 0.0
    %3737 = vmatprep.subr.mxu0 0.0
    %3738 = vmatpush2.msra.mxu0 0.0
    %3739 = vmatprep.subr.mxu0 0.0
    %3740 = vmatpush2.msra.mxu0 0.0
    %3741 = vmatprep.subr.mxu0 0.0
    %3742 = vmatpush2.msra.mxu0 0.0
    %3743 = vmatprep.subr.mxu0 0.0
    %3744 = vmatpush2.msra.mxu0 0.0
    %3745 = vmatprep.mubr.f32.mxu0 0.0
    %3746 = vmatmul.mubr.f32.gmra.mxu0 %v3609
    %v3747 = vpop.f32.mrf.mxu0
    %v3748 = vadd.f32 0.0, %v3747
    %v3749 = vpop.f32.mrf.mxu0
    %3750 = vdwg.mxu0
    %v3751 = vmul.f32 %v3748, 0.03125
    %v3752 = vmul.f32 %v3680, %v3680
    %v3753 = vsub.f32 %v3751, %v3752
    %v3754 = vmax.f32 %v3753, 0.0
    %v3755 = vadd.f32 %v3754, 1e-05
    %v3756 = vrsqrt.pop %v3755
    %v3757 = vlaneseq
    %v3758 = vshrl.u32 %v3757, 7
    %v3759 = vsub.s32 0, %v3758
    %v3760 = vrot.slane %v3680, %v3759
    %v3761 = vsub.f32 %v3593, %v3760
    %v3762 = vlaneseq
    %v3763 = vshrl.u32 %v3762, 7
    %v3764 = vsub.s32 0, %v3763
    %v3765 = vrot.slane %v3756, %v3764
    %v3766 = vmul.f32 %v3761, %v3765
    %v3767 = vmax.f32 %v3766, 0.0
    %3768 = vst [vmem:[#allocation9 + $0x1] sm:$0xf] %v3767
    %v3769 = vld [vmem:[#allocation9] sm:$0xf]
    %v3770 = vld [vmem:[#allocation25] sm:$0xff]
    %v3771 = vld [vmem:[#allocation25 + $0x8] sm:$0xff]
    %v3772 = vld [vmem:[#allocation25 + $0x10] sm:$0xff]
    %v3773 = vld [vmem:[#allocation25 + $0x18] sm:$0xff]
    %v3774 = vld [vmem:[#allocation25 + $0x20] sm:$0xff]
    %v3775 = vld [vmem:[#allocation25 + $0x28] sm:$0xff]
    %v3776 = vld [vmem:[#allocation25 + $0x30] sm:$0xff]
    %v3777 = vld [vmem:[#allocation25 + $0x38] sm:$0xff]
    %v3778 = vld [vmem:[#allocation25 + $0x40] sm:$0xff]
    %v3779 = vld [vmem:[#allocation25 + $0x48] sm:$0xff]
    %v3780 = vld [vmem:[#allocation25 + $0x50] sm:$0xff]
    %v3781 = vld [vmem:[#allocation25 + $0x58] sm:$0xff]
    %v3782 = vld [vmem:[#allocation25 + $0x60] sm:$0xff]
    %v3783 = vld [vmem:[#allocation25 + $0x68] sm:$0xff]
    %v3784 = vld [vmem:[#allocation25 + $0x70] sm:$0xff]
    %v3785 = vld [vmem:[#allocation25 + $0x78] sm:$0xff]
    %v3786 = vld [vmem:[#allocation9 + $0x1] sm:$0xf]
    %s3787 = scalar_lea.vmem [#allocation25], 128
    %v3788 = vld [vmem:[%s3787] sm:$0xff]
    %v3789 = vld [vmem:[%s3787 + $0x8] sm:$0xff]
    %v3790 = vld [vmem:[%s3787 + $0x10] sm:$0xff]
    %v3791 = vld [vmem:[%s3787 + $0x18] sm:$0xff]
    %v3792 = vld [vmem:[%s3787 + $0x20] sm:$0xff]
    %v3793 = vld [vmem:[%s3787 + $0x28] sm:$0xff]
    %v3794 = vld [vmem:[%s3787 + $0x30] sm:$0xff]
    %v3795 = vld [vmem:[%s3787 + $0x38] sm:$0xff]
    %v3796 = vld [vmem:[%s3787 + $0x40] sm:$0xff]
    %v3797 = vld [vmem:[%s3787 + $0x48] sm:$0xff]
    %v3798 = vld [vmem:[%s3787 + $0x50] sm:$0xff]
    %v3799 = vld [vmem:[%s3787 + $0x58] sm:$0xff]
    %v3800 = vld [vmem:[%s3787 + $0x60] sm:$0xff]
    %v3801 = vld [vmem:[%s3787 + $0x68] sm:$0xff]
    %v3802 = vld [vmem:[%s3787 + $0x70] sm:$0xff]
    %v3803 = vld [vmem:[%s3787 + $0x78] sm:$0xff]
    %3804 = vmatprep.subr.mxu0 0.0
    %3805 = vmatpush1.msra.mxu0 %v3803
    %3806 = vmatprep.subr.mxu0 0.0
    %3807 = vmatpush1.msra.mxu0 %v3802
    %3808 = vmatprep.subr.mxu0 0.0
    %3809 = vmatpush1.msra.mxu0 %v3801
    %3810 = vmatprep.subr.mxu0 0.0
    %3811 = vmatpush1.msra.mxu0 %v3800
    %3812 = vmatprep.subr.mxu0 0.0
    %3813 = vmatpush1.msra.mxu0 %v3799
    %3814 = vmatprep.subr.mxu0 0.0
    %3815 = vmatpush1.msra.mxu0 %v3798
    %3816 = vmatprep.subr.mxu0 0.0
    %3817 = vmatpush1.msra.mxu0 %v3797
    %3818 = vmatprep.subr.mxu0 0.0
    %3819 = vmatpush1.msra.mxu0 %v3796
    %3820 = vmatprep.subr.mxu0 0.0
    %3821 = vmatpush1.msra.mxu0 %v3795
    %3822 = vmatprep.subr.mxu0 0.0
    %3823 = vmatpush1.msra.mxu0 %v3794
    %3824 = vmatprep.subr.mxu0 0.0
    %3825 = vmatpush1.msra.mxu0 %v3793
    %3826 = vmatprep.subr.mxu0 0.0
    %3827 = vmatpush1.msra.mxu0 %v3792
    %3828 = vmatprep.subr.mxu0 0.0
    %3829 = vmatpush1.msra.mxu0 %v3791
    %3830 = vmatprep.subr.mxu0 0.0
    %3831 = vmatpush1.msra.mxu0 %v3790
    %3832 = vmatprep.subr.mxu0 0.0
    %3833 = vmatpush1.msra.mxu0 %v3789
    %3834 = vmatprep.subr.mxu0 0.0
    %3835 = vmatpush1.msra.mxu0 %v3788
    %3836 = vmatprep.subr.mxu0 0.0
    %3837 = vmatpush2.msra.mxu0 0.0
    %3838 = vmatprep.subr.mxu0 0.0
    %3839 = vmatpush2.msra.mxu0 0.0
    %3840 = vmatprep.subr.mxu0 0.0
    %3841 = vmatpush2.msra.mxu0 0.0
    %3842 = vmatprep.subr.mxu0 0.0
    %3843 = vmatpush2.msra.mxu0 0.0
    %3844 = vmatprep.subr.mxu0 0.0
    %3845 = vmatpush2.msra.mxu0 0.0
    %3846 = vmatprep.subr.mxu0 0.0
    %3847 = vmatpush2.msra.mxu0 0.0
    %3848 = vmatprep.subr.mxu0 0.0
    %3849 = vmatpush2.msra.mxu0 0.0
    %3850 = vmatprep.subr.mxu0 0.0
    %3851 = vmatpush2.msra.mxu0 0.0
    %3852 = vmatprep.subr.mxu0 0.0
    %3853 = vmatpush2.msra.mxu0 0.0
    %3854 = vmatprep.subr.mxu0 0.0
    %3855 = vmatpush2.msra.mxu0 0.0
    %3856 = vmatprep.subr.mxu0 0.0
    %3857 = vmatpush2.msra.mxu0 0.0
    %3858 = vmatprep.subr.mxu0 0.0
    %3859 = vmatpush2.msra.mxu0 0.0
    %3860 = vmatprep.subr.mxu0 0.0
    %3861 = vmatpush2.msra.mxu0 0.0
    %3862 = vmatprep.subr.mxu0 0.0
    %3863 = vmatpush2.msra.mxu0 0.0
    %3864 = vmatprep.subr.mxu0 0.0
    %3865 = vmatpush2.msra.mxu0 0.0
    %3866 = vmatprep.subr.mxu0 0.0
    %3867 = vmatpush2.msra.mxu0 0.0
    %3868 = vmatprep.mubr.f32.mxu0 0.0
    %3869 = vmatmul.mubr.f32.gmra.mxu0 %v3786
    %v3870 = vpop.f32.mrf.mxu0
    %v3871 = vadd.f32 0.0, %v3870
    %v3872 = vpop.f32.mrf.mxu0
    %3873 = vdwg.mxu0
    %3874 = vmatprep.subr.mxu0 0.0
    %3875 = vmatpush1.msra.mxu0 %v3785
    %3876 = vmatprep.subr.mxu0 0.0
    %3877 = vmatpush1.msra.mxu0 %v3784
    %3878 = vmatprep.subr.mxu0 0.0
    %3879 = vmatpush1.msra.mxu0 %v3783
    %3880 = vmatprep.subr.mxu0 0.0
    %3881 = vmatpush1.msra.mxu0 %v3782
    %3882 = vmatprep.subr.mxu0 0.0
    %3883 = vmatpush1.msra.mxu0 %v3781
    %3884 = vmatprep.subr.mxu0 0.0
    %3885 = vmatpush1.msra.mxu0 %v3780
    %3886 = vmatprep.subr.mxu0 0.0
    %3887 = vmatpush1.msra.mxu0 %v3779
    %3888 = vmatprep.subr.mxu0 0.0
    %3889 = vmatpush1.msra.mxu0 %v3778
    %3890 = vmatprep.subr.mxu0 0.0
    %3891 = vmatpush1.msra.mxu0 %v3777
    %3892 = vmatprep.subr.mxu0 0.0
    %3893 = vmatpush1.msra.mxu0 %v3776
    %3894 = vmatprep.subr.mxu0 0.0
    %3895 = vmatpush1.msra.mxu0 %v3775
    %3896 = vmatprep.subr.mxu0 0.0
    %3897 = vmatpush1.msra.mxu0 %v3774
    %3898 = vmatprep.subr.mxu0 0.0
    %3899 = vmatpush1.msra.mxu0 %v3773
    %3900 = vmatprep.subr.mxu0 0.0
    %3901 = vmatpush1.msra.mxu0 %v3772
    %3902 = vmatprep.subr.mxu0 0.0
    %3903 = vmatpush1.msra.mxu0 %v3771
    %3904 = vmatprep.subr.mxu0 0.0
    %3905 = vmatpush1.msra.mxu0 %v3770
    %3906 = vmatprep.subr.mxu0 0.0
    %3907 = vmatpush2.msra.mxu0 0.0
    %3908 = vmatprep.subr.mxu0 0.0
    %3909 = vmatpush2.msra.mxu0 0.0
    %3910 = vmatprep.subr.mxu0 0.0
    %3911 = vmatpush2.msra.mxu0 0.0
    %3912 = vmatprep.subr.mxu0 0.0
    %3913 = vmatpush2.msra.mxu0 0.0
    %3914 = vmatprep.subr.mxu0 0.0
    %3915 = vmatpush2.msra.mxu0 0.0
    %3916 = vmatprep.subr.mxu0 0.0
    %3917 = vmatpush2.msra.mxu0 0.0
    %3918 = vmatprep.subr.mxu0 0.0
    %3919 = vmatpush2.msra.mxu0 0.0
    %3920 = vmatprep.subr.mxu0 0.0
    %3921 = vmatpush2.msra.mxu0 0.0
    %3922 = vmatprep.subr.mxu0 0.0
    %3923 = vmatpush2.msra.mxu0 0.0
    %3924 = vmatprep.subr.mxu0 0.0
    %3925 = vmatpush2.msra.mxu0 0.0
    %3926 = vmatprep.subr.mxu0 0.0
    %3927 = vmatpush2.msra.mxu0 0.0
    %3928 = vmatprep.subr.mxu0 0.0
    %3929 = vmatpush2.msra.mxu0 0.0
    %3930 = vmatprep.subr.mxu0 0.0
    %3931 = vmatpush2.msra.mxu0 0.0
    %3932 = vmatprep.subr.mxu0 0.0
    %3933 = vmatpush2.msra.mxu0 0.0
    %3934 = vmatprep.subr.mxu0 0.0
    %3935 = vmatpush2.msra.mxu0 0.0
    %3936 = vmatprep.subr.mxu0 0.0
    %3937 = vmatpush2.msra.mxu0 0.0
    %3938 = vmatprep.mubr.f32.mxu0 0.0
    %3939 = vmatmul.mubr.f32.gmra.mxu0 %v3769
    %v3940 = vpop.f32.mrf.mxu0
    %v3941 = vadd.f32 %v3871, %v3940
    %v3942 = vpop.f32.mrf.mxu0
    %3943 = vdwg.mxu0
    %v3944 = vld [vmem:[#allocation9 + $0x2] sm:$0xf]
    %s3945 = scalar_lea.vmem [#allocation25], 256
    %v3946 = vld [vmem:[%s3945] sm:$0xff]
    %v3947 = vld [vmem:[%s3945 + $0x8] sm:$0xff]
    %v3948 = vld [vmem:[%s3945 + $0x10] sm:$0xff]
    %v3949 = vld [vmem:[%s3945 + $0x18] sm:$0xff]
    %v3950 = vld [vmem:[%s3945 + $0x20] sm:$0xff]
    %v3951 = vld [vmem:[%s3945 + $0x28] sm:$0xff]
    %v3952 = vld [vmem:[%s3945 + $0x30] sm:$0xff]
    %v3953 = vld [vmem:[%s3945 + $0x38] sm:$0xff]
    %v3954 = vld [vmem:[%s3945 + $0x40] sm:$0xff]
    %v3955 = vld [vmem:[%s3945 + $0x48] sm:$0xff]
    %v3956 = vld [vmem:[%s3945 + $0x50] sm:$0xff]
    %v3957 = vld [vmem:[%s3945 + $0x58] sm:$0xff]
    %v3958 = vld [vmem:[%s3945 + $0x60] sm:$0xff]
    %v3959 = vld [vmem:[%s3945 + $0x68] sm:$0xff]
    %v3960 = vld [vmem:[%s3945 + $0x70] sm:$0xff]
    %v3961 = vld [vmem:[%s3945 + $0x78] sm:$0xff]
    %3962 = vmatprep.subr.mxu0 0.0
    %3963 = vmatpush1.msra.mxu0 %v3961
    %3964 = vmatprep.subr.mxu0 0.0
    %3965 = vmatpush1.msra.mxu0 %v3960
    %3966 = vmatprep.subr.mxu0 0.0
    %3967 = vmatpush1.msra.mxu0 %v3959
    %3968 = vmatprep.subr.mxu0 0.0
    %3969 = vmatpush1.msra.mxu0 %v3958
    %3970 = vmatprep.subr.mxu0 0.0
    %3971 = vmatpush1.msra.mxu0 %v3957
    %3972 = vmatprep.subr.mxu0 0.0
    %3973 = vmatpush1.msra.mxu0 %v3956
    %3974 = vmatprep.subr.mxu0 0.0
    %3975 = vmatpush1.msra.mxu0 %v3955
    %3976 = vmatprep.subr.mxu0 0.0
    %3977 = vmatpush1.msra.mxu0 %v3954
    %3978 = vmatprep.subr.mxu0 0.0
    %3979 = vmatpush1.msra.mxu0 %v3953
    %3980 = vmatprep.subr.mxu0 0.0
    %3981 = vmatpush1.msra.mxu0 %v3952
    %3982 = vmatprep.subr.mxu0 0.0
    %3983 = vmatpush1.msra.mxu0 %v3951
    %3984 = vmatprep.subr.mxu0 0.0
    %3985 = vmatpush1.msra.mxu0 %v3950
    %3986 = vmatprep.subr.mxu0 0.0
    %3987 = vmatpush1.msra.mxu0 %v3949
    %3988 = vmatprep.subr.mxu0 0.0
    %3989 = vmatpush1.msra.mxu0 %v3948
    %3990 = vmatprep.subr.mxu0 0.0
    %3991 = vmatpush1.msra.mxu0 %v3947
    %3992 = vmatprep.subr.mxu0 0.0
    %3993 = vmatpush1.msra.mxu0 %v3946
    %3994 = vmatprep.subr.mxu0 0.0
    %3995 = vmatpush2.msra.mxu0 0.0
    %3996 = vmatprep.subr.mxu0 0.0
    %3997 = vmatpush2.msra.mxu0 0.0
    %3998 = vmatprep.subr.mxu0 0.0
    %3999 = vmatpush2.msra.mxu0 0.0
    %4000 = vmatprep.subr.mxu0 0.0
    %4001 = vmatpush2.msra.mxu0 0.0
    %4002 = vmatprep.subr.mxu0 0.0
    %4003 = vmatpush2.msra.mxu0 0.0
    %4004 = vmatprep.subr.mxu0 0.0
    %4005 = vmatpush2.msra.mxu0 0.0
    %4006 = vmatprep.subr.mxu0 0.0
    %4007 = vmatpush2.msra.mxu0 0.0
    %4008 = vmatprep.subr.mxu0 0.0
    %4009 = vmatpush2.msra.mxu0 0.0
    %4010 = vmatprep.subr.mxu0 0.0
    %4011 = vmatpush2.msra.mxu0 0.0
    %4012 = vmatprep.subr.mxu0 0.0
    %4013 = vmatpush2.msra.mxu0 0.0
    %4014 = vmatprep.subr.mxu0 0.0
    %4015 = vmatpush2.msra.mxu0 0.0
    %4016 = vmatprep.subr.mxu0 0.0
    %4017 = vmatpush2.msra.mxu0 0.0
    %4018 = vmatprep.subr.mxu0 0.0
    %4019 = vmatpush2.msra.mxu0 0.0
    %4020 = vmatprep.subr.mxu0 0.0
    %4021 = vmatpush2.msra.mxu0 0.0
    %4022 = vmatprep.subr.mxu0 0.0
    %4023 = vmatpush2.msra.mxu0 0.0
    %4024 = vmatprep.subr.mxu0 0.0
    %4025 = vmatpush2.msra.mxu0 0.0
    %4026 = vmatprep.mubr.f32.mxu0 0.0
    %4027 = vmatmul.mubr.f32.gmra.mxu0 %v3944
    %v4028 = vpop.f32.mrf.mxu0
    %v4029 = vadd.f32 0.0, %v4028
    %v4030 = vpop.f32.mrf.mxu0
    %4031 = vdwg.mxu0
    %v4032 = vadd.f32 %v3941, %v4029
    %v4033 = vsel %vm3594, %v4032, 0.0
    %v4034 = vrot.slane %v4033, 4
    %v4035 = vadd.f32 %v4033, %v4034
    %v4036 = vrot.slane %v4035, 2
    %v4037 = vadd.f32 %v4035, %v4036
    %v4038 = vrot.slane %v4037, 1
    %v4039 = vadd.f32 %v4037, %v4038
    %v4040 = vmul.f32 %v4032, %v4032
    %v4041 = vsel %vm3594, %v4040, 0.0
    %v4042 = vrot.slane %v4041, 4
    %v4043 = vadd.f32 %v4041, %v4042
    %v4044 = vrot.slane %v4043, 2
    %v4045 = vadd.f32 %v4043, %v4044
    %v4046 = vrot.slane %v4045, 1
    %v4047 = vadd.f32 %v4045, %v4046
    %4048 = vmatprep.subr.mxu0 0.0
    %4049 = vmatpush1.msra.mxu0 %v443
    %4050 = vmatprep.subr.mxu0 0.0
    %4051 = vmatpush1.msra.mxu0 %v442
    %4052 = vmatprep.subr.mxu0 0.0
    %4053 = vmatpush1.msra.mxu0 %v441
    %4054 = vmatprep.subr.mxu0 0.0
    %4055 = vmatpush1.msra.mxu0 %v440
    %4056 = vmatprep.subr.mxu0 0.0
    %4057 = vmatpush1.msra.mxu0 %v439
    %4058 = vmatprep.subr.mxu0 0.0
    %4059 = vmatpush1.msra.mxu0 %v438
    %4060 = vmatprep.subr.mxu0 0.0
    %4061 = vmatpush1.msra.mxu0 %v437
    %4062 = vmatprep.subr.mxu0 0.0
    %4063 = vmatpush1.msra.mxu0 %v436
    %4064 = vmatprep.subr.mxu0 0.0
    %4065 = vmatpush1.msra.mxu0 %v435
    %4066 = vmatprep.subr.mxu0 0.0
    %4067 = vmatpush1.msra.mxu0 %v434
    %4068 = vmatprep.subr.mxu0 0.0
    %4069 = vmatpush1.msra.mxu0 %v433
    %4070 = vmatprep.subr.mxu0 0.0
    %4071 = vmatpush1.msra.mxu0 %v432
    %4072 = vmatprep.subr.mxu0 0.0
    %4073 = vmatpush1.msra.mxu0 %v431
    %4074 = vmatprep.subr.mxu0 0.0
    %4075 = vmatpush1.msra.mxu0 %v430
    %4076 = vmatprep.subr.mxu0 0.0
    %4077 = vmatpush1.msra.mxu0 %v429
    %4078 = vmatprep.subr.mxu0 0.0
    %4079 = vmatpush1.msra.mxu0 %v428
    %4080 = vmatprep.subr.mxu0 0.0
    %4081 = vmatpush2.msra.mxu0 0.0
    %4082 = vmatprep.subr.mxu0 0.0
    %4083 = vmatpush2.msra.mxu0 0.0
    %4084 = vmatprep.subr.mxu0 0.0
    %4085 = vmatpush2.msra.mxu0 0.0
    %4086 = vmatprep.subr.mxu0 0.0
    %4087 = vmatpush2.msra.mxu0 0.0
    %4088 = vmatprep.subr.mxu0 0.0
    %4089 = vmatpush2.msra.mxu0 0.0
    %4090 = vmatprep.subr.mxu0 0.0
    %4091 = vmatpush2.msra.mxu0 0.0
    %4092 = vmatprep.subr.mxu0 0.0
    %4093 = vmatpush2.msra.mxu0 0.0
    %4094 = vmatprep.subr.mxu0 0.0
    %4095 = vmatpush2.msra.mxu0 0.0
    %4096 = vmatprep.subr.mxu0 0.0
    %4097 = vmatpush2.msra.mxu0 0.0
    %4098 = vmatprep.subr.mxu0 0.0
    %4099 = vmatpush2.msra.mxu0 0.0
    %4100 = vmatprep.subr.mxu0 0.0
    %4101 = vmatpush2.msra.mxu0 0.0
    %4102 = vmatprep.subr.mxu0 0.0
    %4103 = vmatpush2.msra.mxu0 0.0
    %4104 = vmatprep.subr.mxu0 0.0
    %4105 = vmatpush2.msra.mxu0 0.0
    %4106 = vmatprep.subr.mxu0 0.0
    %4107 = vmatpush2.msra.mxu0 0.0
    %4108 = vmatprep.subr.mxu0 0.0
    %4109 = vmatpush2.msra.mxu0 0.0
    %4110 = vmatprep.subr.mxu0 0.0
    %4111 = vmatpush2.msra.mxu0 0.0
    %4112 = vmatprep.mubr.f32.mxu0 0.0
    %4113 = vmatmul.mubr.f32.gmra.mxu0 %v4039
    %v4114 = vpop.f32.mrf.mxu0
    %v4115 = vadd.f32 0.0, %v4114
    %v4116 = vpop.f32.mrf.mxu0
    %4117 = vdwg.mxu0
    %v4118 = vmul.f32 %v4115, 0.03125
    %4119 = vmatprep.subr.mxu0 0.0
    %4120 = vmatpush1.msra.mxu0 %v443
    %4121 = vmatprep.subr.mxu0 0.0
    %4122 = vmatpush1.msra.mxu0 %v442
    %4123 = vmatprep.subr.mxu0 0.0
    %4124 = vmatpush1.msra.mxu0 %v441
    %4125 = vmatprep.subr.mxu0 0.0
    %4126 = vmatpush1.msra.mxu0 %v440
    %4127 = vmatprep.subr.mxu0 0.0
    %4128 = vmatpush1.msra.mxu0 %v439
    %4129 = vmatprep.subr.mxu0 0.0
    %4130 = vmatpush1.msra.mxu0 %v438
    %4131 = vmatprep.subr.mxu0 0.0
    %4132 = vmatpush1.msra.mxu0 %v437
    %4133 = vmatprep.subr.mxu0 0.0
    %4134 = vmatpush1.msra.mxu0 %v436
    %4135 = vmatprep.subr.mxu0 0.0
    %4136 = vmatpush1.msra.mxu0 %v435
    %4137 = vmatprep.subr.mxu0 0.0
    %4138 = vmatpush1.msra.mxu0 %v434
    %4139 = vmatprep.subr.mxu0 0.0
    %4140 = vmatpush1.msra.mxu0 %v433
    %4141 = vmatprep.subr.mxu0 0.0
    %4142 = vmatpush1.msra.mxu0 %v432
    %4143 = vmatprep.subr.mxu0 0.0
    %4144 = vmatpush1.msra.mxu0 %v431
    %4145 = vmatprep.subr.mxu0 0.0
    %4146 = vmatpush1.msra.mxu0 %v430
    %4147 = vmatprep.subr.mxu0 0.0
    %4148 = vmatpush1.msra.mxu0 %v429
    %4149 = vmatprep.subr.mxu0 0.0
    %4150 = vmatpush1.msra.mxu0 %v428
    %4151 = vmatprep.subr.mxu0 0.0
    %4152 = vmatpush2.msra.mxu0 0.0
    %4153 = vmatprep.subr.mxu0 0.0
    %4154 = vmatpush2.msra.mxu0 0.0
    %4155 = vmatprep.subr.mxu0 0.0
    %4156 = vmatpush2.msra.mxu0 0.0
    %4157 = vmatprep.subr.mxu0 0.0
    %4158 = vmatpush2.msra.mxu0 0.0
    %4159 = vmatprep.subr.mxu0 0.0
    %4160 = vmatpush2.msra.mxu0 0.0
    %4161 = vmatprep.subr.mxu0 0.0
    %4162 = vmatpush2.msra.mxu0 0.0
    %4163 = vmatprep.subr.mxu0 0.0
    %4164 = vmatpush2.msra.mxu0 0.0
    %4165 = vmatprep.subr.mxu0 0.0
    %4166 = vmatpush2.msra.mxu0 0.0
    %4167 = vmatprep.subr.mxu0 0.0
    %4168 = vmatpush2.msra.mxu0 0.0
    %4169 = vmatprep.subr.mxu0 0.0
    %4170 = vmatpush2.msra.mxu0 0.0
    %4171 = vmatprep.subr.mxu0 0.0
    %4172 = vmatpush2.msra.mxu0 0.0
    %4173 = vmatprep.subr.mxu0 0.0
    %4174 = vmatpush2.msra.mxu0 0.0
    %4175 = vmatprep.subr.mxu0 0.0
    %4176 = vmatpush2.msra.mxu0 0.0
    %4177 = vmatprep.subr.mxu0 0.0
    %4178 = vmatpush2.msra.mxu0 0.0
    %4179 = vmatprep.subr.mxu0 0.0
    %4180 = vmatpush2.msra.mxu0 0.0
    %4181 = vmatprep.subr.mxu0 0.0
    %4182 = vmatpush2.msra.mxu0 0.0
    %4183 = vmatprep.mubr.f32.mxu0 0.0
    %4184 = vmatmul.mubr.f32.gmra.mxu0 %v4047
    %v4185 = vpop.f32.mrf.mxu0
    %v4186 = vadd.f32 0.0, %v4185
    %v4187 = vpop.f32.mrf.mxu0
    %4188 = vdwg.mxu0
    %v4189 = vmul.f32 %v4186, 0.03125
    %v4190 = vmul.f32 %v4118, %v4118
    %v4191 = vsub.f32 %v4189, %v4190
    %v4192 = vmax.f32 %v4191, 0.0
    %v4193 = vadd.f32 %v4192, 1e-05
    %v4194 = vrsqrt.pop %v4193
    %v4195 = vlaneseq
    %v4196 = vshrl.u32 %v4195, 7
    %v4197 = vsub.s32 0, %v4196
    %v4198 = vrot.slane %v4118, %v4197
    %v4199 = vsub.f32 %v4032, %v4198
    %v4200 = vlaneseq
    %v4201 = vshrl.u32 %v4200, 7
    %v4202 = vsub.s32 0, %v4201
    %v4203 = vrot.slane %v4194, %v4202
    %v4204 = vmul.f32 %v4199, %v4203
    %v4205 = vmax.f32 %v4204, 0.0
    %4206 = vst [vmem:[#allocation10 + $0x1] sm:$0xf] %v4205
    %v4207 = vld [vmem:[#allocation10] sm:$0xf]
    %v4208 = vld [vmem:[#allocation26] sm:$0xff]
    %v4209 = vld [vmem:[#allocation26 + $0x8] sm:$0xff]
    %v4210 = vld [vmem:[#allocation26 + $0x10] sm:$0xff]
    %v4211 = vld [vmem:[#allocation26 + $0x18] sm:$0xff]
    %v4212 = vld [vmem:[#allocation26 + $0x20] sm:$0xff]
    %v4213 = vld [vmem:[#allocation26 + $0x28] sm:$0xff]
    %v4214 = vld [vmem:[#allocation26 + $0x30] sm:$0xff]
    %v4215 = vld [vmem:[#allocation26 + $0x38] sm:$0xff]
    %v4216 = vld [vmem:[#allocation26 + $0x40] sm:$0xff]
    %v4217 = vld [vmem:[#allocation26 + $0x48] sm:$0xff]
    %v4218 = vld [vmem:[#allocation26 + $0x50] sm:$0xff]
    %v4219 = vld [vmem:[#allocation26 + $0x58] sm:$0xff]
    %v4220 = vld [vmem:[#allocation26 + $0x60] sm:$0xff]
    %v4221 = vld [vmem:[#allocation26 + $0x68] sm:$0xff]
    %v4222 = vld [vmem:[#allocation26 + $0x70] sm:$0xff]
    %v4223 = vld [vmem:[#allocation26 + $0x78] sm:$0xff]
    %v4224 = vld [vmem:[#allocation10 + $0x1] sm:$0xf]
    %s4225 = scalar_lea.vmem [#allocation26], 128
    %v4226 = vld [vmem:[%s4225] sm:$0xff]
    %v4227 = vld [vmem:[%s4225 + $0x8] sm:$0xff]
    %v4228 = vld [vmem:[%s4225 + $0x10] sm:$0xff]
    %v4229 = vld [vmem:[%s4225 + $0x18] sm:$0xff]
    %v4230 = vld [vmem:[%s4225 + $0x20] sm:$0xff]
    %v4231 = vld [vmem:[%s4225 + $0x28] sm:$0xff]
    %v4232 = vld [vmem:[%s4225 + $0x30] sm:$0xff]
    %v4233 = vld [vmem:[%s4225 + $0x38] sm:$0xff]
    %v4234 = vld [vmem:[%s4225 + $0x40] sm:$0xff]
    %v4235 = vld [vmem:[%s4225 + $0x48] sm:$0xff]
    %v4236 = vld [vmem:[%s4225 + $0x50] sm:$0xff]
    %v4237 = vld [vmem:[%s4225 + $0x58] sm:$0xff]
    %v4238 = vld [vmem:[%s4225 + $0x60] sm:$0xff]
    %v4239 = vld [vmem:[%s4225 + $0x68] sm:$0xff]
    %v4240 = vld [vmem:[%s4225 + $0x70] sm:$0xff]
    %v4241 = vld [vmem:[%s4225 + $0x78] sm:$0xff]
    %4242 = vmatprep.subr.mxu0 0.0
    %4243 = vmatpush1.msra.mxu0 %v4241
    %4244 = vmatprep.subr.mxu0 0.0
    %4245 = vmatpush1.msra.mxu0 %v4240
    %4246 = vmatprep.subr.mxu0 0.0
    %4247 = vmatpush1.msra.mxu0 %v4239
    %4248 = vmatprep.subr.mxu0 0.0
    %4249 = vmatpush1.msra.mxu0 %v4238
    %4250 = vmatprep.subr.mxu0 0.0
    %4251 = vmatpush1.msra.mxu0 %v4237
    %4252 = vmatprep.subr.mxu0 0.0
    %4253 = vmatpush1.msra.mxu0 %v4236
    %4254 = vmatprep.subr.mxu0 0.0
    %4255 = vmatpush1.msra.mxu0 %v4235
    %4256 = vmatprep.subr.mxu0 0.0
    %4257 = vmatpush1.msra.mxu0 %v4234
    %4258 = vmatprep.subr.mxu0 0.0
    %4259 = vmatpush1.msra.mxu0 %v4233
    %4260 = vmatprep.subr.mxu0 0.0
    %4261 = vmatpush1.msra.mxu0 %v4232
    %4262 = vmatprep.subr.mxu0 0.0
    %4263 = vmatpush1.msra.mxu0 %v4231
    %4264 = vmatprep.subr.mxu0 0.0
    %4265 = vmatpush1.msra.mxu0 %v4230
    %4266 = vmatprep.subr.mxu0 0.0
    %4267 = vmatpush1.msra.mxu0 %v4229
    %4268 = vmatprep.subr.mxu0 0.0
    %4269 = vmatpush1.msra.mxu0 %v4228
    %4270 = vmatprep.subr.mxu0 0.0
    %4271 = vmatpush1.msra.mxu0 %v4227
    %4272 = vmatprep.subr.mxu0 0.0
    %4273 = vmatpush1.msra.mxu0 %v4226
    %4274 = vmatprep.subr.mxu0 0.0
    %4275 = vmatpush2.msra.mxu0 0.0
    %4276 = vmatprep.subr.mxu0 0.0
    %4277 = vmatpush2.msra.mxu0 0.0
    %4278 = vmatprep.subr.mxu0 0.0
    %4279 = vmatpush2.msra.mxu0 0.0
    %4280 = vmatprep.subr.mxu0 0.0
    %4281 = vmatpush2.msra.mxu0 0.0
    %4282 = vmatprep.subr.mxu0 0.0
    %4283 = vmatpush2.msra.mxu0 0.0
    %4284 = vmatprep.subr.mxu0 0.0
    %4285 = vmatpush2.msra.mxu0 0.0
    %4286 = vmatprep.subr.mxu0 0.0
    %4287 = vmatpush2.msra.mxu0 0.0
    %4288 = vmatprep.subr.mxu0 0.0
    %4289 = vmatpush2.msra.mxu0 0.0
    %4290 = vmatprep.subr.mxu0 0.0
    %4291 = vmatpush2.msra.mxu0 0.0
    %4292 = vmatprep.subr.mxu0 0.0
    %4293 = vmatpush2.msra.mxu0 0.0
    %4294 = vmatprep.subr.mxu0 0.0
    %4295 = vmatpush2.msra.mxu0 0.0
    %4296 = vmatprep.subr.mxu0 0.0
    %4297 = vmatpush2.msra.mxu0 0.0
    %4298 = vmatprep.subr.mxu0 0.0
    %4299 = vmatpush2.msra.mxu0 0.0
    %4300 = vmatprep.subr.mxu0 0.0
    %4301 = vmatpush2.msra.mxu0 0.0
    %4302 = vmatprep.subr.mxu0 0.0
    %4303 = vmatpush2.msra.mxu0 0.0
    %4304 = vmatprep.subr.mxu0 0.0
    %4305 = vmatpush2.msra.mxu0 0.0
    %4306 = vmatprep.mubr.f32.mxu0 0.0
    %4307 = vmatmul.mubr.f32.gmra.mxu0 %v4224
    %v4308 = vpop.f32.mrf.mxu0
    %v4309 = vadd.f32 0.0, %v4308
    %v4310 = vpop.f32.mrf.mxu0
    %4311 = vdwg.mxu0
    %4312 = vmatprep.subr.mxu0 0.0
    %4313 = vmatpush1.msra.mxu0 %v4223
    %4314 = vmatprep.subr.mxu0 0.0
    %4315 = vmatpush1.msra.mxu0 %v4222
    %4316 = vmatprep.subr.mxu0 0.0
    %4317 = vmatpush1.msra.mxu0 %v4221
    %4318 = vmatprep.subr.mxu0 0.0
    %4319 = vmatpush1.msra.mxu0 %v4220
    %4320 = vmatprep.subr.mxu0 0.0
    %4321 = vmatpush1.msra.mxu0 %v4219
    %4322 = vmatprep.subr.mxu0 0.0
    %4323 = vmatpush1.msra.mxu0 %v4218
    %4324 = vmatprep.subr.mxu0 0.0
    %4325 = vmatpush1.msra.mxu0 %v4217
    %4326 = vmatprep.subr.mxu0 0.0
    %4327 = vmatpush1.msra.mxu0 %v4216
    %4328 = vmatprep.subr.mxu0 0.0
    %4329 = vmatpush1.msra.mxu0 %v4215
    %4330 = vmatprep.subr.mxu0 0.0
    %4331 = vmatpush1.msra.mxu0 %v4214
    %4332 = vmatprep.subr.mxu0 0.0
    %4333 = vmatpush1.msra.mxu0 %v4213
    %4334 = vmatprep.subr.mxu0 0.0
    %4335 = vmatpush1.msra.mxu0 %v4212
    %4336 = vmatprep.subr.mxu0 0.0
    %4337 = vmatpush1.msra.mxu0 %v4211
    %4338 = vmatprep.subr.mxu0 0.0
    %4339 = vmatpush1.msra.mxu0 %v4210
    %4340 = vmatprep.subr.mxu0 0.0
    %4341 = vmatpush1.msra.mxu0 %v4209
    %4342 = vmatprep.subr.mxu0 0.0
    %4343 = vmatpush1.msra.mxu0 %v4208
    %4344 = vmatprep.subr.mxu0 0.0
    %4345 = vmatpush2.msra.mxu0 0.0
    %4346 = vmatprep.subr.mxu0 0.0
    %4347 = vmatpush2.msra.mxu0 0.0
    %4348 = vmatprep.subr.mxu0 0.0
    %4349 = vmatpush2.msra.mxu0 0.0
    %4350 = vmatprep.subr.mxu0 0.0
    %4351 = vmatpush2.msra.mxu0 0.0
    %4352 = vmatprep.subr.mxu0 0.0
    %4353 = vmatpush2.msra.mxu0 0.0
    %4354 = vmatprep.subr.mxu0 0.0
    %4355 = vmatpush2.msra.mxu0 0.0
    %4356 = vmatprep.subr.mxu0 0.0
    %4357 = vmatpush2.msra.mxu0 0.0
    %4358 = vmatprep.subr.mxu0 0.0
    %4359 = vmatpush2.msra.mxu0 0.0
    %4360 = vmatprep.subr.mxu0 0.0
    %4361 = vmatpush2.msra.mxu0 0.0
    %4362 = vmatprep.subr.mxu0 0.0
    %4363 = vmatpush2.msra.mxu0 0.0
    %4364 = vmatprep.subr.mxu0 0.0
    %4365 = vmatpush2.msra.mxu0 0.0
    %4366 = vmatprep.subr.mxu0 0.0
    %4367 = vmatpush2.msra.mxu0 0.0
    %4368 = vmatprep.subr.mxu0 0.0
    %4369 = vmatpush2.msra.mxu0 0.0
    %4370 = vmatprep.subr.mxu0 0.0
    %4371 = vmatpush2.msra.mxu0 0.0
    %4372 = vmatprep.subr.mxu0 0.0
    %4373 = vmatpush2.msra.mxu0 0.0
    %4374 = vmatprep.subr.mxu0 0.0
    %4375 = vmatpush2.msra.mxu0 0.0
    %4376 = vmatprep.mubr.f32.mxu0 0.0
    %4377 = vmatmul.mubr.f32.gmra.mxu0 %v4207
    %v4378 = vpop.f32.mrf.mxu0
    %v4379 = vadd.f32 %v4309, %v4378
    %v4380 = vpop.f32.mrf.mxu0
    %4381 = vdwg.mxu0
    %v4382 = vld [vmem:[#allocation10 + $0x2] sm:$0xf]
    %s4383 = scalar_lea.vmem [#allocation26], 256
    %v4384 = vld [vmem:[%s4383] sm:$0xff]
    %v4385 = vld [vmem:[%s4383 + $0x8] sm:$0xff]
    %v4386 = vld [vmem:[%s4383 + $0x10] sm:$0xff]
    %v4387 = vld [vmem:[%s4383 + $0x18] sm:$0xff]
    %v4388 = vld [vmem:[%s4383 + $0x20] sm:$0xff]
    %v4389 = vld [vmem:[%s4383 + $0x28] sm:$0xff]
    %v4390 = vld [vmem:[%s4383 + $0x30] sm:$0xff]
    %v4391 = vld [vmem:[%s4383 + $0x38] sm:$0xff]
    %v4392 = vld [vmem:[%s4383 + $0x40] sm:$0xff]
    %v4393 = vld [vmem:[%s4383 + $0x48] sm:$0xff]
    %v4394 = vld [vmem:[%s4383 + $0x50] sm:$0xff]
    %v4395 = vld [vmem:[%s4383 + $0x58] sm:$0xff]
    %v4396 = vld [vmem:[%s4383 + $0x60] sm:$0xff]
    %v4397 = vld [vmem:[%s4383 + $0x68] sm:$0xff]
    %v4398 = vld [vmem:[%s4383 + $0x70] sm:$0xff]
    %v4399 = vld [vmem:[%s4383 + $0x78] sm:$0xff]
    %4400 = vmatprep.subr.mxu0 0.0
    %4401 = vmatpush1.msra.mxu0 %v4399
    %4402 = vmatprep.subr.mxu0 0.0
    %4403 = vmatpush1.msra.mxu0 %v4398
    %4404 = vmatprep.subr.mxu0 0.0
    %4405 = vmatpush1.msra.mxu0 %v4397
    %4406 = vmatprep.subr.mxu0 0.0
    %4407 = vmatpush1.msra.mxu0 %v4396
    %4408 = vmatprep.subr.mxu0 0.0
    %4409 = vmatpush1.msra.mxu0 %v4395
    %4410 = vmatprep.subr.mxu0 0.0
    %4411 = vmatpush1.msra.mxu0 %v4394
    %4412 = vmatprep.subr.mxu0 0.0
    %4413 = vmatpush1.msra.mxu0 %v4393
    %4414 = vmatprep.subr.mxu0 0.0
    %4415 = vmatpush1.msra.mxu0 %v4392
    %4416 = vmatprep.subr.mxu0 0.0
    %4417 = vmatpush1.msra.mxu0 %v4391
    %4418 = vmatprep.subr.mxu0 0.0
    %4419 = vmatpush1.msra.mxu0 %v4390
    %4420 = vmatprep.subr.mxu0 0.0
    %4421 = vmatpush1.msra.mxu0 %v4389
    %4422 = vmatprep.subr.mxu0 0.0
    %4423 = vmatpush1.msra.mxu0 %v4388
    %4424 = vmatprep.subr.mxu0 0.0
    %4425 = vmatpush1.msra.mxu0 %v4387
    %4426 = vmatprep.subr.mxu0 0.0
    %4427 = vmatpush1.msra.mxu0 %v4386
    %4428 = vmatprep.subr.mxu0 0.0
    %4429 = vmatpush1.msra.mxu0 %v4385
    %4430 = vmatprep.subr.mxu0 0.0
    %4431 = vmatpush1.msra.mxu0 %v4384
    %4432 = vmatprep.subr.mxu0 0.0
    %4433 = vmatpush2.msra.mxu0 0.0
    %4434 = vmatprep.subr.mxu0 0.0
    %4435 = vmatpush2.msra.mxu0 0.0
    %4436 = vmatprep.subr.mxu0 0.0
    %4437 = vmatpush2.msra.mxu0 0.0
    %4438 = vmatprep.subr.mxu0 0.0
    %4439 = vmatpush2.msra.mxu0 0.0
    %4440 = vmatprep.subr.mxu0 0.0
    %4441 = vmatpush2.msra.mxu0 0.0
    %4442 = vmatprep.subr.mxu0 0.0
    %4443 = vmatpush2.msra.mxu0 0.0
    %4444 = vmatprep.subr.mxu0 0.0
    %4445 = vmatpush2.msra.mxu0 0.0
    %4446 = vmatprep.subr.mxu0 0.0
    %4447 = vmatpush2.msra.mxu0 0.0
    %4448 = vmatprep.subr.mxu0 0.0
    %4449 = vmatpush2.msra.mxu0 0.0
    %4450 = vmatprep.subr.mxu0 0.0
    %4451 = vmatpush2.msra.mxu0 0.0
    %4452 = vmatprep.subr.mxu0 0.0
    %4453 = vmatpush2.msra.mxu0 0.0
    %4454 = vmatprep.subr.mxu0 0.0
    %4455 = vmatpush2.msra.mxu0 0.0
    %4456 = vmatprep.subr.mxu0 0.0
    %4457 = vmatpush2.msra.mxu0 0.0
    %4458 = vmatprep.subr.mxu0 0.0
    %4459 = vmatpush2.msra.mxu0 0.0
    %4460 = vmatprep.subr.mxu0 0.0
    %4461 = vmatpush2.msra.mxu0 0.0
    %4462 = vmatprep.subr.mxu0 0.0
    %4463 = vmatpush2.msra.mxu0 0.0
    %4464 = vmatprep.mubr.f32.mxu0 0.0
    %4465 = vmatmul.mubr.f32.gmra.mxu0 %v4382
    %v4466 = vpop.f32.mrf.mxu0
    %v4467 = vadd.f32 0.0, %v4466
    %v4468 = vpop.f32.mrf.mxu0
    %4469 = vdwg.mxu0
    %v4470 = vadd.f32 %v4379, %v4467
    %v4471 = vsel %vm3594, %v4470, 0.0
    %v4472 = vrot.slane %v4471, 4
    %v4473 = vadd.f32 %v4471, %v4472
    %v4474 = vrot.slane %v4473, 2
    %v4475 = vadd.f32 %v4473, %v4474
    %v4476 = vrot.slane %v4475, 1
    %v4477 = vadd.f32 %v4475, %v4476
    %v4478 = vmul.f32 %v4470, %v4470
    %v4479 = vsel %vm3594, %v4478, 0.0
    %v4480 = vrot.slane %v4479, 4
    %v4481 = vadd.f32 %v4479, %v4480
    %v4482 = vrot.slane %v4481, 2
    %v4483 = vadd.f32 %v4481, %v4482
    %v4484 = vrot.slane %v4483, 1
    %v4485 = vadd.f32 %v4483, %v4484
    %4486 = vmatprep.subr.mxu0 0.0
    %4487 = vmatpush1.msra.mxu0 %v443
    %4488 = vmatprep.subr.mxu0 0.0
    %4489 = vmatpush1.msra.mxu0 %v442
    %4490 = vmatprep.subr.mxu0 0.0
    %4491 = vmatpush1.msra.mxu0 %v441
    %4492 = vmatprep.subr.mxu0 0.0
    %4493 = vmatpush1.msra.mxu0 %v440
    %4494 = vmatprep.subr.mxu0 0.0
    %4495 = vmatpush1.msra.mxu0 %v439
    %4496 = vmatprep.subr.mxu0 0.0
    %4497 = vmatpush1.msra.mxu0 %v438
    %4498 = vmatprep.subr.mxu0 0.0
    %4499 = vmatpush1.msra.mxu0 %v437
    %4500 = vmatprep.subr.mxu0 0.0
    %4501 = vmatpush1.msra.mxu0 %v436
    %4502 = vmatprep.subr.mxu0 0.0
    %4503 = vmatpush1.msra.mxu0 %v435
    %4504 = vmatprep.subr.mxu0 0.0
    %4505 = vmatpush1.msra.mxu0 %v434
    %4506 = vmatprep.subr.mxu0 0.0
    %4507 = vmatpush1.msra.mxu0 %v433
    %4508 = vmatprep.subr.mxu0 0.0
    %4509 = vmatpush1.msra.mxu0 %v432
    %4510 = vmatprep.subr.mxu0 0.0
    %4511 = vmatpush1.msra.mxu0 %v431
    %4512 = vmatprep.subr.mxu0 0.0
    %4513 = vmatpush1.msra.mxu0 %v430
    %4514 = vmatprep.subr.mxu0 0.0
    %4515 = vmatpush1.msra.mxu0 %v429
    %4516 = vmatprep.subr.mxu0 0.0
    %4517 = vmatpush1.msra.mxu0 %v428
    %4518 = vmatprep.subr.mxu0 0.0
    %4519 = vmatpush2.msra.mxu0 0.0
    %4520 = vmatprep.subr.mxu0 0.0
    %4521 = vmatpush2.msra.mxu0 0.0
    %4522 = vmatprep.subr.mxu0 0.0
    %4523 = vmatpush2.msra.mxu0 0.0
    %4524 = vmatprep.subr.mxu0 0.0
    %4525 = vmatpush2.msra.mxu0 0.0
    %4526 = vmatprep.subr.mxu0 0.0
    %4527 = vmatpush2.msra.mxu0 0.0
    %4528 = vmatprep.subr.mxu0 0.0
    %4529 = vmatpush2.msra.mxu0 0.0
    %4530 = vmatprep.subr.mxu0 0.0
    %4531 = vmatpush2.msra.mxu0 0.0
    %4532 = vmatprep.subr.mxu0 0.0
    %4533 = vmatpush2.msra.mxu0 0.0
    %4534 = vmatprep.subr.mxu0 0.0
    %4535 = vmatpush2.msra.mxu0 0.0
    %4536 = vmatprep.subr.mxu0 0.0
    %4537 = vmatpush2.msra.mxu0 0.0
    %4538 = vmatprep.subr.mxu0 0.0
    %4539 = vmatpush2.msra.mxu0 0.0
    %4540 = vmatprep.subr.mxu0 0.0
    %4541 = vmatpush2.msra.mxu0 0.0
    %4542 = vmatprep.subr.mxu0 0.0
    %4543 = vmatpush2.msra.mxu0 0.0
    %4544 = vmatprep.subr.mxu0 0.0
    %4545 = vmatpush2.msra.mxu0 0.0
    %4546 = vmatprep.subr.mxu0 0.0
    %4547 = vmatpush2.msra.mxu0 0.0
    %4548 = vmatprep.subr.mxu0 0.0
    %4549 = vmatpush2.msra.mxu0 0.0
    %4550 = vmatprep.mubr.f32.mxu0 0.0
    %4551 = vmatmul.mubr.f32.gmra.mxu0 %v4477
    %v4552 = vpop.f32.mrf.mxu0
    %v4553 = vadd.f32 0.0, %v4552
    %v4554 = vpop.f32.mrf.mxu0
    %4555 = vdwg.mxu0
    %v4556 = vmul.f32 %v4553, 0.03125
    %4557 = vmatprep.subr.mxu0 0.0
    %4558 = vmatpush1.msra.mxu0 %v443
    %4559 = vmatprep.subr.mxu0 0.0
    %4560 = vmatpush1.msra.mxu0 %v442
    %4561 = vmatprep.subr.mxu0 0.0
    %4562 = vmatpush1.msra.mxu0 %v441
    %4563 = vmatprep.subr.mxu0 0.0
    %4564 = vmatpush1.msra.mxu0 %v440
    %4565 = vmatprep.subr.mxu0 0.0
    %4566 = vmatpush1.msra.mxu0 %v439
    %4567 = vmatprep.subr.mxu0 0.0
    %4568 = vmatpush1.msra.mxu0 %v438
    %4569 = vmatprep.subr.mxu0 0.0
    %4570 = vmatpush1.msra.mxu0 %v437
    %4571 = vmatprep.subr.mxu0 0.0
    %4572 = vmatpush1.msra.mxu0 %v436
    %4573 = vmatprep.subr.mxu0 0.0
    %4574 = vmatpush1.msra.mxu0 %v435
    %4575 = vmatprep.subr.mxu0 0.0
    %4576 = vmatpush1.msra.mxu0 %v434
    %4577 = vmatprep.subr.mxu0 0.0
    %4578 = vmatpush1.msra.mxu0 %v433
    %4579 = vmatprep.subr.mxu0 0.0
    %4580 = vmatpush1.msra.mxu0 %v432
    %4581 = vmatprep.subr.mxu0 0.0
    %4582 = vmatpush1.msra.mxu0 %v431
    %4583 = vmatprep.subr.mxu0 0.0
    %4584 = vmatpush1.msra.mxu0 %v430
    %4585 = vmatprep.subr.mxu0 0.0
    %4586 = vmatpush1.msra.mxu0 %v429
    %4587 = vmatprep.subr.mxu0 0.0
    %4588 = vmatpush1.msra.mxu0 %v428
    %4589 = vmatprep.subr.mxu0 0.0
    %4590 = vmatpush2.msra.mxu0 0.0
    %4591 = vmatprep.subr.mxu0 0.0
    %4592 = vmatpush2.msra.mxu0 0.0
    %4593 = vmatprep.subr.mxu0 0.0
    %4594 = vmatpush2.msra.mxu0 0.0
    %4595 = vmatprep.subr.mxu0 0.0
    %4596 = vmatpush2.msra.mxu0 0.0
    %4597 = vmatprep.subr.mxu0 0.0
    %4598 = vmatpush2.msra.mxu0 0.0
    %4599 = vmatprep.subr.mxu0 0.0
    %4600 = vmatpush2.msra.mxu0 0.0
    %4601 = vmatprep.subr.mxu0 0.0
    %4602 = vmatpush2.msra.mxu0 0.0
    %4603 = vmatprep.subr.mxu0 0.0
    %4604 = vmatpush2.msra.mxu0 0.0
    %4605 = vmatprep.subr.mxu0 0.0
    %4606 = vmatpush2.msra.mxu0 0.0
    %4607 = vmatprep.subr.mxu0 0.0
    %4608 = vmatpush2.msra.mxu0 0.0
    %4609 = vmatprep.subr.mxu0 0.0
    %4610 = vmatpush2.msra.mxu0 0.0
    %4611 = vmatprep.subr.mxu0 0.0
    %4612 = vmatpush2.msra.mxu0 0.0
    %4613 = vmatprep.subr.mxu0 0.0
    %4614 = vmatpush2.msra.mxu0 0.0
    %4615 = vmatprep.subr.mxu0 0.0
    %4616 = vmatpush2.msra.mxu0 0.0
    %4617 = vmatprep.subr.mxu0 0.0
    %4618 = vmatpush2.msra.mxu0 0.0
    %4619 = vmatprep.subr.mxu0 0.0
    %4620 = vmatpush2.msra.mxu0 0.0
    %4621 = vmatprep.mubr.f32.mxu0 0.0
    %4622 = vmatmul.mubr.f32.gmra.mxu0 %v4485
    %v4623 = vpop.f32.mrf.mxu0
    %v4624 = vadd.f32 0.0, %v4623
    %v4625 = vpop.f32.mrf.mxu0
    %4626 = vdwg.mxu0
    %v4627 = vmul.f32 %v4624, 0.03125
    %v4628 = vmul.f32 %v4556, %v4556
    %v4629 = vsub.f32 %v4627, %v4628
    %v4630 = vmax.f32 %v4629, 0.0
    %v4631 = vadd.f32 %v4630, 1e-05
    %v4632 = vrsqrt.pop %v4631
    %v4633 = vlaneseq
    %v4634 = vshrl.u32 %v4633, 7
    %v4635 = vsub.s32 0, %v4634
    %v4636 = vrot.slane %v4556, %v4635
    %v4637 = vsub.f32 %v4470, %v4636
    %v4638 = vlaneseq
    %v4639 = vshrl.u32 %v4638, 7
    %v4640 = vsub.s32 0, %v4639
    %v4641 = vrot.slane %v4632, %v4640
    %v4642 = vmul.f32 %v4637, %v4641
    %v4643 = vmax.f32 %v4642, 0.0
    %4644 = vst [vmem:[#allocation11] sm:$0xf] %v4643
    %v4645 = vld [vmem:[#allocation28] sm:$0xff]
    %v4646 = vld [vmem:[#allocation28 + $0x8] sm:$0xff]
    %v4647 = vld [vmem:[#allocation28 + $0x10] sm:$0xff]
    %v4648 = vld [vmem:[#allocation28 + $0x18] sm:$0xff]
    %v4649 = vld [vmem:[#allocation28 + $0x20] sm:$0xff]
    %v4650 = vld [vmem:[#allocation28 + $0x28] sm:$0xff]
    %v4651 = vld [vmem:[#allocation28 + $0x30] sm:$0xff]
    %v4652 = vld [vmem:[#allocation28 + $0x38] sm:$0xff]
    %v4653 = vld [vmem:[#allocation28 + $0x40] sm:$0xff]
    %v4654 = vld [vmem:[#allocation28 + $0x48] sm:$0xff]
    %v4655 = vld [vmem:[#allocation28 + $0x50] sm:$0xff]
    %v4656 = vld [vmem:[#allocation28 + $0x58] sm:$0xff]
    %v4657 = vld [vmem:[#allocation28 + $0x60] sm:$0xff]
    %v4658 = vld [vmem:[#allocation28 + $0x68] sm:$0xff]
    %v4659 = vld [vmem:[#allocation28 + $0x70] sm:$0xff]
    %v4660 = vld [vmem:[#allocation28 + $0x78] sm:$0xff]
    %4661 = vmatprep.subr.mxu0 0.0
    %4662 = vmatpush1.msra.mxu0 %v4660
    %4663 = vmatprep.subr.mxu0 0.0
    %4664 = vmatpush1.msra.mxu0 %v4659
    %4665 = vmatprep.subr.mxu0 0.0
    %4666 = vmatpush1.msra.mxu0 %v4658
    %4667 = vmatprep.subr.mxu0 0.0
    %4668 = vmatpush1.msra.mxu0 %v4657
    %4669 = vmatprep.subr.mxu0 0.0
    %4670 = vmatpush1.msra.mxu0 %v4656
    %4671 = vmatprep.subr.mxu0 0.0
    %4672 = vmatpush1.msra.mxu0 %v4655
    %4673 = vmatprep.subr.mxu0 0.0
    %4674 = vmatpush1.msra.mxu0 %v4654
    %4675 = vmatprep.subr.mxu0 0.0
    %4676 = vmatpush1.msra.mxu0 %v4653
    %4677 = vmatprep.subr.mxu0 0.0
    %4678 = vmatpush1.msra.mxu0 %v4652
    %4679 = vmatprep.subr.mxu0 0.0
    %4680 = vmatpush1.msra.mxu0 %v4651
    %4681 = vmatprep.subr.mxu0 0.0
    %4682 = vmatpush1.msra.mxu0 %v4650
    %4683 = vmatprep.subr.mxu0 0.0
    %4684 = vmatpush1.msra.mxu0 %v4649
    %4685 = vmatprep.subr.mxu0 0.0
    %4686 = vmatpush1.msra.mxu0 %v4648
    %4687 = vmatprep.subr.mxu0 0.0
    %4688 = vmatpush1.msra.mxu0 %v4647
    %4689 = vmatprep.subr.mxu0 0.0
    %4690 = vmatpush1.msra.mxu0 %v4646
    %4691 = vmatprep.subr.mxu0 0.0
    %4692 = vmatpush1.msra.mxu0 %v4645
    %4693 = vmatprep.subr.mxu0 0.0
    %4694 = vmatpush2.msra.mxu0 0.0
    %4695 = vmatprep.subr.mxu0 0.0
    %4696 = vmatpush2.msra.mxu0 0.0
    %4697 = vmatprep.subr.mxu0 0.0
    %4698 = vmatpush2.msra.mxu0 0.0
    %4699 = vmatprep.subr.mxu0 0.0
    %4700 = vmatpush2.msra.mxu0 0.0
    %4701 = vmatprep.subr.mxu0 0.0
    %4702 = vmatpush2.msra.mxu0 0.0
    %4703 = vmatprep.subr.mxu0 0.0
    %4704 = vmatpush2.msra.mxu0 0.0
    %4705 = vmatprep.subr.mxu0 0.0
    %4706 = vmatpush2.msra.mxu0 0.0
    %4707 = vmatprep.subr.mxu0 0.0
    %4708 = vmatpush2.msra.mxu0 0.0
    %4709 = vmatprep.subr.mxu0 0.0
    %4710 = vmatpush2.msra.mxu0 0.0
    %4711 = vmatprep.subr.mxu0 0.0
    %4712 = vmatpush2.msra.mxu0 0.0
    %4713 = vmatprep.subr.mxu0 0.0
    %4714 = vmatpush2.msra.mxu0 0.0
    %4715 = vmatprep.subr.mxu0 0.0
    %4716 = vmatpush2.msra.mxu0 0.0
    %4717 = vmatprep.subr.mxu0 0.0
    %4718 = vmatpush2.msra.mxu0 0.0
    %4719 = vmatprep.subr.mxu0 0.0
    %4720 = vmatpush2.msra.mxu0 0.0
    %4721 = vmatprep.subr.mxu0 0.0
    %4722 = vmatpush2.msra.mxu0 0.0
    %4723 = vmatprep.subr.mxu0 0.0
    %4724 = vmatpush2.msra.mxu0 0.0
    %4725 = vmatprep.mubr.f32.mxu0 0.0
    %4726 = vmatmul.mubr.f32.gmra.mxu0 %v4643
    %v4727 = vpop.f32.mrf.mxu0
    %v4728 = vadd.f32 0.0, %v4727
    %v4729 = vpop.f32.mrf.mxu0
    %4730 = vdwg.mxu0
    %4731 = vst [vmem:[%s16] sm:$0xf] %v4728
    %v4732 = vld [vmem:[#allocation11] sm:$0xf]
    %v4733 = vld [vmem:[%s10] sm:$0xff]
    %v4734 = vld [vmem:[%s10 + $0x8] sm:$0xff]
    %v4735 = vld [vmem:[%s10 + $0x10] sm:$0xff]
    %v4736 = vld [vmem:[%s10 + $0x18] sm:$0xff]
    %v4737 = vld [vmem:[%s10 + $0x20] sm:$0xff]
    %v4738 = vld [vmem:[%s10 + $0x28] sm:$0xff]
    %v4739 = vld [vmem:[%s10 + $0x30] sm:$0xff]
    %v4740 = vld [vmem:[%s10 + $0x38] sm:$0xff]
    %v4741 = vld [vmem:[%s10 + $0x40] sm:$0xff]
    %v4742 = vld [vmem:[%s10 + $0x48] sm:$0xff]
    %v4743 = vld [vmem:[%s10 + $0x50] sm:$0xff]
    %v4744 = vld [vmem:[%s10 + $0x58] sm:$0xff]
    %v4745 = vld [vmem:[%s10 + $0x60] sm:$0xff]
    %v4746 = vld [vmem:[%s10 + $0x68] sm:$0xff]
    %v4747 = vld [vmem:[%s10 + $0x70] sm:$0xff]
    %v4748 = vld [vmem:[%s10 + $0x78] sm:$0xff]
    %v4749 = vld [vmem:[%s10 + $0x80] sm:$0xff]
    %v4750 = vld [vmem:[%s10 + $0x88] sm:$0xff]
    %v4751 = vld [vmem:[%s10 + $0x90] sm:$0xff]
    %v4752 = vld [vmem:[%s10 + $0x98] sm:$0xff]
    %v4753 = vld [vmem:[%s10 + $0xa0] sm:$0xff]
    %v4754 = vld [vmem:[%s10 + $0xa8] sm:$0xff]
    %v4755 = vld [vmem:[%s10 + $0xb0] sm:$0xff]
    %v4756 = vld [vmem:[%s10 + $0xb8] sm:$0xff]
    %v4757 = vld [vmem:[%s10 + $0xc0] sm:$0xff]
    %v4758 = vld [vmem:[%s10 + $0xc8] sm:$0xff]
    %v4759 = vld [vmem:[%s10 + $0xd0] sm:$0xff]
    %v4760 = vld [vmem:[%s10 + $0xd8] sm:$0xff]
    %v4761 = vld [vmem:[%s10 + $0xe0] sm:$0xff]
    %v4762 = vld [vmem:[%s10 + $0xe8] sm:$0xff]
    %v4763 = vld [vmem:[%s10 + $0xf0] sm:$0xff]
    %v4764 = vld [vmem:[%s10 + $0xf8] sm:$0xff]
    %v4765 = vld [vmem:[#allocation11 + $0x1] sm:$0xf]
    %s4766 = scalar_lea.vmem %s10, 256
    %v4767 = vld [vmem:[%s4766] sm:$0xff]
    %v4768 = vld [vmem:[%s4766 + $0x8] sm:$0xff]
    %v4769 = vld [vmem:[%s4766 + $0x10] sm:$0xff]
    %v4770 = vld [vmem:[%s4766 + $0x18] sm:$0xff]
    %v4771 = vld [vmem:[%s4766 + $0x20] sm:$0xff]
    %v4772 = vld [vmem:[%s4766 + $0x28] sm:$0xff]
    %v4773 = vld [vmem:[%s4766 + $0x30] sm:$0xff]
    %v4774 = vld [vmem:[%s4766 + $0x38] sm:$0xff]
    %v4775 = vld [vmem:[%s4766 + $0x40] sm:$0xff]
    %v4776 = vld [vmem:[%s4766 + $0x48] sm:$0xff]
    %v4777 = vld [vmem:[%s4766 + $0x50] sm:$0xff]
    %v4778 = vld [vmem:[%s4766 + $0x58] sm:$0xff]
    %v4779 = vld [vmem:[%s4766 + $0x60] sm:$0xff]
    %v4780 = vld [vmem:[%s4766 + $0x68] sm:$0xff]
    %v4781 = vld [vmem:[%s4766 + $0x70] sm:$0xff]
    %v4782 = vld [vmem:[%s4766 + $0x78] sm:$0xff]
    %v4783 = vld [vmem:[%s4766 + $0x80] sm:$0xff]
    %v4784 = vld [vmem:[%s4766 + $0x88] sm:$0xff]
    %v4785 = vld [vmem:[%s4766 + $0x90] sm:$0xff]
    %v4786 = vld [vmem:[%s4766 + $0x98] sm:$0xff]
    %v4787 = vld [vmem:[%s4766 + $0xa0] sm:$0xff]
    %v4788 = vld [vmem:[%s4766 + $0xa8] sm:$0xff]
    %v4789 = vld [vmem:[%s4766 + $0xb0] sm:$0xff]
    %v4790 = vld [vmem:[%s4766 + $0xb8] sm:$0xff]
    %v4791 = vld [vmem:[%s4766 + $0xc0] sm:$0xff]
    %v4792 = vld [vmem:[%s4766 + $0xc8] sm:$0xff]
    %v4793 = vld [vmem:[%s4766 + $0xd0] sm:$0xff]
    %v4794 = vld [vmem:[%s4766 + $0xd8] sm:$0xff]
    %v4795 = vld [vmem:[%s4766 + $0xe0] sm:$0xff]
    %v4796 = vld [vmem:[%s4766 + $0xe8] sm:$0xff]
    %v4797 = vld [vmem:[%s4766 + $0xf0] sm:$0xff]
    %v4798 = vld [vmem:[%s4766 + $0xf8] sm:$0xff]
    %4799 = vmatprep.subr.mxu0 %v4798
    %4800 = vmatpush1.msra.mxu0 %v4797
    %4801 = vmatprep.subr.mxu0 %v4796
    %4802 = vmatpush1.msra.mxu0 %v4795
    %4803 = vmatprep.subr.mxu0 %v4794
    %4804 = vmatpush1.msra.mxu0 %v4793
    %4805 = vmatprep.subr.mxu0 %v4792
    %4806 = vmatpush1.msra.mxu0 %v4791
    %4807 = vmatprep.subr.mxu0 %v4790
    %4808 = vmatpush1.msra.mxu0 %v4789
    %4809 = vmatprep.subr.mxu0 %v4788
    %4810 = vmatpush1.msra.mxu0 %v4787
    %4811 = vmatprep.subr.mxu0 %v4786
    %4812 = vmatpush1.msra.mxu0 %v4785
    %4813 = vmatprep.subr.mxu0 %v4784
    %4814 = vmatpush1.msra.mxu0 %v4783
    %4815 = vmatprep.subr.mxu0 %v4782
    %4816 = vmatpush1.msra.mxu0 %v4781
    %4817 = vmatprep.subr.mxu0 %v4780
    %4818 = vmatpush1.msra.mxu0 %v4779
    %4819 = vmatprep.subr.mxu0 %v4778
    %4820 = vmatpush1.msra.mxu0 %v4777
    %4821 = vmatprep.subr.mxu0 %v4776
    %4822 = vmatpush1.msra.mxu0 %v4775
    %4823 = vmatprep.subr.mxu0 %v4774
    %4824 = vmatpush1.msra.mxu0 %v4773
    %4825 = vmatprep.subr.mxu0 %v4772
    %4826 = vmatpush1.msra.mxu0 %v4771
    %4827 = vmatprep.subr.mxu0 %v4770
    %4828 = vmatpush1.msra.mxu0 %v4769
    %4829 = vmatprep.subr.mxu0 %v4768
    %4830 = vmatpush1.msra.mxu0 %v4767
    %4831 = vmatprep.subr.mxu0 0.0
    %4832 = vmatpush2.msra.mxu0 0.0
    %4833 = vmatprep.subr.mxu0 0.0
    %4834 = vmatpush2.msra.mxu0 0.0
    %4835 = vmatprep.subr.mxu0 0.0
    %4836 = vmatpush2.msra.mxu0 0.0
    %4837 = vmatprep.subr.mxu0 0.0
    %4838 = vmatpush2.msra.mxu0 0.0
    %4839 = vmatprep.subr.mxu0 0.0
    %4840 = vmatpush2.msra.mxu0 0.0
    %4841 = vmatprep.subr.mxu0 0.0
    %4842 = vmatpush2.msra.mxu0 0.0
    %4843 = vmatprep.subr.mxu0 0.0
    %4844 = vmatpush2.msra.mxu0 0.0
    %4845 = vmatprep.subr.mxu0 0.0
    %4846 = vmatpush2.msra.mxu0 0.0
    %4847 = vmatprep.subr.mxu0 0.0
    %4848 = vmatpush2.msra.mxu0 0.0
    %4849 = vmatprep.subr.mxu0 0.0
    %4850 = vmatpush2.msra.mxu0 0.0
    %4851 = vmatprep.subr.mxu0 0.0
    %4852 = vmatpush2.msra.mxu0 0.0
    %4853 = vmatprep.subr.mxu0 0.0
    %4854 = vmatpush2.msra.mxu0 0.0
    %4855 = vmatprep.subr.mxu0 0.0
    %4856 = vmatpush2.msra.mxu0 0.0
    %4857 = vmatprep.subr.mxu0 0.0
    %4858 = vmatpush2.msra.mxu0 0.0
    %4859 = vmatprep.subr.mxu0 0.0
    %4860 = vmatpush2.msra.mxu0 0.0
    %4861 = vmatprep.subr.mxu0 0.0
    %4862 = vmatpush2.msra.mxu0 0.0
    %4863 = vmatprep.mubr.f32.mxu0 0.0
    %4864 = vmatmul.mubr.f32.gmra.mxu0 %v4765
    %v4865 = vpop.f32.mrf.mxu0
    %v4866 = vadd.f32 0.0, %v4865
    %v4867 = vpop.f32.mrf.mxu0
    %v4868 = vadd.f32 0.0, %v4867
    %4869 = vdwg.mxu0
    %4870 = vmatprep.subr.mxu0 %v4764
    %4871 = vmatpush1.msra.mxu0 %v4763
    %4872 = vmatprep.subr.mxu0 %v4762
    %4873 = vmatpush1.msra.mxu0 %v4761
    %4874 = vmatprep.subr.mxu0 %v4760
    %4875 = vmatpush1.msra.mxu0 %v4759
    %4876 = vmatprep.subr.mxu0 %v4758
    %4877 = vmatpush1.msra.mxu0 %v4757
    %4878 = vmatprep.subr.mxu0 %v4756
    %4879 = vmatpush1.msra.mxu0 %v4755
    %4880 = vmatprep.subr.mxu0 %v4754
    %4881 = vmatpush1.msra.mxu0 %v4753
    %4882 = vmatprep.subr.mxu0 %v4752
    %4883 = vmatpush1.msra.mxu0 %v4751
    %4884 = vmatprep.subr.mxu0 %v4750
    %4885 = vmatpush1.msra.mxu0 %v4749
    %4886 = vmatprep.subr.mxu0 %v4748
    %4887 = vmatpush1.msra.mxu0 %v4747
    %4888 = vmatprep.subr.mxu0 %v4746
    %4889 = vmatpush1.msra.mxu0 %v4745
    %4890 = vmatprep.subr.mxu0 %v4744
    %4891 = vmatpush1.msra.mxu0 %v4743
    %4892 = vmatprep.subr.mxu0 %v4742
    %4893 = vmatpush1.msra.mxu0 %v4741
    %4894 = vmatprep.subr.mxu0 %v4740
    %4895 = vmatpush1.msra.mxu0 %v4739
    %4896 = vmatprep.subr.mxu0 %v4738
    %4897 = vmatpush1.msra.mxu0 %v4737
    %4898 = vmatprep.subr.mxu0 %v4736
    %4899 = vmatpush1.msra.mxu0 %v4735
    %4900 = vmatprep.subr.mxu0 %v4734
    %4901 = vmatpush1.msra.mxu0 %v4733
    %4902 = vmatprep.subr.mxu0 0.0
    %4903 = vmatpush2.msra.mxu0 0.0
    %4904 = vmatprep.subr.mxu0 0.0
    %4905 = vmatpush2.msra.mxu0 0.0
    %4906 = vmatprep.subr.mxu0 0.0
    %4907 = vmatpush2.msra.mxu0 0.0
    %4908 = vmatprep.subr.mxu0 0.0
    %4909 = vmatpush2.msra.mxu0 0.0
    %4910 = vmatprep.subr.mxu0 0.0
    %4911 = vmatpush2.msra.mxu0 0.0
    %4912 = vmatprep.subr.mxu0 0.0
    %4913 = vmatpush2.msra.mxu0 0.0
    %4914 = vmatprep.subr.mxu0 0.0
    %4915 = vmatpush2.msra.mxu0 0.0
    %4916 = vmatprep.subr.mxu0 0.0
    %4917 = vmatpush2.msra.mxu0 0.0
    %4918 = vmatprep.subr.mxu0 0.0
    %4919 = vmatpush2.msra.mxu0 0.0
    %4920 = vmatprep.subr.mxu0 0.0
    %4921 = vmatpush2.msra.mxu0 0.0
    %4922 = vmatprep.subr.mxu0 0.0
    %4923 = vmatpush2.msra.mxu0 0.0
    %4924 = vmatprep.subr.mxu0 0.0
    %4925 = vmatpush2.msra.mxu0 0.0
    %4926 = vmatprep.subr.mxu0 0.0
    %4927 = vmatpush2.msra.mxu0 0.0
    %4928 = vmatprep.subr.mxu0 0.0
    %4929 = vmatpush2.msra.mxu0 0.0
    %4930 = vmatprep.subr.mxu0 0.0
    %4931 = vmatpush2.msra.mxu0 0.0
    %4932 = vmatprep.subr.mxu0 0.0
    %4933 = vmatpush2.msra.mxu0 0.0
    %4934 = vmatprep.mubr.f32.mxu0 0.0
    %4935 = vmatmul.mubr.f32.gmra.mxu0 %v4732
    %v4936 = vpop.f32.mrf.mxu0
    %v4937 = vadd.f32 %v4866, %v4936
    %v4938 = vpop.f32.mrf.mxu0
    %v4939 = vadd.f32 %v4868, %v4938
    %4940 = vdwg.mxu0
    %v4941 = vsel %vm3594, %v4937, 0.0
    %v4942 = vrot.slane %v4941, 4
    %v4943 = vadd.f32 %v4941, %v4942
    %v4944 = vrot.slane %v4943, 2
    %v4945 = vadd.f32 %v4943, %v4944
    %v4946 = vrot.slane %v4945, 1
    %v4947 = vadd.f32 %v4945, %v4946
    %v4948 = vsel %vm3594, %v4939, 0.0
    %v4949 = vrot.slane %v4948, 4
    %v4950 = vadd.f32 %v4948, %v4949
    %v4951 = vrot.slane %v4950, 2
    %v4952 = vadd.f32 %v4950, %v4951
    %v4953 = vrot.slane %v4952, 1
    %v4954 = vadd.f32 %v4952, %v4953
    %v4955 = vmul.f32 %v4937, %v4937
    %v4956 = vmul.f32 %v4939, %v4939
    %v4957 = vsel %vm3594, %v4955, 0.0
    %v4958 = vrot.slane %v4957, 4
    %v4959 = vadd.f32 %v4957, %v4958
    %v4960 = vrot.slane %v4959, 2
    %v4961 = vadd.f32 %v4959, %v4960
    %v4962 = vrot.slane %v4961, 1
    %v4963 = vadd.f32 %v4961, %v4962
    %v4964 = vsel %vm3594, %v4956, 0.0
    %v4965 = vrot.slane %v4964, 4
    %v4966 = vadd.f32 %v4964, %v4965
    %v4967 = vrot.slane %v4966, 2
    %v4968 = vadd.f32 %v4966, %v4967
    %v4969 = vrot.slane %v4968, 1
    %v4970 = vadd.f32 %v4968, %v4969
    %4971 = vmatprep.subr.mxu0 %v541
    %4972 = vmatpush1.msra.mxu0 %v394
    %4973 = vmatprep.subr.mxu0 %v540
    %4974 = vmatpush1.msra.mxu0 %v393
    %4975 = vmatprep.subr.mxu0 %v539
    %4976 = vmatpush1.msra.mxu0 %v392
    %4977 = vmatprep.subr.mxu0 %v538
    %4978 = vmatpush1.msra.mxu0 %v391
    %4979 = vmatprep.subr.mxu0 %v537
    %4980 = vmatpush1.msra.mxu0 %v390
    %4981 = vmatprep.subr.mxu0 %v536
    %4982 = vmatpush1.msra.mxu0 %v389
    %4983 = vmatprep.subr.mxu0 %v535
    %4984 = vmatpush1.msra.mxu0 %v388
    %4985 = vmatprep.subr.mxu0 %v534
    %4986 = vmatpush1.msra.mxu0 %v387
    %4987 = vmatprep.subr.mxu0 %v533
    %4988 = vmatpush1.msra.mxu0 %v386
    %4989 = vmatprep.subr.mxu0 %v532
    %4990 = vmatpush1.msra.mxu0 %v385
    %4991 = vmatprep.subr.mxu0 %v531
    %4992 = vmatpush1.msra.mxu0 %v384
    %4993 = vmatprep.subr.mxu0 %v530
    %4994 = vmatpush1.msra.mxu0 %v383
    %4995 = vmatprep.subr.mxu0 %v529
    %4996 = vmatpush1.msra.mxu0 %v382
    %4997 = vmatprep.subr.mxu0 %v528
    %4998 = vmatpush1.msra.mxu0 %v381
    %4999 = vmatprep.subr.mxu0 %v527
    %5000 = vmatpush1.msra.mxu0 %v380
    %5001 = vmatprep.subr.mxu0 %v526
    %5002 = vmatpush1.msra.mxu0 %v379
    %5003 = vmatprep.subr.mxu0 %v573
    %5004 = vmatpush2.msra.mxu0 %v572
    %5005 = vmatprep.subr.mxu0 %v571
    %5006 = vmatpush2.msra.mxu0 %v570
    %5007 = vmatprep.subr.mxu0 %v569
    %5008 = vmatpush2.msra.mxu0 %v568
    %5009 = vmatprep.subr.mxu0 %v567
    %5010 = vmatpush2.msra.mxu0 %v566
    %5011 = vmatprep.subr.mxu0 %v565
    %5012 = vmatpush2.msra.mxu0 %v564
    %5013 = vmatprep.subr.mxu0 %v563
    %5014 = vmatpush2.msra.mxu0 %v562
    %5015 = vmatprep.subr.mxu0 %v561
    %5016 = vmatpush2.msra.mxu0 %v560
    %5017 = vmatprep.subr.mxu0 %v559
    %5018 = vmatpush2.msra.mxu0 %v558
    %5019 = vmatprep.subr.mxu0 %v557
    %5020 = vmatpush2.msra.mxu0 %v556
    %5021 = vmatprep.subr.mxu0 %v555
    %5022 = vmatpush2.msra.mxu0 %v554
    %5023 = vmatprep.subr.mxu0 %v553
    %5024 = vmatpush2.msra.mxu0 %v552
    %5025 = vmatprep.subr.mxu0 %v551
    %5026 = vmatpush2.msra.mxu0 %v550
    %5027 = vmatprep.subr.mxu0 %v549
    %5028 = vmatpush2.msra.mxu0 %v548
    %5029 = vmatprep.subr.mxu0 %v547
    %5030 = vmatpush2.msra.mxu0 %v546
    %5031 = vmatprep.subr.mxu0 %v545
    %5032 = vmatpush2.msra.mxu0 %v544
    %5033 = vmatprep.subr.mxu0 %v543
    %5034 = vmatpush2.msra.mxu0 %v542
    %5035 = vmatprep.mubr.f32.mxu0 %v4954
    %5036 = vmatmul.mubr.f32.gmra.mxu0 %v4947
    %v5037 = vpop.f32.mrf.mxu0
    %v5038 = vadd.f32 0.0, %v5037
    %v5039 = vpop.f32.mrf.mxu0
    %v5040 = vadd.f32 0.0, %v5039
    %5041 = vdwg.mxu0
    %v5042 = vmul.f32 %v5038, 0.0078125
    %v5043 = vmul.f32 %v5040, 0.0078125
    %5044 = vmatprep.subr.mxu0 %v541
    %5045 = vmatpush1.msra.mxu0 %v394
    %5046 = vmatprep.subr.mxu0 %v540
    %5047 = vmatpush1.msra.mxu0 %v393
    %5048 = vmatprep.subr.mxu0 %v539
    %5049 = vmatpush1.msra.mxu0 %v392
    %5050 = vmatprep.subr.mxu0 %v538
    %5051 = vmatpush1.msra.mxu0 %v391
    %5052 = vmatprep.subr.mxu0 %v537
    %5053 = vmatpush1.msra.mxu0 %v390
    %5054 = vmatprep.subr.mxu0 %v536
    %5055 = vmatpush1.msra.mxu0 %v389
    %5056 = vmatprep.subr.mxu0 %v535
    %5057 = vmatpush1.msra.mxu0 %v388
    %5058 = vmatprep.subr.mxu0 %v534
    %5059 = vmatpush1.msra.mxu0 %v387
    %5060 = vmatprep.subr.mxu0 %v533
    %5061 = vmatpush1.msra.mxu0 %v386
    %5062 = vmatprep.subr.mxu0 %v532
    %5063 = vmatpush1.msra.mxu0 %v385
    %5064 = vmatprep.subr.mxu0 %v531
    %5065 = vmatpush1.msra.mxu0 %v384
    %5066 = vmatprep.subr.mxu0 %v530
    %5067 = vmatpush1.msra.mxu0 %v383
    %5068 = vmatprep.subr.mxu0 %v529
    %5069 = vmatpush1.msra.mxu0 %v382
    %5070 = vmatprep.subr.mxu0 %v528
    %5071 = vmatpush1.msra.mxu0 %v381
    %5072 = vmatprep.subr.mxu0 %v527
    %5073 = vmatpush1.msra.mxu0 %v380
    %5074 = vmatprep.subr.mxu0 %v526
    %5075 = vmatpush1.msra.mxu0 %v379
    %5076 = vmatprep.subr.mxu0 %v573
    %5077 = vmatpush2.msra.mxu0 %v572
    %5078 = vmatprep.subr.mxu0 %v571
    %5079 = vmatpush2.msra.mxu0 %v570
    %5080 = vmatprep.subr.mxu0 %v569
    %5081 = vmatpush2.msra.mxu0 %v568
    %5082 = vmatprep.subr.mxu0 %v567
    %5083 = vmatpush2.msra.mxu0 %v566
    %5084 = vmatprep.subr.mxu0 %v565
    %5085 = vmatpush2.msra.mxu0 %v564
    %5086 = vmatprep.subr.mxu0 %v563
    %5087 = vmatpush2.msra.mxu0 %v562
    %5088 = vmatprep.subr.mxu0 %v561
    %5089 = vmatpush2.msra.mxu0 %v560
    %5090 = vmatprep.subr.mxu0 %v559
    %5091 = vmatpush2.msra.mxu0 %v558
    %5092 = vmatprep.subr.mxu0 %v557
    %5093 = vmatpush2.msra.mxu0 %v556
    %5094 = vmatprep.subr.mxu0 %v555
    %5095 = vmatpush2.msra.mxu0 %v554
    %5096 = vmatprep.subr.mxu0 %v553
    %5097 = vmatpush2.msra.mxu0 %v552
    %5098 = vmatprep.subr.mxu0 %v551
    %5099 = vmatpush2.msra.mxu0 %v550
    %5100 = vmatprep.subr.mxu0 %v549
    %5101 = vmatpush2.msra.mxu0 %v548
    %5102 = vmatprep.subr.mxu0 %v547
    %5103 = vmatpush2.msra.mxu0 %v546
    %5104 = vmatprep.subr.mxu0 %v545
    %5105 = vmatpush2.msra.mxu0 %v544
    %5106 = vmatprep.subr.mxu0 %v543
    %5107 = vmatpush2.msra.mxu0 %v542
    %5108 = vmatprep.mubr.f32.mxu0 %v4970
    %5109 = vmatmul.mubr.f32.gmra.mxu0 %v4963
    %v5110 = vpop.f32.mrf.mxu0
    %v5111 = vadd.f32 0.0, %v5110
    %v5112 = vpop.f32.mrf.mxu0
    %v5113 = vadd.f32 0.0, %v5112
    %5114 = vdwg.mxu0
    %v5115 = vmul.f32 %v5111, 0.0078125
    %v5116 = vmul.f32 %v5113, 0.0078125
    %v5117 = vmul.f32 %v5042, %v5042
    %v5118 = vmul.f32 %v5043, %v5043
    %v5119 = vsub.f32 %v5115, %v5117
    %v5120 = vsub.f32 %v5116, %v5118
    %v5121 = vmax.f32 %v5119, 0.0
    %v5122 = vmax.f32 %v5120, 0.0
    %v5123 = vadd.f32 %v5121, 1e-05
    %v5124 = vadd.f32 %v5122, 1e-05
    %v5125 = vrsqrt.pop %v5123
    %v5126 = vrsqrt.pop %v5124
    %v5127 = vlaneseq
    %v5128 = vshrl.u32 %v5127, 7
    %v5129 = vsub.s32 0, %v5128
    %v5130 = vrot.slane %v5042, %v5129
    %v5131 = vlaneseq
    %v5132 = vshrl.u32 %v5131, 7
    %v5133 = vsub.s32 0, %v5132
    %v5134 = vrot.slane %v5043, %v5133
    %v5135 = vsub.f32 %v4937, %v5130
    %v5136 = vsub.f32 %v4939, %v5134
    %v5137 = vlaneseq
    %v5138 = vshrl.u32 %v5137, 7
    %v5139 = vsub.s32 0, %v5138
    %v5140 = vrot.slane %v5125, %v5139
    %v5141 = vlaneseq
    %v5142 = vshrl.u32 %v5141, 7
    %v5143 = vsub.s32 0, %v5142
    %v5144 = vrot.slane %v5126, %v5143
    %v5145 = vmul.f32 %v5135, %v5140
    %v5146 = vmul.f32 %v5136, %v5144
    %v5147 = vmax.f32 %v5145, 0.0
    %v5148 = vmax.f32 %v5146, 0.0
    %5149 = vst [vmem:[#allocation12 + $0x1] sm:$0x1] %v5147
    %5150 = vst [vmem:[#allocation12 + $0x2] sm:$0x1] %v5148
    %v5152 = vrot.slane %v5147, 1
    %5154 = vst [vmem:[#allocation12 + $0x3] sm:$0x1] %v5152
    %v5156 = vrot.slane %v5148, 1
    %5158 = vst [vmem:[#allocation12 + $0x4] sm:$0x1] %v5156
    %v5159 = vrot.slane %v5147, 2
    %5161 = vst [vmem:[#allocation12 + $0x5] sm:$0x1] %v5159
    %v5162 = vrot.slane %v5148, 2
    %5164 = vst [vmem:[#allocation12 + $0x6] sm:$0x1] %v5162
    %v5165 = vrot.slane %v5147, 3
    %5167 = vst [vmem:[#allocation12 + $0x7] sm:$0x1] %v5165
    %v5168 = vrot.slane %v5148, 3
    %5170 = vst [vmem:[#allocation12 + $0x10] sm:$0x1] %v5168
    %v5171 = vld [vmem:[#allocation7 + $0x1] sm:$0xff]
    %v5173 = vrot.slane %v5171, 7
    %5175 = vst [vmem:[#allocation12 + $0x8] sm:$0xfe] %v5173
    %5176 = vst [vmem:[#allocation12 + $0x18] sm:$0x1] %v5173
    %v5177 = vld [vmem:[#allocation12] sm:$0xff]
    %v5178 = vld [vmem:[#allocation12 + $0x8] sm:$0xff]
    %v5179 = vld [vmem:[#allocation29] sm:$0xff]
    %v5180 = vld [vmem:[#allocation29 + $0x8] sm:$0xff]
    %v5181 = vld [vmem:[#allocation29 + $0x10] sm:$0xff]
    %v5182 = vld [vmem:[#allocation29 + $0x18] sm:$0xff]
    %v5183 = vld [vmem:[#allocation29 + $0x20] sm:$0xff]
    %v5184 = vld [vmem:[#allocation29 + $0x28] sm:$0xff]
    %v5185 = vld [vmem:[#allocation29 + $0x30] sm:$0xff]
    %v5186 = vld [vmem:[#allocation29 + $0x38] sm:$0xff]
    %v5187 = vld [vmem:[#allocation29 + $0x40] sm:$0xff]
    %v5188 = vld [vmem:[#allocation29 + $0x48] sm:$0xff]
    %v5189 = vld [vmem:[#allocation29 + $0x50] sm:$0xff]
    %v5190 = vld [vmem:[#allocation29 + $0x58] sm:$0xff]
    %v5191 = vld [vmem:[#allocation29 + $0x60] sm:$0xff]
    %v5192 = vld [vmem:[#allocation29 + $0x68] sm:$0xff]
    %v5193 = vld [vmem:[#allocation29 + $0x70] sm:$0xff]
    %v5194 = vld [vmem:[#allocation29 + $0x78] sm:$0xff]
    %v5195 = vld [vmem:[#allocation29 + $0x80] sm:$0xff]
    %v5196 = vld [vmem:[#allocation29 + $0x88] sm:$0xff]
    %v5197 = vld [vmem:[#allocation29 + $0x90] sm:$0xff]
    %v5198 = vld [vmem:[#allocation29 + $0x98] sm:$0xff]
    %v5199 = vld [vmem:[#allocation29 + $0xa0] sm:$0xff]
    %v5200 = vld [vmem:[#allocation29 + $0xa8] sm:$0xff]
    %v5201 = vld [vmem:[#allocation29 + $0xb0] sm:$0xff]
    %v5202 = vld [vmem:[#allocation29 + $0xb8] sm:$0xff]
    %v5203 = vld [vmem:[#allocation29 + $0xc0] sm:$0xff]
    %v5204 = vld [vmem:[#allocation29 + $0xc8] sm:$0xff]
    %v5205 = vld [vmem:[#allocation29 + $0xd0] sm:$0xff]
    %v5206 = vld [vmem:[#allocation29 + $0xd8] sm:$0xff]
    %v5207 = vld [vmem:[#allocation29 + $0xe0] sm:$0xff]
    %v5208 = vld [vmem:[#allocation29 + $0xe8] sm:$0xff]
    %v5209 = vld [vmem:[#allocation29 + $0xf0] sm:$0xff]
    %v5210 = vld [vmem:[#allocation29 + $0xf8] sm:$0xff]
    %v5211 = vld [vmem:[#allocation12] sm:$0xfe]
    %v5212 = vld [vmem:[#allocation12 + $0x8] sm:$0xfe]
    %v5213 = vld [vmem:[#allocation12 + $0x10] sm:$0x1]
    %v5214 = vld [vmem:[#allocation12 + $0x18] sm:$0x1]
    %s5215 = scalar_lea.vmem [#allocation29], 256
    %v5216 = vld [vmem:[%s5215] sm:$0xff]
    %v5217 = vld [vmem:[%s5215 + $0x8] sm:$0xff]
    %v5218 = vld [vmem:[%s5215 + $0x10] sm:$0xff]
    %v5219 = vld [vmem:[%s5215 + $0x18] sm:$0xff]
    %v5220 = vld [vmem:[%s5215 + $0x20] sm:$0xff]
    %v5221 = vld [vmem:[%s5215 + $0x28] sm:$0xff]
    %v5222 = vld [vmem:[%s5215 + $0x30] sm:$0xff]
    %v5223 = vld [vmem:[%s5215 + $0x38] sm:$0xff]
    %v5224 = vld [vmem:[%s5215 + $0x40] sm:$0xff]
    %v5225 = vld [vmem:[%s5215 + $0x48] sm:$0xff]
    %v5226 = vld [vmem:[%s5215 + $0x50] sm:$0xff]
    %v5227 = vld [vmem:[%s5215 + $0x58] sm:$0xff]
    %v5228 = vld [vmem:[%s5215 + $0x60] sm:$0xff]
    %v5229 = vld [vmem:[%s5215 + $0x68] sm:$0xff]
    %v5230 = vld [vmem:[%s5215 + $0x70] sm:$0xff]
    %v5231 = vld [vmem:[%s5215 + $0x78] sm:$0xff]
    %v5232 = vld [vmem:[%s5215 + $0x80] sm:$0xff]
    %v5233 = vld [vmem:[%s5215 + $0x88] sm:$0xff]
    %v5234 = vld [vmem:[%s5215 + $0x90] sm:$0xff]
    %v5235 = vld [vmem:[%s5215 + $0x98] sm:$0xff]
    %v5236 = vld [vmem:[%s5215 + $0xa0] sm:$0xff]
    %v5237 = vld [vmem:[%s5215 + $0xa8] sm:$0xff]
    %v5238 = vld [vmem:[%s5215 + $0xb0] sm:$0xff]
    %v5239 = vld [vmem:[%s5215 + $0xb8] sm:$0xff]
    %v5240 = vld [vmem:[%s5215 + $0xc0] sm:$0xff]
    %v5241 = vld [vmem:[%s5215 + $0xc8] sm:$0xff]
    %v5242 = vld [vmem:[%s5215 + $0xd0] sm:$0xff]
    %v5243 = vld [vmem:[%s5215 + $0xd8] sm:$0xff]
    %v5244 = vld [vmem:[%s5215 + $0xe0] sm:$0xff]
    %v5245 = vld [vmem:[%s5215 + $0xe8] sm:$0xff]
    %v5246 = vld [vmem:[%s5215 + $0xf0] sm:$0xff]
    %v5247 = vld [vmem:[%s5215 + $0xf8] sm:$0xff]
    %vm5252 = vcmask 1046528
    %v5253 = vrot.slane %v5211, 1
    %v5254 = vrot.slane %v5213, 1
    %v5255 = vsel %vm5252, %v5253, %v5254
    %v5256 = vrot.slane %v5212, 1
    %v5257 = vrot.slane %v5214, 1
    %v5258 = vsel %vm5252, %v5256, %v5257
    %5261 = vmatprep.subr.mxu0 0.0
    %5262 = vmatpush1.msra.mxu0 %v5231
    %5263 = vmatprep.subr.mxu0 0.0
    %5264 = vmatpush1.msra.mxu0 %v5230
    %5265 = vmatprep.subr.mxu0 0.0
    %5266 = vmatpush1.msra.mxu0 %v5229
    %5267 = vmatprep.subr.mxu0 0.0
    %5268 = vmatpush1.msra.mxu0 %v5228
    %5269 = vmatprep.subr.mxu0 0.0
    %5270 = vmatpush1.msra.mxu0 %v5227
    %5271 = vmatprep.subr.mxu0 0.0
    %5272 = vmatpush1.msra.mxu0 %v5226
    %5273 = vmatprep.subr.mxu0 0.0
    %5274 = vmatpush1.msra.mxu0 %v5225
    %5275 = vmatprep.subr.mxu0 0.0
    %5276 = vmatpush1.msra.mxu0 %v5224
    %5277 = vmatprep.subr.mxu0 0.0
    %5278 = vmatpush1.msra.mxu0 %v5223
    %5279 = vmatprep.subr.mxu0 0.0
    %5280 = vmatpush1.msra.mxu0 %v5222
    %5281 = vmatprep.subr.mxu0 0.0
    %5282 = vmatpush1.msra.mxu0 %v5221
    %5283 = vmatprep.subr.mxu0 0.0
    %5284 = vmatpush1.msra.mxu0 %v5220
    %5285 = vmatprep.subr.mxu0 0.0
    %5286 = vmatpush1.msra.mxu0 %v5219
    %5287 = vmatprep.subr.mxu0 0.0
    %5288 = vmatpush1.msra.mxu0 %v5218
    %5289 = vmatprep.subr.mxu0 0.0
    %5290 = vmatpush1.msra.mxu0 %v5217
    %5291 = vmatprep.subr.mxu0 0.0
    %5292 = vmatpush1.msra.mxu0 %v5216
    %5293 = vmatprep.subr.mxu0 0.0
    %5294 = vmatpush2.msra.mxu0 %v5247
    %5295 = vmatprep.subr.mxu0 0.0
    %5296 = vmatpush2.msra.mxu0 %v5246
    %5297 = vmatprep.subr.mxu0 0.0
    %5298 = vmatpush2.msra.mxu0 %v5245
    %5299 = vmatprep.subr.mxu0 0.0
    %5300 = vmatpush2.msra.mxu0 %v5244
    %5301 = vmatprep.subr.mxu0 0.0
    %5302 = vmatpush2.msra.mxu0 %v5243
    %5303 = vmatprep.subr.mxu0 0.0
    %5304 = vmatpush2.msra.mxu0 %v5242
    %5305 = vmatprep.subr.mxu0 0.0
    %5306 = vmatpush2.msra.mxu0 %v5241
    %5307 = vmatprep.subr.mxu0 0.0
    %5308 = vmatpush2.msra.mxu0 %v5240
    %5309 = vmatprep.subr.mxu0 0.0
    %5310 = vmatpush2.msra.mxu0 %v5239
    %5311 = vmatprep.subr.mxu0 0.0
    %5312 = vmatpush2.msra.mxu0 %v5238
    %5313 = vmatprep.subr.mxu0 0.0
    %5314 = vmatpush2.msra.mxu0 %v5237
    %5315 = vmatprep.subr.mxu0 0.0
    %5316 = vmatpush2.msra.mxu0 %v5236
    %5317 = vmatprep.subr.mxu0 0.0
    %5318 = vmatpush2.msra.mxu0 %v5235
    %5319 = vmatprep.subr.mxu0 0.0
    %5320 = vmatpush2.msra.mxu0 %v5234
    %5321 = vmatprep.subr.mxu0 0.0
    %5322 = vmatpush2.msra.mxu0 %v5233
    %5323 = vmatprep.subr.mxu0 0.0
    %5324 = vmatpush2.msra.mxu0 %v5232
    %5325 = vmatprep.mubr.f32.mxu0 %v5258
    %5326 = vmatmul.mubr.f32.gmra.mxu0 %v5255
    %v5327 = vpop.f32.mrf.mxu0
    %v5328 = vadd.f32 0.0, %v5327
    %v5329 = vpop.f32.mrf.mxu0
    %5330 = vdwg.mxu0
    %5331 = vmatprep.subr.mxu0 0.0
    %5332 = vmatpush1.msra.mxu0 %v5194
    %5333 = vmatprep.subr.mxu0 0.0
    %5334 = vmatpush1.msra.mxu0 %v5193
    %5335 = vmatprep.subr.mxu0 0.0
    %5336 = vmatpush1.msra.mxu0 %v5192
    %5337 = vmatprep.subr.mxu0 0.0
    %5338 = vmatpush1.msra.mxu0 %v5191
    %5339 = vmatprep.subr.mxu0 0.0
    %5340 = vmatpush1.msra.mxu0 %v5190
    %5341 = vmatprep.subr.mxu0 0.0
    %5342 = vmatpush1.msra.mxu0 %v5189
    %5343 = vmatprep.subr.mxu0 0.0
    %5344 = vmatpush1.msra.mxu0 %v5188
    %5345 = vmatprep.subr.mxu0 0.0
    %5346 = vmatpush1.msra.mxu0 %v5187
    %5347 = vmatprep.subr.mxu0 0.0
    %5348 = vmatpush1.msra.mxu0 %v5186
    %5349 = vmatprep.subr.mxu0 0.0
    %5350 = vmatpush1.msra.mxu0 %v5185
    %5351 = vmatprep.subr.mxu0 0.0
    %5352 = vmatpush1.msra.mxu0 %v5184
    %5353 = vmatprep.subr.mxu0 0.0
    %5354 = vmatpush1.msra.mxu0 %v5183
    %5355 = vmatprep.subr.mxu0 0.0
    %5356 = vmatpush1.msra.mxu0 %v5182
    %5357 = vmatprep.subr.mxu0 0.0
    %5358 = vmatpush1.msra.mxu0 %v5181
    %5359 = vmatprep.subr.mxu0 0.0
    %5360 = vmatpush1.msra.mxu0 %v5180
    %5361 = vmatprep.subr.mxu0 0.0
    %5362 = vmatpush1.msra.mxu0 %v5179
    %5363 = vmatprep.subr.mxu0 0.0
    %5364 = vmatpush2.msra.mxu0 %v5210
    %5365 = vmatprep.subr.mxu0 0.0
    %5366 = vmatpush2.msra.mxu0 %v5209
    %5367 = vmatprep.subr.mxu0 0.0
    %5368 = vmatpush2.msra.mxu0 %v5208
    %5369 = vmatprep.subr.mxu0 0.0
    %5370 = vmatpush2.msra.mxu0 %v5207
    %5371 = vmatprep.subr.mxu0 0.0
    %5372 = vmatpush2.msra.mxu0 %v5206
    %5373 = vmatprep.subr.mxu0 0.0
    %5374 = vmatpush2.msra.mxu0 %v5205
    %5375 = vmatprep.subr.mxu0 0.0
    %5376 = vmatpush2.msra.mxu0 %v5204
    %5377 = vmatprep.subr.mxu0 0.0
    %5378 = vmatpush2.msra.mxu0 %v5203
    %5379 = vmatprep.subr.mxu0 0.0
    %5380 = vmatpush2.msra.mxu0 %v5202
    %5381 = vmatprep.subr.mxu0 0.0
    %5382 = vmatpush2.msra.mxu0 %v5201
    %5383 = vmatprep.subr.mxu0 0.0
    %5384 = vmatpush2.msra.mxu0 %v5200
    %5385 = vmatprep.subr.mxu0 0.0
    %5386 = vmatpush2.msra.mxu0 %v5199
    %5387 = vmatprep.subr.mxu0 0.0
    %5388 = vmatpush2.msra.mxu0 %v5198
    %5389 = vmatprep.subr.mxu0 0.0
    %5390 = vmatpush2.msra.mxu0 %v5197
    %5391 = vmatprep.subr.mxu0 0.0
    %5392 = vmatpush2.msra.mxu0 %v5196
    %5393 = vmatprep.subr.mxu0 0.0
    %5394 = vmatpush2.msra.mxu0 %v5195
    %5395 = vmatprep.mubr.f32.mxu0 %v5178
    %5396 = vmatmul.mubr.f32.gmra.mxu0 %v5177
    %v5397 = vpop.f32.mrf.mxu0
    %v5398 = vadd.f32 %v5328, %v5397
    %v5399 = vpop.f32.mrf.mxu0
    %5400 = vdwg.mxu0
    %v5401 = vld [vmem:[#allocation12] sm:$0xfc]
    %v5402 = vld [vmem:[#allocation12 + $0x8] sm:$0xfc]
    %v5403 = vld [vmem:[#allocation12 + $0x10] sm:$0x3]
    %v5404 = vld [vmem:[#allocation12 + $0x18] sm:$0x3]
    %s5405 = scalar_lea.vmem [#allocation29], 512
    %v5406 = vld [vmem:[%s5405] sm:$0xff]
    %v5407 = vld [vmem:[%s5405 + $0x8] sm:$0xff]
    %v5408 = vld [vmem:[%s5405 + $0x10] sm:$0xff]
    %v5409 = vld [vmem:[%s5405 + $0x18] sm:$0xff]
    %v5410 = vld [vmem:[%s5405 + $0x20] sm:$0xff]
    %v5411 = vld [vmem:[%s5405 + $0x28] sm:$0xff]
    %v5412 = vld [vmem:[%s5405 + $0x30] sm:$0xff]
    %v5413 = vld [vmem:[%s5405 + $0x38] sm:$0xff]
    %v5414 = vld [vmem:[%s5405 + $0x40] sm:$0xff]
    %v5415 = vld [vmem:[%s5405 + $0x48] sm:$0xff]
    %v5416 = vld [vmem:[%s5405 + $0x50] sm:$0xff]
    %v5417 = vld [vmem:[%s5405 + $0x58] sm:$0xff]
    %v5418 = vld [vmem:[%s5405 + $0x60] sm:$0xff]
    %v5419 = vld [vmem:[%s5405 + $0x68] sm:$0xff]
    %v5420 = vld [vmem:[%s5405 + $0x70] sm:$0xff]
    %v5421 = vld [vmem:[%s5405 + $0x78] sm:$0xff]
    %v5422 = vld [vmem:[%s5405 + $0x80] sm:$0xff]
    %v5423 = vld [vmem:[%s5405 + $0x88] sm:$0xff]
    %v5424 = vld [vmem:[%s5405 + $0x90] sm:$0xff]
    %v5425 = vld [vmem:[%s5405 + $0x98] sm:$0xff]
    %v5426 = vld [vmem:[%s5405 + $0xa0] sm:$0xff]
    %v5427 = vld [vmem:[%s5405 + $0xa8] sm:$0xff]
    %v5428 = vld [vmem:[%s5405 + $0xb0] sm:$0xff]
    %v5429 = vld [vmem:[%s5405 + $0xb8] sm:$0xff]
    %v5430 = vld [vmem:[%s5405 + $0xc0] sm:$0xff]
    %v5431 = vld [vmem:[%s5405 + $0xc8] sm:$0xff]
    %v5432 = vld [vmem:[%s5405 + $0xd0] sm:$0xff]
    %v5433 = vld [vmem:[%s5405 + $0xd8] sm:$0xff]
    %v5434 = vld [vmem:[%s5405 + $0xe0] sm:$0xff]
    %v5435 = vld [vmem:[%s5405 + $0xe8] sm:$0xff]
    %v5436 = vld [vmem:[%s5405 + $0xf0] sm:$0xff]
    %v5437 = vld [vmem:[%s5405 + $0xf8] sm:$0xff]
    %vm5442 = vcmask 1045504
    %v5443 = vrot.slane %v5401, 2
    %v5444 = vrot.slane %v5403, 2
    %v5445 = vsel %vm5442, %v5443, %v5444
    %v5446 = vrot.slane %v5402, 2
    %v5447 = vrot.slane %v5404, 2
    %v5448 = vsel %vm5442, %v5446, %v5447
    %5451 = vmatprep.subr.mxu0 0.0
    %5452 = vmatpush1.msra.mxu0 %v5421
    %5453 = vmatprep.subr.mxu0 0.0
    %5454 = vmatpush1.msra.mxu0 %v5420
    %5455 = vmatprep.subr.mxu0 0.0
    %5456 = vmatpush1.msra.mxu0 %v5419
    %5457 = vmatprep.subr.mxu0 0.0
    %5458 = vmatpush1.msra.mxu0 %v5418
    %5459 = vmatprep.subr.mxu0 0.0
    %5460 = vmatpush1.msra.mxu0 %v5417
    %5461 = vmatprep.subr.mxu0 0.0
    %5462 = vmatpush1.msra.mxu0 %v5416
    %5463 = vmatprep.subr.mxu0 0.0
    %5464 = vmatpush1.msra.mxu0 %v5415
    %5465 = vmatprep.subr.mxu0 0.0
    %5466 = vmatpush1.msra.mxu0 %v5414
    %5467 = vmatprep.subr.mxu0 0.0
    %5468 = vmatpush1.msra.mxu0 %v5413
    %5469 = vmatprep.subr.mxu0 0.0
    %5470 = vmatpush1.msra.mxu0 %v5412
    %5471 = vmatprep.subr.mxu0 0.0
    %5472 = vmatpush1.msra.mxu0 %v5411
    %5473 = vmatprep.subr.mxu0 0.0
    %5474 = vmatpush1.msra.mxu0 %v5410
    %5475 = vmatprep.subr.mxu0 0.0
    %5476 = vmatpush1.msra.mxu0 %v5409
    %5477 = vmatprep.subr.mxu0 0.0
    %5478 = vmatpush1.msra.mxu0 %v5408
    %5479 = vmatprep.subr.mxu0 0.0
    %5480 = vmatpush1.msra.mxu0 %v5407
    %5481 = vmatprep.subr.mxu0 0.0
    %5482 = vmatpush1.msra.mxu0 %v5406
    %5483 = vmatprep.subr.mxu0 0.0
    %5484 = vmatpush2.msra.mxu0 %v5437
    %5485 = vmatprep.subr.mxu0 0.0
    %5486 = vmatpush2.msra.mxu0 %v5436
    %5487 = vmatprep.subr.mxu0 0.0
    %5488 = vmatpush2.msra.mxu0 %v5435
    %5489 = vmatprep.subr.mxu0 0.0
    %5490 = vmatpush2.msra.mxu0 %v5434
    %5491 = vmatprep.subr.mxu0 0.0
    %5492 = vmatpush2.msra.mxu0 %v5433
    %5493 = vmatprep.subr.mxu0 0.0
    %5494 = vmatpush2.msra.mxu0 %v5432
    %5495 = vmatprep.subr.mxu0 0.0
    %5496 = vmatpush2.msra.mxu0 %v5431
    %5497 = vmatprep.subr.mxu0 0.0
    %5498 = vmatpush2.msra.mxu0 %v5430
    %5499 = vmatprep.subr.mxu0 0.0
    %5500 = vmatpush2.msra.mxu0 %v5429
    %5501 = vmatprep.subr.mxu0 0.0
    %5502 = vmatpush2.msra.mxu0 %v5428
    %5503 = vmatprep.subr.mxu0 0.0
    %5504 = vmatpush2.msra.mxu0 %v5427
    %5505 = vmatprep.subr.mxu0 0.0
    %5506 = vmatpush2.msra.mxu0 %v5426
    %5507 = vmatprep.subr.mxu0 0.0
    %5508 = vmatpush2.msra.mxu0 %v5425
    %5509 = vmatprep.subr.mxu0 0.0
    %5510 = vmatpush2.msra.mxu0 %v5424
    %5511 = vmatprep.subr.mxu0 0.0
    %5512 = vmatpush2.msra.mxu0 %v5423
    %5513 = vmatprep.subr.mxu0 0.0
    %5514 = vmatpush2.msra.mxu0 %v5422
    %5515 = vmatprep.mubr.f32.mxu0 %v5448
    %5516 = vmatmul.mubr.f32.gmra.mxu0 %v5445
    %v5517 = vpop.f32.mrf.mxu0
    %v5518 = vadd.f32 0.0, %v5517
    %v5519 = vpop.f32.mrf.mxu0
    %5520 = vdwg.mxu0
    %v5521 = vadd.f32 %v5398, %v5518
    %v5522 = vrot.slane %v5521, 4
    %v5523 = vadd.f32 %v5521, %v5522
    %v5524 = vrot.slane %v5523, 2
    %v5525 = vadd.f32 %v5523, %v5524
    %v5526 = vrot.slane %v5525, 1
    %v5527 = vadd.f32 %v5525, %v5526
    %v5528 = vmul.f32 %v5521, %v5521
    %v5529 = vrot.slane %v5528, 4
    %v5530 = vadd.f32 %v5528, %v5529
    %v5531 = vrot.slane %v5530, 2
    %v5532 = vadd.f32 %v5530, %v5531
    %v5533 = vrot.slane %v5532, 1
    %v5534 = vadd.f32 %v5532, %v5533
    %5535 = vmatprep.subr.mxu0 0.0
    %5536 = vmatpush1.msra.mxu0 %v394
    %5537 = vmatprep.subr.mxu0 0.0
    %5538 = vmatpush1.msra.mxu0 %v393
    %5539 = vmatprep.subr.mxu0 0.0
    %5540 = vmatpush1.msra.mxu0 %v392
    %5541 = vmatprep.subr.mxu0 0.0
    %5542 = vmatpush1.msra.mxu0 %v391
    %5543 = vmatprep.subr.mxu0 0.0
    %5544 = vmatpush1.msra.mxu0 %v390
    %5545 = vmatprep.subr.mxu0 0.0
    %5546 = vmatpush1.msra.mxu0 %v389
    %5547 = vmatprep.subr.mxu0 0.0
    %5548 = vmatpush1.msra.mxu0 %v388
    %5549 = vmatprep.subr.mxu0 0.0
    %5550 = vmatpush1.msra.mxu0 %v387
    %5551 = vmatprep.subr.mxu0 0.0
    %5552 = vmatpush1.msra.mxu0 %v386
    %5553 = vmatprep.subr.mxu0 0.0
    %5554 = vmatpush1.msra.mxu0 %v385
    %5555 = vmatprep.subr.mxu0 0.0
    %5556 = vmatpush1.msra.mxu0 %v384
    %5557 = vmatprep.subr.mxu0 0.0
    %5558 = vmatpush1.msra.mxu0 %v383
    %5559 = vmatprep.subr.mxu0 0.0
    %5560 = vmatpush1.msra.mxu0 %v382
    %5561 = vmatprep.subr.mxu0 0.0
    %5562 = vmatpush1.msra.mxu0 %v381
    %5563 = vmatprep.subr.mxu0 0.0
    %5564 = vmatpush1.msra.mxu0 %v380
    %5565 = vmatprep.subr.mxu0 0.0
    %5566 = vmatpush1.msra.mxu0 %v379
    %5567 = vmatprep.subr.mxu0 0.0
    %5568 = vmatpush2.msra.mxu0 0.0
    %5569 = vmatprep.subr.mxu0 0.0
    %5570 = vmatpush2.msra.mxu0 0.0
    %5571 = vmatprep.subr.mxu0 0.0
    %5572 = vmatpush2.msra.mxu0 0.0
    %5573 = vmatprep.subr.mxu0 0.0
    %5574 = vmatpush2.msra.mxu0 0.0
    %5575 = vmatprep.subr.mxu0 0.0
    %5576 = vmatpush2.msra.mxu0 0.0
    %5577 = vmatprep.subr.mxu0 0.0
    %5578 = vmatpush2.msra.mxu0 0.0
    %5579 = vmatprep.subr.mxu0 0.0
    %5580 = vmatpush2.msra.mxu0 0.0
    %5581 = vmatprep.subr.mxu0 0.0
    %5582 = vmatpush2.msra.mxu0 0.0
    %5583 = vmatprep.subr.mxu0 0.0
    %5584 = vmatpush2.msra.mxu0 0.0
    %5585 = vmatprep.subr.mxu0 0.0
    %5586 = vmatpush2.msra.mxu0 0.0
    %5587 = vmatprep.subr.mxu0 0.0
    %5588 = vmatpush2.msra.mxu0 0.0
    %5589 = vmatprep.subr.mxu0 0.0
    %5590 = vmatpush2.msra.mxu0 0.0
    %5591 = vmatprep.subr.mxu0 0.0
    %5592 = vmatpush2.msra.mxu0 0.0
    %5593 = vmatprep.subr.mxu0 0.0
    %5594 = vmatpush2.msra.mxu0 0.0
    %5595 = vmatprep.subr.mxu0 0.0
    %5596 = vmatpush2.msra.mxu0 0.0
    %5597 = vmatprep.subr.mxu0 0.0
    %5598 = vmatpush2.msra.mxu0 0.0
    %5599 = vmatprep.mubr.f32.mxu0 0.0
    %5600 = vmatmul.mubr.f32.gmra.mxu0 %v5527
    %v5601 = vpop.f32.mrf.mxu0
    %v5602 = vadd.f32 0.0, %v5601
    %v5603 = vpop.f32.mrf.mxu0
    %5604 = vdwg.mxu0
    %v5605 = vmul.f32 %v5602, 0.0078125
    %5606 = vmatprep.subr.mxu0 0.0
    %5607 = vmatpush1.msra.mxu0 %v394
    %5608 = vmatprep.subr.mxu0 0.0
    %5609 = vmatpush1.msra.mxu0 %v393
    %5610 = vmatprep.subr.mxu0 0.0
    %5611 = vmatpush1.msra.mxu0 %v392
    %5612 = vmatprep.subr.mxu0 0.0
    %5613 = vmatpush1.msra.mxu0 %v391
    %5614 = vmatprep.subr.mxu0 0.0
    %5615 = vmatpush1.msra.mxu0 %v390
    %5616 = vmatprep.subr.mxu0 0.0
    %5617 = vmatpush1.msra.mxu0 %v389
    %5618 = vmatprep.subr.mxu0 0.0
    %5619 = vmatpush1.msra.mxu0 %v388
    %5620 = vmatprep.subr.mxu0 0.0
    %5621 = vmatpush1.msra.mxu0 %v387
    %5622 = vmatprep.subr.mxu0 0.0
    %5623 = vmatpush1.msra.mxu0 %v386
    %5624 = vmatprep.subr.mxu0 0.0
    %5625 = vmatpush1.msra.mxu0 %v385
    %5626 = vmatprep.subr.mxu0 0.0
    %5627 = vmatpush1.msra.mxu0 %v384
    %5628 = vmatprep.subr.mxu0 0.0
    %5629 = vmatpush1.msra.mxu0 %v383
    %5630 = vmatprep.subr.mxu0 0.0
    %5631 = vmatpush1.msra.mxu0 %v382
    %5632 = vmatprep.subr.mxu0 0.0
    %5633 = vmatpush1.msra.mxu0 %v381
    %5634 = vmatprep.subr.mxu0 0.0
    %5635 = vmatpush1.msra.mxu0 %v380
    %5636 = vmatprep.subr.mxu0 0.0
    %5637 = vmatpush1.msra.mxu0 %v379
    %5638 = vmatprep.subr.mxu0 0.0
    %5639 = vmatpush2.msra.mxu0 0.0
    %5640 = vmatprep.subr.mxu0 0.0
    %5641 = vmatpush2.msra.mxu0 0.0
    %5642 = vmatprep.subr.mxu0 0.0
    %5643 = vmatpush2.msra.mxu0 0.0
    %5644 = vmatprep.subr.mxu0 0.0
    %5645 = vmatpush2.msra.mxu0 0.0
    %5646 = vmatprep.subr.mxu0 0.0
    %5647 = vmatpush2.msra.mxu0 0.0
    %5648 = vmatprep.subr.mxu0 0.0
    %5649 = vmatpush2.msra.mxu0 0.0
    %5650 = vmatprep.subr.mxu0 0.0
    %5651 = vmatpush2.msra.mxu0 0.0
    %5652 = vmatprep.subr.mxu0 0.0
    %5653 = vmatpush2.msra.mxu0 0.0
    %5654 = vmatprep.subr.mxu0 0.0
    %5655 = vmatpush2.msra.mxu0 0.0
    %5656 = vmatprep.subr.mxu0 0.0
    %5657 = vmatpush2.msra.mxu0 0.0
    %5658 = vmatprep.subr.mxu0 0.0
    %5659 = vmatpush2.msra.mxu0 0.0
    %5660 = vmatprep.subr.mxu0 0.0
    %5661 = vmatpush2.msra.mxu0 0.0
    %5662 = vmatprep.subr.mxu0 0.0
    %5663 = vmatpush2.msra.mxu0 0.0
    %5664 = vmatprep.subr.mxu0 0.0
    %5665 = vmatpush2.msra.mxu0 0.0
    %5666 = vmatprep.subr.mxu0 0.0
    %5667 = vmatpush2.msra.mxu0 0.0
    %5668 = vmatprep.subr.mxu0 0.0
    %5669 = vmatpush2.msra.mxu0 0.0
    %5670 = vmatprep.mubr.f32.mxu0 0.0
    %5671 = vmatmul.mubr.f32.gmra.mxu0 %v5534
    %v5672 = vpop.f32.mrf.mxu0
    %v5673 = vadd.f32 0.0, %v5672
    %v5674 = vpop.f32.mrf.mxu0
    %5675 = vdwg.mxu0
    %v5676 = vmul.f32 %v5673, 0.0078125
    %v5677 = vmul.f32 %v5605, %v5605
    %v5678 = vsub.f32 %v5676, %v5677
    %v5679 = vmax.f32 %v5678, 0.0
    %v5680 = vadd.f32 %v5679, 1e-05
    %v5681 = vrsqrt.pop %v5680
    %v5682 = vlaneseq
    %v5683 = vshrl.u32 %v5682, 7
    %v5684 = vsub.s32 0, %v5683
    %v5685 = vrot.slane %v5605, %v5684
    %v5686 = vsub.f32 %v5521, %v5685
    %v5687 = vlaneseq
    %v5688 = vshrl.u32 %v5687, 7
    %v5689 = vsub.s32 0, %v5688
    %v5690 = vrot.slane %v5681, %v5689
    %v5691 = vmul.f32 %v5686, %v5690
    %v5692 = vmax.f32 %v5691, 0.0
    %v5693 = vld [vmem:[#allocation31] sm:$0xff]
    %v5694 = vld [vmem:[#allocation31 + $0x8] sm:$0xff]
    %v5695 = vld [vmem:[#allocation31 + $0x10] sm:$0xff]
    %v5696 = vld [vmem:[#allocation31 + $0x18] sm:$0xff]
    %v5697 = vld [vmem:[#allocation31 + $0x20] sm:$0xff]
    %v5698 = vld [vmem:[#allocation31 + $0x28] sm:$0xff]
    %v5699 = vld [vmem:[#allocation31 + $0x30] sm:$0xff]
    %v5700 = vld [vmem:[#allocation31 + $0x38] sm:$0xff]
    %v5701 = vld [vmem:[#allocation31 + $0x40] sm:$0xff]
    %v5702 = vld [vmem:[#allocation31 + $0x48] sm:$0xff]
    %v5703 = vld [vmem:[#allocation31 + $0x50] sm:$0xff]
    %v5704 = vld [vmem:[#allocation31 + $0x58] sm:$0xff]
    %v5705 = vld [vmem:[#allocation31 + $0x60] sm:$0xff]
    %v5706 = vld [vmem:[#allocation31 + $0x68] sm:$0xff]
    %v5707 = vld [vmem:[#allocation31 + $0x70] sm:$0xff]
    %v5708 = vld [vmem:[#allocation31 + $0x78] sm:$0xff]
    %5709 = vmatprep.subr.mxu0 0.0
    %5710 = vmatpush1.msra.mxu0 %v5708
    %5711 = vmatprep.subr.mxu0 0.0
    %5712 = vmatpush1.msra.mxu0 %v5707
    %5713 = vmatprep.subr.mxu0 0.0
    %5714 = vmatpush1.msra.mxu0 %v5706
    %5715 = vmatprep.subr.mxu0 0.0
    %5716 = vmatpush1.msra.mxu0 %v5705
    %5717 = vmatprep.subr.mxu0 0.0
    %5718 = vmatpush1.msra.mxu0 %v5704
    %5719 = vmatprep.subr.mxu0 0.0
    %5720 = vmatpush1.msra.mxu0 %v5703
    %5721 = vmatprep.subr.mxu0 0.0
    %5722 = vmatpush1.msra.mxu0 %v5702
    %5723 = vmatprep.subr.mxu0 0.0
    %5724 = vmatpush1.msra.mxu0 %v5701
    %5725 = vmatprep.subr.mxu0 0.0
    %5726 = vmatpush1.msra.mxu0 %v5700
    %5727 = vmatprep.subr.mxu0 0.0
    %5728 = vmatpush1.msra.mxu0 %v5699
    %5729 = vmatprep.subr.mxu0 0.0
    %5730 = vmatpush1.msra.mxu0 %v5698
    %5731 = vmatprep.subr.mxu0 0.0
    %5732 = vmatpush1.msra.mxu0 %v5697
    %5733 = vmatprep.subr.mxu0 0.0
    %5734 = vmatpush1.msra.mxu0 %v5696
    %5735 = vmatprep.subr.mxu0 0.0
    %5736 = vmatpush1.msra.mxu0 %v5695
    %5737 = vmatprep.subr.mxu0 0.0
    %5738 = vmatpush1.msra.mxu0 %v5694
    %5739 = vmatprep.subr.mxu0 0.0
    %5740 = vmatpush1.msra.mxu0 %v5693
    %5741 = vmatprep.subr.mxu0 0.0
    %5742 = vmatpush2.msra.mxu0 0.0
    %5743 = vmatprep.subr.mxu0 0.0
    %5744 = vmatpush2.msra.mxu0 0.0
    %5745 = vmatprep.subr.mxu0 0.0
    %5746 = vmatpush2.msra.mxu0 0.0
    %5747 = vmatprep.subr.mxu0 0.0
    %5748 = vmatpush2.msra.mxu0 0.0
    %5749 = vmatprep.subr.mxu0 0.0
    %5750 = vmatpush2.msra.mxu0 0.0
    %5751 = vmatprep.subr.mxu0 0.0
    %5752 = vmatpush2.msra.mxu0 0.0
    %5753 = vmatprep.subr.mxu0 0.0
    %5754 = vmatpush2.msra.mxu0 0.0
    %5755 = vmatprep.subr.mxu0 0.0
    %5756 = vmatpush2.msra.mxu0 0.0
    %5757 = vmatprep.subr.mxu0 0.0
    %5758 = vmatpush2.msra.mxu0 0.0
    %5759 = vmatprep.subr.mxu0 0.0
    %5760 = vmatpush2.msra.mxu0 0.0
    %5761 = vmatprep.subr.mxu0 0.0
    %5762 = vmatpush2.msra.mxu0 0.0
    %5763 = vmatprep.subr.mxu0 0.0
    %5764 = vmatpush2.msra.mxu0 0.0
    %5765 = vmatprep.subr.mxu0 0.0
    %5766 = vmatpush2.msra.mxu0 0.0
    %5767 = vmatprep.subr.mxu0 0.0
    %5768 = vmatpush2.msra.mxu0 0.0
    %5769 = vmatprep.subr.mxu0 0.0
    %5770 = vmatpush2.msra.mxu0 0.0
    %5771 = vmatprep.subr.mxu0 0.0
    %5772 = vmatpush2.msra.mxu0 0.0
    %5773 = vmatprep.mubr.f32.mxu0 0.0
    %5774 = vmatmul.mubr.f32.gmra.mxu0 %v5692
    %v5775 = vpop.f32.mrf.mxu0
    %v5776 = vadd.f32 0.0, %v5775
    %v5777 = vpop.f32.mrf.mxu0
    %5778 = vdwg.mxu0
    %5779 = vst [vmem:[%s17] sm:$0xff] %v5776
    %5780 = vst [vmem:[#allocation13] sm:$0xff] %v5692
    %v5781 = vld [vmem:[#allocation13] sm:$0xff]
    %v5782 = vld [vmem:[#allocation32] sm:$0xff]
    %v5783 = vld [vmem:[#allocation32 + $0x8] sm:$0xff]
    %v5784 = vld [vmem:[#allocation32 + $0x10] sm:$0xff]
    %v5785 = vld [vmem:[#allocation32 + $0x18] sm:$0xff]
    %v5786 = vld [vmem:[#allocation32 + $0x20] sm:$0xff]
    %v5787 = vld [vmem:[#allocation32 + $0x28] sm:$0xff]
    %v5788 = vld [vmem:[#allocation32 + $0x30] sm:$0xff]
    %v5789 = vld [vmem:[#allocation32 + $0x38] sm:$0xff]
    %v5790 = vld [vmem:[#allocation32 + $0x40] sm:$0xff]
    %v5791 = vld [vmem:[#allocation32 + $0x48] sm:$0xff]
    %v5792 = vld [vmem:[#allocation32 + $0x50] sm:$0xff]
    %v5793 = vld [vmem:[#allocation32 + $0x58] sm:$0xff]
    %v5794 = vld [vmem:[#allocation32 + $0x60] sm:$0xff]
    %v5795 = vld [vmem:[#allocation32 + $0x68] sm:$0xff]
    %v5796 = vld [vmem:[#allocation32 + $0x70] sm:$0xff]
    %v5797 = vld [vmem:[#allocation32 + $0x78] sm:$0xff]
    %v5798 = vld [vmem:[#allocation32 + $0x80] sm:$0xff]
    %v5799 = vld [vmem:[#allocation32 + $0x88] sm:$0xff]
    %v5800 = vld [vmem:[#allocation32 + $0x90] sm:$0xff]
    %v5801 = vld [vmem:[#allocation32 + $0x98] sm:$0xff]
    %v5802 = vld [vmem:[#allocation32 + $0xa0] sm:$0xff]
    %v5803 = vld [vmem:[#allocation32 + $0xa8] sm:$0xff]
    %v5804 = vld [vmem:[#allocation32 + $0xb0] sm:$0xff]
    %v5805 = vld [vmem:[#allocation32 + $0xb8] sm:$0xff]
    %v5806 = vld [vmem:[#allocation32 + $0xc0] sm:$0xff]
    %v5807 = vld [vmem:[#allocation32 + $0xc8] sm:$0xff]
    %v5808 = vld [vmem:[#allocation32 + $0xd0] sm:$0xff]
    %v5809 = vld [vmem:[#allocation32 + $0xd8] sm:$0xff]
    %v5810 = vld [vmem:[#allocation32 + $0xe0] sm:$0xff]
    %v5811 = vld [vmem:[#allocation32 + $0xe8] sm:$0xff]
    %v5812 = vld [vmem:[#allocation32 + $0xf0] sm:$0xff]
    %v5813 = vld [vmem:[#allocation32 + $0xf8] sm:$0xff]
    %v5814 = vld [vmem:[#allocation13 + $0x1] sm:$0xff]
    %s5815 = scalar_lea.vmem [#allocation32], 256
    %v5816 = vld [vmem:[%s5815] sm:$0xff]
    %v5817 = vld [vmem:[%s5815 + $0x8] sm:$0xff]
    %v5818 = vld [vmem:[%s5815 + $0x10] sm:$0xff]
    %v5819 = vld [vmem:[%s5815 + $0x18] sm:$0xff]
    %v5820 = vld [vmem:[%s5815 + $0x20] sm:$0xff]
    %v5821 = vld [vmem:[%s5815 + $0x28] sm:$0xff]
    %v5822 = vld [vmem:[%s5815 + $0x30] sm:$0xff]
    %v5823 = vld [vmem:[%s5815 + $0x38] sm:$0xff]
    %v5824 = vld [vmem:[%s5815 + $0x40] sm:$0xff]
    %v5825 = vld [vmem:[%s5815 + $0x48] sm:$0xff]
    %v5826 = vld [vmem:[%s5815 + $0x50] sm:$0xff]
    %v5827 = vld [vmem:[%s5815 + $0x58] sm:$0xff]
    %v5828 = vld [vmem:[%s5815 + $0x60] sm:$0xff]
    %v5829 = vld [vmem:[%s5815 + $0x68] sm:$0xff]
    %v5830 = vld [vmem:[%s5815 + $0x70] sm:$0xff]
    %v5831 = vld [vmem:[%s5815 + $0x78] sm:$0xff]
    %v5832 = vld [vmem:[%s5815 + $0x80] sm:$0xff]
    %v5833 = vld [vmem:[%s5815 + $0x88] sm:$0xff]
    %v5834 = vld [vmem:[%s5815 + $0x90] sm:$0xff]
    %v5835 = vld [vmem:[%s5815 + $0x98] sm:$0xff]
    %v5836 = vld [vmem:[%s5815 + $0xa0] sm:$0xff]
    %v5837 = vld [vmem:[%s5815 + $0xa8] sm:$0xff]
    %v5838 = vld [vmem:[%s5815 + $0xb0] sm:$0xff]
    %v5839 = vld [vmem:[%s5815 + $0xb8] sm:$0xff]
    %v5840 = vld [vmem:[%s5815 + $0xc0] sm:$0xff]
    %v5841 = vld [vmem:[%s5815 + $0xc8] sm:$0xff]
    %v5842 = vld [vmem:[%s5815 + $0xd0] sm:$0xff]
    %v5843 = vld [vmem:[%s5815 + $0xd8] sm:$0xff]
    %v5844 = vld [vmem:[%s5815 + $0xe0] sm:$0xff]
    %v5845 = vld [vmem:[%s5815 + $0xe8] sm:$0xff]
    %v5846 = vld [vmem:[%s5815 + $0xf0] sm:$0xff]
    %v5847 = vld [vmem:[%s5815 + $0xf8] sm:$0xff]
    %5848 = vmatprep.subr.mxu0 %v5847
    %5849 = vmatpush1.msra.mxu0 %v5846
    %5850 = vmatprep.subr.mxu0 %v5845
    %5851 = vmatpush1.msra.mxu0 %v5844
    %5852 = vmatprep.subr.mxu0 %v5843
    %5853 = vmatpush1.msra.mxu0 %v5842
    %5854 = vmatprep.subr.mxu0 %v5841
    %5855 = vmatpush1.msra.mxu0 %v5840
    %5856 = vmatprep.subr.mxu0 %v5839
    %5857 = vmatpush1.msra.mxu0 %v5838
    %5858 = vmatprep.subr.mxu0 %v5837
    %5859 = vmatpush1.msra.mxu0 %v5836
    %5860 = vmatprep.subr.mxu0 %v5835
    %5861 = vmatpush1.msra.mxu0 %v5834
    %5862 = vmatprep.subr.mxu0 %v5833
    %5863 = vmatpush1.msra.mxu0 %v5832
    %5864 = vmatprep.subr.mxu0 %v5831
    %5865 = vmatpush1.msra.mxu0 %v5830
    %5866 = vmatprep.subr.mxu0 %v5829
    %5867 = vmatpush1.msra.mxu0 %v5828
    %5868 = vmatprep.subr.mxu0 %v5827
    %5869 = vmatpush1.msra.mxu0 %v5826
    %5870 = vmatprep.subr.mxu0 %v5825
    %5871 = vmatpush1.msra.mxu0 %v5824
    %5872 = vmatprep.subr.mxu0 %v5823
    %5873 = vmatpush1.msra.mxu0 %v5822
    %5874 = vmatprep.subr.mxu0 %v5821
    %5875 = vmatpush1.msra.mxu0 %v5820
    %5876 = vmatprep.subr.mxu0 %v5819
    %5877 = vmatpush1.msra.mxu0 %v5818
    %5878 = vmatprep.subr.mxu0 %v5817
    %5879 = vmatpush1.msra.mxu0 %v5816
    %5880 = vmatprep.subr.mxu0 0.0
    %5881 = vmatpush2.msra.mxu0 0.0
    %5882 = vmatprep.subr.mxu0 0.0
    %5883 = vmatpush2.msra.mxu0 0.0
    %5884 = vmatprep.subr.mxu0 0.0
    %5885 = vmatpush2.msra.mxu0 0.0
    %5886 = vmatprep.subr.mxu0 0.0
    %5887 = vmatpush2.msra.mxu0 0.0
    %5888 = vmatprep.subr.mxu0 0.0
    %5889 = vmatpush2.msra.mxu0 0.0
    %5890 = vmatprep.subr.mxu0 0.0
    %5891 = vmatpush2.msra.mxu0 0.0
    %5892 = vmatprep.subr.mxu0 0.0
    %5893 = vmatpush2.msra.mxu0 0.0
    %5894 = vmatprep.subr.mxu0 0.0
    %5895 = vmatpush2.msra.mxu0 0.0
    %5896 = vmatprep.subr.mxu0 0.0
    %5897 = vmatpush2.msra.mxu0 0.0
    %5898 = vmatprep.subr.mxu0 0.0
    %5899 = vmatpush2.msra.mxu0 0.0
    %5900 = vmatprep.subr.mxu0 0.0
    %5901 = vmatpush2.msra.mxu0 0.0
    %5902 = vmatprep.subr.mxu0 0.0
    %5903 = vmatpush2.msra.mxu0 0.0
    %5904 = vmatprep.subr.mxu0 0.0
    %5905 = vmatpush2.msra.mxu0 0.0
    %5906 = vmatprep.subr.mxu0 0.0
    %5907 = vmatpush2.msra.mxu0 0.0
    %5908 = vmatprep.subr.mxu0 0.0
    %5909 = vmatpush2.msra.mxu0 0.0
    %5910 = vmatprep.subr.mxu0 0.0
    %5911 = vmatpush2.msra.mxu0 0.0
    %5912 = vmatprep.mubr.f32.mxu0 0.0
    %5913 = vmatmul.mubr.f32.gmra.mxu0 %v5814
    %v5914 = vpop.f32.mrf.mxu0
    %v5915 = vadd.f32 0.0, %v5914
    %v5916 = vpop.f32.mrf.mxu0
    %v5917 = vadd.f32 0.0, %v5916
    %5918 = vdwg.mxu0
    %5919 = vmatprep.subr.mxu0 %v5813
    %5920 = vmatpush1.msra.mxu0 %v5812
    %5921 = vmatprep.subr.mxu0 %v5811
    %5922 = vmatpush1.msra.mxu0 %v5810
    %5923 = vmatprep.subr.mxu0 %v5809
    %5924 = vmatpush1.msra.mxu0 %v5808
    %5925 = vmatprep.subr.mxu0 %v5807
    %5926 = vmatpush1.msra.mxu0 %v5806
    %5927 = vmatprep.subr.mxu0 %v5805
    %5928 = vmatpush1.msra.mxu0 %v5804
    %5929 = vmatprep.subr.mxu0 %v5803
    %5930 = vmatpush1.msra.mxu0 %v5802
    %5931 = vmatprep.subr.mxu0 %v5801
    %5932 = vmatpush1.msra.mxu0 %v5800
    %5933 = vmatprep.subr.mxu0 %v5799
    %5934 = vmatpush1.msra.mxu0 %v5798
    %5935 = vmatprep.subr.mxu0 %v5797
    %5936 = vmatpush1.msra.mxu0 %v5796
    %5937 = vmatprep.subr.mxu0 %v5795
    %5938 = vmatpush1.msra.mxu0 %v5794
    %5939 = vmatprep.subr.mxu0 %v5793
    %5940 = vmatpush1.msra.mxu0 %v5792
    %5941 = vmatprep.subr.mxu0 %v5791
    %5942 = vmatpush1.msra.mxu0 %v5790
    %5943 = vmatprep.subr.mxu0 %v5789
    %5944 = vmatpush1.msra.mxu0 %v5788
    %5945 = vmatprep.subr.mxu0 %v5787
    %5946 = vmatpush1.msra.mxu0 %v5786
    %5947 = vmatprep.subr.mxu0 %v5785
    %5948 = vmatpush1.msra.mxu0 %v5784
    %5949 = vmatprep.subr.mxu0 %v5783
    %5950 = vmatpush1.msra.mxu0 %v5782
    %5951 = vmatprep.subr.mxu0 0.0
    %5952 = vmatpush2.msra.mxu0 0.0
    %5953 = vmatprep.subr.mxu0 0.0
    %5954 = vmatpush2.msra.mxu0 0.0
    %5955 = vmatprep.subr.mxu0 0.0
    %5956 = vmatpush2.msra.mxu0 0.0
    %5957 = vmatprep.subr.mxu0 0.0
    %5958 = vmatpush2.msra.mxu0 0.0
    %5959 = vmatprep.subr.mxu0 0.0
    %5960 = vmatpush2.msra.mxu0 0.0
    %5961 = vmatprep.subr.mxu0 0.0
    %5962 = vmatpush2.msra.mxu0 0.0
    %5963 = vmatprep.subr.mxu0 0.0
    %5964 = vmatpush2.msra.mxu0 0.0
    %5965 = vmatprep.subr.mxu0 0.0
    %5966 = vmatpush2.msra.mxu0 0.0
    %5967 = vmatprep.subr.mxu0 0.0
    %5968 = vmatpush2.msra.mxu0 0.0
    %5969 = vmatprep.subr.mxu0 0.0
    %5970 = vmatpush2.msra.mxu0 0.0
    %5971 = vmatprep.subr.mxu0 0.0
    %5972 = vmatpush2.msra.mxu0 0.0
    %5973 = vmatprep.subr.mxu0 0.0
    %5974 = vmatpush2.msra.mxu0 0.0
    %5975 = vmatprep.subr.mxu0 0.0
    %5976 = vmatpush2.msra.mxu0 0.0
    %5977 = vmatprep.subr.mxu0 0.0
    %5978 = vmatpush2.msra.mxu0 0.0
    %5979 = vmatprep.subr.mxu0 0.0
    %5980 = vmatpush2.msra.mxu0 0.0
    %5981 = vmatprep.subr.mxu0 0.0
    %5982 = vmatpush2.msra.mxu0 0.0
    %5983 = vmatprep.mubr.f32.mxu0 0.0
    %5984 = vmatmul.mubr.f32.gmra.mxu0 %v5781
    %v5985 = vpop.f32.mrf.mxu0
    %v5986 = vadd.f32 %v5915, %v5985
    %v5987 = vpop.f32.mrf.mxu0
    %v5988 = vadd.f32 %v5917, %v5987
    %5989 = vdwg.mxu0
    %v5990 = vrot.slane %v5986, 4
    %v5991 = vadd.f32 %v5986, %v5990
    %v5992 = vrot.slane %v5991, 2
    %v5993 = vadd.f32 %v5991, %v5992
    %v5994 = vrot.slane %v5993, 1
    %v5995 = vadd.f32 %v5993, %v5994
    %v5996 = vrot.slane %v5988, 4
    %v5997 = vadd.f32 %v5988, %v5996
    %v5998 = vrot.slane %v5997, 2
    %v5999 = vadd.f32 %v5997, %v5998
    %v6000 = vrot.slane %v5999, 1
    %v6001 = vadd.f32 %v5999, %v6000
    %v6002 = vmul.f32 %v5986, %v5986
    %v6003 = vmul.f32 %v5988, %v5988
    %v6004 = vrot.slane %v6002, 4
    %v6005 = vadd.f32 %v6002, %v6004
    %v6006 = vrot.slane %v6005, 2
    %v6007 = vadd.f32 %v6005, %v6006
    %v6008 = vrot.slane %v6007, 1
    %v6009 = vadd.f32 %v6007, %v6008
    %v6010 = vrot.slane %v6003, 4
    %v6011 = vadd.f32 %v6003, %v6010
    %v6012 = vrot.slane %v6011, 2
    %v6013 = vadd.f32 %v6011, %v6012
    %v6014 = vrot.slane %v6013, 1
    %v6015 = vadd.f32 %v6013, %v6014
    %6016 = vmatprep.subr.mxu0 %v654
    %6017 = vmatpush1.msra.mxu0 %v345
    %6018 = vmatprep.subr.mxu0 %v653
    %6019 = vmatpush1.msra.mxu0 %v344
    %6020 = vmatprep.subr.mxu0 %v652
    %6021 = vmatpush1.msra.mxu0 %v343
    %6022 = vmatprep.subr.mxu0 %v651
    %6023 = vmatpush1.msra.mxu0 %v342
    %6024 = vmatprep.subr.mxu0 %v650
    %6025 = vmatpush1.msra.mxu0 %v341
    %6026 = vmatprep.subr.mxu0 %v649
    %6027 = vmatpush1.msra.mxu0 %v340
    %6028 = vmatprep.subr.mxu0 %v648
    %6029 = vmatpush1.msra.mxu0 %v339
    %6030 = vmatprep.subr.mxu0 %v647
    %6031 = vmatpush1.msra.mxu0 %v338
    %6032 = vmatprep.subr.mxu0 %v646
    %6033 = vmatpush1.msra.mxu0 %v337
    %6034 = vmatprep.subr.mxu0 %v645
    %6035 = vmatpush1.msra.mxu0 %v336
    %6036 = vmatprep.subr.mxu0 %v644
    %6037 = vmatpush1.msra.mxu0 %v335
    %6038 = vmatprep.subr.mxu0 %v643
    %6039 = vmatpush1.msra.mxu0 %v334
    %6040 = vmatprep.subr.mxu0 %v642
    %6041 = vmatpush1.msra.mxu0 %v333
    %6042 = vmatprep.subr.mxu0 %v641
    %6043 = vmatpush1.msra.mxu0 %v332
    %6044 = vmatprep.subr.mxu0 %v640
    %6045 = vmatpush1.msra.mxu0 %v331
    %6046 = vmatprep.subr.mxu0 %v639
    %6047 = vmatpush1.msra.mxu0 %v330
    %6048 = vmatprep.subr.mxu0 %v686
    %6049 = vmatpush2.msra.mxu0 %v685
    %6050 = vmatprep.subr.mxu0 %v684
    %6051 = vmatpush2.msra.mxu0 %v683
    %6052 = vmatprep.subr.mxu0 %v682
    %6053 = vmatpush2.msra.mxu0 %v681
    %6054 = vmatprep.subr.mxu0 %v680
    %6055 = vmatpush2.msra.mxu0 %v679
    %6056 = vmatprep.subr.mxu0 %v678
    %6057 = vmatpush2.msra.mxu0 %v677
    %6058 = vmatprep.subr.mxu0 %v676
    %6059 = vmatpush2.msra.mxu0 %v675
    %6060 = vmatprep.subr.mxu0 %v674
    %6061 = vmatpush2.msra.mxu0 %v673
    %6062 = vmatprep.subr.mxu0 %v672
    %6063 = vmatpush2.msra.mxu0 %v671
    %6064 = vmatprep.subr.mxu0 %v670
    %6065 = vmatpush2.msra.mxu0 %v669
    %6066 = vmatprep.subr.mxu0 %v668
    %6067 = vmatpush2.msra.mxu0 %v667
    %6068 = vmatprep.subr.mxu0 %v666
    %6069 = vmatpush2.msra.mxu0 %v665
    %6070 = vmatprep.subr.mxu0 %v664
    %6071 = vmatpush2.msra.mxu0 %v663
    %6072 = vmatprep.subr.mxu0 %v662
    %6073 = vmatpush2.msra.mxu0 %v661
    %6074 = vmatprep.subr.mxu0 %v660
    %6075 = vmatpush2.msra.mxu0 %v659
    %6076 = vmatprep.subr.mxu0 %v658
    %6077 = vmatpush2.msra.mxu0 %v657
    %6078 = vmatprep.subr.mxu0 %v656
    %6079 = vmatpush2.msra.mxu0 %v655
    %6080 = vmatprep.mubr.f32.mxu0 %v6001
    %6081 = vmatmul.mubr.f32.gmra.mxu0 %v5995
    %v6082 = vpop.f32.mrf.mxu0
    %v6083 = vadd.f32 0.0, %v6082
    %v6084 = vpop.f32.mrf.mxu0
    %v6085 = vadd.f32 0.0, %v6084
    %6086 = vdwg.mxu0
    %v6087 = vmul.f32 %v6083, 0.001953125
    %v6088 = vmul.f32 %v6085, 0.001953125
    %6089 = vmatprep.subr.mxu0 %v654
    %6090 = vmatpush1.msra.mxu0 %v345
    %6091 = vmatprep.subr.mxu0 %v653
    %6092 = vmatpush1.msra.mxu0 %v344
    %6093 = vmatprep.subr.mxu0 %v652
    %6094 = vmatpush1.msra.mxu0 %v343
    %6095 = vmatprep.subr.mxu0 %v651
    %6096 = vmatpush1.msra.mxu0 %v342
    %6097 = vmatprep.subr.mxu0 %v650
    %6098 = vmatpush1.msra.mxu0 %v341
    %6099 = vmatprep.subr.mxu0 %v649
    %6100 = vmatpush1.msra.mxu0 %v340
    %6101 = vmatprep.subr.mxu0 %v648
    %6102 = vmatpush1.msra.mxu0 %v339
    %6103 = vmatprep.subr.mxu0 %v647
    %6104 = vmatpush1.msra.mxu0 %v338
    %6105 = vmatprep.subr.mxu0 %v646
    %6106 = vmatpush1.msra.mxu0 %v337
    %6107 = vmatprep.subr.mxu0 %v645
    %6108 = vmatpush1.msra.mxu0 %v336
    %6109 = vmatprep.subr.mxu0 %v644
    %6110 = vmatpush1.msra.mxu0 %v335
    %6111 = vmatprep.subr.mxu0 %v643
    %6112 = vmatpush1.msra.mxu0 %v334
    %6113 = vmatprep.subr.mxu0 %v642
    %6114 = vmatpush1.msra.mxu0 %v333
    %6115 = vmatprep.subr.mxu0 %v641
    %6116 = vmatpush1.msra.mxu0 %v332
    %6117 = vmatprep.subr.mxu0 %v640
    %6118 = vmatpush1.msra.mxu0 %v331
    %6119 = vmatprep.subr.mxu0 %v639
    %6120 = vmatpush1.msra.mxu0 %v330
    %6121 = vmatprep.subr.mxu0 %v686
    %6122 = vmatpush2.msra.mxu0 %v685
    %6123 = vmatprep.subr.mxu0 %v684
    %6124 = vmatpush2.msra.mxu0 %v683
    %6125 = vmatprep.subr.mxu0 %v682
    %6126 = vmatpush2.msra.mxu0 %v681
    %6127 = vmatprep.subr.mxu0 %v680
    %6128 = vmatpush2.msra.mxu0 %v679
    %6129 = vmatprep.subr.mxu0 %v678
    %6130 = vmatpush2.msra.mxu0 %v677
    %6131 = vmatprep.subr.mxu0 %v676
    %6132 = vmatpush2.msra.mxu0 %v675
    %6133 = vmatprep.subr.mxu0 %v674
    %6134 = vmatpush2.msra.mxu0 %v673
    %6135 = vmatprep.subr.mxu0 %v672
    %6136 = vmatpush2.msra.mxu0 %v671
    %6137 = vmatprep.subr.mxu0 %v670
    %6138 = vmatpush2.msra.mxu0 %v669
    %6139 = vmatprep.subr.mxu0 %v668
    %6140 = vmatpush2.msra.mxu0 %v667
    %6141 = vmatprep.subr.mxu0 %v666
    %6142 = vmatpush2.msra.mxu0 %v665
    %6143 = vmatprep.subr.mxu0 %v664
    %6144 = vmatpush2.msra.mxu0 %v663
    %6145 = vmatprep.subr.mxu0 %v662
    %6146 = vmatpush2.msra.mxu0 %v661
    %6147 = vmatprep.subr.mxu0 %v660
    %6148 = vmatpush2.msra.mxu0 %v659
    %6149 = vmatprep.subr.mxu0 %v658
    %6150 = vmatpush2.msra.mxu0 %v657
    %6151 = vmatprep.subr.mxu0 %v656
    %6152 = vmatpush2.msra.mxu0 %v655
    %6153 = vmatprep.mubr.f32.mxu0 %v6015
    %6154 = vmatmul.mubr.f32.gmra.mxu0 %v6009
    %v6155 = vpop.f32.mrf.mxu0
    %v6156 = vadd.f32 0.0, %v6155
    %v6157 = vpop.f32.mrf.mxu0
    %v6158 = vadd.f32 0.0, %v6157
    %6159 = vdwg.mxu0
    %v6160 = vmul.f32 %v6156, 0.001953125
    %v6161 = vmul.f32 %v6158, 0.001953125
    %v6162 = vmul.f32 %v6087, %v6087
    %v6163 = vmul.f32 %v6088, %v6088
    %v6164 = vsub.f32 %v6160, %v6162
    %v6165 = vsub.f32 %v6161, %v6163
    %v6166 = vmax.f32 %v6164, 0.0
    %v6167 = vmax.f32 %v6165, 0.0
    %v6168 = vadd.f32 %v6166, 1e-05
    %v6169 = vadd.f32 %v6167, 1e-05
    %v6170 = vrsqrt.pop %v6168
    %v6171 = vrsqrt.pop %v6169
    %v6172 = vlaneseq
    %v6173 = vshrl.u32 %v6172, 7
    %v6174 = vsub.s32 0, %v6173
    %v6175 = vrot.slane %v6087, %v6174
    %v6176 = vlaneseq
    %v6177 = vshrl.u32 %v6176, 7
    %v6178 = vsub.s32 0, %v6177
    %v6179 = vrot.slane %v6088, %v6178
    %v6180 = vsub.f32 %v5986, %v6175
    %v6181 = vsub.f32 %v5988, %v6179
    %v6182 = vlaneseq
    %v6183 = vshrl.u32 %v6182, 7
    %v6184 = vsub.s32 0, %v6183
    %v6185 = vrot.slane %v6170, %v6184
    %v6186 = vlaneseq
    %v6187 = vshrl.u32 %v6186, 7
    %v6188 = vsub.s32 0, %v6187
    %v6189 = vrot.slane %v6171, %v6188
    %v6190 = vmul.f32 %v6180, %v6185
    %v6191 = vmul.f32 %v6181, %v6189
    %v6192 = vmax.f32 %v6190, 0.0
    %v6193 = vmax.f32 %v6191, 0.0
    %6194 = vst [vmem:[#allocation14 + $0x1] sm:$0x1] %v6192
    %6195 = vst [vmem:[#allocation14 + $0x2] sm:$0x1] %v6193
    %v6197 = vrot.slane %v6192, 1
    %6199 = vst [vmem:[#allocation14 + $0x3] sm:$0x1] %v6197
    %v6201 = vrot.slane %v6193, 1
    %6203 = vst [vmem:[#allocation14 + $0x4] sm:$0x1] %v6201
    %v6204 = vrot.slane %v6192, 2
    %6206 = vst [vmem:[#allocation14 + $0x5] sm:$0x1] %v6204
    %v6207 = vrot.slane %v6193, 2
    %6209 = vst [vmem:[#allocation14 + $0x6] sm:$0x1] %v6207
    %v6210 = vrot.slane %v6192, 3
    %6212 = vst [vmem:[#allocation14 + $0x7] sm:$0x1] %v6210
    %v6213 = vrot.slane %v6193, 3
    %6215 = vst [vmem:[#allocation14 + $0x10] sm:$0x1] %v6213
    %v6216 = vrot.slane %v6192, 4
    %6218 = vst [vmem:[#allocation14 + $0x11] sm:$0x1] %v6216
    %v6219 = vrot.slane %v6193, 4
    %6221 = vst [vmem:[#allocation14 + $0x12] sm:$0x1] %v6219
    %v6222 = vrot.slane %v6192, 5
    %6224 = vst [vmem:[#allocation14 + $0x13] sm:$0x1] %v6222
    %v6225 = vrot.slane %v6193, 5
    %6227 = vst [vmem:[#allocation14 + $0x14] sm:$0x1] %v6225
    %v6228 = vrot.slane %v6192, 6
    %6230 = vst [vmem:[#allocation14 + $0x15] sm:$0x1] %v6228
    %v6231 = vrot.slane %v6193, 6
    %6233 = vst [vmem:[#allocation14 + $0x16] sm:$0x1] %v6231
    %v6234 = vrot.slane %v6192, 7
    %6236 = vst [vmem:[#allocation14 + $0x17] sm:$0x1] %v6234
    %v6237 = vrot.slane %v6193, 7
    %6239 = vst [vmem:[#allocation14 + $0x20] sm:$0x1] %v6237
    %v6240 = vld [vmem:[#allocation3 + $0x1] sm:$0xff]
    %v6241 = vld [vmem:[#allocation3 + $0x9] sm:$0xff]
    %vm6244 = vcmask 1040384
    %v6245 = vrot.slane %v6240, 7
    %v6246 = vrot.slane %v6241, 7
    %v6247 = vsel %vm6244, %v6245, %v6246
    %6251 = vst [vmem:[#allocation14 + $0x8] sm:$0xfe] %v6245
    %6252 = vst [vmem:[#allocation14 + $0x18] sm:$0xff] %v6247
    %6253 = vst [vmem:[#allocation14 + $0x28] sm:$0x1] %v6246
    %v6254 = vld [vmem:[#allocation14] sm:$0xff]
    %v6255 = vld [vmem:[#allocation14 + $0x8] sm:$0xff]
    %v6256 = vld [vmem:[#allocation14 + $0x10] sm:$0xff]
    %v6257 = vld [vmem:[#allocation14 + $0x18] sm:$0xff]
    %v6258 = vld [vmem:[#allocation34] sm:$0xff]
    %v6259 = vld [vmem:[#allocation34 + $0x8] sm:$0xff]
    %v6260 = vld [vmem:[#allocation34 + $0x10] sm:$0xff]
    %v6261 = vld [vmem:[#allocation34 + $0x18] sm:$0xff]
    %v6262 = vld [vmem:[#allocation34 + $0x20] sm:$0xff]
    %v6263 = vld [vmem:[#allocation34 + $0x28] sm:$0xff]
    %v6264 = vld [vmem:[#allocation34 + $0x30] sm:$0xff]
    %v6265 = vld [vmem:[#allocation34 + $0x38] sm:$0xff]
    %v6266 = vld [vmem:[#allocation34 + $0x40] sm:$0xff]
    %v6267 = vld [vmem:[#allocation34 + $0x48] sm:$0xff]
    %v6268 = vld [vmem:[#allocation34 + $0x50] sm:$0xff]
    %v6269 = vld [vmem:[#allocation34 + $0x58] sm:$0xff]
    %v6270 = vld [vmem:[#allocation34 + $0x60] sm:$0xff]
    %v6271 = vld [vmem:[#allocation34 + $0x68] sm:$0xff]
    %v6272 = vld [vmem:[#allocation34 + $0x70] sm:$0xff]
    %v6273 = vld [vmem:[#allocation34 + $0x78] sm:$0xff]
    %v6274 = vld [vmem:[#allocation34 + $0x80] sm:$0xff]
    %v6275 = vld [vmem:[#allocation34 + $0x88] sm:$0xff]
    %v6276 = vld [vmem:[#allocation34 + $0x90] sm:$0xff]
    %v6277 = vld [vmem:[#allocation34 + $0x98] sm:$0xff]
    %v6278 = vld [vmem:[#allocation34 + $0xa0] sm:$0xff]
    %v6279 = vld [vmem:[#allocation34 + $0xa8] sm:$0xff]
    %v6280 = vld [vmem:[#allocation34 + $0xb0] sm:$0xff]
    %v6281 = vld [vmem:[#allocation34 + $0xb8] sm:$0xff]
    %v6282 = vld [vmem:[#allocation34 + $0xc0] sm:$0xff]
    %v6283 = vld [vmem:[#allocation34 + $0xc8] sm:$0xff]
    %v6284 = vld [vmem:[#allocation34 + $0xd0] sm:$0xff]
    %v6285 = vld [vmem:[#allocation34 + $0xd8] sm:$0xff]
    %v6286 = vld [vmem:[#allocation34 + $0xe0] sm:$0xff]
    %v6287 = vld [vmem:[#allocation34 + $0xe8] sm:$0xff]
    %v6288 = vld [vmem:[#allocation34 + $0xf0] sm:$0xff]
    %v6289 = vld [vmem:[#allocation34 + $0xf8] sm:$0xff]
    %v6290 = vld [vmem:[#allocation14] sm:$0xfe]
    %v6291 = vld [vmem:[#allocation14 + $0x8] sm:$0xfe]
    %v6292 = vld [vmem:[#allocation14 + $0x20] sm:$0x1]
    %v6293 = vld [vmem:[#allocation14 + $0x28] sm:$0x1]
    %s6294 = scalar_lea.vmem [#allocation34], 256
    %v6295 = vld [vmem:[%s6294] sm:$0xff]
    %v6296 = vld [vmem:[%s6294 + $0x8] sm:$0xff]
    %v6297 = vld [vmem:[%s6294 + $0x10] sm:$0xff]
    %v6298 = vld [vmem:[%s6294 + $0x18] sm:$0xff]
    %v6299 = vld [vmem:[%s6294 + $0x20] sm:$0xff]
    %v6300 = vld [vmem:[%s6294 + $0x28] sm:$0xff]
    %v6301 = vld [vmem:[%s6294 + $0x30] sm:$0xff]
    %v6302 = vld [vmem:[%s6294 + $0x38] sm:$0xff]
    %v6303 = vld [vmem:[%s6294 + $0x40] sm:$0xff]
    %v6304 = vld [vmem:[%s6294 + $0x48] sm:$0xff]
    %v6305 = vld [vmem:[%s6294 + $0x50] sm:$0xff]
    %v6306 = vld [vmem:[%s6294 + $0x58] sm:$0xff]
    %v6307 = vld [vmem:[%s6294 + $0x60] sm:$0xff]
    %v6308 = vld [vmem:[%s6294 + $0x68] sm:$0xff]
    %v6309 = vld [vmem:[%s6294 + $0x70] sm:$0xff]
    %v6310 = vld [vmem:[%s6294 + $0x78] sm:$0xff]
    %v6311 = vld [vmem:[%s6294 + $0x80] sm:$0xff]
    %v6312 = vld [vmem:[%s6294 + $0x88] sm:$0xff]
    %v6313 = vld [vmem:[%s6294 + $0x90] sm:$0xff]
    %v6314 = vld [vmem:[%s6294 + $0x98] sm:$0xff]
    %v6315 = vld [vmem:[%s6294 + $0xa0] sm:$0xff]
    %v6316 = vld [vmem:[%s6294 + $0xa8] sm:$0xff]
    %v6317 = vld [vmem:[%s6294 + $0xb0] sm:$0xff]
    %v6318 = vld [vmem:[%s6294 + $0xb8] sm:$0xff]
    %v6319 = vld [vmem:[%s6294 + $0xc0] sm:$0xff]
    %v6320 = vld [vmem:[%s6294 + $0xc8] sm:$0xff]
    %v6321 = vld [vmem:[%s6294 + $0xd0] sm:$0xff]
    %v6322 = vld [vmem:[%s6294 + $0xd8] sm:$0xff]
    %v6323 = vld [vmem:[%s6294 + $0xe0] sm:$0xff]
    %v6324 = vld [vmem:[%s6294 + $0xe8] sm:$0xff]
    %v6325 = vld [vmem:[%s6294 + $0xf0] sm:$0xff]
    %v6326 = vld [vmem:[%s6294 + $0xf8] sm:$0xff]
    %v6333 = vrot.slane %v6290, 1
    %v6334 = vrot.slane %v6256, 1
    %v6335 = vsel %vm5252, %v6333, %v6334
    %v6336 = vrot.slane %v6291, 1
    %v6337 = vrot.slane %v6257, 1
    %v6338 = vsel %vm5252, %v6336, %v6337
    %v6339 = vrot.slane %v6292, 1
    %v6340 = vsel %vm5252, %v6334, %v6339
    %v6341 = vrot.slane %v6293, 1
    %v6342 = vsel %vm5252, %v6337, %v6341
    %6347 = vmatprep.subr.mxu0 0.0
    %6348 = vmatpush1.msra.mxu0 %v6310
    %6349 = vmatprep.subr.mxu0 0.0
    %6350 = vmatpush1.msra.mxu0 %v6309
    %6351 = vmatprep.subr.mxu0 0.0
    %6352 = vmatpush1.msra.mxu0 %v6308
    %6353 = vmatprep.subr.mxu0 0.0
    %6354 = vmatpush1.msra.mxu0 %v6307
    %6355 = vmatprep.subr.mxu0 0.0
    %6356 = vmatpush1.msra.mxu0 %v6306
    %6357 = vmatprep.subr.mxu0 0.0
    %6358 = vmatpush1.msra.mxu0 %v6305
    %6359 = vmatprep.subr.mxu0 0.0
    %6360 = vmatpush1.msra.mxu0 %v6304
    %6361 = vmatprep.subr.mxu0 0.0
    %6362 = vmatpush1.msra.mxu0 %v6303
    %6363 = vmatprep.subr.mxu0 0.0
    %6364 = vmatpush1.msra.mxu0 %v6302
    %6365 = vmatprep.subr.mxu0 0.0
    %6366 = vmatpush1.msra.mxu0 %v6301
    %6367 = vmatprep.subr.mxu0 0.0
    %6368 = vmatpush1.msra.mxu0 %v6300
    %6369 = vmatprep.subr.mxu0 0.0
    %6370 = vmatpush1.msra.mxu0 %v6299
    %6371 = vmatprep.subr.mxu0 0.0
    %6372 = vmatpush1.msra.mxu0 %v6298
    %6373 = vmatprep.subr.mxu0 0.0
    %6374 = vmatpush1.msra.mxu0 %v6297
    %6375 = vmatprep.subr.mxu0 0.0
    %6376 = vmatpush1.msra.mxu0 %v6296
    %6377 = vmatprep.subr.mxu0 0.0
    %6378 = vmatpush1.msra.mxu0 %v6295
    %6379 = vmatprep.subr.mxu0 0.0
    %6380 = vmatpush2.msra.mxu0 %v6326
    %6381 = vmatprep.subr.mxu0 0.0
    %6382 = vmatpush2.msra.mxu0 %v6325
    %6383 = vmatprep.subr.mxu0 0.0
    %6384 = vmatpush2.msra.mxu0 %v6324
    %6385 = vmatprep.subr.mxu0 0.0
    %6386 = vmatpush2.msra.mxu0 %v6323
    %6387 = vmatprep.subr.mxu0 0.0
    %6388 = vmatpush2.msra.mxu0 %v6322
    %6389 = vmatprep.subr.mxu0 0.0
    %6390 = vmatpush2.msra.mxu0 %v6321
    %6391 = vmatprep.subr.mxu0 0.0
    %6392 = vmatpush2.msra.mxu0 %v6320
    %6393 = vmatprep.subr.mxu0 0.0
    %6394 = vmatpush2.msra.mxu0 %v6319
    %6395 = vmatprep.subr.mxu0 0.0
    %6396 = vmatpush2.msra.mxu0 %v6318
    %6397 = vmatprep.subr.mxu0 0.0
    %6398 = vmatpush2.msra.mxu0 %v6317
    %6399 = vmatprep.subr.mxu0 0.0
    %6400 = vmatpush2.msra.mxu0 %v6316
    %6401 = vmatprep.subr.mxu0 0.0
    %6402 = vmatpush2.msra.mxu0 %v6315
    %6403 = vmatprep.subr.mxu0 0.0
    %6404 = vmatpush2.msra.mxu0 %v6314
    %6405 = vmatprep.subr.mxu0 0.0
    %6406 = vmatpush2.msra.mxu0 %v6313
    %6407 = vmatprep.subr.mxu0 0.0
    %6408 = vmatpush2.msra.mxu0 %v6312
    %6409 = vmatprep.subr.mxu0 0.0
    %6410 = vmatpush2.msra.mxu0 %v6311
    %6411 = vmatprep.mubr.f32.mxu0 %v6338
    %6412 = vmatmul.mubr.f32.gmra.mxu0 %v6335
    %v6413 = vpop.f32.mrf.mxu0
    %v6414 = vadd.f32 0.0, %v6413
    %v6415 = vpop.f32.mrf.mxu0
    %6416 = vmatprep.mubr.f32.mxu0 %v6342
    %6417 = vmatmul.mubr.f32.gmra.mxu0 %v6340
    %v6418 = vpop.f32.mrf.mxu0
    %v6419 = vadd.f32 0.0, %v6418
    %v6420 = vpop.f32.mrf.mxu0
    %6421 = vdwg.mxu0
    %6422 = vmatprep.subr.mxu0 0.0
    %6423 = vmatpush1.msra.mxu0 %v6273
    %6424 = vmatprep.subr.mxu0 0.0
    %6425 = vmatpush1.msra.mxu0 %v6272
    %6426 = vmatprep.subr.mxu0 0.0
    %6427 = vmatpush1.msra.mxu0 %v6271
    %6428 = vmatprep.subr.mxu0 0.0
    %6429 = vmatpush1.msra.mxu0 %v6270
    %6430 = vmatprep.subr.mxu0 0.0
    %6431 = vmatpush1.msra.mxu0 %v6269
    %6432 = vmatprep.subr.mxu0 0.0
    %6433 = vmatpush1.msra.mxu0 %v6268
    %6434 = vmatprep.subr.mxu0 0.0
    %6435 = vmatpush1.msra.mxu0 %v6267
    %6436 = vmatprep.subr.mxu0 0.0
    %6437 = vmatpush1.msra.mxu0 %v6266
    %6438 = vmatprep.subr.mxu0 0.0
    %6439 = vmatpush1.msra.mxu0 %v6265
    %6440 = vmatprep.subr.mxu0 0.0
    %6441 = vmatpush1.msra.mxu0 %v6264
    %6442 = vmatprep.subr.mxu0 0.0
    %6443 = vmatpush1.msra.mxu0 %v6263
    %6444 = vmatprep.subr.mxu0 0.0
    %6445 = vmatpush1.msra.mxu0 %v6262
    %6446 = vmatprep.subr.mxu0 0.0
    %6447 = vmatpush1.msra.mxu0 %v6261
    %6448 = vmatprep.subr.mxu0 0.0
    %6449 = vmatpush1.msra.mxu0 %v6260
    %6450 = vmatprep.subr.mxu0 0.0
    %6451 = vmatpush1.msra.mxu0 %v6259
    %6452 = vmatprep.subr.mxu0 0.0
    %6453 = vmatpush1.msra.mxu0 %v6258
    %6454 = vmatprep.subr.mxu0 0.0
    %6455 = vmatpush2.msra.mxu0 %v6289
    %6456 = vmatprep.subr.mxu0 0.0
    %6457 = vmatpush2.msra.mxu0 %v6288
    %6458 = vmatprep.subr.mxu0 0.0
    %6459 = vmatpush2.msra.mxu0 %v6287
    %6460 = vmatprep.subr.mxu0 0.0
    %6461 = vmatpush2.msra.mxu0 %v6286
    %6462 = vmatprep.subr.mxu0 0.0
    %6463 = vmatpush2.msra.mxu0 %v6285
    %6464 = vmatprep.subr.mxu0 0.0
    %6465 = vmatpush2.msra.mxu0 %v6284
    %6466 = vmatprep.subr.mxu0 0.0
    %6467 = vmatpush2.msra.mxu0 %v6283
    %6468 = vmatprep.subr.mxu0 0.0
    %6469 = vmatpush2.msra.mxu0 %v6282
    %6470 = vmatprep.subr.mxu0 0.0
    %6471 = vmatpush2.msra.mxu0 %v6281
    %6472 = vmatprep.subr.mxu0 0.0
    %6473 = vmatpush2.msra.mxu0 %v6280
    %6474 = vmatprep.subr.mxu0 0.0
    %6475 = vmatpush2.msra.mxu0 %v6279
    %6476 = vmatprep.subr.mxu0 0.0
    %6477 = vmatpush2.msra.mxu0 %v6278
    %6478 = vmatprep.subr.mxu0 0.0
    %6479 = vmatpush2.msra.mxu0 %v6277
    %6480 = vmatprep.subr.mxu0 0.0
    %6481 = vmatpush2.msra.mxu0 %v6276
    %6482 = vmatprep.subr.mxu0 0.0
    %6483 = vmatpush2.msra.mxu0 %v6275
    %6484 = vmatprep.subr.mxu0 0.0
    %6485 = vmatpush2.msra.mxu0 %v6274
    %6486 = vmatprep.mubr.f32.mxu0 %v6255
    %6487 = vmatmul.mubr.f32.gmra.mxu0 %v6254
    %v6488 = vpop.f32.mrf.mxu0
    %v6489 = vadd.f32 %v6414, %v6488
    %v6490 = vpop.f32.mrf.mxu0
    %6491 = vmatprep.mubr.f32.mxu0 %v6257
    %6492 = vmatmul.mubr.f32.gmra.mxu0 %v6256
    %v6493 = vpop.f32.mrf.mxu0
    %v6494 = vadd.f32 %v6419, %v6493
    %v6495 = vpop.f32.mrf.mxu0
    %6496 = vdwg.mxu0
    %v6497 = vld [vmem:[#allocation14] sm:$0xfc]
    %v6498 = vld [vmem:[#allocation14 + $0x8] sm:$0xfc]
    %v6499 = vld [vmem:[#allocation14 + $0x20] sm:$0x3]
    %v6500 = vld [vmem:[#allocation14 + $0x28] sm:$0x3]
    %s6501 = scalar_lea.vmem [#allocation34], 512
    %v6502 = vld [vmem:[%s6501] sm:$0xff]
    %v6503 = vld [vmem:[%s6501 + $0x8] sm:$0xff]
    %v6504 = vld [vmem:[%s6501 + $0x10] sm:$0xff]
    %v6505 = vld [vmem:[%s6501 + $0x18] sm:$0xff]
    %v6506 = vld [vmem:[%s6501 + $0x20] sm:$0xff]
    %v6507 = vld [vmem:[%s6501 + $0x28] sm:$0xff]
    %v6508 = vld [vmem:[%s6501 + $0x30] sm:$0xff]
    %v6509 = vld [vmem:[%s6501 + $0x38] sm:$0xff]
    %v6510 = vld [vmem:[%s6501 + $0x40] sm:$0xff]
    %v6511 = vld [vmem:[%s6501 + $0x48] sm:$0xff]
    %v6512 = vld [vmem:[%s6501 + $0x50] sm:$0xff]
    %v6513 = vld [vmem:[%s6501 + $0x58] sm:$0xff]
    %v6514 = vld [vmem:[%s6501 + $0x60] sm:$0xff]
    %v6515 = vld [vmem:[%s6501 + $0x68] sm:$0xff]
    %v6516 = vld [vmem:[%s6501 + $0x70] sm:$0xff]
    %v6517 = vld [vmem:[%s6501 + $0x78] sm:$0xff]
    %v6518 = vld [vmem:[%s6501 + $0x80] sm:$0xff]
    %v6519 = vld [vmem:[%s6501 + $0x88] sm:$0xff]
    %v6520 = vld [vmem:[%s6501 + $0x90] sm:$0xff]
    %v6521 = vld [vmem:[%s6501 + $0x98] sm:$0xff]
    %v6522 = vld [vmem:[%s6501 + $0xa0] sm:$0xff]
    %v6523 = vld [vmem:[%s6501 + $0xa8] sm:$0xff]
    %v6524 = vld [vmem:[%s6501 + $0xb0] sm:$0xff]
    %v6525 = vld [vmem:[%s6501 + $0xb8] sm:$0xff]
    %v6526 = vld [vmem:[%s6501 + $0xc0] sm:$0xff]
    %v6527 = vld [vmem:[%s6501 + $0xc8] sm:$0xff]
    %v6528 = vld [vmem:[%s6501 + $0xd0] sm:$0xff]
    %v6529 = vld [vmem:[%s6501 + $0xd8] sm:$0xff]
    %v6530 = vld [vmem:[%s6501 + $0xe0] sm:$0xff]
    %v6531 = vld [vmem:[%s6501 + $0xe8] sm:$0xff]
    %v6532 = vld [vmem:[%s6501 + $0xf0] sm:$0xff]
    %v6533 = vld [vmem:[%s6501 + $0xf8] sm:$0xff]
    %v6538 = vrot.slane %v6497, 2
    %v6539 = vrot.slane %v6256, 2
    %v6540 = vsel %vm5442, %v6538, %v6539
    %v6541 = vrot.slane %v6498, 2
    %v6542 = vrot.slane %v6257, 2
    %v6543 = vsel %vm5442, %v6541, %v6542
    %v6544 = vrot.slane %v6499, 2
    %v6545 = vsel %vm5442, %v6539, %v6544
    %v6546 = vrot.slane %v6500, 2
    %v6547 = vsel %vm5442, %v6542, %v6546
    %6552 = vmatprep.subr.mxu0 0.0
    %6553 = vmatpush1.msra.mxu0 %v6517
    %6554 = vmatprep.subr.mxu0 0.0
    %6555 = vmatpush1.msra.mxu0 %v6516
    %6556 = vmatprep.subr.mxu0 0.0
    %6557 = vmatpush1.msra.mxu0 %v6515
    %6558 = vmatprep.subr.mxu0 0.0
    %6559 = vmatpush1.msra.mxu0 %v6514
    %6560 = vmatprep.subr.mxu0 0.0
    %6561 = vmatpush1.msra.mxu0 %v6513
    %6562 = vmatprep.subr.mxu0 0.0
    %6563 = vmatpush1.msra.mxu0 %v6512
    %6564 = vmatprep.subr.mxu0 0.0
    %6565 = vmatpush1.msra.mxu0 %v6511
    %6566 = vmatprep.subr.mxu0 0.0
    %6567 = vmatpush1.msra.mxu0 %v6510
    %6568 = vmatprep.subr.mxu0 0.0
    %6569 = vmatpush1.msra.mxu0 %v6509
    %6570 = vmatprep.subr.mxu0 0.0
    %6571 = vmatpush1.msra.mxu0 %v6508
    %6572 = vmatprep.subr.mxu0 0.0
    %6573 = vmatpush1.msra.mxu0 %v6507
    %6574 = vmatprep.subr.mxu0 0.0
    %6575 = vmatpush1.msra.mxu0 %v6506
    %6576 = vmatprep.subr.mxu0 0.0
    %6577 = vmatpush1.msra.mxu0 %v6505
    %6578 = vmatprep.subr.mxu0 0.0
    %6579 = vmatpush1.msra.mxu0 %v6504
    %6580 = vmatprep.subr.mxu0 0.0
    %6581 = vmatpush1.msra.mxu0 %v6503
    %6582 = vmatprep.subr.mxu0 0.0
    %6583 = vmatpush1.msra.mxu0 %v6502
    %6584 = vmatprep.subr.mxu0 0.0
    %6585 = vmatpush2.msra.mxu0 %v6533
    %6586 = vmatprep.subr.mxu0 0.0
    %6587 = vmatpush2.msra.mxu0 %v6532
    %6588 = vmatprep.subr.mxu0 0.0
    %6589 = vmatpush2.msra.mxu0 %v6531
    %6590 = vmatprep.subr.mxu0 0.0
    %6591 = vmatpush2.msra.mxu0 %v6530
    %6592 = vmatprep.subr.mxu0 0.0
    %6593 = vmatpush2.msra.mxu0 %v6529
    %6594 = vmatprep.subr.mxu0 0.0
    %6595 = vmatpush2.msra.mxu0 %v6528
    %6596 = vmatprep.subr.mxu0 0.0
    %6597 = vmatpush2.msra.mxu0 %v6527
    %6598 = vmatprep.subr.mxu0 0.0
    %6599 = vmatpush2.msra.mxu0 %v6526
    %6600 = vmatprep.subr.mxu0 0.0
    %6601 = vmatpush2.msra.mxu0 %v6525
    %6602 = vmatprep.subr.mxu0 0.0
    %6603 = vmatpush2.msra.mxu0 %v6524
    %6604 = vmatprep.subr.mxu0 0.0
    %6605 = vmatpush2.msra.mxu0 %v6523
    %6606 = vmatprep.subr.mxu0 0.0
    %6607 = vmatpush2.msra.mxu0 %v6522
    %6608 = vmatprep.subr.mxu0 0.0
    %6609 = vmatpush2.msra.mxu0 %v6521
    %6610 = vmatprep.subr.mxu0 0.0
    %6611 = vmatpush2.msra.mxu0 %v6520
    %6612 = vmatprep.subr.mxu0 0.0
    %6613 = vmatpush2.msra.mxu0 %v6519
    %6614 = vmatprep.subr.mxu0 0.0
    %6615 = vmatpush2.msra.mxu0 %v6518
    %6616 = vmatprep.mubr.f32.mxu0 %v6543
    %6617 = vmatmul.mubr.f32.gmra.mxu0 %v6540
    %v6618 = vpop.f32.mrf.mxu0
    %v6619 = vadd.f32 0.0, %v6618
    %v6620 = vpop.f32.mrf.mxu0
    %6621 = vmatprep.mubr.f32.mxu0 %v6547
    %6622 = vmatmul.mubr.f32.gmra.mxu0 %v6545
    %v6623 = vpop.f32.mrf.mxu0
    %v6624 = vadd.f32 0.0, %v6623
    %v6625 = vpop.f32.mrf.mxu0
    %6626 = vdwg.mxu0
    %v6627 = vadd.f32 %v6489, %v6619
    %v6628 = vadd.f32 %v6494, %v6624
    %v6629 = vadd.f32 %v6627, %v6628
    %v6630 = vrot.slane %v6629, 4
    %v6631 = vadd.f32 %v6629, %v6630
    %v6632 = vrot.slane %v6631, 2
    %v6633 = vadd.f32 %v6631, %v6632
    %v6634 = vrot.slane %v6633, 1
    %v6635 = vadd.f32 %v6633, %v6634
    %v6636 = vmul.f32 %v6627, %v6627
    %v6637 = vmul.f32 %v6628, %v6628
    %v6638 = vadd.f32 %v6636, %v6637
    %v6639 = vrot.slane %v6638, 4
    %v6640 = vadd.f32 %v6638, %v6639
    %v6641 = vrot.slane %v6640, 2
    %v6642 = vadd.f32 %v6640, %v6641
    %v6643 = vrot.slane %v6642, 1
    %v6644 = vadd.f32 %v6642, %v6643
    %6645 = vmatprep.subr.mxu0 0.0
    %6646 = vmatpush1.msra.mxu0 %v345
    %6647 = vmatprep.subr.mxu0 0.0
    %6648 = vmatpush1.msra.mxu0 %v344
    %6649 = vmatprep.subr.mxu0 0.0
    %6650 = vmatpush1.msra.mxu0 %v343
    %6651 = vmatprep.subr.mxu0 0.0
    %6652 = vmatpush1.msra.mxu0 %v342
    %6653 = vmatprep.subr.mxu0 0.0
    %6654 = vmatpush1.msra.mxu0 %v341
    %6655 = vmatprep.subr.mxu0 0.0
    %6656 = vmatpush1.msra.mxu0 %v340
    %6657 = vmatprep.subr.mxu0 0.0
    %6658 = vmatpush1.msra.mxu0 %v339
    %6659 = vmatprep.subr.mxu0 0.0
    %6660 = vmatpush1.msra.mxu0 %v338
    %6661 = vmatprep.subr.mxu0 0.0
    %6662 = vmatpush1.msra.mxu0 %v337
    %6663 = vmatprep.subr.mxu0 0.0
    %6664 = vmatpush1.msra.mxu0 %v336
    %6665 = vmatprep.subr.mxu0 0.0
    %6666 = vmatpush1.msra.mxu0 %v335
    %6667 = vmatprep.subr.mxu0 0.0
    %6668 = vmatpush1.msra.mxu0 %v334
    %6669 = vmatprep.subr.mxu0 0.0
    %6670 = vmatpush1.msra.mxu0 %v333
    %6671 = vmatprep.subr.mxu0 0.0
    %6672 = vmatpush1.msra.mxu0 %v332
    %6673 = vmatprep.subr.mxu0 0.0
    %6674 = vmatpush1.msra.mxu0 %v331
    %6675 = vmatprep.subr.mxu0 0.0
    %6676 = vmatpush1.msra.mxu0 %v330
    %6677 = vmatprep.subr.mxu0 0.0
    %6678 = vmatpush2.msra.mxu0 0.0
    %6679 = vmatprep.subr.mxu0 0.0
    %6680 = vmatpush2.msra.mxu0 0.0
    %6681 = vmatprep.subr.mxu0 0.0
    %6682 = vmatpush2.msra.mxu0 0.0
    %6683 = vmatprep.subr.mxu0 0.0
    %6684 = vmatpush2.msra.mxu0 0.0
    %6685 = vmatprep.subr.mxu0 0.0
    %6686 = vmatpush2.msra.mxu0 0.0
    %6687 = vmatprep.subr.mxu0 0.0
    %6688 = vmatpush2.msra.mxu0 0.0
    %6689 = vmatprep.subr.mxu0 0.0
    %6690 = vmatpush2.msra.mxu0 0.0
    %6691 = vmatprep.subr.mxu0 0.0
    %6692 = vmatpush2.msra.mxu0 0.0
    %6693 = vmatprep.subr.mxu0 0.0
    %6694 = vmatpush2.msra.mxu0 0.0
    %6695 = vmatprep.subr.mxu0 0.0
    %6696 = vmatpush2.msra.mxu0 0.0
    %6697 = vmatprep.subr.mxu0 0.0
    %6698 = vmatpush2.msra.mxu0 0.0
    %6699 = vmatprep.subr.mxu0 0.0
    %6700 = vmatpush2.msra.mxu0 0.0
    %6701 = vmatprep.subr.mxu0 0.0
    %6702 = vmatpush2.msra.mxu0 0.0
    %6703 = vmatprep.subr.mxu0 0.0
    %6704 = vmatpush2.msra.mxu0 0.0
    %6705 = vmatprep.subr.mxu0 0.0
    %6706 = vmatpush2.msra.mxu0 0.0
    %6707 = vmatprep.subr.mxu0 0.0
    %6708 = vmatpush2.msra.mxu0 0.0
    %6709 = vmatprep.mubr.f32.mxu0 0.0
    %6710 = vmatmul.mubr.f32.gmra.mxu0 %v6635
    %v6711 = vpop.f32.mrf.mxu0
    %v6712 = vadd.f32 0.0, %v6711
    %v6713 = vpop.f32.mrf.mxu0
    %6714 = vdwg.mxu0
    %v6715 = vmul.f32 %v6712, 0.001953125
    %6716 = vmatprep.subr.mxu0 0.0
    %6717 = vmatpush1.msra.mxu0 %v345
    %6718 = vmatprep.subr.mxu0 0.0
    %6719 = vmatpush1.msra.mxu0 %v344
    %6720 = vmatprep.subr.mxu0 0.0
    %6721 = vmatpush1.msra.mxu0 %v343
    %6722 = vmatprep.subr.mxu0 0.0
    %6723 = vmatpush1.msra.mxu0 %v342
    %6724 = vmatprep.subr.mxu0 0.0
    %6725 = vmatpush1.msra.mxu0 %v341
    %6726 = vmatprep.subr.mxu0 0.0
    %6727 = vmatpush1.msra.mxu0 %v340
    %6728 = vmatprep.subr.mxu0 0.0
    %6729 = vmatpush1.msra.mxu0 %v339
    %6730 = vmatprep.subr.mxu0 0.0
    %6731 = vmatpush1.msra.mxu0 %v338
    %6732 = vmatprep.subr.mxu0 0.0
    %6733 = vmatpush1.msra.mxu0 %v337
    %6734 = vmatprep.subr.mxu0 0.0
    %6735 = vmatpush1.msra.mxu0 %v336
    %6736 = vmatprep.subr.mxu0 0.0
    %6737 = vmatpush1.msra.mxu0 %v335
    %6738 = vmatprep.subr.mxu0 0.0
    %6739 = vmatpush1.msra.mxu0 %v334
    %6740 = vmatprep.subr.mxu0 0.0
    %6741 = vmatpush1.msra.mxu0 %v333
    %6742 = vmatprep.subr.mxu0 0.0
    %6743 = vmatpush1.msra.mxu0 %v332
    %6744 = vmatprep.subr.mxu0 0.0
    %6745 = vmatpush1.msra.mxu0 %v331
    %6746 = vmatprep.subr.mxu0 0.0
    %6747 = vmatpush1.msra.mxu0 %v330
    %6748 = vmatprep.subr.mxu0 0.0
    %6749 = vmatpush2.msra.mxu0 0.0
    %6750 = vmatprep.subr.mxu0 0.0
    %6751 = vmatpush2.msra.mxu0 0.0
    %6752 = vmatprep.subr.mxu0 0.0
    %6753 = vmatpush2.msra.mxu0 0.0
    %6754 = vmatprep.subr.mxu0 0.0
    %6755 = vmatpush2.msra.mxu0 0.0
    %6756 = vmatprep.subr.mxu0 0.0
    %6757 = vmatpush2.msra.mxu0 0.0
    %6758 = vmatprep.subr.mxu0 0.0
    %6759 = vmatpush2.msra.mxu0 0.0
    %6760 = vmatprep.subr.mxu0 0.0
    %6761 = vmatpush2.msra.mxu0 0.0
    %6762 = vmatprep.subr.mxu0 0.0
    %6763 = vmatpush2.msra.mxu0 0.0
    %6764 = vmatprep.subr.mxu0 0.0
    %6765 = vmatpush2.msra.mxu0 0.0
    %6766 = vmatprep.subr.mxu0 0.0
    %6767 = vmatpush2.msra.mxu0 0.0
    %6768 = vmatprep.subr.mxu0 0.0
    %6769 = vmatpush2.msra.mxu0 0.0
    %6770 = vmatprep.subr.mxu0 0.0
    %6771 = vmatpush2.msra.mxu0 0.0
    %6772 = vmatprep.subr.mxu0 0.0
    %6773 = vmatpush2.msra.mxu0 0.0
    %6774 = vmatprep.subr.mxu0 0.0
    %6775 = vmatpush2.msra.mxu0 0.0
    %6776 = vmatprep.subr.mxu0 0.0
    %6777 = vmatpush2.msra.mxu0 0.0
    %6778 = vmatprep.subr.mxu0 0.0
    %6779 = vmatpush2.msra.mxu0 0.0
    %6780 = vmatprep.mubr.f32.mxu0 0.0
    %6781 = vmatmul.mubr.f32.gmra.mxu0 %v6644
    %v6782 = vpop.f32.mrf.mxu0
    %v6783 = vadd.f32 0.0, %v6782
    %v6784 = vpop.f32.mrf.mxu0
    %6785 = vdwg.mxu0
    %v6786 = vmul.f32 %v6783, 0.001953125
    %v6787 = vmul.f32 %v6715, %v6715
    %v6788 = vsub.f32 %v6786, %v6787
    %v6789 = vmax.f32 %v6788, 0.0
    %v6790 = vadd.f32 %v6789, 1e-05
    %v6791 = vrsqrt.pop %v6790
    %v6792 = vlaneseq
    %v6793 = vshrl.u32 %v6792, 7
    %v6794 = vsub.s32 0, %v6793
    %v6795 = vrot.slane %v6715, %v6794
    %v6796 = vsub.f32 %v6627, %v6795
    %v6797 = vsub.f32 %v6628, %v6795
    %v6798 = vlaneseq
    %v6799 = vshrl.u32 %v6798, 7
    %v6800 = vsub.s32 0, %v6799
    %v6801 = vrot.slane %v6791, %v6800
    %v6802 = vmul.f32 %v6796, %v6801
    %v6803 = vmul.f32 %v6797, %v6801
    %v6804 = vmax.f32 %v6802, 0.0
    %v6805 = vmax.f32 %v6803, 0.0
    %v6806 = vld [vmem:[#allocation35] sm:$0xff]
    %v6807 = vld [vmem:[#allocation35 + $0x8] sm:$0xff]
    %v6808 = vld [vmem:[#allocation35 + $0x10] sm:$0xff]
    %v6809 = vld [vmem:[#allocation35 + $0x18] sm:$0xff]
    %v6810 = vld [vmem:[#allocation35 + $0x20] sm:$0xff]
    %v6811 = vld [vmem:[#allocation35 + $0x28] sm:$0xff]
    %v6812 = vld [vmem:[#allocation35 + $0x30] sm:$0xff]
    %v6813 = vld [vmem:[#allocation35 + $0x38] sm:$0xff]
    %v6814 = vld [vmem:[#allocation35 + $0x40] sm:$0xff]
    %v6815 = vld [vmem:[#allocation35 + $0x48] sm:$0xff]
    %v6816 = vld [vmem:[#allocation35 + $0x50] sm:$0xff]
    %v6817 = vld [vmem:[#allocation35 + $0x58] sm:$0xff]
    %v6818 = vld [vmem:[#allocation35 + $0x60] sm:$0xff]
    %v6819 = vld [vmem:[#allocation35 + $0x68] sm:$0xff]
    %v6820 = vld [vmem:[#allocation35 + $0x70] sm:$0xff]
    %v6821 = vld [vmem:[#allocation35 + $0x78] sm:$0xff]
    %6822 = vmatprep.subr.mxu0 0.0
    %6823 = vmatpush1.msra.mxu0 %v6821
    %6824 = vmatprep.subr.mxu0 0.0
    %6825 = vmatpush1.msra.mxu0 %v6820
    %6826 = vmatprep.subr.mxu0 0.0
    %6827 = vmatpush1.msra.mxu0 %v6819
    %6828 = vmatprep.subr.mxu0 0.0
    %6829 = vmatpush1.msra.mxu0 %v6818
    %6830 = vmatprep.subr.mxu0 0.0
    %6831 = vmatpush1.msra.mxu0 %v6817
    %6832 = vmatprep.subr.mxu0 0.0
    %6833 = vmatpush1.msra.mxu0 %v6816
    %6834 = vmatprep.subr.mxu0 0.0
    %6835 = vmatpush1.msra.mxu0 %v6815
    %6836 = vmatprep.subr.mxu0 0.0
    %6837 = vmatpush1.msra.mxu0 %v6814
    %6838 = vmatprep.subr.mxu0 0.0
    %6839 = vmatpush1.msra.mxu0 %v6813
    %6840 = vmatprep.subr.mxu0 0.0
    %6841 = vmatpush1.msra.mxu0 %v6812
    %6842 = vmatprep.subr.mxu0 0.0
    %6843 = vmatpush1.msra.mxu0 %v6811
    %6844 = vmatprep.subr.mxu0 0.0
    %6845 = vmatpush1.msra.mxu0 %v6810
    %6846 = vmatprep.subr.mxu0 0.0
    %6847 = vmatpush1.msra.mxu0 %v6809
    %6848 = vmatprep.subr.mxu0 0.0
    %6849 = vmatpush1.msra.mxu0 %v6808
    %6850 = vmatprep.subr.mxu0 0.0
    %6851 = vmatpush1.msra.mxu0 %v6807
    %6852 = vmatprep.subr.mxu0 0.0
    %6853 = vmatpush1.msra.mxu0 %v6806
    %6854 = vmatprep.subr.mxu0 0.0
    %6855 = vmatpush2.msra.mxu0 0.0
    %6856 = vmatprep.subr.mxu0 0.0
    %6857 = vmatpush2.msra.mxu0 0.0
    %6858 = vmatprep.subr.mxu0 0.0
    %6859 = vmatpush2.msra.mxu0 0.0
    %6860 = vmatprep.subr.mxu0 0.0
    %6861 = vmatpush2.msra.mxu0 0.0
    %6862 = vmatprep.subr.mxu0 0.0
    %6863 = vmatpush2.msra.mxu0 0.0
    %6864 = vmatprep.subr.mxu0 0.0
    %6865 = vmatpush2.msra.mxu0 0.0
    %6866 = vmatprep.subr.mxu0 0.0
    %6867 = vmatpush2.msra.mxu0 0.0
    %6868 = vmatprep.subr.mxu0 0.0
    %6869 = vmatpush2.msra.mxu0 0.0
    %6870 = vmatprep.subr.mxu0 0.0
    %6871 = vmatpush2.msra.mxu0 0.0
    %6872 = vmatprep.subr.mxu0 0.0
    %6873 = vmatpush2.msra.mxu0 0.0
    %6874 = vmatprep.subr.mxu0 0.0
    %6875 = vmatpush2.msra.mxu0 0.0
    %6876 = vmatprep.subr.mxu0 0.0
    %6877 = vmatpush2.msra.mxu0 0.0
    %6878 = vmatprep.subr.mxu0 0.0
    %6879 = vmatpush2.msra.mxu0 0.0
    %6880 = vmatprep.subr.mxu0 0.0
    %6881 = vmatpush2.msra.mxu0 0.0
    %6882 = vmatprep.subr.mxu0 0.0
    %6883 = vmatpush2.msra.mxu0 0.0
    %6884 = vmatprep.subr.mxu0 0.0
    %6885 = vmatpush2.msra.mxu0 0.0
    %6886 = vmatprep.mubr.f32.mxu0 0.0
    %6887 = vmatmul.mubr.f32.gmra.mxu0 %v6804
    %v6888 = vpop.f32.mrf.mxu0
    %v6889 = vadd.f32 0.0, %v6888
    %v6890 = vpop.f32.mrf.mxu0
    %6891 = vmatprep.mubr.f32.mxu0 0.0
    %6892 = vmatmul.mubr.f32.gmra.mxu0 %v6805
    %v6893 = vpop.f32.mrf.mxu0
    %v6894 = vadd.f32 0.0, %v6893
    %v6895 = vpop.f32.mrf.mxu0
    %6896 = vdwg.mxu0
    %6897 = vst [vmem:[%s18] sm:$0xff] %v6889
    %6898 = vst [vmem:[%s18 + $0x8] sm:$0xff] %v6894
    // Predicated region
    $region122: #{feature_net_forward.1} parent=1 // pred_check
      _
    $region123: #{feature_net_forward.1} parent=1 // pred_check_branch
      %6900 = sbr.rel (0) target = $region125
    $region124: #{feature_net_forward.1} parent=1 // pred_region
      _
    $region125: #{feature_net_forward.1} parent=1 // pred_fallthru
      _
    // Predicated region
    $region126: #{feature_net_forward.1} parent=1 // pred_check
      _
    $region127: #{feature_net_forward.1} parent=1 // pred_check_branch
      %6902 = sbr.rel (0) target = $region129
    $region128: #{feature_net_forward.1} parent=1 // pred_region
      _
    $region129: #{feature_net_forward.1} parent=1 // pred_fallthru
      _
    // Predicated region
    $region130: #{feature_net_forward.1} parent=1 // pred_check
      _
    $region131: #{feature_net_forward.1} parent=1 // pred_check_branch
      %6904 = sbr.rel (0) target = $region133
    $region132: #{feature_net_forward.1} parent=1 // pred_region
      _
    $region133: #{feature_net_forward.1} parent=1 // pred_fallthru
      _
    // Predicated region
    $region134: #{feature_net_forward.1} parent=1 // pred_check
      _
    $region135: #{feature_net_forward.1} parent=1 // pred_check_branch
      %6906 = sbr.rel (0) target = $region137
    $region136: #{feature_net_forward.1} parent=1 // pred_region
      _
    $region137: #{feature_net_forward.1} parent=1 // pred_fallthru
      _
    // Predicated region
    $region138: #{feature_net_forward.1} parent=1 // pred_check
      _
    $region139: #{feature_net_forward.1} parent=1 // pred_check_branch
      %6908 = sbr.rel (0) target = $region141
    $region140: #{feature_net_forward.1} parent=1 // pred_region
      _
    $region141: #{feature_net_forward.1} parent=1 // pred_fallthru
      _
    // Predicated region
    $region142: #{feature_net_forward.1} parent=1 // pred_check
      _
    $region143: #{feature_net_forward.1} parent=1 // pred_check_branch
      %6910 = sbr.rel (0) target = $region145
    $region144: #{feature_net_forward.1} parent=1 // pred_region
      _
    $region145: #{feature_net_forward.1} parent=1 // pred_fallthru
      _
    %6911 = vsyncpa [#allocation16], 1
    %6912 = vsyncpa [#allocation18], 1
    %6913 = vsyncpa [#allocation21], 1
    %6914 = vsyncpa [#allocation24], 1
    %6915 = vsyncpa [#allocation27], 1
    %6916 = vsyncpa [#allocation30], 1
    %6917 = vsyncpa [#allocation33], 1
    %6918 = vsyncpa [#allocation36], 1

</llo_original>
